<compile_context>
chip_gen: v7x
topology: tpu7x:2x2x1
jax: 0.10.0
libtpu: 0.0.40
codegen_flags: <defaults>
</compile_context>

<pallas_src>
import jax
import jax.numpy as jnp
from jax.experimental import pallas as pl
from jax.experimental.pallas import tpu as pltpu


VMEM_SPEC = pl.BlockSpec(memory_space=pltpu.MemorySpace.VMEM)

# Per-layer dtypes: matmul operands (patches/weights) and stored activation dtype.
CONV_OPERAND_DTYPES = {1: jnp.float32, 2: jnp.bfloat16, 3: jnp.bfloat16}
CONV_OUTPUT_DTYPES = {1: jnp.bfloat16, 2: jnp.bfloat16, 3: jnp.float32}


# ---------------------------------------------------------------------------
# Pallas kernels
# ---------------------------------------------------------------------------

def _make_conv_bn_relu_pool_kernel(use_mxu):
    """Fused conv-matmul + BN(scale,bias) + ReLU + 2x2 max-pool over 4 positions."""

    def kernel(p_ref, w_ref, scale_ref, bias_ref, o_ref):
        # p_ref:   (4, TM, K)  patches, pool-position-major (bf16 / f32)
        # w_ref:   (K, Cout)   conv weights in (dh, dw, cin) row order
        # scale_ref, bias_ref: (1, Cout) f32 (folded eval-mode BN + conv bias)
        # o_ref:   (TM, Cout)  pooled activations
        scale = scale_ref[...]
        bias = bias_ref[...]
        w = w_ref[...]
        pooled = None
        for p in range(4):                       # 4 positions of each 2x2 pool window
            x = p_ref[p]                         # (TM, K)
            if use_mxu:
                acc = jnp.dot(x, w, preferred_element_type=jnp.float32)
            else:
                # conv1: Cin=1 -> K=9.  A K=9 matmul wastes the MXU and pads the
                # lane dim 9->128; do 9 broadcast FMAs on the VPU instead (f32).
                acc = jnp.zeros((x.shape[0], w.shape[1]), jnp.float32)
                for k in range(w.shape[0]):
                    acc = acc + (x[:, k:k + 1].astype(jnp.float32)
                                 * w[k:k + 1, :].astype(jnp.float32))
            y = jnp.maximum(acc * scale + bias, 0.0)          # f32 epilogue (v5e VPU)
            pooled = y if pooled is None else jnp.maximum(pooled, y)
        o_ref[...] = pooled.astype(o_ref.dtype)

    return kernel


def head_kernel(x_ref, w1_ref, b1_ref, w2_ref, b2_ref, o_ref):
    """Global average pool over spatial axis, then fc1 + ReLU + fc2 (lane-padded)."""
    pooled = jnp.mean(x_ref[...], axis=1)                                   # (N, 256)
    h = jnp.dot(pooled, w1_ref[...], preferred_element_type=jnp.float32) + b1_ref[...]
    h = jnp.maximum(h, 0.0)                                                 # (N, 512)
    o_ref[...] = jnp.dot(h, w2_ref[...],
                         preferred_element_type=jnp.float32) + b2_ref[...]  # (N, 128)


# ---------------------------------------------------------------------------
# Wrappers
# ---------------------------------------------------------------------------

def build_pool_grouped_patches(x, dtype):
    """x: (N, H, W, C) -> patches (4, N*Ho*Wo, 9*C).

    Axis 0 is the position inside each 2x2 pooling window; rows are the pooled
    output pixels (n, i, j); K columns are ordered (dh, dw, cin), matching the
    conv-weight layout.  Built with strided slices only (no big transpose).
    """
    N, H, W, C = x.shape
    Ho, Wo = H // 2, W // 2
    xp = jnp.pad(x, ((0, 0), (1, 1), (1, 1), (0, 0)))
    groups = []
    for ph in range(2):
        for pw in range(2):
            taps = []
            for dh in range(3):
                for dw in range(3):
                    taps.append(xp[:, ph + dh: ph + dh + 2 * Ho: 2,
                                   pw + dw: pw + dw + 2 * Wo: 2, :])   # (N,Ho,Wo,C)
            g = jnp.stack(taps, axis=3)                                # (N,Ho,Wo,9,C)
            groups.append(g.reshape(N * Ho * Wo, 9 * C))
    return jnp.stack(groups, axis=0).astype(dtype)                     # (4, Mo, 9C)


def _pick_tile_m(mo, target):
    """Largest row-tile <= target that divides Mo and is a multiple of 8."""
    if mo <= target or mo % 8:
        return mo
    tm = (target // 8) * 8
    while mo % tm:
        tm -= 8
    return tm


def conv_bn_relu_pool(patches, w, scale, bias, out_dtype, target_tm=512):
    """patches: (4, Mo, K) pool-grouped -> pooled activations (Mo, Cout)."""
    _, mo, k = patches.shape
    cout = w.shape[-1]
    cin = k // 9
    tm = _pick_tile_m(mo, target_tm)
    grid = (pl.cdiv(mo, tm),)
    kernel = _make_conv_bn_relu_pool_kernel(use_mxu=(cin > 1))

    # Explicit scoped-VMEM budget from the tile sizes (double-buffered) + headroom.
    tile_bytes = 2 * (4 * tm * k * patches.dtype.itemsize
                      + k * cout * w.dtype.itemsize
                      + tm * cout * jnp.dtype(out_dtype).itemsize
                      + 2 * cout * 4)
    vmem_limit = int(min(48 * 1024 * 1024, max(8 * 1024 * 1024, 4 * tile_bytes)))

    flops = 2 * 4 * mo * k * cout + 6 * 4 * mo * cout
    bytes_accessed = (patches.size * patches.dtype.itemsize
                      + w.size * w.dtype.itemsize + 2 * cout * 4
                      + mo * cout * jnp.dtype(out_dtype).itemsize)

    return pl.pallas_call(
        kernel,
        out_shape=jax.ShapeDtypeStruct((mo, cout), out_dtype),
        grid=grid,
        in_specs=[
            pl.BlockSpec((4, tm, k), lambda i: (0, i, 0)),    # patch tile (pipelined)
            pl.BlockSpec((k, cout), lambda i: (0, 0)),        # weights (resident)
            pl.BlockSpec((1, cout), lambda i: (0, 0)),        # BN scale
            pl.BlockSpec((1, cout), lambda i: (0, 0)),        # BN bias (+conv bias)
        ],
        out_specs=pl.BlockSpec((tm, cout), lambda i: (i, 0)),  # lane-dense Cout
        compiler_params=pltpu.CompilerParams(
            dimension_semantics=("parallel",),
            vmem_limit_bytes=vmem_limit),
        cost_estimate=pl.CostEstimate(flops=flops, transcendentals=0,
                                      bytes_accessed=bytes_accessed),
    )(patches, w, scale, bias)


def head(x, w1, b1, w2, b2):
    """x: (N, S, 256) -> lane-padded logits (N, 128)."""
    N = x.shape[0]
    return pl.pallas_call(
        head_kernel,
        out_shape=jax.ShapeDtypeStruct((N, w2.shape[-1]), jnp.float32),
        in_specs=[VMEM_SPEC] * 5,
        out_specs=VMEM_SPEC,
    )(x, w1, b1, w2, b2)


# ---------------------------------------------------------------------------
# Parameters (deterministic synthetic init; shapes from SimpleCNN.__init__)
# ---------------------------------------------------------------------------

def init_params(key):
    eps = 1e-5
    params = {}
    channels = [(1, 64), (64, 128), (128, 256)]
    keys = jax.random.split(key, 2 * len(channels) + 4)

    for i, (cin, cout) in enumerate(channels, start=1):
        kw, kb = keys[2 * (i - 1)], keys[2 * (i - 1) + 1]
        # conv weight stored in patch layout (9*Cin, Cout), rows ordered (dh, dw, cin)
        w = jax.random.normal(kw, (9 * cin, cout), jnp.float32) / jnp.sqrt(9.0 * cin)
        b = jax.random.normal(kb, (cout,), jnp.float32) * 0.01
        # BatchNorm (eval mode, PyTorch-init stats): gamma=1, beta=0, mean=0, var=1
        gamma = jnp.ones((cout,), jnp.float32)
        beta = jnp.zeros((cout,), jnp.float32)
        rmean = jnp.zeros((cout,), jnp.float32)
        rvar = jnp.ones((cout,), jnp.float32)
        scale = gamma / jnp.sqrt(rvar + eps)
        bias = scale * (b - rmean) + beta          # fold conv bias + BN shift
        w_dtype = jnp.float32 if cin == 1 else jnp.bfloat16   # conv1 runs on the VPU
        params[f"conv{i}_w"] = w.astype(w_dtype)
        params[f"conv{i}_scale"] = scale.reshape(1, cout)
        params[f"conv{i}_bias"] = bias.reshape(1, cout)

    k1, k2, k3, k4 = keys[-4:]
    params["fc1_w"] = jax.random.normal(k1, (256, 512), jnp.float32) / jnp.sqrt(256.0)
    params["fc1_b"] = (jax.random.normal(k2, (512,), jnp.float32) * 0.01).reshape(1, 512)
    fc2_w = jax.random.normal(k3, (512, 10), jnp.float32) / jnp.sqrt(512.0)
    fc2_b = (jax.random.normal(k4, (10,), jnp.float32) * 0.01).reshape(1, 10)
    # Lane-dense head store: pad fc2 to 128 output lanes (zeros), slice to 10 outside.
    params["fc2_w"] = jnp.pad(fc2_w, ((0, 0), (0, 118)))
    params["fc2_b"] = jnp.pad(fc2_b, ((0, 0), (0, 118)))
    return params


# ---------------------------------------------------------------------------
# Full forward pass (Pallas) and pure-JAX reference
# ---------------------------------------------------------------------------

@jax.jit
def simple_cnn_forward(x_nchw, params):
    # layout: convert PyTorch NCHW -> NHWC once at the boundary.
    x = jnp.transpose(x_nchw, (0, 2, 3, 1)).astype(jnp.float32)

    for i in (1, 2, 3):
        N, H, W, _ = x.shape
        Ho, Wo = H // 2, W // 2
        patches = build_pool_grouped_patches(x, CONV_OPERAND_DTYPES[i])  # (4, Mo, 9Cin)
        y = conv_bn_relu_pool(patches,
                              params[f"conv{i}_w"],
                              params[f"conv{i}_scale"],
                              params[f"conv{i}_bias"],
                              out_dtype=CONV_OUTPUT_DTYPES[i])           # (Mo, Cout)
        x = y.reshape(N, Ho, Wo, -1)                                     # pooled NHWC

    N, Ho, Wo, C = x.shape
    feats = x.reshape(N, Ho * Wo, C).astype(jnp.float32)                 # (N, 4, 256)
    logits = head(feats, params["fc1_w"], params["fc1_b"],
                  params["fc2_w"], params["fc2_b"])                      # (N, 128)
    return logits[:, :10]


@jax.jit
def reference_forward(x_nchw, params):
    """Pure-JAX (XLA) reference in f32, for correctness checking."""
    x = jnp.transpose(x_nchw, (0, 2, 3, 1)).astype(jnp.float32)
    for i, cin in enumerate((1, 64, 128), start=1):
        w = params[f"conv{i}_w"].astype(jnp.float32).reshape(3, 3, cin, -1)
        y = jax.lax.conv_general_dilated(
            x, w, window_strides=(1, 1), padding=((1, 1), (1, 1)),
            dimension_numbers=("NHWC", "HWIO", "NHWC"))
        y = jnp.maximum(y * params[f"conv{i}_scale"] + params[f"conv{i}_bias"], 0.0)
        x = jax.lax.reduce_window(y, -jnp.inf, jax.lax.max,
                                  (1, 2, 2, 1), (1, 2, 2, 1), "VALID")
    g = jnp.mean(x, axis=(1, 2))                                         # (N, 256)
    h = jnp.maximum(g @ params["fc1_w"] + params["fc1_b"], 0.0)
    return h @ params["fc2_w"][:, :10] + params["fc2_b"][:, :10]


if __name__ == "__main__":
    key = jax.random.PRNGKey(0)
    k_x, k_p = jax.random.split(key)
    # SimpleCNN takes 1-channel images; batch=2, spatial=16 (three 2x2 pools -> 2x2).
    x = jax.random.normal(k_x, (2, 1, 16, 16), jnp.float32)
    params = init_params(k_p)

    out = jax.block_until_ready(simple_cnn_forward(x, params))
    ref = jax.block_until_ready(reference_forward(x, params))

    assert out.shape == (2, 10) and out.dtype == jnp.float32
    err = float(jnp.max(jnp.abs(out - ref)))
    tol = 0.05 + 0.03 * float(jnp.max(jnp.abs(ref)))   # bf16 operand/activation slack
    assert err < tol, f"mismatch vs f32 reference: max abs err = {err} (tol {tol})"
    print("KERNEL_OK")
</pallas_src>

<mosaic_0001>
module attributes {stable_mosaic.version = 11 : i64} {
  func.func @kernel(%arg0: i32, %arg1: memref<4x128x9xf32, #tpu.memory_space<vmem>>, %arg2: memref<9x64xf32, #tpu.memory_space<vmem>>, %arg3: memref<1x64xf32, #tpu.memory_space<vmem>>, %arg4: memref<1x64xf32, #tpu.memory_space<vmem>>, %arg5: memref<128x64xbf16, #tpu.memory_space<vmem>>) attributes {dimension_semantics = [#tpu.dimension_semantics<parallel>], iteration_bounds = array<i64: 1>, scalar_prefetch = 0 : i64, scratch_operands = 0 : i64, tpu.core_type = #tpu.core_type<tc>, window_params = [{transform_indices = @transform_0, window_bounds = array<i64: 4, 128, 9>}, {pipeline_mode = #tpu.pipeline_mode<synchronous>, transform_indices = @transform_1, window_bounds = array<i64: 9, 64>}, {pipeline_mode = #tpu.pipeline_mode<synchronous>, transform_indices = @transform_2, window_bounds = array<i64: 1, 64>}, {pipeline_mode = #tpu.pipeline_mode<synchronous>, transform_indices = @transform_3, window_bounds = array<i64: 1, 64>}, {transform_indices = @transform_4, window_bounds = array<i64: 128, 64>}]} {
    %c0 = arith.constant 0 : index
    %c0_0 = arith.constant 0 : index
    %0 = vector.load %arg3[%c0, %c0_0] : memref<1x64xf32, #tpu.memory_space<vmem>>, vector<1x64xf32>
    %c0_1 = arith.constant 0 : index
    %c0_2 = arith.constant 0 : index
    %1 = vector.load %arg4[%c0_1, %c0_2] : memref<1x64xf32, #tpu.memory_space<vmem>>, vector<1x64xf32>
    %c0_3 = arith.constant 0 : index
    %c0_4 = arith.constant 0 : index
    %2 = vector.load %arg2[%c0_3, %c0_4] : memref<9x64xf32, #tpu.memory_space<vmem>>, vector<9x64xf32>
    %c0_5 = arith.constant 0 : index
    %c0_6 = arith.constant 0 : index
    %c0_7 = arith.constant 0 : index
    %3 = vector.load %arg1[%c0_5, %c0_6, %c0_7] : memref<4x128x9xf32, #tpu.memory_space<vmem>>, vector<1x128x9xf32>
    %4 = vector.shape_cast %3 : vector<1x128x9xf32> to vector<128x9xf32>
    %cst = arith.constant 0.000000e+00 : f32
    %5 = vector.broadcast %cst : f32 to vector<128x64xf32>
    %6 = vector.extract_strided_slice %4 {offsets = [0, 0], sizes = [128, 1], strides = [1, 1]} : vector<128x9xf32> to vector<128x1xf32>
    %7 = vector.extract_strided_slice %2 {offsets = [0, 0], sizes = [1, 64], strides = [1, 1]} : vector<9x64xf32> to vector<1x64xf32>
    %8 = vector.broadcast %6 : vector<128x1xf32> to vector<128x64xf32>
    %9 = vector.broadcast %7 : vector<1x64xf32> to vector<128x64xf32>
    %10 = arith.mulf %8, %9 : vector<128x64xf32>
    %11 = arith.addf %5, %10 : vector<128x64xf32>
    %12 = vector.extract_strided_slice %4 {offsets = [0, 1], sizes = [128, 1], strides = [1, 1]} : vector<128x9xf32> to vector<128x1xf32>
    %13 = vector.extract_strided_slice %2 {offsets = [1, 0], sizes = [1, 64], strides = [1, 1]} : vector<9x64xf32> to vector<1x64xf32>
    %14 = vector.broadcast %12 : vector<128x1xf32> to vector<128x64xf32>
    %15 = vector.broadcast %13 : vector<1x64xf32> to vector<128x64xf32>
    %16 = arith.mulf %14, %15 : vector<128x64xf32>
    %17 = arith.addf %11, %16 : vector<128x64xf32>
    %18 = vector.extract_strided_slice %4 {offsets = [0, 2], sizes = [128, 1], strides = [1, 1]} : vector<128x9xf32> to vector<128x1xf32>
    %19 = vector.extract_strided_slice %2 {offsets = [2, 0], sizes = [1, 64], strides = [1, 1]} : vector<9x64xf32> to vector<1x64xf32>
    %20 = vector.broadcast %18 : vector<128x1xf32> to vector<128x64xf32>
    %21 = vector.broadcast %19 : vector<1x64xf32> to vector<128x64xf32>
    %22 = arith.mulf %20, %21 : vector<128x64xf32>
    %23 = arith.addf %17, %22 : vector<128x64xf32>
    %24 = vector.extract_strided_slice %4 {offsets = [0, 3], sizes = [128, 1], strides = [1, 1]} : vector<128x9xf32> to vector<128x1xf32>
    %25 = vector.extract_strided_slice %2 {offsets = [3, 0], sizes = [1, 64], strides = [1, 1]} : vector<9x64xf32> to vector<1x64xf32>
    %26 = vector.broadcast %24 : vector<128x1xf32> to vector<128x64xf32>
    %27 = vector.broadcast %25 : vector<1x64xf32> to vector<128x64xf32>
    %28 = arith.mulf %26, %27 : vector<128x64xf32>
    %29 = arith.addf %23, %28 : vector<128x64xf32>
    %30 = vector.extract_strided_slice %4 {offsets = [0, 4], sizes = [128, 1], strides = [1, 1]} : vector<128x9xf32> to vector<128x1xf32>
    %31 = vector.extract_strided_slice %2 {offsets = [4, 0], sizes = [1, 64], strides = [1, 1]} : vector<9x64xf32> to vector<1x64xf32>
    %32 = vector.broadcast %30 : vector<128x1xf32> to vector<128x64xf32>
    %33 = vector.broadcast %31 : vector<1x64xf32> to vector<128x64xf32>
    %34 = arith.mulf %32, %33 : vector<128x64xf32>
    %35 = arith.addf %29, %34 : vector<128x64xf32>
    %36 = vector.extract_strided_slice %4 {offsets = [0, 5], sizes = [128, 1], strides = [1, 1]} : vector<128x9xf32> to vector<128x1xf32>
    %37 = vector.extract_strided_slice %2 {offsets = [5, 0], sizes = [1, 64], strides = [1, 1]} : vector<9x64xf32> to vector<1x64xf32>
    %38 = vector.broadcast %36 : vector<128x1xf32> to vector<128x64xf32>
    %39 = vector.broadcast %37 : vector<1x64xf32> to vector<128x64xf32>
    %40 = arith.mulf %38, %39 : vector<128x64xf32>
    %41 = arith.addf %35, %40 : vector<128x64xf32>
    %42 = vector.extract_strided_slice %4 {offsets = [0, 6], sizes = [128, 1], strides = [1, 1]} : vector<128x9xf32> to vector<128x1xf32>
    %43 = vector.extract_strided_slice %2 {offsets = [6, 0], sizes = [1, 64], strides = [1, 1]} : vector<9x64xf32> to vector<1x64xf32>
    %44 = vector.broadcast %42 : vector<128x1xf32> to vector<128x64xf32>
    %45 = vector.broadcast %43 : vector<1x64xf32> to vector<128x64xf32>
    %46 = arith.mulf %44, %45 : vector<128x64xf32>
    %47 = arith.addf %41, %46 : vector<128x64xf32>
    %48 = vector.extract_strided_slice %4 {offsets = [0, 7], sizes = [128, 1], strides = [1, 1]} : vector<128x9xf32> to vector<128x1xf32>
    %49 = vector.extract_strided_slice %2 {offsets = [7, 0], sizes = [1, 64], strides = [1, 1]} : vector<9x64xf32> to vector<1x64xf32>
    %50 = vector.broadcast %48 : vector<128x1xf32> to vector<128x64xf32>
    %51 = vector.broadcast %49 : vector<1x64xf32> to vector<128x64xf32>
    %52 = arith.mulf %50, %51 : vector<128x64xf32>
    %53 = arith.addf %47, %52 : vector<128x64xf32>
    %54 = vector.extract_strided_slice %4 {offsets = [0, 8], sizes = [128, 1], strides = [1, 1]} : vector<128x9xf32> to vector<128x1xf32>
    %55 = vector.extract_strided_slice %2 {offsets = [8, 0], sizes = [1, 64], strides = [1, 1]} : vector<9x64xf32> to vector<1x64xf32>
    %56 = vector.broadcast %54 : vector<128x1xf32> to vector<128x64xf32>
    %57 = vector.broadcast %55 : vector<1x64xf32> to vector<128x64xf32>
    %58 = arith.mulf %56, %57 : vector<128x64xf32>
    %59 = arith.addf %53, %58 : vector<128x64xf32>
    %60 = vector.broadcast %0 : vector<1x64xf32> to vector<128x64xf32>
    %61 = arith.mulf %59, %60 : vector<128x64xf32>
    %62 = vector.broadcast %1 : vector<1x64xf32> to vector<128x64xf32>
    %63 = arith.addf %61, %62 : vector<128x64xf32>
    %cst_8 = arith.constant 0.000000e+00 : f32
    %64 = vector.broadcast %cst_8 : f32 to vector<128x64xf32>
    %65 = arith.maximumf %63, %64 : vector<128x64xf32>
    %c1 = arith.constant 1 : index
    %c0_9 = arith.constant 0 : index
    %c0_10 = arith.constant 0 : index
    %66 = vector.load %arg1[%c1, %c0_9, %c0_10] : memref<4x128x9xf32, #tpu.memory_space<vmem>>, vector<1x128x9xf32>
    %67 = vector.shape_cast %66 : vector<1x128x9xf32> to vector<128x9xf32>
    %cst_11 = arith.constant 0.000000e+00 : f32
    %68 = vector.broadcast %cst_11 : f32 to vector<128x64xf32>
    %69 = vector.extract_strided_slice %67 {offsets = [0, 0], sizes = [128, 1], strides = [1, 1]} : vector<128x9xf32> to vector<128x1xf32>
    %70 = vector.extract_strided_slice %2 {offsets = [0, 0], sizes = [1, 64], strides = [1, 1]} : vector<9x64xf32> to vector<1x64xf32>
    %71 = vector.broadcast %69 : vector<128x1xf32> to vector<128x64xf32>
    %72 = vector.broadcast %70 : vector<1x64xf32> to vector<128x64xf32>
    %73 = arith.mulf %71, %72 : vector<128x64xf32>
    %74 = arith.addf %68, %73 : vector<128x64xf32>
    %75 = vector.extract_strided_slice %67 {offsets = [0, 1], sizes = [128, 1], strides = [1, 1]} : vector<128x9xf32> to vector<128x1xf32>
    %76 = vector.extract_strided_slice %2 {offsets = [1, 0], sizes = [1, 64], strides = [1, 1]} : vector<9x64xf32> to vector<1x64xf32>
    %77 = vector.broadcast %75 : vector<128x1xf32> to vector<128x64xf32>
    %78 = vector.broadcast %76 : vector<1x64xf32> to vector<128x64xf32>
    %79 = arith.mulf %77, %78 : vector<128x64xf32>
    %80 = arith.addf %74, %79 : vector<128x64xf32>
    %81 = vector.extract_strided_slice %67 {offsets = [0, 2], sizes = [128, 1], strides = [1, 1]} : vector<128x9xf32> to vector<128x1xf32>
    %82 = vector.extract_strided_slice %2 {offsets = [2, 0], sizes = [1, 64], strides = [1, 1]} : vector<9x64xf32> to vector<1x64xf32>
    %83 = vector.broadcast %81 : vector<128x1xf32> to vector<128x64xf32>
    %84 = vector.broadcast %82 : vector<1x64xf32> to vector<128x64xf32>
    %85 = arith.mulf %83, %84 : vector<128x64xf32>
    %86 = arith.addf %80, %85 : vector<128x64xf32>
    %87 = vector.extract_strided_slice %67 {offsets = [0, 3], sizes = [128, 1], strides = [1, 1]} : vector<128x9xf32> to vector<128x1xf32>
    %88 = vector.extract_strided_slice %2 {offsets = [3, 0], sizes = [1, 64], strides = [1, 1]} : vector<9x64xf32> to vector<1x64xf32>
    %89 = vector.broadcast %87 : vector<128x1xf32> to vector<128x64xf32>
    %90 = vector.broadcast %88 : vector<1x64xf32> to vector<128x64xf32>
    %91 = arith.mulf %89, %90 : vector<128x64xf32>
    %92 = arith.addf %86, %91 : vector<128x64xf32>
    %93 = vector.extract_strided_slice %67 {offsets = [0, 4], sizes = [128, 1], strides = [1, 1]} : vector<128x9xf32> to vector<128x1xf32>
    %94 = vector.extract_strided_slice %2 {offsets = [4, 0], sizes = [1, 64], strides = [1, 1]} : vector<9x64xf32> to vector<1x64xf32>
    %95 = vector.broadcast %93 : vector<128x1xf32> to vector<128x64xf32>
    %96 = vector.broadcast %94 : vector<1x64xf32> to vector<128x64xf32>
    %97 = arith.mulf %95, %96 : vector<128x64xf32>
    %98 = arith.addf %92, %97 : vector<128x64xf32>
    %99 = vector.extract_strided_slice %67 {offsets = [0, 5], sizes = [128, 1], strides = [1, 1]} : vector<128x9xf32> to vector<128x1xf32>
    %100 = vector.extract_strided_slice %2 {offsets = [5, 0], sizes = [1, 64], strides = [1, 1]} : vector<9x64xf32> to vector<1x64xf32>
    %101 = vector.broadcast %99 : vector<128x1xf32> to vector<128x64xf32>
    %102 = vector.broadcast %100 : vector<1x64xf32> to vector<128x64xf32>
    %103 = arith.mulf %101, %102 : vector<128x64xf32>
    %104 = arith.addf %98, %103 : vector<128x64xf32>
    %105 = vector.extract_strided_slice %67 {offsets = [0, 6], sizes = [128, 1], strides = [1, 1]} : vector<128x9xf32> to vector<128x1xf32>
    %106 = vector.extract_strided_slice %2 {offsets = [6, 0], sizes = [1, 64], strides = [1, 1]} : vector<9x64xf32> to vector<1x64xf32>
    %107 = vector.broadcast %105 : vector<128x1xf32> to vector<128x64xf32>
    %108 = vector.broadcast %106 : vector<1x64xf32> to vector<128x64xf32>
    %109 = arith.mulf %107, %108 : vector<128x64xf32>
    %110 = arith.addf %104, %109 : vector<128x64xf32>
    %111 = vector.extract_strided_slice %67 {offsets = [0, 7], sizes = [128, 1], strides = [1, 1]} : vector<128x9xf32> to vector<128x1xf32>
    %112 = vector.extract_strided_slice %2 {offsets = [7, 0], sizes = [1, 64], strides = [1, 1]} : vector<9x64xf32> to vector<1x64xf32>
    %113 = vector.broadcast %111 : vector<128x1xf32> to vector<128x64xf32>
    %114 = vector.broadcast %112 : vector<1x64xf32> to vector<128x64xf32>
    %115 = arith.mulf %113, %114 : vector<128x64xf32>
    %116 = arith.addf %110, %115 : vector<128x64xf32>
    %117 = vector.extract_strided_slice %67 {offsets = [0, 8], sizes = [128, 1], strides = [1, 1]} : vector<128x9xf32> to vector<128x1xf32>
    %118 = vector.extract_strided_slice %2 {offsets = [8, 0], sizes = [1, 64], strides = [1, 1]} : vector<9x64xf32> to vector<1x64xf32>
    %119 = vector.broadcast %117 : vector<128x1xf32> to vector<128x64xf32>
    %120 = vector.broadcast %118 : vector<1x64xf32> to vector<128x64xf32>
    %121 = arith.mulf %119, %120 : vector<128x64xf32>
    %122 = arith.addf %116, %121 : vector<128x64xf32>
    %123 = vector.broadcast %0 : vector<1x64xf32> to vector<128x64xf32>
    %124 = arith.mulf %122, %123 : vector<128x64xf32>
    %125 = vector.broadcast %1 : vector<1x64xf32> to vector<128x64xf32>
    %126 = arith.addf %124, %125 : vector<128x64xf32>
    %cst_12 = arith.constant 0.000000e+00 : f32
    %127 = vector.broadcast %cst_12 : f32 to vector<128x64xf32>
    %128 = arith.maximumf %126, %127 : vector<128x64xf32>
    %129 = arith.maximumf %65, %128 : vector<128x64xf32>
    %c2 = arith.constant 2 : index
    %c0_13 = arith.constant 0 : index
    %c0_14 = arith.constant 0 : index
    %130 = vector.load %arg1[%c2, %c0_13, %c0_14] : memref<4x128x9xf32, #tpu.memory_space<vmem>>, vector<1x128x9xf32>
    %131 = vector.shape_cast %130 : vector<1x128x9xf32> to vector<128x9xf32>
    %cst_15 = arith.constant 0.000000e+00 : f32
    %132 = vector.broadcast %cst_15 : f32 to vector<128x64xf32>
    %133 = vector.extract_strided_slice %131 {offsets = [0, 0], sizes = [128, 1], strides = [1, 1]} : vector<128x9xf32> to vector<128x1xf32>
    %134 = vector.extract_strided_slice %2 {offsets = [0, 0], sizes = [1, 64], strides = [1, 1]} : vector<9x64xf32> to vector<1x64xf32>
    %135 = vector.broadcast %133 : vector<128x1xf32> to vector<128x64xf32>
    %136 = vector.broadcast %134 : vector<1x64xf32> to vector<128x64xf32>
    %137 = arith.mulf %135, %136 : vector<128x64xf32>
    %138 = arith.addf %132, %137 : vector<128x64xf32>
    %139 = vector.extract_strided_slice %131 {offsets = [0, 1], sizes = [128, 1], strides = [1, 1]} : vector<128x9xf32> to vector<128x1xf32>
    %140 = vector.extract_strided_slice %2 {offsets = [1, 0], sizes = [1, 64], strides = [1, 1]} : vector<9x64xf32> to vector<1x64xf32>
    %141 = vector.broadcast %139 : vector<128x1xf32> to vector<128x64xf32>
    %142 = vector.broadcast %140 : vector<1x64xf32> to vector<128x64xf32>
    %143 = arith.mulf %141, %142 : vector<128x64xf32>
    %144 = arith.addf %138, %143 : vector<128x64xf32>
    %145 = vector.extract_strided_slice %131 {offsets = [0, 2], sizes = [128, 1], strides = [1, 1]} : vector<128x9xf32> to vector<128x1xf32>
    %146 = vector.extract_strided_slice %2 {offsets = [2, 0], sizes = [1, 64], strides = [1, 1]} : vector<9x64xf32> to vector<1x64xf32>
    %147 = vector.broadcast %145 : vector<128x1xf32> to vector<128x64xf32>
    %148 = vector.broadcast %146 : vector<1x64xf32> to vector<128x64xf32>
    %149 = arith.mulf %147, %148 : vector<128x64xf32>
    %150 = arith.addf %144, %149 : vector<128x64xf32>
    %151 = vector.extract_strided_slice %131 {offsets = [0, 3], sizes = [128, 1], strides = [1, 1]} : vector<128x9xf32> to vector<128x1xf32>
    %152 = vector.extract_strided_slice %2 {offsets = [3, 0], sizes = [1, 64], strides = [1, 1]} : vector<9x64xf32> to vector<1x64xf32>
    %153 = vector.broadcast %151 : vector<128x1xf32> to vector<128x64xf32>
    %154 = vector.broadcast %152 : vector<1x64xf32> to vector<128x64xf32>
    %155 = arith.mulf %153, %154 : vector<128x64xf32>
    %156 = arith.addf %150, %155 : vector<128x64xf32>
    %157 = vector.extract_strided_slice %131 {offsets = [0, 4], sizes = [128, 1], strides = [1, 1]} : vector<128x9xf32> to vector<128x1xf32>
    %158 = vector.extract_strided_slice %2 {offsets = [4, 0], sizes = [1, 64], strides = [1, 1]} : vector<9x64xf32> to vector<1x64xf32>
    %159 = vector.broadcast %157 : vector<128x1xf32> to vector<128x64xf32>
    %160 = vector.broadcast %158 : vector<1x64xf32> to vector<128x64xf32>
    %161 = arith.mulf %159, %160 : vector<128x64xf32>
    %162 = arith.addf %156, %161 : vector<128x64xf32>
    %163 = vector.extract_strided_slice %131 {offsets = [0, 5], sizes = [128, 1], strides = [1, 1]} : vector<128x9xf32> to vector<128x1xf32>
    %164 = vector.extract_strided_slice %2 {offsets = [5, 0], sizes = [1, 64], strides = [1, 1]} : vector<9x64xf32> to vector<1x64xf32>
    %165 = vector.broadcast %163 : vector<128x1xf32> to vector<128x64xf32>
    %166 = vector.broadcast %164 : vector<1x64xf32> to vector<128x64xf32>
    %167 = arith.mulf %165, %166 : vector<128x64xf32>
    %168 = arith.addf %162, %167 : vector<128x64xf32>
    %169 = vector.extract_strided_slice %131 {offsets = [0, 6], sizes = [128, 1], strides = [1, 1]} : vector<128x9xf32> to vector<128x1xf32>
    %170 = vector.extract_strided_slice %2 {offsets = [6, 0], sizes = [1, 64], strides = [1, 1]} : vector<9x64xf32> to vector<1x64xf32>
    %171 = vector.broadcast %169 : vector<128x1xf32> to vector<128x64xf32>
    %172 = vector.broadcast %170 : vector<1x64xf32> to vector<128x64xf32>
    %173 = arith.mulf %171, %172 : vector<128x64xf32>
    %174 = arith.addf %168, %173 : vector<128x64xf32>
    %175 = vector.extract_strided_slice %131 {offsets = [0, 7], sizes = [128, 1], strides = [1, 1]} : vector<128x9xf32> to vector<128x1xf32>
    %176 = vector.extract_strided_slice %2 {offsets = [7, 0], sizes = [1, 64], strides = [1, 1]} : vector<9x64xf32> to vector<1x64xf32>
    %177 = vector.broadcast %175 : vector<128x1xf32> to vector<128x64xf32>
    %178 = vector.broadcast %176 : vector<1x64xf32> to vector<128x64xf32>
    %179 = arith.mulf %177, %178 : vector<128x64xf32>
    %180 = arith.addf %174, %179 : vector<128x64xf32>
    %181 = vector.extract_strided_slice %131 {offsets = [0, 8], sizes = [128, 1], strides = [1, 1]} : vector<128x9xf32> to vector<128x1xf32>
    %182 = vector.extract_strided_slice %2 {offsets = [8, 0], sizes = [1, 64], strides = [1, 1]} : vector<9x64xf32> to vector<1x64xf32>
    %183 = vector.broadcast %181 : vector<128x1xf32> to vector<128x64xf32>
    %184 = vector.broadcast %182 : vector<1x64xf32> to vector<128x64xf32>
    %185 = arith.mulf %183, %184 : vector<128x64xf32>
    %186 = arith.addf %180, %185 : vector<128x64xf32>
    %187 = vector.broadcast %0 : vector<1x64xf32> to vector<128x64xf32>
    %188 = arith.mulf %186, %187 : vector<128x64xf32>
    %189 = vector.broadcast %1 : vector<1x64xf32> to vector<128x64xf32>
    %190 = arith.addf %188, %189 : vector<128x64xf32>
    %cst_16 = arith.constant 0.000000e+00 : f32
    %191 = vector.broadcast %cst_16 : f32 to vector<128x64xf32>
    %192 = arith.maximumf %190, %191 : vector<128x64xf32>
    %193 = arith.maximumf %129, %192 : vector<128x64xf32>
    %c3 = arith.constant 3 : index
    %c0_17 = arith.constant 0 : index
    %c0_18 = arith.constant 0 : index
    %194 = vector.load %arg1[%c3, %c0_17, %c0_18] : memref<4x128x9xf32, #tpu.memory_space<vmem>>, vector<1x128x9xf32>
    %195 = vector.shape_cast %194 : vector<1x128x9xf32> to vector<128x9xf32>
    %cst_19 = arith.constant 0.000000e+00 : f32
    %196 = vector.broadcast %cst_19 : f32 to vector<128x64xf32>
    %197 = vector.extract_strided_slice %195 {offsets = [0, 0], sizes = [128, 1], strides = [1, 1]} : vector<128x9xf32> to vector<128x1xf32>
    %198 = vector.extract_strided_slice %2 {offsets = [0, 0], sizes = [1, 64], strides = [1, 1]} : vector<9x64xf32> to vector<1x64xf32>
    %199 = vector.broadcast %197 : vector<128x1xf32> to vector<128x64xf32>
    %200 = vector.broadcast %198 : vector<1x64xf32> to vector<128x64xf32>
    %201 = arith.mulf %199, %200 : vector<128x64xf32>
    %202 = arith.addf %196, %201 : vector<128x64xf32>
    %203 = vector.extract_strided_slice %195 {offsets = [0, 1], sizes = [128, 1], strides = [1, 1]} : vector<128x9xf32> to vector<128x1xf32>
    %204 = vector.extract_strided_slice %2 {offsets = [1, 0], sizes = [1, 64], strides = [1, 1]} : vector<9x64xf32> to vector<1x64xf32>
    %205 = vector.broadcast %203 : vector<128x1xf32> to vector<128x64xf32>
    %206 = vector.broadcast %204 : vector<1x64xf32> to vector<128x64xf32>
    %207 = arith.mulf %205, %206 : vector<128x64xf32>
    %208 = arith.addf %202, %207 : vector<128x64xf32>
    %209 = vector.extract_strided_slice %195 {offsets = [0, 2], sizes = [128, 1], strides = [1, 1]} : vector<128x9xf32> to vector<128x1xf32>
    %210 = vector.extract_strided_slice %2 {offsets = [2, 0], sizes = [1, 64], strides = [1, 1]} : vector<9x64xf32> to vector<1x64xf32>
    %211 = vector.broadcast %209 : vector<128x1xf32> to vector<128x64xf32>
    %212 = vector.broadcast %210 : vector<1x64xf32> to vector<128x64xf32>
    %213 = arith.mulf %211, %212 : vector<128x64xf32>
    %214 = arith.addf %208, %213 : vector<128x64xf32>
    %215 = vector.extract_strided_slice %195 {offsets = [0, 3], sizes = [128, 1], strides = [1, 1]} : vector<128x9xf32> to vector<128x1xf32>
    %216 = vector.extract_strided_slice %2 {offsets = [3, 0], sizes = [1, 64], strides = [1, 1]} : vector<9x64xf32> to vector<1x64xf32>
    %217 = vector.broadcast %215 : vector<128x1xf32> to vector<128x64xf32>
    %218 = vector.broadcast %216 : vector<1x64xf32> to vector<128x64xf32>
    %219 = arith.mulf %217, %218 : vector<128x64xf32>
    %220 = arith.addf %214, %219 : vector<128x64xf32>
    %221 = vector.extract_strided_slice %195 {offsets = [0, 4], sizes = [128, 1], strides = [1, 1]} : vector<128x9xf32> to vector<128x1xf32>
    %222 = vector.extract_strided_slice %2 {offsets = [4, 0], sizes = [1, 64], strides = [1, 1]} : vector<9x64xf32> to vector<1x64xf32>
    %223 = vector.broadcast %221 : vector<128x1xf32> to vector<128x64xf32>
    %224 = vector.broadcast %222 : vector<1x64xf32> to vector<128x64xf32>
    %225 = arith.mulf %223, %224 : vector<128x64xf32>
    %226 = arith.addf %220, %225 : vector<128x64xf32>
    %227 = vector.extract_strided_slice %195 {offsets = [0, 5], sizes = [128, 1], strides = [1, 1]} : vector<128x9xf32> to vector<128x1xf32>
    %228 = vector.extract_strided_slice %2 {offsets = [5, 0], sizes = [1, 64], strides = [1, 1]} : vector<9x64xf32> to vector<1x64xf32>
    %229 = vector.broadcast %227 : vector<128x1xf32> to vector<128x64xf32>
    %230 = vector.broadcast %228 : vector<1x64xf32> to vector<128x64xf32>
    %231 = arith.mulf %229, %230 : vector<128x64xf32>
    %232 = arith.addf %226, %231 : vector<128x64xf32>
    %233 = vector.extract_strided_slice %195 {offsets = [0, 6], sizes = [128, 1], strides = [1, 1]} : vector<128x9xf32> to vector<128x1xf32>
    %234 = vector.extract_strided_slice %2 {offsets = [6, 0], sizes = [1, 64], strides = [1, 1]} : vector<9x64xf32> to vector<1x64xf32>
    %235 = vector.broadcast %233 : vector<128x1xf32> to vector<128x64xf32>
    %236 = vector.broadcast %234 : vector<1x64xf32> to vector<128x64xf32>
    %237 = arith.mulf %235, %236 : vector<128x64xf32>
    %238 = arith.addf %232, %237 : vector<128x64xf32>
    %239 = vector.extract_strided_slice %195 {offsets = [0, 7], sizes = [128, 1], strides = [1, 1]} : vector<128x9xf32> to vector<128x1xf32>
    %240 = vector.extract_strided_slice %2 {offsets = [7, 0], sizes = [1, 64], strides = [1, 1]} : vector<9x64xf32> to vector<1x64xf32>
    %241 = vector.broadcast %239 : vector<128x1xf32> to vector<128x64xf32>
    %242 = vector.broadcast %240 : vector<1x64xf32> to vector<128x64xf32>
    %243 = arith.mulf %241, %242 : vector<128x64xf32>
    %244 = arith.addf %238, %243 : vector<128x64xf32>
    %245 = vector.extract_strided_slice %195 {offsets = [0, 8], sizes = [128, 1], strides = [1, 1]} : vector<128x9xf32> to vector<128x1xf32>
    %246 = vector.extract_strided_slice %2 {offsets = [8, 0], sizes = [1, 64], strides = [1, 1]} : vector<9x64xf32> to vector<1x64xf32>
    %247 = vector.broadcast %245 : vector<128x1xf32> to vector<128x64xf32>
    %248 = vector.broadcast %246 : vector<1x64xf32> to vector<128x64xf32>
    %249 = arith.mulf %247, %248 : vector<128x64xf32>
    %250 = arith.addf %244, %249 : vector<128x64xf32>
    %251 = vector.broadcast %0 : vector<1x64xf32> to vector<128x64xf32>
    %252 = arith.mulf %250, %251 : vector<128x64xf32>
    %253 = vector.broadcast %1 : vector<1x64xf32> to vector<128x64xf32>
    %254 = arith.addf %252, %253 : vector<128x64xf32>
    %cst_20 = arith.constant 0.000000e+00 : f32
    %255 = vector.broadcast %cst_20 : f32 to vector<128x64xf32>
    %256 = arith.maximumf %254, %255 : vector<128x64xf32>
    %257 = arith.maximumf %193, %256 : vector<128x64xf32>
    %258 = arith.truncf %257 : vector<128x64xf32> to vector<128x64xbf16>
    %c0_21 = arith.constant 0 : index
    %c0_22 = arith.constant 0 : index
    %259 = vector.load %arg5[%c0_21, %c0_22] : memref<128x64xbf16, #tpu.memory_space<vmem>>, vector<128x64xbf16>
    tpu.vector_store %arg5[%c0_21, %c0_22], %258 {strides = array<i32>} : memref<128x64xbf16, #tpu.memory_space<vmem>>, vector<128x64xbf16>,
    return
  }
  func.func @transform_0(%arg0: i32) -> (i32, i32, i32) {
    %c0_i32 = arith.constant 0 : i32
    %c0_i32_0 = arith.constant 0 : i32
    %c0_i32_1 = arith.constant 0 : i32
    return %c0_i32, %arg0, %c0_i32_0 : i32, i32, i32
  }
  func.func @transform_1(%arg0: i32) -> (i32, i32) {
    %c0_i32 = arith.constant 0 : i32
    %c0_i32_0 = arith.constant 0 : i32
    %c0_i32_1 = arith.constant 0 : i32
    return %c0_i32, %c0_i32_0 : i32, i32
  }
  func.func @transform_2(%arg0: i32) -> (i32, i32) {
    %c0_i32 = arith.constant 0 : i32
    %c0_i32_0 = arith.constant 0 : i32
    %c0_i32_1 = arith.constant 0 : i32
    return %c0_i32, %c0_i32_0 : i32, i32
  }
  func.func @transform_3(%arg0: i32) -> (i32, i32) {
    %c0_i32 = arith.constant 0 : i32
    %c0_i32_0 = arith.constant 0 : i32
    %c0_i32_1 = arith.constant 0 : i32
    return %c0_i32, %c0_i32_0 : i32, i32
  }
  func.func @transform_4(%arg0: i32) -> (i32, i32) {
    %c0_i32 = arith.constant 0 : i32
    %c0_i32_0 = arith.constant 0 : i32
    return %arg0, %c0_i32 : i32, i32
  }
}

module attributes {stable_mosaic.version = 11 : i64} {
  func.func @kernel(%arg0: i32, %arg1: memref<4x32x576xbf16, #tpu.memory_space<vmem>>, %arg2: memref<576x128xbf16, #tpu.memory_space<vmem>>, %arg3: memref<1x128xf32, #tpu.memory_space<vmem>>, %arg4: memref<1x128xf32, #tpu.memory_space<vmem>>, %arg5: memref<32x128xbf16, #tpu.memory_space<vmem>>) attributes {dimension_semantics = [#tpu.dimension_semantics<parallel>], iteration_bounds = array<i64: 1>, scalar_prefetch = 0 : i64, scratch_operands = 0 : i64, tpu.core_type = #tpu.core_type<tc>, window_params = [{transform_indices = @transform_0, window_bounds = array<i64: 4, 32, 576>}, {pipeline_mode = #tpu.pipeline_mode<synchronous>, transform_indices = @transform_1, window_bounds = array<i64: 576, 128>}, {pipeline_mode = #tpu.pipeline_mode<synchronous>, transform_indices = @transform_2, window_bounds = array<i64: 1, 128>}, {pipeline_mode = #tpu.pipeline_mode<synchronous>, transform_indices = @transform_3, window_bounds = array<i64: 1, 128>}, {transform_indices = @transform_4, window_bounds = array<i64: 32, 128>}]} {
    %c0 = arith.constant 0 : index
    %c0_0 = arith.constant 0 : index
    %0 = vector.load %arg3[%c0, %c0_0] : memref<1x128xf32, #tpu.memory_space<vmem>>, vector<1x128xf32>
    %c0_1 = arith.constant 0 : index
    %c0_2 = arith.constant 0 : index
    %1 = vector.load %arg4[%c0_1, %c0_2] : memref<1x128xf32, #tpu.memory_space<vmem>>, vector<1x128xf32>
    %c0_3 = arith.constant 0 : index
    %c0_4 = arith.constant 0 : index
    %2 = vector.load %arg2[%c0_3, %c0_4] : memref<576x128xbf16, #tpu.memory_space<vmem>>, vector<576x128xbf16>
    %c0_5 = arith.constant 0 : index
    %c0_6 = arith.constant 0 : index
    %c0_7 = arith.constant 0 : index
    %3 = vector.load %arg1[%c0_5, %c0_6, %c0_7] : memref<4x32x576xbf16, #tpu.memory_space<vmem>>, vector<1x32x576xbf16>
    %4 = vector.shape_cast %3 : vector<1x32x576xbf16> to vector<32x576xbf16>
    %cst = arith.constant dense<0.000000e+00> : vector<32x128xf32>
    %5 = tpu.matmul %4, %2, %cst {dimension_numbers = #tpu.dot_dimension_numbers<[1], [0], [0], [1], [0, 0, 1, 1], [], []>} : vector<32x576xbf16>, vector<576x128xbf16>, vector<32x128xf32> -> vector<32x128xf32>
    %6 = vector.broadcast %0 : vector<1x128xf32> to vector<32x128xf32>
    %7 = arith.mulf %5, %6 : vector<32x128xf32>
    %8 = vector.broadcast %1 : vector<1x128xf32> to vector<32x128xf32>
    %9 = arith.addf %7, %8 : vector<32x128xf32>
    %cst_8 = arith.constant 0.000000e+00 : f32
    %10 = vector.broadcast %cst_8 : f32 to vector<32x128xf32>
    %11 = arith.maximumf %9, %10 : vector<32x128xf32>
    %c1 = arith.constant 1 : index
    %c0_9 = arith.constant 0 : index
    %c0_10 = arith.constant 0 : index
    %12 = vector.load %arg1[%c1, %c0_9, %c0_10] : memref<4x32x576xbf16, #tpu.memory_space<vmem>>, vector<1x32x576xbf16>
    %13 = vector.shape_cast %12 : vector<1x32x576xbf16> to vector<32x576xbf16>
    %cst_11 = arith.constant dense<0.000000e+00> : vector<32x128xf32>
    %14 = tpu.matmul %13, %2, %cst_11 {dimension_numbers = #tpu.dot_dimension_numbers<[1], [0], [0], [1], [0, 0, 1, 1], [], []>} : vector<32x576xbf16>, vector<576x128xbf16>, vector<32x128xf32> -> vector<32x128xf32>
    %15 = vector.broadcast %0 : vector<1x128xf32> to vector<32x128xf32>
    %16 = arith.mulf %14, %15 : vector<32x128xf32>
    %17 = vector.broadcast %1 : vector<1x128xf32> to vector<32x128xf32>
    %18 = arith.addf %16, %17 : vector<32x128xf32>
    %cst_12 = arith.constant 0.000000e+00 : f32
    %19 = vector.broadcast %cst_12 : f32 to vector<32x128xf32>
    %20 = arith.maximumf %18, %19 : vector<32x128xf32>
    %21 = arith.maximumf %11, %20 : vector<32x128xf32>
    %c2 = arith.constant 2 : index
    %c0_13 = arith.constant 0 : index
    %c0_14 = arith.constant 0 : index
    %22 = vector.load %arg1[%c2, %c0_13, %c0_14] : memref<4x32x576xbf16, #tpu.memory_space<vmem>>, vector<1x32x576xbf16>
    %23 = vector.shape_cast %22 : vector<1x32x576xbf16> to vector<32x576xbf16>
    %cst_15 = arith.constant dense<0.000000e+00> : vector<32x128xf32>
    %24 = tpu.matmul %23, %2, %cst_15 {dimension_numbers = #tpu.dot_dimension_numbers<[1], [0], [0], [1], [0, 0, 1, 1], [], []>} : vector<32x576xbf16>, vector<576x128xbf16>, vector<32x128xf32> -> vector<32x128xf32>
    %25 = vector.broadcast %0 : vector<1x128xf32> to vector<32x128xf32>
    %26 = arith.mulf %24, %25 : vector<32x128xf32>
    %27 = vector.broadcast %1 : vector<1x128xf32> to vector<32x128xf32>
    %28 = arith.addf %26, %27 : vector<32x128xf32>
    %cst_16 = arith.constant 0.000000e+00 : f32
    %29 = vector.broadcast %cst_16 : f32 to vector<32x128xf32>
    %30 = arith.maximumf %28, %29 : vector<32x128xf32>
    %31 = arith.maximumf %21, %30 : vector<32x128xf32>
    %c3 = arith.constant 3 : index
    %c0_17 = arith.constant 0 : index
    %c0_18 = arith.constant 0 : index
    %32 = vector.load %arg1[%c3, %c0_17, %c0_18] : memref<4x32x576xbf16, #tpu.memory_space<vmem>>, vector<1x32x576xbf16>
    %33 = vector.shape_cast %32 : vector<1x32x576xbf16> to vector<32x576xbf16>
    %cst_19 = arith.constant dense<0.000000e+00> : vector<32x128xf32>
    %34 = tpu.matmul %33, %2, %cst_19 {dimension_numbers = #tpu.dot_dimension_numbers<[1], [0], [0], [1], [0, 0, 1, 1], [], []>} : vector<32x576xbf16>, vector<576x128xbf16>, vector<32x128xf32> -> vector<32x128xf32>
    %35 = vector.broadcast %0 : vector<1x128xf32> to vector<32x128xf32>
    %36 = arith.mulf %34, %35 : vector<32x128xf32>
    %37 = vector.broadcast %1 : vector<1x128xf32> to vector<32x128xf32>
    %38 = arith.addf %36, %37 : vector<32x128xf32>
    %cst_20 = arith.constant 0.000000e+00 : f32
    %39 = vector.broadcast %cst_20 : f32 to vector<32x128xf32>
    %40 = arith.maximumf %38, %39 : vector<32x128xf32>
    %41 = arith.maximumf %31, %40 : vector<32x128xf32>
    %42 = arith.truncf %41 : vector<32x128xf32> to vector<32x128xbf16>
    %c0_21 = arith.constant 0 : index
    %c0_22 = arith.constant 0 : index
    %43 = vector.load %arg5[%c0_21, %c0_22] : memref<32x128xbf16, #tpu.memory_space<vmem>>, vector<32x128xbf16>
    tpu.vector_store %arg5[%c0_21, %c0_22], %42 {strides = array<i32>} : memref<32x128xbf16, #tpu.memory_space<vmem>>, vector<32x128xbf16>,
    return
  }
  func.func @transform_0(%arg0: i32) -> (i32, i32, i32) {
    %c0_i32 = arith.constant 0 : i32
    %c0_i32_0 = arith.constant 0 : i32
    %c0_i32_1 = arith.constant 0 : i32
    return %c0_i32, %arg0, %c0_i32_0 : i32, i32, i32
  }
  func.func @transform_1(%arg0: i32) -> (i32, i32) {
    %c0_i32 = arith.constant 0 : i32
    %c0_i32_0 = arith.constant 0 : i32
    %c0_i32_1 = arith.constant 0 : i32
    return %c0_i32, %c0_i32_0 : i32, i32
  }
  func.func @transform_2(%arg0: i32) -> (i32, i32) {
    %c0_i32 = arith.constant 0 : i32
    %c0_i32_0 = arith.constant 0 : i32
    %c0_i32_1 = arith.constant 0 : i32
    return %c0_i32, %c0_i32_0 : i32, i32
  }
  func.func @transform_3(%arg0: i32) -> (i32, i32) {
    %c0_i32 = arith.constant 0 : i32
    %c0_i32_0 = arith.constant 0 : i32
    %c0_i32_1 = arith.constant 0 : i32
    return %c0_i32, %c0_i32_0 : i32, i32
  }
  func.func @transform_4(%arg0: i32) -> (i32, i32) {
    %c0_i32 = arith.constant 0 : i32
    %c0_i32_0 = arith.constant 0 : i32
    return %arg0, %c0_i32 : i32, i32
  }
}

module attributes {stable_mosaic.version = 11 : i64} {
  func.func @kernel(%arg0: i32, %arg1: memref<4x8x1152xbf16, #tpu.memory_space<vmem>>, %arg2: memref<1152x256xbf16, #tpu.memory_space<vmem>>, %arg3: memref<1x256xf32, #tpu.memory_space<vmem>>, %arg4: memref<1x256xf32, #tpu.memory_space<vmem>>, %arg5: memref<8x256xf32, #tpu.memory_space<vmem>>) attributes {dimension_semantics = [#tpu.dimension_semantics<parallel>], iteration_bounds = array<i64: 1>, scalar_prefetch = 0 : i64, scratch_operands = 0 : i64, tpu.core_type = #tpu.core_type<tc>, window_params = [{transform_indices = @transform_0, window_bounds = array<i64: 4, 8, 1152>}, {pipeline_mode = #tpu.pipeline_mode<synchronous>, transform_indices = @transform_1, window_bounds = array<i64: 1152, 256>}, {pipeline_mode = #tpu.pipeline_mode<synchronous>, transform_indices = @transform_2, window_bounds = array<i64: 1, 256>}, {pipeline_mode = #tpu.pipeline_mode<synchronous>, transform_indices = @transform_3, window_bounds = array<i64: 1, 256>}, {transform_indices = @transform_4, window_bounds = array<i64: 8, 256>}]} {
    %c0 = arith.constant 0 : index
    %c0_0 = arith.constant 0 : index
    %0 = vector.load %arg3[%c0, %c0_0] : memref<1x256xf32, #tpu.memory_space<vmem>>, vector<1x256xf32>
    %c0_1 = arith.constant 0 : index
    %c0_2 = arith.constant 0 : index
    %1 = vector.load %arg4[%c0_1, %c0_2] : memref<1x256xf32, #tpu.memory_space<vmem>>, vector<1x256xf32>
    %c0_3 = arith.constant 0 : index
    %c0_4 = arith.constant 0 : index
    %2 = vector.load %arg2[%c0_3, %c0_4] : memref<1152x256xbf16, #tpu.memory_space<vmem>>, vector<1152x256xbf16>
    %c0_5 = arith.constant 0 : index
    %c0_6 = arith.constant 0 : index
    %c0_7 = arith.constant 0 : index
    %3 = vector.load %arg1[%c0_5, %c0_6, %c0_7] : memref<4x8x1152xbf16, #tpu.memory_space<vmem>>, vector<1x8x1152xbf16>
    %4 = vector.shape_cast %3 : vector<1x8x1152xbf16> to vector<8x1152xbf16>
    %cst = arith.constant dense<0.000000e+00> : vector<8x256xf32>
    %5 = tpu.matmul %4, %2, %cst {dimension_numbers = #tpu.dot_dimension_numbers<[1], [0], [0], [1], [0, 0, 1, 1], [], []>} : vector<8x1152xbf16>, vector<1152x256xbf16>, vector<8x256xf32> -> vector<8x256xf32>
    %6 = vector.broadcast %0 : vector<1x256xf32> to vector<8x256xf32>
    %7 = arith.mulf %5, %6 : vector<8x256xf32>
    %8 = vector.broadcast %1 : vector<1x256xf32> to vector<8x256xf32>
    %9 = arith.addf %7, %8 : vector<8x256xf32>
    %cst_8 = arith.constant 0.000000e+00 : f32
    %10 = vector.broadcast %cst_8 : f32 to vector<8x256xf32>
    %11 = arith.maximumf %9, %10 : vector<8x256xf32>
    %c1 = arith.constant 1 : index
    %c0_9 = arith.constant 0 : index
    %c0_10 = arith.constant 0 : index
    %12 = vector.load %arg1[%c1, %c0_9, %c0_10] : memref<4x8x1152xbf16, #tpu.memory_space<vmem>>, vector<1x8x1152xbf16>
    %13 = vector.shape_cast %12 : vector<1x8x1152xbf16> to vector<8x1152xbf16>
    %cst_11 = arith.constant dense<0.000000e+00> : vector<8x256xf32>
    %14 = tpu.matmul %13, %2, %cst_11 {dimension_numbers = #tpu.dot_dimension_numbers<[1], [0], [0], [1], [0, 0, 1, 1], [], []>} : vector<8x1152xbf16>, vector<1152x256xbf16>, vector<8x256xf32> -> vector<8x256xf32>
    %15 = vector.broadcast %0 : vector<1x256xf32> to vector<8x256xf32>
    %16 = arith.mulf %14, %15 : vector<8x256xf32>
    %17 = vector.broadcast %1 : vector<1x256xf32> to vector<8x256xf32>
    %18 = arith.addf %16, %17 : vector<8x256xf32>
    %cst_12 = arith.constant 0.000000e+00 : f32
    %19 = vector.broadcast %cst_12 : f32 to vector<8x256xf32>
    %20 = arith.maximumf %18, %19 : vector<8x256xf32>
    %21 = arith.maximumf %11, %20 : vector<8x256xf32>
    %c2 = arith.constant 2 : index
    %c0_13 = arith.constant 0 : index
    %c0_14 = arith.constant 0 : index
    %22 = vector.load %arg1[%c2, %c0_13, %c0_14] : memref<4x8x1152xbf16, #tpu.memory_space<vmem>>, vector<1x8x1152xbf16>
    %23 = vector.shape_cast %22 : vector<1x8x1152xbf16> to vector<8x1152xbf16>
    %cst_15 = arith.constant dense<0.000000e+00> : vector<8x256xf32>
    %24 = tpu.matmul %23, %2, %cst_15 {dimension_numbers = #tpu.dot_dimension_numbers<[1], [0], [0], [1], [0, 0, 1, 1], [], []>} : vector<8x1152xbf16>, vector<1152x256xbf16>, vector<8x256xf32> -> vector<8x256xf32>
    %25 = vector.broadcast %0 : vector<1x256xf32> to vector<8x256xf32>
    %26 = arith.mulf %24, %25 : vector<8x256xf32>
    %27 = vector.broadcast %1 : vector<1x256xf32> to vector<8x256xf32>
    %28 = arith.addf %26, %27 : vector<8x256xf32>
    %cst_16 = arith.constant 0.000000e+00 : f32
    %29 = vector.broadcast %cst_16 : f32 to vector<8x256xf32>
    %30 = arith.maximumf %28, %29 : vector<8x256xf32>
    %31 = arith.maximumf %21, %30 : vector<8x256xf32>
    %c3 = arith.constant 3 : index
    %c0_17 = arith.constant 0 : index
    %c0_18 = arith.constant 0 : index
    %32 = vector.load %arg1[%c3, %c0_17, %c0_18] : memref<4x8x1152xbf16, #tpu.memory_space<vmem>>, vector<1x8x1152xbf16>
    %33 = vector.shape_cast %32 : vector<1x8x1152xbf16> to vector<8x1152xbf16>
    %cst_19 = arith.constant dense<0.000000e+00> : vector<8x256xf32>
    %34 = tpu.matmul %33, %2, %cst_19 {dimension_numbers = #tpu.dot_dimension_numbers<[1], [0], [0], [1], [0, 0, 1, 1], [], []>} : vector<8x1152xbf16>, vector<1152x256xbf16>, vector<8x256xf32> -> vector<8x256xf32>
    %35 = vector.broadcast %0 : vector<1x256xf32> to vector<8x256xf32>
    %36 = arith.mulf %34, %35 : vector<8x256xf32>
    %37 = vector.broadcast %1 : vector<1x256xf32> to vector<8x256xf32>
    %38 = arith.addf %36, %37 : vector<8x256xf32>
    %cst_20 = arith.constant 0.000000e+00 : f32
    %39 = vector.broadcast %cst_20 : f32 to vector<8x256xf32>
    %40 = arith.maximumf %38, %39 : vector<8x256xf32>
    %41 = arith.maximumf %31, %40 : vector<8x256xf32>
    %c0_21 = arith.constant 0 : index
    %c0_22 = arith.constant 0 : index
    %42 = vector.load %arg5[%c0_21, %c0_22] : memref<8x256xf32, #tpu.memory_space<vmem>>, vector<8x256xf32>
    tpu.vector_store %arg5[%c0_21, %c0_22], %41 {strides = array<i32>} : memref<8x256xf32, #tpu.memory_space<vmem>>, vector<8x256xf32>,
    return
  }
  func.func @transform_0(%arg0: i32) -> (i32, i32, i32) {
    %c0_i32 = arith.constant 0 : i32
    %c0_i32_0 = arith.constant 0 : i32
    %c0_i32_1 = arith.constant 0 : i32
    return %c0_i32, %arg0, %c0_i32_0 : i32, i32, i32
  }
  func.func @transform_1(%arg0: i32) -> (i32, i32) {
    %c0_i32 = arith.constant 0 : i32
    %c0_i32_0 = arith.constant 0 : i32
    %c0_i32_1 = arith.constant 0 : i32
    return %c0_i32, %c0_i32_0 : i32, i32
  }
  func.func @transform_2(%arg0: i32) -> (i32, i32) {
    %c0_i32 = arith.constant 0 : i32
    %c0_i32_0 = arith.constant 0 : i32
    %c0_i32_1 = arith.constant 0 : i32
    return %c0_i32, %c0_i32_0 : i32, i32
  }
  func.func @transform_3(%arg0: i32) -> (i32, i32) {
    %c0_i32 = arith.constant 0 : i32
    %c0_i32_0 = arith.constant 0 : i32
    %c0_i32_1 = arith.constant 0 : i32
    return %c0_i32, %c0_i32_0 : i32, i32
  }
  func.func @transform_4(%arg0: i32) -> (i32, i32) {
    %c0_i32 = arith.constant 0 : i32
    %c0_i32_0 = arith.constant 0 : i32
    return %arg0, %c0_i32 : i32, i32
  }
}

module attributes {stable_mosaic.version = 11 : i64} {
  func.func @head_kernel(%arg0: memref<2x4x256xf32, #tpu.memory_space<vmem>>, %arg1: memref<256x512xf32, #tpu.memory_space<vmem>>, %arg2: memref<1x512xf32, #tpu.memory_space<vmem>>, %arg3: memref<512x128xf32, #tpu.memory_space<vmem>>, %arg4: memref<1x128xf32, #tpu.memory_space<vmem>>, %arg5: memref<2x128xf32, #tpu.memory_space<vmem>>) attributes {dimension_semantics = [], scalar_prefetch = 0 : i64, scratch_operands = 0 : i64, tpu.core_type = #tpu.core_type<tc>} {
    %c0 = arith.constant 0 : index
    %c0_0 = arith.constant 0 : index
    %c0_1 = arith.constant 0 : index
    %0 = vector.load %arg0[%c0, %c0_0, %c0_1] : memref<2x4x256xf32, #tpu.memory_space<vmem>>, vector<2x4x256xf32>
    %cst = arith.constant dense<0.000000e+00> : vector<2x256xf32>
    %1 = vector.multi_reduction <add>, %0, %cst [1] : vector<2x4x256xf32> to vector<2x256xf32>
    %cst_2 = arith.constant 4.000000e+00 : f32
    %2 = vector.broadcast %cst_2 : f32 to vector<2x256xf32>
    %3 = arith.divf %1, %2 : vector<2x256xf32>
    %c0_3 = arith.constant 0 : index
    %c0_4 = arith.constant 0 : index
    %4 = vector.load %arg1[%c0_3, %c0_4] : memref<256x512xf32, #tpu.memory_space<vmem>>, vector<256x512xf32>
    %cst_5 = arith.constant dense<0.000000e+00> : vector<2x512xf32>
    %5 = tpu.matmul %3, %4, %cst_5 {dimension_numbers = #tpu.dot_dimension_numbers<[1], [0], [0], [1], [0, 0, 1, 1], [], []>} : vector<2x256xf32>, vector<256x512xf32>, vector<2x512xf32> -> vector<2x512xf32>
    %c0_6 = arith.constant 0 : index
    %c0_7 = arith.constant 0 : index
    %6 = vector.load %arg2[%c0_6, %c0_7] : memref<1x512xf32, #tpu.memory_space<vmem>>, vector<1x512xf32>
    %7 = vector.broadcast %6 : vector<1x512xf32> to vector<2x512xf32>
    %8 = arith.addf %5, %7 : vector<2x512xf32>
    %cst_8 = arith.constant 0.000000e+00 : f32
    %9 = vector.broadcast %cst_8 : f32 to vector<2x512xf32>
    %10 = arith.maximumf %8, %9 : vector<2x512xf32>
    %c0_9 = arith.constant 0 : index
    %c0_10 = arith.constant 0 : index
    %11 = vector.load %arg3[%c0_9, %c0_10] : memref<512x128xf32, #tpu.memory_space<vmem>>, vector<512x128xf32>
    %cst_11 = arith.constant dense<0.000000e+00> : vector<2x128xf32>
    %12 = tpu.matmul %10, %11, %cst_11 {dimension_numbers = #tpu.dot_dimension_numbers<[1], [0], [0], [1], [0, 0, 1, 1], [], []>} : vector<2x512xf32>, vector<512x128xf32>, vector<2x128xf32> -> vector<2x128xf32>
    %c0_12 = arith.constant 0 : index
    %c0_13 = arith.constant 0 : index
    %13 = vector.load %arg4[%c0_12, %c0_13] : memref<1x128xf32, #tpu.memory_space<vmem>>, vector<1x128xf32>
    %14 = vector.broadcast %13 : vector<1x128xf32> to vector<2x128xf32>
    %15 = arith.addf %12, %14 : vector<2x128xf32>
    %c0_14 = arith.constant 0 : index
    %c0_15 = arith.constant 0 : index
    %16 = vector.load %arg5[%c0_14, %c0_15] : memref<2x128xf32, #tpu.memory_space<vmem>>, vector<2x128xf32>
    tpu.vector_store %arg5[%c0_14, %c0_15], %15 {strides = array<i32>} : memref<2x128xf32, #tpu.memory_space<vmem>>, vector<2x128xf32>,
    return
  }
}

</mosaic_0001>

<llo_original>
// kernel: simple_cnn_forward.4
$region0: #{simple_cnn_forward.4}
  #allocation0 [shape = 'u32[]', space=smem, size = 0x4, offset = 0x4, fixed_abs, tag = 'smem constant byte address 0x4 - core index']
  #allocation1 [shape = 'u32[144,128]{1,0:T(1,128)}', space=vmem, size = 0x12000, scoped, tag = 'internal scratch']
  %s0 = inlined_call_operand.vmem [shape: f32[4,128,9], index: 0, kind: input, shape index: {}]
  %s1 = inlined_call_operand.vmem [shape: f32[9,64], index: 1, kind: input, shape index: {}]
  %s2 = inlined_call_operand.vmem [shape: f32[1,64], index: 2, kind: input, shape index: {}]
  %s3 = inlined_call_operand.vmem [shape: f32[1,64], index: 3, kind: input, shape index: {}]
  %s4 = inlined_call_operand.vmem [shape: bf16[128,64], index: 4, kind: output, shape index: {}]
  %s5 = sld [smem:[#allocation0]]
  $region26: #{simple_cnn_forward.4} parent=0
    _
  %s7 = ssub.s32 1, %s5
  %s8 = scalar_select 0, %s7, %s5
  // Predicated region
  $region2: #{simple_cnn_forward.4} parent=0 // pred_check
    _
  $region3: #{simple_cnn_forward.4} parent=0 // pred_check_branch
    %10 = sbr.rel (0) target = $region5
  $region4: #{simple_cnn_forward.4} parent=0 // pred_region
    _
  $region5: #{simple_cnn_forward.4} parent=0 // pred_fallthru
    _
  // Predicated region
  $region6: #{simple_cnn_forward.4} parent=0 // pred_check
    _
  $region7: #{simple_cnn_forward.4} parent=0 // pred_check_branch
    %12 = sbr.rel (0) target = $region9
  $region8: #{simple_cnn_forward.4} parent=0 // pred_region
    _
  $region9: #{simple_cnn_forward.4} parent=0 // pred_fallthru
    _
  // Predicated region
  $region10: #{simple_cnn_forward.4} parent=0 // pred_check
    _
  $region11: #{simple_cnn_forward.4} parent=0 // pred_check_branch
    %14 = sbr.rel (0) target = $region13
  $region12: #{simple_cnn_forward.4} parent=0 // pred_region
    _
  $region13: #{simple_cnn_forward.4} parent=0 // pred_fallthru
    _
  // Predicated region
  $region14: #{simple_cnn_forward.4} parent=0 // pred_check
    _
  $region15: #{simple_cnn_forward.4} parent=0 // pred_check_branch
    %16 = sbr.rel (0) target = $region17
  $region16: #{simple_cnn_forward.4} parent=0 // pred_region
    _
  $region17: #{simple_cnn_forward.4} parent=0 // pred_fallthru
    _
  %v17 = vld [vmem:[%s2] sm:$0x1]
  %v18 = vld [vmem:[%s3] sm:$0x1]
  %v19 = vld [vmem:[%s1] sm:$0xff]
  %v20 = vld [vmem:[%s1 + $0x8] sm:$0x1]
  %v21 = vld [vmem:[%s0] sm:$0xff]
  %v22 = vld [vmem:[%s0 + $0x8] sm:$0xff]
  %v23 = vld [vmem:[%s0 + $0x10] sm:$0xff]
  %v24 = vld [vmem:[%s0 + $0x18] sm:$0xff]
  %v25 = vld [vmem:[%s0 + $0x20] sm:$0xff]
  %v26 = vld [vmem:[%s0 + $0x28] sm:$0xff]
  %v27 = vld [vmem:[%s0 + $0x30] sm:$0xff]
  %v28 = vld [vmem:[%s0 + $0x38] sm:$0xff]
  %v29 = vld [vmem:[%s0 + $0x40] sm:$0xff]
  %v30 = vld [vmem:[%s0 + $0x48] sm:$0xff]
  %v31 = vld [vmem:[%s0 + $0x50] sm:$0xff]
  %v32 = vld [vmem:[%s0 + $0x58] sm:$0xff]
  %v33 = vld [vmem:[%s0 + $0x60] sm:$0xff]
  %v34 = vld [vmem:[%s0 + $0x68] sm:$0xff]
  %v35 = vld [vmem:[%s0 + $0x70] sm:$0xff]
  %v36 = vld [vmem:[%s0 + $0x78] sm:$0xff]
  %38 = vset.pattern.permute.xlu0 0
  %39 = vperm.xlu0 %38, %v21
  %v40 = vpop.permute.xlu0 %39
  %43 = vset.pattern.permute.xlu0 0
  %44 = vperm.xlu0 %43, %v22
  %v45 = vpop.permute.xlu0 %44
  %48 = vset.pattern.permute.xlu0 0
  %49 = vperm.xlu0 %48, %v23
  %v50 = vpop.permute.xlu0 %49
  %53 = vset.pattern.permute.xlu0 0
  %54 = vperm.xlu0 %53, %v24
  %v55 = vpop.permute.xlu0 %54
  %58 = vset.pattern.permute.xlu0 0
  %59 = vperm.xlu0 %58, %v25
  %v60 = vpop.permute.xlu0 %59
  %63 = vset.pattern.permute.xlu0 0
  %64 = vperm.xlu0 %63, %v26
  %v65 = vpop.permute.xlu0 %64
  %68 = vset.pattern.permute.xlu0 0
  %69 = vperm.xlu0 %68, %v27
  %v70 = vpop.permute.xlu0 %69
  %73 = vset.pattern.permute.xlu0 0
  %74 = vperm.xlu0 %73, %v28
  %v75 = vpop.permute.xlu0 %74
  %78 = vset.pattern.permute.xlu0 0
  %79 = vperm.xlu0 %78, %v29
  %v80 = vpop.permute.xlu0 %79
  %83 = vset.pattern.permute.xlu0 0
  %84 = vperm.xlu0 %83, %v30
  %v85 = vpop.permute.xlu0 %84
  %88 = vset.pattern.permute.xlu0 0
  %89 = vperm.xlu0 %88, %v31
  %v90 = vpop.permute.xlu0 %89
  %93 = vset.pattern.permute.xlu0 0
  %94 = vperm.xlu0 %93, %v32
  %v95 = vpop.permute.xlu0 %94
  %98 = vset.pattern.permute.xlu0 0
  %99 = vperm.xlu0 %98, %v33
  %v100 = vpop.permute.xlu0 %99
  %103 = vset.pattern.permute.xlu0 0
  %104 = vperm.xlu0 %103, %v34
  %v105 = vpop.permute.xlu0 %104
  %108 = vset.pattern.permute.xlu0 0
  %109 = vperm.xlu0 %108, %v35
  %v110 = vpop.permute.xlu0 %109
  %113 = vset.pattern.permute.xlu0 0
  %114 = vperm.xlu0 %113, %v36
  %v115 = vpop.permute.xlu0 %114
  %v117 = vlaneseq
  %v118 = vshrl.u32 %v117, 7
  %v119 = vsub.s32 0, %v118
  %v120 = vrot.slane %v19, %v119
  %v121 = vmul.f32 %v40, %v120
  %v122 = vmul.f32 %v45, %v120
  %v123 = vmul.f32 %v50, %v120
  %v124 = vmul.f32 %v55, %v120
  %v125 = vmul.f32 %v60, %v120
  %v126 = vmul.f32 %v65, %v120
  %v127 = vmul.f32 %v70, %v120
  %v128 = vmul.f32 %v75, %v120
  %v129 = vmul.f32 %v80, %v120
  %v130 = vmul.f32 %v85, %v120
  %v131 = vmul.f32 %v90, %v120
  %v132 = vmul.f32 %v95, %v120
  %v133 = vmul.f32 %v100, %v120
  %v134 = vmul.f32 %v105, %v120
  %v135 = vmul.f32 %v110, %v120
  %v136 = vmul.f32 %v115, %v120
  %v137 = vadd.f32 %v121, 0.0
  %v138 = vadd.f32 %v122, 0.0
  %v139 = vadd.f32 %v123, 0.0
  %v140 = vadd.f32 %v124, 0.0
  %v141 = vadd.f32 %v125, 0.0
  %v142 = vadd.f32 %v126, 0.0
  %v143 = vadd.f32 %v127, 0.0
  %v144 = vadd.f32 %v128, 0.0
  %v145 = vadd.f32 %v129, 0.0
  %v146 = vadd.f32 %v130, 0.0
  %v147 = vadd.f32 %v131, 0.0
  %v148 = vadd.f32 %v132, 0.0
  %v149 = vadd.f32 %v133, 0.0
  %v150 = vadd.f32 %v134, 0.0
  %v151 = vadd.f32 %v135, 0.0
  %v152 = vadd.f32 %v136, 0.0
  %153 = vset.pattern.permute.xlu0 1
  %154 = vperm.xlu0 %153, %v21
  %v155 = vpop.permute.xlu0 %154
  %157 = vset.pattern.permute.xlu0 1
  %158 = vperm.xlu0 %157, %v22
  %v159 = vpop.permute.xlu0 %158
  %161 = vset.pattern.permute.xlu0 1
  %162 = vperm.xlu0 %161, %v23
  %v163 = vpop.permute.xlu0 %162
  %165 = vset.pattern.permute.xlu0 1
  %166 = vperm.xlu0 %165, %v24
  %v167 = vpop.permute.xlu0 %166
  %169 = vset.pattern.permute.xlu0 1
  %170 = vperm.xlu0 %169, %v25
  %v171 = vpop.permute.xlu0 %170
  %173 = vset.pattern.permute.xlu0 1
  %174 = vperm.xlu0 %173, %v26
  %v175 = vpop.permute.xlu0 %174
  %177 = vset.pattern.permute.xlu0 1
  %178 = vperm.xlu0 %177, %v27
  %v179 = vpop.permute.xlu0 %178
  %181 = vset.pattern.permute.xlu0 1
  %182 = vperm.xlu0 %181, %v28
  %v183 = vpop.permute.xlu0 %182
  %185 = vset.pattern.permute.xlu0 1
  %186 = vperm.xlu0 %185, %v29
  %v187 = vpop.permute.xlu0 %186
  %189 = vset.pattern.permute.xlu0 1
  %190 = vperm.xlu0 %189, %v30
  %v191 = vpop.permute.xlu0 %190
  %193 = vset.pattern.permute.xlu0 1
  %194 = vperm.xlu0 %193, %v31
  %v195 = vpop.permute.xlu0 %194
  %197 = vset.pattern.permute.xlu0 1
  %198 = vperm.xlu0 %197, %v32
  %v199 = vpop.permute.xlu0 %198
  %201 = vset.pattern.permute.xlu0 1
  %202 = vperm.xlu0 %201, %v33
  %v203 = vpop.permute.xlu0 %202
  %205 = vset.pattern.permute.xlu0 1
  %206 = vperm.xlu0 %205, %v34
  %v207 = vpop.permute.xlu0 %206
  %209 = vset.pattern.permute.xlu0 1
  %210 = vperm.xlu0 %209, %v35
  %v211 = vpop.permute.xlu0 %210
  %213 = vset.pattern.permute.xlu0 1
  %214 = vperm.xlu0 %213, %v36
  %v215 = vpop.permute.xlu0 %214
  %v217 = vlaneseq
  %v218 = vshrl.u32 %v217, 7
  %v219 = vsub.s32 1, %v218
  %v220 = vrot.slane %v19, %v219
  %v221 = vmul.f32 %v155, %v220
  %v222 = vmul.f32 %v159, %v220
  %v223 = vmul.f32 %v163, %v220
  %v224 = vmul.f32 %v167, %v220
  %v225 = vmul.f32 %v171, %v220
  %v226 = vmul.f32 %v175, %v220
  %v227 = vmul.f32 %v179, %v220
  %v228 = vmul.f32 %v183, %v220
  %v229 = vmul.f32 %v187, %v220
  %v230 = vmul.f32 %v191, %v220
  %v231 = vmul.f32 %v195, %v220
  %v232 = vmul.f32 %v199, %v220
  %v233 = vmul.f32 %v203, %v220
  %v234 = vmul.f32 %v207, %v220
  %v235 = vmul.f32 %v211, %v220
  %v236 = vmul.f32 %v215, %v220
  %v237 = vadd.f32 %v137, %v221
  %v238 = vadd.f32 %v138, %v222
  %v239 = vadd.f32 %v139, %v223
  %v240 = vadd.f32 %v140, %v224
  %v241 = vadd.f32 %v141, %v225
  %v242 = vadd.f32 %v142, %v226
  %v243 = vadd.f32 %v143, %v227
  %v244 = vadd.f32 %v144, %v228
  %v245 = vadd.f32 %v145, %v229
  %v246 = vadd.f32 %v146, %v230
  %v247 = vadd.f32 %v147, %v231
  %v248 = vadd.f32 %v148, %v232
  %v249 = vadd.f32 %v149, %v233
  %v250 = vadd.f32 %v150, %v234
  %v251 = vadd.f32 %v151, %v235
  %v252 = vadd.f32 %v152, %v236
  %253 = vset.pattern.permute.xlu0 2
  %254 = vperm.xlu0 %253, %v21
  %v255 = vpop.permute.xlu0 %254
  %257 = vset.pattern.permute.xlu0 2
  %258 = vperm.xlu0 %257, %v22
  %v259 = vpop.permute.xlu0 %258
  %261 = vset.pattern.permute.xlu0 2
  %262 = vperm.xlu0 %261, %v23
  %v263 = vpop.permute.xlu0 %262
  %265 = vset.pattern.permute.xlu0 2
  %266 = vperm.xlu0 %265, %v24
  %v267 = vpop.permute.xlu0 %266
  %269 = vset.pattern.permute.xlu0 2
  %270 = vperm.xlu0 %269, %v25
  %v271 = vpop.permute.xlu0 %270
  %273 = vset.pattern.permute.xlu0 2
  %274 = vperm.xlu0 %273, %v26
  %v275 = vpop.permute.xlu0 %274
  %277 = vset.pattern.permute.xlu0 2
  %278 = vperm.xlu0 %277, %v27
  %v279 = vpop.permute.xlu0 %278
  %281 = vset.pattern.permute.xlu0 2
  %282 = vperm.xlu0 %281, %v28
  %v283 = vpop.permute.xlu0 %282
  %285 = vset.pattern.permute.xlu0 2
  %286 = vperm.xlu0 %285, %v29
  %v287 = vpop.permute.xlu0 %286
  %289 = vset.pattern.permute.xlu0 2
  %290 = vperm.xlu0 %289, %v30
  %v291 = vpop.permute.xlu0 %290
  %293 = vset.pattern.permute.xlu0 2
  %294 = vperm.xlu0 %293, %v31
  %v295 = vpop.permute.xlu0 %294
  %297 = vset.pattern.permute.xlu0 2
  %298 = vperm.xlu0 %297, %v32
  %v299 = vpop.permute.xlu0 %298
  %301 = vset.pattern.permute.xlu0 2
  %302 = vperm.xlu0 %301, %v33
  %v303 = vpop.permute.xlu0 %302
  %305 = vset.pattern.permute.xlu0 2
  %306 = vperm.xlu0 %305, %v34
  %v307 = vpop.permute.xlu0 %306
  %309 = vset.pattern.permute.xlu0 2
  %310 = vperm.xlu0 %309, %v35
  %v311 = vpop.permute.xlu0 %310
  %313 = vset.pattern.permute.xlu0 2
  %314 = vperm.xlu0 %313, %v36
  %v315 = vpop.permute.xlu0 %314
  %v317 = vlaneseq
  %v318 = vshrl.u32 %v317, 7
  %v319 = vsub.s32 2, %v318
  %v320 = vrot.slane %v19, %v319
  %v321 = vmul.f32 %v255, %v320
  %v322 = vmul.f32 %v259, %v320
  %v323 = vmul.f32 %v263, %v320
  %v324 = vmul.f32 %v267, %v320
  %v325 = vmul.f32 %v271, %v320
  %v326 = vmul.f32 %v275, %v320
  %v327 = vmul.f32 %v279, %v320
  %v328 = vmul.f32 %v283, %v320
  %v329 = vmul.f32 %v287, %v320
  %v330 = vmul.f32 %v291, %v320
  %v331 = vmul.f32 %v295, %v320
  %v332 = vmul.f32 %v299, %v320
  %v333 = vmul.f32 %v303, %v320
  %v334 = vmul.f32 %v307, %v320
  %v335 = vmul.f32 %v311, %v320
  %v336 = vmul.f32 %v315, %v320
  %v337 = vadd.f32 %v237, %v321
  %v338 = vadd.f32 %v238, %v322
  %v339 = vadd.f32 %v239, %v323
  %v340 = vadd.f32 %v240, %v324
  %v341 = vadd.f32 %v241, %v325
  %v342 = vadd.f32 %v242, %v326
  %v343 = vadd.f32 %v243, %v327
  %v344 = vadd.f32 %v244, %v328
  %v345 = vadd.f32 %v245, %v329
  %v346 = vadd.f32 %v246, %v330
  %v347 = vadd.f32 %v247, %v331
  %v348 = vadd.f32 %v248, %v332
  %v349 = vadd.f32 %v249, %v333
  %v350 = vadd.f32 %v250, %v334
  %v351 = vadd.f32 %v251, %v335
  %v352 = vadd.f32 %v252, %v336
  %353 = vset.pattern.permute.xlu0 3
  %354 = vperm.xlu0 %353, %v21
  %v355 = vpop.permute.xlu0 %354
  %357 = vset.pattern.permute.xlu0 3
  %358 = vperm.xlu0 %357, %v22
  %v359 = vpop.permute.xlu0 %358
  %361 = vset.pattern.permute.xlu0 3
  %362 = vperm.xlu0 %361, %v23
  %v363 = vpop.permute.xlu0 %362
  %365 = vset.pattern.permute.xlu0 3
  %366 = vperm.xlu0 %365, %v24
  %v367 = vpop.permute.xlu0 %366
  %369 = vset.pattern.permute.xlu0 3
  %370 = vperm.xlu0 %369, %v25
  %v371 = vpop.permute.xlu0 %370
  %373 = vset.pattern.permute.xlu0 3
  %374 = vperm.xlu0 %373, %v26
  %v375 = vpop.permute.xlu0 %374
  %377 = vset.pattern.permute.xlu0 3
  %378 = vperm.xlu0 %377, %v27
  %v379 = vpop.permute.xlu0 %378
  %381 = vset.pattern.permute.xlu0 3
  %382 = vperm.xlu0 %381, %v28
  %v383 = vpop.permute.xlu0 %382
  %385 = vset.pattern.permute.xlu0 3
  %386 = vperm.xlu0 %385, %v29
  %v387 = vpop.permute.xlu0 %386
  %389 = vset.pattern.permute.xlu0 3
  %390 = vperm.xlu0 %389, %v30
  %v391 = vpop.permute.xlu0 %390
  %393 = vset.pattern.permute.xlu0 3
  %394 = vperm.xlu0 %393, %v31
  %v395 = vpop.permute.xlu0 %394
  %397 = vset.pattern.permute.xlu0 3
  %398 = vperm.xlu0 %397, %v32
  %v399 = vpop.permute.xlu0 %398
  %401 = vset.pattern.permute.xlu0 3
  %402 = vperm.xlu0 %401, %v33
  %v403 = vpop.permute.xlu0 %402
  %405 = vset.pattern.permute.xlu0 3
  %406 = vperm.xlu0 %405, %v34
  %v407 = vpop.permute.xlu0 %406
  %409 = vset.pattern.permute.xlu0 3
  %410 = vperm.xlu0 %409, %v35
  %v411 = vpop.permute.xlu0 %410
  %413 = vset.pattern.permute.xlu0 3
  %414 = vperm.xlu0 %413, %v36
  %v415 = vpop.permute.xlu0 %414
  %v417 = vlaneseq
  %v418 = vshrl.u32 %v417, 7
  %v419 = vsub.s32 3, %v418
  %v420 = vrot.slane %v19, %v419
  %v421 = vmul.f32 %v355, %v420
  %v422 = vmul.f32 %v359, %v420
  %v423 = vmul.f32 %v363, %v420
  %v424 = vmul.f32 %v367, %v420
  %v425 = vmul.f32 %v371, %v420
  %v426 = vmul.f32 %v375, %v420
  %v427 = vmul.f32 %v379, %v420
  %v428 = vmul.f32 %v383, %v420
  %v429 = vmul.f32 %v387, %v420
  %v430 = vmul.f32 %v391, %v420
  %v431 = vmul.f32 %v395, %v420
  %v432 = vmul.f32 %v399, %v420
  %v433 = vmul.f32 %v403, %v420
  %v434 = vmul.f32 %v407, %v420
  %v435 = vmul.f32 %v411, %v420
  %v436 = vmul.f32 %v415, %v420
  %v437 = vadd.f32 %v337, %v421
  %v438 = vadd.f32 %v338, %v422
  %v439 = vadd.f32 %v339, %v423
  %v440 = vadd.f32 %v340, %v424
  %v441 = vadd.f32 %v341, %v425
  %v442 = vadd.f32 %v342, %v426
  %v443 = vadd.f32 %v343, %v427
  %v444 = vadd.f32 %v344, %v428
  %v445 = vadd.f32 %v345, %v429
  %v446 = vadd.f32 %v346, %v430
  %v447 = vadd.f32 %v347, %v431
  %v448 = vadd.f32 %v348, %v432
  %v449 = vadd.f32 %v349, %v433
  %v450 = vadd.f32 %v350, %v434
  %v451 = vadd.f32 %v351, %v435
  %v452 = vadd.f32 %v352, %v436
  %453 = vset.pattern.permute.xlu0 4
  %454 = vperm.xlu0 %453, %v21
  %v455 = vpop.permute.xlu0 %454
  %457 = vset.pattern.permute.xlu0 4
  %458 = vperm.xlu0 %457, %v22
  %v459 = vpop.permute.xlu0 %458
  %461 = vset.pattern.permute.xlu0 4
  %462 = vperm.xlu0 %461, %v23
  %v463 = vpop.permute.xlu0 %462
  %465 = vset.pattern.permute.xlu0 4
  %466 = vperm.xlu0 %465, %v24
  %v467 = vpop.permute.xlu0 %466
  %469 = vset.pattern.permute.xlu0 4
  %470 = vperm.xlu0 %469, %v25
  %v471 = vpop.permute.xlu0 %470
  %473 = vset.pattern.permute.xlu0 4
  %474 = vperm.xlu0 %473, %v26
  %v475 = vpop.permute.xlu0 %474
  %477 = vset.pattern.permute.xlu0 4
  %478 = vperm.xlu0 %477, %v27
  %v479 = vpop.permute.xlu0 %478
  %481 = vset.pattern.permute.xlu0 4
  %482 = vperm.xlu0 %481, %v28
  %v483 = vpop.permute.xlu0 %482
  %485 = vset.pattern.permute.xlu0 4
  %486 = vperm.xlu0 %485, %v29
  %v487 = vpop.permute.xlu0 %486
  %489 = vset.pattern.permute.xlu0 4
  %490 = vperm.xlu0 %489, %v30
  %v491 = vpop.permute.xlu0 %490
  %493 = vset.pattern.permute.xlu0 4
  %494 = vperm.xlu0 %493, %v31
  %v495 = vpop.permute.xlu0 %494
  %497 = vset.pattern.permute.xlu0 4
  %498 = vperm.xlu0 %497, %v32
  %v499 = vpop.permute.xlu0 %498
  %501 = vset.pattern.permute.xlu0 4
  %502 = vperm.xlu0 %501, %v33
  %v503 = vpop.permute.xlu0 %502
  %505 = vset.pattern.permute.xlu0 4
  %506 = vperm.xlu0 %505, %v34
  %v507 = vpop.permute.xlu0 %506
  %509 = vset.pattern.permute.xlu0 4
  %510 = vperm.xlu0 %509, %v35
  %v511 = vpop.permute.xlu0 %510
  %513 = vset.pattern.permute.xlu0 4
  %514 = vperm.xlu0 %513, %v36
  %v515 = vpop.permute.xlu0 %514
  %v517 = vlaneseq
  %v518 = vshrl.u32 %v517, 7
  %v519 = vsub.s32 4, %v518
  %v520 = vrot.slane %v19, %v519
  %v521 = vmul.f32 %v455, %v520
  %v522 = vmul.f32 %v459, %v520
  %v523 = vmul.f32 %v463, %v520
  %v524 = vmul.f32 %v467, %v520
  %v525 = vmul.f32 %v471, %v520
  %v526 = vmul.f32 %v475, %v520
  %v527 = vmul.f32 %v479, %v520
  %v528 = vmul.f32 %v483, %v520
  %v529 = vmul.f32 %v487, %v520
  %v530 = vmul.f32 %v491, %v520
  %v531 = vmul.f32 %v495, %v520
  %v532 = vmul.f32 %v499, %v520
  %v533 = vmul.f32 %v503, %v520
  %v534 = vmul.f32 %v507, %v520
  %v535 = vmul.f32 %v511, %v520
  %v536 = vmul.f32 %v515, %v520
  %v537 = vadd.f32 %v437, %v521
  %v538 = vadd.f32 %v438, %v522
  %v539 = vadd.f32 %v439, %v523
  %v540 = vadd.f32 %v440, %v524
  %v541 = vadd.f32 %v441, %v525
  %v542 = vadd.f32 %v442, %v526
  %v543 = vadd.f32 %v443, %v527
  %v544 = vadd.f32 %v444, %v528
  %v545 = vadd.f32 %v445, %v529
  %v546 = vadd.f32 %v446, %v530
  %v547 = vadd.f32 %v447, %v531
  %v548 = vadd.f32 %v448, %v532
  %v549 = vadd.f32 %v449, %v533
  %v550 = vadd.f32 %v450, %v534
  %v551 = vadd.f32 %v451, %v535
  %v552 = vadd.f32 %v452, %v536
  %553 = vset.pattern.permute.xlu0 5
  %554 = vperm.xlu0 %553, %v21
  %v555 = vpop.permute.xlu0 %554
  %557 = vset.pattern.permute.xlu0 5
  %558 = vperm.xlu0 %557, %v22
  %v559 = vpop.permute.xlu0 %558
  %561 = vset.pattern.permute.xlu0 5
  %562 = vperm.xlu0 %561, %v23
  %v563 = vpop.permute.xlu0 %562
  %565 = vset.pattern.permute.xlu0 5
  %566 = vperm.xlu0 %565, %v24
  %v567 = vpop.permute.xlu0 %566
  %569 = vset.pattern.permute.xlu0 5
  %570 = vperm.xlu0 %569, %v25
  %v571 = vpop.permute.xlu0 %570
  %573 = vset.pattern.permute.xlu0 5
  %574 = vperm.xlu0 %573, %v26
  %v575 = vpop.permute.xlu0 %574
  %577 = vset.pattern.permute.xlu0 5
  %578 = vperm.xlu0 %577, %v27
  %v579 = vpop.permute.xlu0 %578
  %581 = vset.pattern.permute.xlu0 5
  %582 = vperm.xlu0 %581, %v28
  %v583 = vpop.permute.xlu0 %582
  %585 = vset.pattern.permute.xlu0 5
  %586 = vperm.xlu0 %585, %v29
  %v587 = vpop.permute.xlu0 %586
  %589 = vset.pattern.permute.xlu0 5
  %590 = vperm.xlu0 %589, %v30
  %v591 = vpop.permute.xlu0 %590
  %593 = vset.pattern.permute.xlu0 5
  %594 = vperm.xlu0 %593, %v31
  %v595 = vpop.permute.xlu0 %594
  %597 = vset.pattern.permute.xlu0 5
  %598 = vperm.xlu0 %597, %v32
  %v599 = vpop.permute.xlu0 %598
  %601 = vset.pattern.permute.xlu0 5
  %602 = vperm.xlu0 %601, %v33
  %v603 = vpop.permute.xlu0 %602
  %605 = vset.pattern.permute.xlu0 5
  %606 = vperm.xlu0 %605, %v34
  %v607 = vpop.permute.xlu0 %606
  %609 = vset.pattern.permute.xlu0 5
  %610 = vperm.xlu0 %609, %v35
  %v611 = vpop.permute.xlu0 %610
  %613 = vset.pattern.permute.xlu0 5
  %614 = vperm.xlu0 %613, %v36
  %v615 = vpop.permute.xlu0 %614
  %v617 = vlaneseq
  %v618 = vshrl.u32 %v617, 7
  %v619 = vsub.s32 5, %v618
  %v620 = vrot.slane %v19, %v619
  %v621 = vmul.f32 %v555, %v620
  %v622 = vmul.f32 %v559, %v620
  %v623 = vmul.f32 %v563, %v620
  %v624 = vmul.f32 %v567, %v620
  %v625 = vmul.f32 %v571, %v620
  %v626 = vmul.f32 %v575, %v620
  %v627 = vmul.f32 %v579, %v620
  %v628 = vmul.f32 %v583, %v620
  %v629 = vmul.f32 %v587, %v620
  %v630 = vmul.f32 %v591, %v620
  %v631 = vmul.f32 %v595, %v620
  %v632 = vmul.f32 %v599, %v620
  %v633 = vmul.f32 %v603, %v620
  %v634 = vmul.f32 %v607, %v620
  %v635 = vmul.f32 %v611, %v620
  %v636 = vmul.f32 %v615, %v620
  %v637 = vadd.f32 %v537, %v621
  %v638 = vadd.f32 %v538, %v622
  %v639 = vadd.f32 %v539, %v623
  %v640 = vadd.f32 %v540, %v624
  %v641 = vadd.f32 %v541, %v625
  %v642 = vadd.f32 %v542, %v626
  %v643 = vadd.f32 %v543, %v627
  %v644 = vadd.f32 %v544, %v628
  %v645 = vadd.f32 %v545, %v629
  %v646 = vadd.f32 %v546, %v630
  %v647 = vadd.f32 %v547, %v631
  %v648 = vadd.f32 %v548, %v632
  %v649 = vadd.f32 %v549, %v633
  %v650 = vadd.f32 %v550, %v634
  %v651 = vadd.f32 %v551, %v635
  %v652 = vadd.f32 %v552, %v636
  %653 = vset.pattern.permute.xlu0 6
  %654 = vperm.xlu0 %653, %v21
  %v655 = vpop.permute.xlu0 %654
  %657 = vset.pattern.permute.xlu0 6
  %658 = vperm.xlu0 %657, %v22
  %v659 = vpop.permute.xlu0 %658
  %661 = vset.pattern.permute.xlu0 6
  %662 = vperm.xlu0 %661, %v23
  %v663 = vpop.permute.xlu0 %662
  %665 = vset.pattern.permute.xlu0 6
  %666 = vperm.xlu0 %665, %v24
  %v667 = vpop.permute.xlu0 %666
  %669 = vset.pattern.permute.xlu0 6
  %670 = vperm.xlu0 %669, %v25
  %v671 = vpop.permute.xlu0 %670
  %673 = vset.pattern.permute.xlu0 6
  %674 = vperm.xlu0 %673, %v26
  %v675 = vpop.permute.xlu0 %674
  %677 = vset.pattern.permute.xlu0 6
  %678 = vperm.xlu0 %677, %v27
  %v679 = vpop.permute.xlu0 %678
  %681 = vset.pattern.permute.xlu0 6
  %682 = vperm.xlu0 %681, %v28
  %v683 = vpop.permute.xlu0 %682
  %685 = vset.pattern.permute.xlu0 6
  %686 = vperm.xlu0 %685, %v29
  %v687 = vpop.permute.xlu0 %686
  %689 = vset.pattern.permute.xlu0 6
  %690 = vperm.xlu0 %689, %v30
  %v691 = vpop.permute.xlu0 %690
  %693 = vset.pattern.permute.xlu0 6
  %694 = vperm.xlu0 %693, %v31
  %v695 = vpop.permute.xlu0 %694
  %697 = vset.pattern.permute.xlu0 6
  %698 = vperm.xlu0 %697, %v32
  %v699 = vpop.permute.xlu0 %698
  %701 = vset.pattern.permute.xlu0 6
  %702 = vperm.xlu0 %701, %v33
  %v703 = vpop.permute.xlu0 %702
  %705 = vset.pattern.permute.xlu0 6
  %706 = vperm.xlu0 %705, %v34
  %v707 = vpop.permute.xlu0 %706
  %709 = vset.pattern.permute.xlu0 6
  %710 = vperm.xlu0 %709, %v35
  %v711 = vpop.permute.xlu0 %710
  %713 = vset.pattern.permute.xlu0 6
  %714 = vperm.xlu0 %713, %v36
  %v715 = vpop.permute.xlu0 %714
  %v717 = vlaneseq
  %v718 = vshrl.u32 %v717, 7
  %v719 = vsub.s32 6, %v718
  %v720 = vrot.slane %v19, %v719
  %v721 = vmul.f32 %v655, %v720
  %v722 = vmul.f32 %v659, %v720
  %v723 = vmul.f32 %v663, %v720
  %v724 = vmul.f32 %v667, %v720
  %v725 = vmul.f32 %v671, %v720
  %v726 = vmul.f32 %v675, %v720
  %v727 = vmul.f32 %v679, %v720
  %v728 = vmul.f32 %v683, %v720
  %v729 = vmul.f32 %v687, %v720
  %v730 = vmul.f32 %v691, %v720
  %v731 = vmul.f32 %v695, %v720
  %v732 = vmul.f32 %v699, %v720
  %v733 = vmul.f32 %v703, %v720
  %v734 = vmul.f32 %v707, %v720
  %v735 = vmul.f32 %v711, %v720
  %v736 = vmul.f32 %v715, %v720
  %v737 = vadd.f32 %v637, %v721
  %v738 = vadd.f32 %v638, %v722
  %v739 = vadd.f32 %v639, %v723
  %v740 = vadd.f32 %v640, %v724
  %v741 = vadd.f32 %v641, %v725
  %v742 = vadd.f32 %v642, %v726
  %v743 = vadd.f32 %v643, %v727
  %v744 = vadd.f32 %v644, %v728
  %v745 = vadd.f32 %v645, %v729
  %v746 = vadd.f32 %v646, %v730
  %v747 = vadd.f32 %v647, %v731
  %v748 = vadd.f32 %v648, %v732
  %v749 = vadd.f32 %v649, %v733
  %v750 = vadd.f32 %v650, %v734
  %v751 = vadd.f32 %v651, %v735
  %v752 = vadd.f32 %v652, %v736
  %753 = vset.pattern.permute.xlu0 7
  %754 = vperm.xlu0 %753, %v21
  %v755 = vpop.permute.xlu0 %754
  %757 = vset.pattern.permute.xlu0 7
  %758 = vperm.xlu0 %757, %v22
  %v759 = vpop.permute.xlu0 %758
  %761 = vset.pattern.permute.xlu0 7
  %762 = vperm.xlu0 %761, %v23
  %v763 = vpop.permute.xlu0 %762
  %765 = vset.pattern.permute.xlu0 7
  %766 = vperm.xlu0 %765, %v24
  %v767 = vpop.permute.xlu0 %766
  %769 = vset.pattern.permute.xlu0 7
  %770 = vperm.xlu0 %769, %v25
  %v771 = vpop.permute.xlu0 %770
  %773 = vset.pattern.permute.xlu0 7
  %774 = vperm.xlu0 %773, %v26
  %v775 = vpop.permute.xlu0 %774
  %777 = vset.pattern.permute.xlu0 7
  %778 = vperm.xlu0 %777, %v27
  %v779 = vpop.permute.xlu0 %778
  %781 = vset.pattern.permute.xlu0 7
  %782 = vperm.xlu0 %781, %v28
  %v783 = vpop.permute.xlu0 %782
  %785 = vset.pattern.permute.xlu0 7
  %786 = vperm.xlu0 %785, %v29
  %v787 = vpop.permute.xlu0 %786
  %789 = vset.pattern.permute.xlu0 7
  %790 = vperm.xlu0 %789, %v30
  %v791 = vpop.permute.xlu0 %790
  %793 = vset.pattern.permute.xlu0 7
  %794 = vperm.xlu0 %793, %v31
  %v795 = vpop.permute.xlu0 %794
  %797 = vset.pattern.permute.xlu0 7
  %798 = vperm.xlu0 %797, %v32
  %v799 = vpop.permute.xlu0 %798
  %801 = vset.pattern.permute.xlu0 7
  %802 = vperm.xlu0 %801, %v33
  %v803 = vpop.permute.xlu0 %802
  %805 = vset.pattern.permute.xlu0 7
  %806 = vperm.xlu0 %805, %v34
  %v807 = vpop.permute.xlu0 %806
  %809 = vset.pattern.permute.xlu0 7
  %810 = vperm.xlu0 %809, %v35
  %v811 = vpop.permute.xlu0 %810
  %813 = vset.pattern.permute.xlu0 7
  %814 = vperm.xlu0 %813, %v36
  %v815 = vpop.permute.xlu0 %814
  %v817 = vlaneseq
  %v818 = vshrl.u32 %v817, 7
  %v819 = vsub.s32 7, %v818
  %v820 = vrot.slane %v19, %v819
  %v821 = vmul.f32 %v755, %v820
  %v822 = vmul.f32 %v759, %v820
  %v823 = vmul.f32 %v763, %v820
  %v824 = vmul.f32 %v767, %v820
  %v825 = vmul.f32 %v771, %v820
  %v826 = vmul.f32 %v775, %v820
  %v827 = vmul.f32 %v779, %v820
  %v828 = vmul.f32 %v783, %v820
  %v829 = vmul.f32 %v787, %v820
  %v830 = vmul.f32 %v791, %v820
  %v831 = vmul.f32 %v795, %v820
  %v832 = vmul.f32 %v799, %v820
  %v833 = vmul.f32 %v803, %v820
  %v834 = vmul.f32 %v807, %v820
  %v835 = vmul.f32 %v811, %v820
  %v836 = vmul.f32 %v815, %v820
  %v837 = vadd.f32 %v737, %v821
  %v838 = vadd.f32 %v738, %v822
  %v839 = vadd.f32 %v739, %v823
  %v840 = vadd.f32 %v740, %v824
  %v841 = vadd.f32 %v741, %v825
  %v842 = vadd.f32 %v742, %v826
  %v843 = vadd.f32 %v743, %v827
  %v844 = vadd.f32 %v744, %v828
  %v845 = vadd.f32 %v745, %v829
  %v846 = vadd.f32 %v746, %v830
  %v847 = vadd.f32 %v747, %v831
  %v848 = vadd.f32 %v748, %v832
  %v849 = vadd.f32 %v749, %v833
  %v850 = vadd.f32 %v750, %v834
  %v851 = vadd.f32 %v751, %v835
  %v852 = vadd.f32 %v752, %v836
  %853 = vset.pattern.permute.xlu0 8
  %854 = vperm.xlu0 %853, %v21
  %v855 = vpop.permute.xlu0 %854
  %857 = vset.pattern.permute.xlu0 8
  %858 = vperm.xlu0 %857, %v22
  %v859 = vpop.permute.xlu0 %858
  %861 = vset.pattern.permute.xlu0 8
  %862 = vperm.xlu0 %861, %v23
  %v863 = vpop.permute.xlu0 %862
  %865 = vset.pattern.permute.xlu0 8
  %866 = vperm.xlu0 %865, %v24
  %v867 = vpop.permute.xlu0 %866
  %869 = vset.pattern.permute.xlu0 8
  %870 = vperm.xlu0 %869, %v25
  %v871 = vpop.permute.xlu0 %870
  %873 = vset.pattern.permute.xlu0 8
  %874 = vperm.xlu0 %873, %v26
  %v875 = vpop.permute.xlu0 %874
  %877 = vset.pattern.permute.xlu0 8
  %878 = vperm.xlu0 %877, %v27
  %v879 = vpop.permute.xlu0 %878
  %881 = vset.pattern.permute.xlu0 8
  %882 = vperm.xlu0 %881, %v28
  %v883 = vpop.permute.xlu0 %882
  %885 = vset.pattern.permute.xlu0 8
  %886 = vperm.xlu0 %885, %v29
  %v887 = vpop.permute.xlu0 %886
  %889 = vset.pattern.permute.xlu0 8
  %890 = vperm.xlu0 %889, %v30
  %v891 = vpop.permute.xlu0 %890
  %893 = vset.pattern.permute.xlu0 8
  %894 = vperm.xlu0 %893, %v31
  %v895 = vpop.permute.xlu0 %894
  %897 = vset.pattern.permute.xlu0 8
  %898 = vperm.xlu0 %897, %v32
  %v899 = vpop.permute.xlu0 %898
  %901 = vset.pattern.permute.xlu0 8
  %902 = vperm.xlu0 %901, %v33
  %v903 = vpop.permute.xlu0 %902
  %905 = vset.pattern.permute.xlu0 8
  %906 = vperm.xlu0 %905, %v34
  %v907 = vpop.permute.xlu0 %906
  %909 = vset.pattern.permute.xlu0 8
  %910 = vperm.xlu0 %909, %v35
  %v911 = vpop.permute.xlu0 %910
  %913 = vset.pattern.permute.xlu0 8
  %914 = vperm.xlu0 %913, %v36
  %v915 = vpop.permute.xlu0 %914
  %v917 = vlaneseq
  %v918 = vshrl.u32 %v917, 7
  %v919 = vsub.s32 0, %v918
  %v920 = vrot.slane %v20, %v919
  %v921 = vmul.f32 %v855, %v920
  %v922 = vmul.f32 %v859, %v920
  %v923 = vmul.f32 %v863, %v920
  %v924 = vmul.f32 %v867, %v920
  %v925 = vmul.f32 %v871, %v920
  %v926 = vmul.f32 %v875, %v920
  %v927 = vmul.f32 %v879, %v920
  %v928 = vmul.f32 %v883, %v920
  %v929 = vmul.f32 %v887, %v920
  %v930 = vmul.f32 %v891, %v920
  %v931 = vmul.f32 %v895, %v920
  %v932 = vmul.f32 %v899, %v920
  %v933 = vmul.f32 %v903, %v920
  %v934 = vmul.f32 %v907, %v920
  %v935 = vmul.f32 %v911, %v920
  %v936 = vmul.f32 %v915, %v920
  %v937 = vadd.f32 %v837, %v921
  %v938 = vadd.f32 %v838, %v922
  %v939 = vadd.f32 %v839, %v923
  %v940 = vadd.f32 %v840, %v924
  %v941 = vadd.f32 %v841, %v925
  %v942 = vadd.f32 %v842, %v926
  %v943 = vadd.f32 %v843, %v927
  %v944 = vadd.f32 %v844, %v928
  %v945 = vadd.f32 %v845, %v929
  %v946 = vadd.f32 %v846, %v930
  %v947 = vadd.f32 %v847, %v931
  %v948 = vadd.f32 %v848, %v932
  %v949 = vadd.f32 %v849, %v933
  %v950 = vadd.f32 %v850, %v934
  %v951 = vadd.f32 %v851, %v935
  %v952 = vadd.f32 %v852, %v936
  %v954 = vlaneseq
  %v955 = vshrl.u32 %v954, 7
  %v956 = vsub.s32 0, %v955
  %v957 = vrot.slane %v17, %v956
  %v959 = vmul.f32 %v937, %v957
  %v960 = vmul.f32 %v938, %v957
  %v961 = vmul.f32 %v939, %v957
  %v962 = vmul.f32 %v940, %v957
  %v963 = vmul.f32 %v941, %v957
  %v964 = vmul.f32 %v942, %v957
  %v965 = vmul.f32 %v943, %v957
  %v966 = vmul.f32 %v944, %v957
  %v967 = vmul.f32 %v945, %v957
  %v968 = vmul.f32 %v946, %v957
  %v969 = vmul.f32 %v947, %v957
  %v970 = vmul.f32 %v948, %v957
  %v971 = vmul.f32 %v949, %v957
  %v972 = vmul.f32 %v950, %v957
  %v973 = vmul.f32 %v951, %v957
  %v974 = vmul.f32 %v952, %v957
  %v976 = vlaneseq
  %v977 = vshrl.u32 %v976, 7
  %v978 = vsub.s32 0, %v977
  %v979 = vrot.slane %v18, %v978
  %v981 = vadd.f32 %v959, %v979
  %v982 = vadd.f32 %v960, %v979
  %v983 = vadd.f32 %v961, %v979
  %v984 = vadd.f32 %v962, %v979
  %v985 = vadd.f32 %v963, %v979
  %v986 = vadd.f32 %v964, %v979
  %v987 = vadd.f32 %v965, %v979
  %v988 = vadd.f32 %v966, %v979
  %v989 = vadd.f32 %v967, %v979
  %v990 = vadd.f32 %v968, %v979
  %v991 = vadd.f32 %v969, %v979
  %v992 = vadd.f32 %v970, %v979
  %v993 = vadd.f32 %v971, %v979
  %v994 = vadd.f32 %v972, %v979
  %v995 = vadd.f32 %v973, %v979
  %v996 = vadd.f32 %v974, %v979
  %v997 = vmax.f32 %v981, 0.0
  %v998 = vmax.f32 %v982, 0.0
  %v999 = vmax.f32 %v983, 0.0
  %v1000 = vmax.f32 %v984, 0.0
  %v1001 = vmax.f32 %v985, 0.0
  %v1002 = vmax.f32 %v986, 0.0
  %v1003 = vmax.f32 %v987, 0.0
  %v1004 = vmax.f32 %v988, 0.0
  %v1005 = vmax.f32 %v989, 0.0
  %v1006 = vmax.f32 %v990, 0.0
  %v1007 = vmax.f32 %v991, 0.0
  %v1008 = vmax.f32 %v992, 0.0
  %v1009 = vmax.f32 %v993, 0.0
  %v1010 = vmax.f32 %v994, 0.0
  %v1011 = vmax.f32 %v995, 0.0
  %v1012 = vmax.f32 %v996, 0.0
  %s1013 = scalar_lea.vmem %s0, 128
  %v1014 = vld [vmem:[%s1013] sm:$0xff]
  %v1015 = vld [vmem:[%s1013 + $0x8] sm:$0xff]
  %v1016 = vld [vmem:[%s1013 + $0x10] sm:$0xff]
  %v1017 = vld [vmem:[%s1013 + $0x18] sm:$0xff]
  %v1018 = vld [vmem:[%s1013 + $0x20] sm:$0xff]
  %v1019 = vld [vmem:[%s1013 + $0x28] sm:$0xff]
  %v1020 = vld [vmem:[%s1013 + $0x30] sm:$0xff]
  %v1021 = vld [vmem:[%s1013 + $0x38] sm:$0xff]
  %v1022 = vld [vmem:[%s1013 + $0x40] sm:$0xff]
  %v1023 = vld [vmem:[%s1013 + $0x48] sm:$0xff]
  %v1024 = vld [vmem:[%s1013 + $0x50] sm:$0xff]
  %v1025 = vld [vmem:[%s1013 + $0x58] sm:$0xff]
  %v1026 = vld [vmem:[%s1013 + $0x60] sm:$0xff]
  %v1027 = vld [vmem:[%s1013 + $0x68] sm:$0xff]
  %v1028 = vld [vmem:[%s1013 + $0x70] sm:$0xff]
  %v1029 = vld [vmem:[%s1013 + $0x78] sm:$0xff]
  %1031 = vset.pattern.permute.xlu0 0
  %1032 = vperm.xlu0 %1031, %v1014
  %v1033 = vpop.permute.xlu0 %1032
  %1036 = vset.pattern.permute.xlu0 0
  %1037 = vperm.xlu0 %1036, %v1015
  %v1038 = vpop.permute.xlu0 %1037
  %1041 = vset.pattern.permute.xlu0 0
  %1042 = vperm.xlu0 %1041, %v1016
  %v1043 = vpop.permute.xlu0 %1042
  %1046 = vset.pattern.permute.xlu0 0
  %1047 = vperm.xlu0 %1046, %v1017
  %v1048 = vpop.permute.xlu0 %1047
  %1051 = vset.pattern.permute.xlu0 0
  %1052 = vperm.xlu0 %1051, %v1018
  %v1053 = vpop.permute.xlu0 %1052
  %1056 = vset.pattern.permute.xlu0 0
  %1057 = vperm.xlu0 %1056, %v1019
  %v1058 = vpop.permute.xlu0 %1057
  %1061 = vset.pattern.permute.xlu0 0
  %1062 = vperm.xlu0 %1061, %v1020
  %v1063 = vpop.permute.xlu0 %1062
  %1066 = vset.pattern.permute.xlu0 0
  %1067 = vperm.xlu0 %1066, %v1021
  %v1068 = vpop.permute.xlu0 %1067
  %1071 = vset.pattern.permute.xlu0 0
  %1072 = vperm.xlu0 %1071, %v1022
  %v1073 = vpop.permute.xlu0 %1072
  %1076 = vset.pattern.permute.xlu0 0
  %1077 = vperm.xlu0 %1076, %v1023
  %v1078 = vpop.permute.xlu0 %1077
  %1081 = vset.pattern.permute.xlu0 0
  %1082 = vperm.xlu0 %1081, %v1024
  %v1083 = vpop.permute.xlu0 %1082
  %1086 = vset.pattern.permute.xlu0 0
  %1087 = vperm.xlu0 %1086, %v1025
  %v1088 = vpop.permute.xlu0 %1087
  %1091 = vset.pattern.permute.xlu0 0
  %1092 = vperm.xlu0 %1091, %v1026
  %v1093 = vpop.permute.xlu0 %1092
  %1096 = vset.pattern.permute.xlu0 0
  %1097 = vperm.xlu0 %1096, %v1027
  %v1098 = vpop.permute.xlu0 %1097
  %1101 = vset.pattern.permute.xlu0 0
  %1102 = vperm.xlu0 %1101, %v1028
  %v1103 = vpop.permute.xlu0 %1102
  %1106 = vset.pattern.permute.xlu0 0
  %1107 = vperm.xlu0 %1106, %v1029
  %v1108 = vpop.permute.xlu0 %1107
  %v1110 = vmul.f32 %v1033, %v120
  %v1111 = vmul.f32 %v1038, %v120
  %v1112 = vmul.f32 %v1043, %v120
  %v1113 = vmul.f32 %v1048, %v120
  %v1114 = vmul.f32 %v1053, %v120
  %v1115 = vmul.f32 %v1058, %v120
  %v1116 = vmul.f32 %v1063, %v120
  %v1117 = vmul.f32 %v1068, %v120
  %v1118 = vmul.f32 %v1073, %v120
  %v1119 = vmul.f32 %v1078, %v120
  %v1120 = vmul.f32 %v1083, %v120
  %v1121 = vmul.f32 %v1088, %v120
  %v1122 = vmul.f32 %v1093, %v120
  %v1123 = vmul.f32 %v1098, %v120
  %v1124 = vmul.f32 %v1103, %v120
  %v1125 = vmul.f32 %v1108, %v120
  %v1126 = vadd.f32 %v1110, 0.0
  %v1127 = vadd.f32 %v1111, 0.0
  %v1128 = vadd.f32 %v1112, 0.0
  %v1129 = vadd.f32 %v1113, 0.0
  %v1130 = vadd.f32 %v1114, 0.0
  %v1131 = vadd.f32 %v1115, 0.0
  %v1132 = vadd.f32 %v1116, 0.0
  %v1133 = vadd.f32 %v1117, 0.0
  %v1134 = vadd.f32 %v1118, 0.0
  %v1135 = vadd.f32 %v1119, 0.0
  %v1136 = vadd.f32 %v1120, 0.0
  %v1137 = vadd.f32 %v1121, 0.0
  %v1138 = vadd.f32 %v1122, 0.0
  %v1139 = vadd.f32 %v1123, 0.0
  %v1140 = vadd.f32 %v1124, 0.0
  %v1141 = vadd.f32 %v1125, 0.0
  %1142 = vset.pattern.permute.xlu0 1
  %1143 = vperm.xlu0 %1142, %v1014
  %v1144 = vpop.permute.xlu0 %1143
  %1146 = vset.pattern.permute.xlu0 1
  %1147 = vperm.xlu0 %1146, %v1015
  %v1148 = vpop.permute.xlu0 %1147
  %1150 = vset.pattern.permute.xlu0 1
  %1151 = vperm.xlu0 %1150, %v1016
  %v1152 = vpop.permute.xlu0 %1151
  %1154 = vset.pattern.permute.xlu0 1
  %1155 = vperm.xlu0 %1154, %v1017
  %v1156 = vpop.permute.xlu0 %1155
  %1158 = vset.pattern.permute.xlu0 1
  %1159 = vperm.xlu0 %1158, %v1018
  %v1160 = vpop.permute.xlu0 %1159
  %1162 = vset.pattern.permute.xlu0 1
  %1163 = vperm.xlu0 %1162, %v1019
  %v1164 = vpop.permute.xlu0 %1163
  %1166 = vset.pattern.permute.xlu0 1
  %1167 = vperm.xlu0 %1166, %v1020
  %v1168 = vpop.permute.xlu0 %1167
  %1170 = vset.pattern.permute.xlu0 1
  %1171 = vperm.xlu0 %1170, %v1021
  %v1172 = vpop.permute.xlu0 %1171
  %1174 = vset.pattern.permute.xlu0 1
  %1175 = vperm.xlu0 %1174, %v1022
  %v1176 = vpop.permute.xlu0 %1175
  %1178 = vset.pattern.permute.xlu0 1
  %1179 = vperm.xlu0 %1178, %v1023
  %v1180 = vpop.permute.xlu0 %1179
  %1182 = vset.pattern.permute.xlu0 1
  %1183 = vperm.xlu0 %1182, %v1024
  %v1184 = vpop.permute.xlu0 %1183
  %1186 = vset.pattern.permute.xlu0 1
  %1187 = vperm.xlu0 %1186, %v1025
  %v1188 = vpop.permute.xlu0 %1187
  %1190 = vset.pattern.permute.xlu0 1
  %1191 = vperm.xlu0 %1190, %v1026
  %v1192 = vpop.permute.xlu0 %1191
  %1194 = vset.pattern.permute.xlu0 1
  %1195 = vperm.xlu0 %1194, %v1027
  %v1196 = vpop.permute.xlu0 %1195
  %1198 = vset.pattern.permute.xlu0 1
  %1199 = vperm.xlu0 %1198, %v1028
  %v1200 = vpop.permute.xlu0 %1199
  %1202 = vset.pattern.permute.xlu0 1
  %1203 = vperm.xlu0 %1202, %v1029
  %v1204 = vpop.permute.xlu0 %1203
  %v1206 = vmul.f32 %v1144, %v220
  %v1207 = vmul.f32 %v1148, %v220
  %v1208 = vmul.f32 %v1152, %v220
  %v1209 = vmul.f32 %v1156, %v220
  %v1210 = vmul.f32 %v1160, %v220
  %v1211 = vmul.f32 %v1164, %v220
  %v1212 = vmul.f32 %v1168, %v220
  %v1213 = vmul.f32 %v1172, %v220
  %v1214 = vmul.f32 %v1176, %v220
  %v1215 = vmul.f32 %v1180, %v220
  %v1216 = vmul.f32 %v1184, %v220
  %v1217 = vmul.f32 %v1188, %v220
  %v1218 = vmul.f32 %v1192, %v220
  %v1219 = vmul.f32 %v1196, %v220
  %v1220 = vmul.f32 %v1200, %v220
  %v1221 = vmul.f32 %v1204, %v220
  %v1222 = vadd.f32 %v1126, %v1206
  %v1223 = vadd.f32 %v1127, %v1207
  %v1224 = vadd.f32 %v1128, %v1208
  %v1225 = vadd.f32 %v1129, %v1209
  %v1226 = vadd.f32 %v1130, %v1210
  %v1227 = vadd.f32 %v1131, %v1211
  %v1228 = vadd.f32 %v1132, %v1212
  %v1229 = vadd.f32 %v1133, %v1213
  %v1230 = vadd.f32 %v1134, %v1214
  %v1231 = vadd.f32 %v1135, %v1215
  %v1232 = vadd.f32 %v1136, %v1216
  %v1233 = vadd.f32 %v1137, %v1217
  %v1234 = vadd.f32 %v1138, %v1218
  %v1235 = vadd.f32 %v1139, %v1219
  %v1236 = vadd.f32 %v1140, %v1220
  %v1237 = vadd.f32 %v1141, %v1221
  %1238 = vset.pattern.permute.xlu0 2
  %1239 = vperm.xlu0 %1238, %v1014
  %v1240 = vpop.permute.xlu0 %1239
  %1242 = vset.pattern.permute.xlu0 2
  %1243 = vperm.xlu0 %1242, %v1015
  %v1244 = vpop.permute.xlu0 %1243
  %1246 = vset.pattern.permute.xlu0 2
  %1247 = vperm.xlu0 %1246, %v1016
  %v1248 = vpop.permute.xlu0 %1247
  %1250 = vset.pattern.permute.xlu0 2
  %1251 = vperm.xlu0 %1250, %v1017
  %v1252 = vpop.permute.xlu0 %1251
  %1254 = vset.pattern.permute.xlu0 2
  %1255 = vperm.xlu0 %1254, %v1018
  %v1256 = vpop.permute.xlu0 %1255
  %1258 = vset.pattern.permute.xlu0 2
  %1259 = vperm.xlu0 %1258, %v1019
  %v1260 = vpop.permute.xlu0 %1259
  %1262 = vset.pattern.permute.xlu0 2
  %1263 = vperm.xlu0 %1262, %v1020
  %v1264 = vpop.permute.xlu0 %1263
  %1266 = vset.pattern.permute.xlu0 2
  %1267 = vperm.xlu0 %1266, %v1021
  %v1268 = vpop.permute.xlu0 %1267
  %1270 = vset.pattern.permute.xlu0 2
  %1271 = vperm.xlu0 %1270, %v1022
  %v1272 = vpop.permute.xlu0 %1271
  %1274 = vset.pattern.permute.xlu0 2
  %1275 = vperm.xlu0 %1274, %v1023
  %v1276 = vpop.permute.xlu0 %1275
  %1278 = vset.pattern.permute.xlu0 2
  %1279 = vperm.xlu0 %1278, %v1024
  %v1280 = vpop.permute.xlu0 %1279
  %1282 = vset.pattern.permute.xlu0 2
  %1283 = vperm.xlu0 %1282, %v1025
  %v1284 = vpop.permute.xlu0 %1283
  %1286 = vset.pattern.permute.xlu0 2
  %1287 = vperm.xlu0 %1286, %v1026
  %v1288 = vpop.permute.xlu0 %1287
  %1290 = vset.pattern.permute.xlu0 2
  %1291 = vperm.xlu0 %1290, %v1027
  %v1292 = vpop.permute.xlu0 %1291
  %1294 = vset.pattern.permute.xlu0 2
  %1295 = vperm.xlu0 %1294, %v1028
  %v1296 = vpop.permute.xlu0 %1295
  %1298 = vset.pattern.permute.xlu0 2
  %1299 = vperm.xlu0 %1298, %v1029
  %v1300 = vpop.permute.xlu0 %1299
  %v1302 = vmul.f32 %v1240, %v320
  %v1303 = vmul.f32 %v1244, %v320
  %v1304 = vmul.f32 %v1248, %v320
  %v1305 = vmul.f32 %v1252, %v320
  %v1306 = vmul.f32 %v1256, %v320
  %v1307 = vmul.f32 %v1260, %v320
  %v1308 = vmul.f32 %v1264, %v320
  %v1309 = vmul.f32 %v1268, %v320
  %v1310 = vmul.f32 %v1272, %v320
  %v1311 = vmul.f32 %v1276, %v320
  %v1312 = vmul.f32 %v1280, %v320
  %v1313 = vmul.f32 %v1284, %v320
  %v1314 = vmul.f32 %v1288, %v320
  %v1315 = vmul.f32 %v1292, %v320
  %v1316 = vmul.f32 %v1296, %v320
  %v1317 = vmul.f32 %v1300, %v320
  %v1318 = vadd.f32 %v1222, %v1302
  %v1319 = vadd.f32 %v1223, %v1303
  %v1320 = vadd.f32 %v1224, %v1304
  %v1321 = vadd.f32 %v1225, %v1305
  %v1322 = vadd.f32 %v1226, %v1306
  %v1323 = vadd.f32 %v1227, %v1307
  %v1324 = vadd.f32 %v1228, %v1308
  %v1325 = vadd.f32 %v1229, %v1309
  %v1326 = vadd.f32 %v1230, %v1310
  %v1327 = vadd.f32 %v1231, %v1311
  %v1328 = vadd.f32 %v1232, %v1312
  %v1329 = vadd.f32 %v1233, %v1313
  %v1330 = vadd.f32 %v1234, %v1314
  %v1331 = vadd.f32 %v1235, %v1315
  %v1332 = vadd.f32 %v1236, %v1316
  %v1333 = vadd.f32 %v1237, %v1317
  %1334 = vset.pattern.permute.xlu0 3
  %1335 = vperm.xlu0 %1334, %v1014
  %v1336 = vpop.permute.xlu0 %1335
  %1338 = vset.pattern.permute.xlu0 3
  %1339 = vperm.xlu0 %1338, %v1015
  %v1340 = vpop.permute.xlu0 %1339
  %1342 = vset.pattern.permute.xlu0 3
  %1343 = vperm.xlu0 %1342, %v1016
  %v1344 = vpop.permute.xlu0 %1343
  %1346 = vset.pattern.permute.xlu0 3
  %1347 = vperm.xlu0 %1346, %v1017
  %v1348 = vpop.permute.xlu0 %1347
  %1350 = vset.pattern.permute.xlu0 3
  %1351 = vperm.xlu0 %1350, %v1018
  %v1352 = vpop.permute.xlu0 %1351
  %1354 = vset.pattern.permute.xlu0 3
  %1355 = vperm.xlu0 %1354, %v1019
  %v1356 = vpop.permute.xlu0 %1355
  %1358 = vset.pattern.permute.xlu0 3
  %1359 = vperm.xlu0 %1358, %v1020
  %v1360 = vpop.permute.xlu0 %1359
  %1362 = vset.pattern.permute.xlu0 3
  %1363 = vperm.xlu0 %1362, %v1021
  %v1364 = vpop.permute.xlu0 %1363
  %1366 = vset.pattern.permute.xlu0 3
  %1367 = vperm.xlu0 %1366, %v1022
  %v1368 = vpop.permute.xlu0 %1367
  %1370 = vset.pattern.permute.xlu0 3
  %1371 = vperm.xlu0 %1370, %v1023
  %v1372 = vpop.permute.xlu0 %1371
  %1374 = vset.pattern.permute.xlu0 3
  %1375 = vperm.xlu0 %1374, %v1024
  %v1376 = vpop.permute.xlu0 %1375
  %1378 = vset.pattern.permute.xlu0 3
  %1379 = vperm.xlu0 %1378, %v1025
  %v1380 = vpop.permute.xlu0 %1379
  %1382 = vset.pattern.permute.xlu0 3
  %1383 = vperm.xlu0 %1382, %v1026
  %v1384 = vpop.permute.xlu0 %1383
  %1386 = vset.pattern.permute.xlu0 3
  %1387 = vperm.xlu0 %1386, %v1027
  %v1388 = vpop.permute.xlu0 %1387
  %1390 = vset.pattern.permute.xlu0 3
  %1391 = vperm.xlu0 %1390, %v1028
  %v1392 = vpop.permute.xlu0 %1391
  %1394 = vset.pattern.permute.xlu0 3
  %1395 = vperm.xlu0 %1394, %v1029
  %v1396 = vpop.permute.xlu0 %1395
  %v1398 = vmul.f32 %v1336, %v420
  %v1399 = vmul.f32 %v1340, %v420
  %v1400 = vmul.f32 %v1344, %v420
  %v1401 = vmul.f32 %v1348, %v420
  %v1402 = vmul.f32 %v1352, %v420
  %v1403 = vmul.f32 %v1356, %v420
  %v1404 = vmul.f32 %v1360, %v420
  %v1405 = vmul.f32 %v1364, %v420
  %v1406 = vmul.f32 %v1368, %v420
  %v1407 = vmul.f32 %v1372, %v420
  %v1408 = vmul.f32 %v1376, %v420
  %v1409 = vmul.f32 %v1380, %v420
  %v1410 = vmul.f32 %v1384, %v420
  %v1411 = vmul.f32 %v1388, %v420
  %v1412 = vmul.f32 %v1392, %v420
  %v1413 = vmul.f32 %v1396, %v420
  %v1414 = vadd.f32 %v1318, %v1398
  %v1415 = vadd.f32 %v1319, %v1399
  %v1416 = vadd.f32 %v1320, %v1400
  %v1417 = vadd.f32 %v1321, %v1401
  %v1418 = vadd.f32 %v1322, %v1402
  %v1419 = vadd.f32 %v1323, %v1403
  %v1420 = vadd.f32 %v1324, %v1404
  %v1421 = vadd.f32 %v1325, %v1405
  %v1422 = vadd.f32 %v1326, %v1406
  %v1423 = vadd.f32 %v1327, %v1407
  %v1424 = vadd.f32 %v1328, %v1408
  %v1425 = vadd.f32 %v1329, %v1409
  %v1426 = vadd.f32 %v1330, %v1410
  %v1427 = vadd.f32 %v1331, %v1411
  %v1428 = vadd.f32 %v1332, %v1412
  %v1429 = vadd.f32 %v1333, %v1413
  %1430 = vset.pattern.permute.xlu0 4
  %1431 = vperm.xlu0 %1430, %v1014
  %v1432 = vpop.permute.xlu0 %1431
  %1434 = vset.pattern.permute.xlu0 4
  %1435 = vperm.xlu0 %1434, %v1015
  %v1436 = vpop.permute.xlu0 %1435
  %1438 = vset.pattern.permute.xlu0 4
  %1439 = vperm.xlu0 %1438, %v1016
  %v1440 = vpop.permute.xlu0 %1439
  %1442 = vset.pattern.permute.xlu0 4
  %1443 = vperm.xlu0 %1442, %v1017
  %v1444 = vpop.permute.xlu0 %1443
  %1446 = vset.pattern.permute.xlu0 4
  %1447 = vperm.xlu0 %1446, %v1018
  %v1448 = vpop.permute.xlu0 %1447
  %1450 = vset.pattern.permute.xlu0 4
  %1451 = vperm.xlu0 %1450, %v1019
  %v1452 = vpop.permute.xlu0 %1451
  %1454 = vset.pattern.permute.xlu0 4
  %1455 = vperm.xlu0 %1454, %v1020
  %v1456 = vpop.permute.xlu0 %1455
  %1458 = vset.pattern.permute.xlu0 4
  %1459 = vperm.xlu0 %1458, %v1021
  %v1460 = vpop.permute.xlu0 %1459
  %1462 = vset.pattern.permute.xlu0 4
  %1463 = vperm.xlu0 %1462, %v1022
  %v1464 = vpop.permute.xlu0 %1463
  %1466 = vset.pattern.permute.xlu0 4
  %1467 = vperm.xlu0 %1466, %v1023
  %v1468 = vpop.permute.xlu0 %1467
  %1470 = vset.pattern.permute.xlu0 4
  %1471 = vperm.xlu0 %1470, %v1024
  %v1472 = vpop.permute.xlu0 %1471
  %1474 = vset.pattern.permute.xlu0 4
  %1475 = vperm.xlu0 %1474, %v1025
  %v1476 = vpop.permute.xlu0 %1475
  %1478 = vset.pattern.permute.xlu0 4
  %1479 = vperm.xlu0 %1478, %v1026
  %v1480 = vpop.permute.xlu0 %1479
  %1482 = vset.pattern.permute.xlu0 4
  %1483 = vperm.xlu0 %1482, %v1027
  %v1484 = vpop.permute.xlu0 %1483
  %1486 = vset.pattern.permute.xlu0 4
  %1487 = vperm.xlu0 %1486, %v1028
  %v1488 = vpop.permute.xlu0 %1487
  %1490 = vset.pattern.permute.xlu0 4
  %1491 = vperm.xlu0 %1490, %v1029
  %v1492 = vpop.permute.xlu0 %1491
  %v1494 = vmul.f32 %v1432, %v520
  %v1495 = vmul.f32 %v1436, %v520
  %v1496 = vmul.f32 %v1440, %v520
  %v1497 = vmul.f32 %v1444, %v520
  %v1498 = vmul.f32 %v1448, %v520
  %v1499 = vmul.f32 %v1452, %v520
  %v1500 = vmul.f32 %v1456, %v520
  %v1501 = vmul.f32 %v1460, %v520
  %v1502 = vmul.f32 %v1464, %v520
  %v1503 = vmul.f32 %v1468, %v520
  %v1504 = vmul.f32 %v1472, %v520
  %v1505 = vmul.f32 %v1476, %v520
  %v1506 = vmul.f32 %v1480, %v520
  %v1507 = vmul.f32 %v1484, %v520
  %v1508 = vmul.f32 %v1488, %v520
  %v1509 = vmul.f32 %v1492, %v520
  %v1510 = vadd.f32 %v1414, %v1494
  %v1511 = vadd.f32 %v1415, %v1495
  %v1512 = vadd.f32 %v1416, %v1496
  %v1513 = vadd.f32 %v1417, %v1497
  %v1514 = vadd.f32 %v1418, %v1498
  %v1515 = vadd.f32 %v1419, %v1499
  %v1516 = vadd.f32 %v1420, %v1500
  %v1517 = vadd.f32 %v1421, %v1501
  %v1518 = vadd.f32 %v1422, %v1502
  %v1519 = vadd.f32 %v1423, %v1503
  %v1520 = vadd.f32 %v1424, %v1504
  %v1521 = vadd.f32 %v1425, %v1505
  %v1522 = vadd.f32 %v1426, %v1506
  %v1523 = vadd.f32 %v1427, %v1507
  %v1524 = vadd.f32 %v1428, %v1508
  %v1525 = vadd.f32 %v1429, %v1509
  %1526 = vset.pattern.permute.xlu0 5
  %1527 = vperm.xlu0 %1526, %v1014
  %v1528 = vpop.permute.xlu0 %1527
  %1530 = vset.pattern.permute.xlu0 5
  %1531 = vperm.xlu0 %1530, %v1015
  %v1532 = vpop.permute.xlu0 %1531
  %1534 = vset.pattern.permute.xlu0 5
  %1535 = vperm.xlu0 %1534, %v1016
  %v1536 = vpop.permute.xlu0 %1535
  %1538 = vset.pattern.permute.xlu0 5
  %1539 = vperm.xlu0 %1538, %v1017
  %v1540 = vpop.permute.xlu0 %1539
  %1542 = vset.pattern.permute.xlu0 5
  %1543 = vperm.xlu0 %1542, %v1018
  %v1544 = vpop.permute.xlu0 %1543
  %1546 = vset.pattern.permute.xlu0 5
  %1547 = vperm.xlu0 %1546, %v1019
  %v1548 = vpop.permute.xlu0 %1547
  %1550 = vset.pattern.permute.xlu0 5
  %1551 = vperm.xlu0 %1550, %v1020
  %v1552 = vpop.permute.xlu0 %1551
  %1554 = vset.pattern.permute.xlu0 5
  %1555 = vperm.xlu0 %1554, %v1021
  %v1556 = vpop.permute.xlu0 %1555
  %1558 = vset.pattern.permute.xlu0 5
  %1559 = vperm.xlu0 %1558, %v1022
  %v1560 = vpop.permute.xlu0 %1559
  %1562 = vset.pattern.permute.xlu0 5
  %1563 = vperm.xlu0 %1562, %v1023
  %v1564 = vpop.permute.xlu0 %1563
  %1566 = vset.pattern.permute.xlu0 5
  %1567 = vperm.xlu0 %1566, %v1024
  %v1568 = vpop.permute.xlu0 %1567
  %1570 = vset.pattern.permute.xlu0 5
  %1571 = vperm.xlu0 %1570, %v1025
  %v1572 = vpop.permute.xlu0 %1571
  %1574 = vset.pattern.permute.xlu0 5
  %1575 = vperm.xlu0 %1574, %v1026
  %v1576 = vpop.permute.xlu0 %1575
  %1578 = vset.pattern.permute.xlu0 5
  %1579 = vperm.xlu0 %1578, %v1027
  %v1580 = vpop.permute.xlu0 %1579
  %1582 = vset.pattern.permute.xlu0 5
  %1583 = vperm.xlu0 %1582, %v1028
  %v1584 = vpop.permute.xlu0 %1583
  %1586 = vset.pattern.permute.xlu0 5
  %1587 = vperm.xlu0 %1586, %v1029
  %v1588 = vpop.permute.xlu0 %1587
  %v1590 = vmul.f32 %v1528, %v620
  %v1591 = vmul.f32 %v1532, %v620
  %v1592 = vmul.f32 %v1536, %v620
  %v1593 = vmul.f32 %v1540, %v620
  %v1594 = vmul.f32 %v1544, %v620
  %v1595 = vmul.f32 %v1548, %v620
  %v1596 = vmul.f32 %v1552, %v620
  %v1597 = vmul.f32 %v1556, %v620
  %v1598 = vmul.f32 %v1560, %v620
  %v1599 = vmul.f32 %v1564, %v620
  %v1600 = vmul.f32 %v1568, %v620
  %v1601 = vmul.f32 %v1572, %v620
  %v1602 = vmul.f32 %v1576, %v620
  %v1603 = vmul.f32 %v1580, %v620
  %v1604 = vmul.f32 %v1584, %v620
  %v1605 = vmul.f32 %v1588, %v620
  %v1606 = vadd.f32 %v1510, %v1590
  %v1607 = vadd.f32 %v1511, %v1591
  %v1608 = vadd.f32 %v1512, %v1592
  %v1609 = vadd.f32 %v1513, %v1593
  %v1610 = vadd.f32 %v1514, %v1594
  %v1611 = vadd.f32 %v1515, %v1595
  %v1612 = vadd.f32 %v1516, %v1596
  %v1613 = vadd.f32 %v1517, %v1597
  %v1614 = vadd.f32 %v1518, %v1598
  %v1615 = vadd.f32 %v1519, %v1599
  %v1616 = vadd.f32 %v1520, %v1600
  %v1617 = vadd.f32 %v1521, %v1601
  %v1618 = vadd.f32 %v1522, %v1602
  %v1619 = vadd.f32 %v1523, %v1603
  %v1620 = vadd.f32 %v1524, %v1604
  %v1621 = vadd.f32 %v1525, %v1605
  %1622 = vset.pattern.permute.xlu0 6
  %1623 = vperm.xlu0 %1622, %v1014
  %v1624 = vpop.permute.xlu0 %1623
  %1626 = vset.pattern.permute.xlu0 6
  %1627 = vperm.xlu0 %1626, %v1015
  %v1628 = vpop.permute.xlu0 %1627
  %1630 = vset.pattern.permute.xlu0 6
  %1631 = vperm.xlu0 %1630, %v1016
  %v1632 = vpop.permute.xlu0 %1631
  %1634 = vset.pattern.permute.xlu0 6
  %1635 = vperm.xlu0 %1634, %v1017
  %v1636 = vpop.permute.xlu0 %1635
  %1638 = vset.pattern.permute.xlu0 6
  %1639 = vperm.xlu0 %1638, %v1018
  %v1640 = vpop.permute.xlu0 %1639
  %1642 = vset.pattern.permute.xlu0 6
  %1643 = vperm.xlu0 %1642, %v1019
  %v1644 = vpop.permute.xlu0 %1643
  %1646 = vset.pattern.permute.xlu0 6
  %1647 = vperm.xlu0 %1646, %v1020
  %v1648 = vpop.permute.xlu0 %1647
  %1650 = vset.pattern.permute.xlu0 6
  %1651 = vperm.xlu0 %1650, %v1021
  %v1652 = vpop.permute.xlu0 %1651
  %1654 = vset.pattern.permute.xlu0 6
  %1655 = vperm.xlu0 %1654, %v1022
  %v1656 = vpop.permute.xlu0 %1655
  %1658 = vset.pattern.permute.xlu0 6
  %1659 = vperm.xlu0 %1658, %v1023
  %v1660 = vpop.permute.xlu0 %1659
  %1662 = vset.pattern.permute.xlu0 6
  %1663 = vperm.xlu0 %1662, %v1024
  %v1664 = vpop.permute.xlu0 %1663
  %1666 = vset.pattern.permute.xlu0 6
  %1667 = vperm.xlu0 %1666, %v1025
  %v1668 = vpop.permute.xlu0 %1667
  %1670 = vset.pattern.permute.xlu0 6
  %1671 = vperm.xlu0 %1670, %v1026
  %v1672 = vpop.permute.xlu0 %1671
  %1674 = vset.pattern.permute.xlu0 6
  %1675 = vperm.xlu0 %1674, %v1027
  %v1676 = vpop.permute.xlu0 %1675
  %1678 = vset.pattern.permute.xlu0 6
  %1679 = vperm.xlu0 %1678, %v1028
  %v1680 = vpop.permute.xlu0 %1679
  %1682 = vset.pattern.permute.xlu0 6
  %1683 = vperm.xlu0 %1682, %v1029
  %v1684 = vpop.permute.xlu0 %1683
  %v1686 = vmul.f32 %v1624, %v720
  %v1687 = vmul.f32 %v1628, %v720
  %v1688 = vmul.f32 %v1632, %v720
  %v1689 = vmul.f32 %v1636, %v720
  %v1690 = vmul.f32 %v1640, %v720
  %v1691 = vmul.f32 %v1644, %v720
  %v1692 = vmul.f32 %v1648, %v720
  %v1693 = vmul.f32 %v1652, %v720
  %v1694 = vmul.f32 %v1656, %v720
  %v1695 = vmul.f32 %v1660, %v720
  %v1696 = vmul.f32 %v1664, %v720
  %v1697 = vmul.f32 %v1668, %v720
  %v1698 = vmul.f32 %v1672, %v720
  %v1699 = vmul.f32 %v1676, %v720
  %v1700 = vmul.f32 %v1680, %v720
  %v1701 = vmul.f32 %v1684, %v720
  %v1702 = vadd.f32 %v1606, %v1686
  %v1703 = vadd.f32 %v1607, %v1687
  %v1704 = vadd.f32 %v1608, %v1688
  %v1705 = vadd.f32 %v1609, %v1689
  %v1706 = vadd.f32 %v1610, %v1690
  %v1707 = vadd.f32 %v1611, %v1691
  %v1708 = vadd.f32 %v1612, %v1692
  %v1709 = vadd.f32 %v1613, %v1693
  %v1710 = vadd.f32 %v1614, %v1694
  %v1711 = vadd.f32 %v1615, %v1695
  %v1712 = vadd.f32 %v1616, %v1696
  %v1713 = vadd.f32 %v1617, %v1697
  %v1714 = vadd.f32 %v1618, %v1698
  %v1715 = vadd.f32 %v1619, %v1699
  %v1716 = vadd.f32 %v1620, %v1700
  %v1717 = vadd.f32 %v1621, %v1701
  %1718 = vset.pattern.permute.xlu0 7
  %1719 = vperm.xlu0 %1718, %v1014
  %v1720 = vpop.permute.xlu0 %1719
  %1722 = vset.pattern.permute.xlu0 7
  %1723 = vperm.xlu0 %1722, %v1015
  %v1724 = vpop.permute.xlu0 %1723
  %1726 = vset.pattern.permute.xlu0 7
  %1727 = vperm.xlu0 %1726, %v1016
  %v1728 = vpop.permute.xlu0 %1727
  %1730 = vset.pattern.permute.xlu0 7
  %1731 = vperm.xlu0 %1730, %v1017
  %v1732 = vpop.permute.xlu0 %1731
  %1734 = vset.pattern.permute.xlu0 7
  %1735 = vperm.xlu0 %1734, %v1018
  %v1736 = vpop.permute.xlu0 %1735
  %1738 = vset.pattern.permute.xlu0 7
  %1739 = vperm.xlu0 %1738, %v1019
  %v1740 = vpop.permute.xlu0 %1739
  %1742 = vset.pattern.permute.xlu0 7
  %1743 = vperm.xlu0 %1742, %v1020
  %v1744 = vpop.permute.xlu0 %1743
  %1746 = vset.pattern.permute.xlu0 7
  %1747 = vperm.xlu0 %1746, %v1021
  %v1748 = vpop.permute.xlu0 %1747
  %1750 = vset.pattern.permute.xlu0 7
  %1751 = vperm.xlu0 %1750, %v1022
  %v1752 = vpop.permute.xlu0 %1751
  %1754 = vset.pattern.permute.xlu0 7
  %1755 = vperm.xlu0 %1754, %v1023
  %v1756 = vpop.permute.xlu0 %1755
  %1758 = vset.pattern.permute.xlu0 7
  %1759 = vperm.xlu0 %1758, %v1024
  %v1760 = vpop.permute.xlu0 %1759
  %1762 = vset.pattern.permute.xlu0 7
  %1763 = vperm.xlu0 %1762, %v1025
  %v1764 = vpop.permute.xlu0 %1763
  %1766 = vset.pattern.permute.xlu0 7
  %1767 = vperm.xlu0 %1766, %v1026
  %v1768 = vpop.permute.xlu0 %1767
  %1770 = vset.pattern.permute.xlu0 7
  %1771 = vperm.xlu0 %1770, %v1027
  %v1772 = vpop.permute.xlu0 %1771
  %1774 = vset.pattern.permute.xlu0 7
  %1775 = vperm.xlu0 %1774, %v1028
  %v1776 = vpop.permute.xlu0 %1775
  %1778 = vset.pattern.permute.xlu0 7
  %1779 = vperm.xlu0 %1778, %v1029
  %v1780 = vpop.permute.xlu0 %1779
  %v1782 = vmul.f32 %v1720, %v820
  %v1783 = vmul.f32 %v1724, %v820
  %v1784 = vmul.f32 %v1728, %v820
  %v1785 = vmul.f32 %v1732, %v820
  %v1786 = vmul.f32 %v1736, %v820
  %v1787 = vmul.f32 %v1740, %v820
  %v1788 = vmul.f32 %v1744, %v820
  %v1789 = vmul.f32 %v1748, %v820
  %v1790 = vmul.f32 %v1752, %v820
  %v1791 = vmul.f32 %v1756, %v820
  %v1792 = vmul.f32 %v1760, %v820
  %v1793 = vmul.f32 %v1764, %v820
  %v1794 = vmul.f32 %v1768, %v820
  %v1795 = vmul.f32 %v1772, %v820
  %v1796 = vmul.f32 %v1776, %v820
  %v1797 = vmul.f32 %v1780, %v820
  %v1798 = vadd.f32 %v1702, %v1782
  %v1799 = vadd.f32 %v1703, %v1783
  %v1800 = vadd.f32 %v1704, %v1784
  %v1801 = vadd.f32 %v1705, %v1785
  %v1802 = vadd.f32 %v1706, %v1786
  %v1803 = vadd.f32 %v1707, %v1787
  %v1804 = vadd.f32 %v1708, %v1788
  %v1805 = vadd.f32 %v1709, %v1789
  %v1806 = vadd.f32 %v1710, %v1790
  %v1807 = vadd.f32 %v1711, %v1791
  %v1808 = vadd.f32 %v1712, %v1792
  %v1809 = vadd.f32 %v1713, %v1793
  %v1810 = vadd.f32 %v1714, %v1794
  %v1811 = vadd.f32 %v1715, %v1795
  %v1812 = vadd.f32 %v1716, %v1796
  %v1813 = vadd.f32 %v1717, %v1797
  %1814 = vset.pattern.permute.xlu0 8
  %1815 = vperm.xlu0 %1814, %v1014
  %v1816 = vpop.permute.xlu0 %1815
  %1818 = vset.pattern.permute.xlu0 8
  %1819 = vperm.xlu0 %1818, %v1015
  %v1820 = vpop.permute.xlu0 %1819
  %1822 = vset.pattern.permute.xlu0 8
  %1823 = vperm.xlu0 %1822, %v1016
  %v1824 = vpop.permute.xlu0 %1823
  %1826 = vset.pattern.permute.xlu0 8
  %1827 = vperm.xlu0 %1826, %v1017
  %v1828 = vpop.permute.xlu0 %1827
  %1830 = vset.pattern.permute.xlu0 8
  %1831 = vperm.xlu0 %1830, %v1018
  %v1832 = vpop.permute.xlu0 %1831
  %1834 = vset.pattern.permute.xlu0 8
  %1835 = vperm.xlu0 %1834, %v1019
  %v1836 = vpop.permute.xlu0 %1835
  %1838 = vset.pattern.permute.xlu0 8
  %1839 = vperm.xlu0 %1838, %v1020
  %v1840 = vpop.permute.xlu0 %1839
  %1842 = vset.pattern.permute.xlu0 8
  %1843 = vperm.xlu0 %1842, %v1021
  %v1844 = vpop.permute.xlu0 %1843
  %1846 = vset.pattern.permute.xlu0 8
  %1847 = vperm.xlu0 %1846, %v1022
  %v1848 = vpop.permute.xlu0 %1847
  %1850 = vset.pattern.permute.xlu0 8
  %1851 = vperm.xlu0 %1850, %v1023
  %v1852 = vpop.permute.xlu0 %1851
  %1854 = vset.pattern.permute.xlu0 8
  %1855 = vperm.xlu0 %1854, %v1024
  %v1856 = vpop.permute.xlu0 %1855
  %1858 = vset.pattern.permute.xlu0 8
  %1859 = vperm.xlu0 %1858, %v1025
  %v1860 = vpop.permute.xlu0 %1859
  %1862 = vset.pattern.permute.xlu0 8
  %1863 = vperm.xlu0 %1862, %v1026
  %v1864 = vpop.permute.xlu0 %1863
  %1866 = vset.pattern.permute.xlu0 8
  %1867 = vperm.xlu0 %1866, %v1027
  %v1868 = vpop.permute.xlu0 %1867
  %1870 = vset.pattern.permute.xlu0 8
  %1871 = vperm.xlu0 %1870, %v1028
  %v1872 = vpop.permute.xlu0 %1871
  %1874 = vset.pattern.permute.xlu0 8
  %1875 = vperm.xlu0 %1874, %v1029
  %v1876 = vpop.permute.xlu0 %1875
  %v1878 = vmul.f32 %v1816, %v920
  %v1879 = vmul.f32 %v1820, %v920
  %v1880 = vmul.f32 %v1824, %v920
  %v1881 = vmul.f32 %v1828, %v920
  %v1882 = vmul.f32 %v1832, %v920
  %v1883 = vmul.f32 %v1836, %v920
  %v1884 = vmul.f32 %v1840, %v920
  %v1885 = vmul.f32 %v1844, %v920
  %v1886 = vmul.f32 %v1848, %v920
  %v1887 = vmul.f32 %v1852, %v920
  %v1888 = vmul.f32 %v1856, %v920
  %v1889 = vmul.f32 %v1860, %v920
  %v1890 = vmul.f32 %v1864, %v920
  %v1891 = vmul.f32 %v1868, %v920
  %v1892 = vmul.f32 %v1872, %v920
  %v1893 = vmul.f32 %v1876, %v920
  %v1894 = vadd.f32 %v1798, %v1878
  %v1895 = vadd.f32 %v1799, %v1879
  %v1896 = vadd.f32 %v1800, %v1880
  %v1897 = vadd.f32 %v1801, %v1881
  %v1898 = vadd.f32 %v1802, %v1882
  %v1899 = vadd.f32 %v1803, %v1883
  %v1900 = vadd.f32 %v1804, %v1884
  %v1901 = vadd.f32 %v1805, %v1885
  %v1902 = vadd.f32 %v1806, %v1886
  %v1903 = vadd.f32 %v1807, %v1887
  %v1904 = vadd.f32 %v1808, %v1888
  %v1905 = vadd.f32 %v1809, %v1889
  %v1906 = vadd.f32 %v1810, %v1890
  %v1907 = vadd.f32 %v1811, %v1891
  %v1908 = vadd.f32 %v1812, %v1892
  %v1909 = vadd.f32 %v1813, %v1893
  %v1910 = vmul.f32 %v1894, %v957
  %v1911 = vmul.f32 %v1895, %v957
  %v1912 = vmul.f32 %v1896, %v957
  %v1913 = vmul.f32 %v1897, %v957
  %v1914 = vmul.f32 %v1898, %v957
  %v1915 = vmul.f32 %v1899, %v957
  %v1916 = vmul.f32 %v1900, %v957
  %v1917 = vmul.f32 %v1901, %v957
  %v1918 = vmul.f32 %v1902, %v957
  %v1919 = vmul.f32 %v1903, %v957
  %v1920 = vmul.f32 %v1904, %v957
  %v1921 = vmul.f32 %v1905, %v957
  %v1922 = vmul.f32 %v1906, %v957
  %v1923 = vmul.f32 %v1907, %v957
  %v1924 = vmul.f32 %v1908, %v957
  %v1925 = vmul.f32 %v1909, %v957
  %v1926 = vadd.f32 %v1910, %v979
  %v1927 = vadd.f32 %v1911, %v979
  %v1928 = vadd.f32 %v1912, %v979
  %v1929 = vadd.f32 %v1913, %v979
  %v1930 = vadd.f32 %v1914, %v979
  %v1931 = vadd.f32 %v1915, %v979
  %v1932 = vadd.f32 %v1916, %v979
  %v1933 = vadd.f32 %v1917, %v979
  %v1934 = vadd.f32 %v1918, %v979
  %v1935 = vadd.f32 %v1919, %v979
  %v1936 = vadd.f32 %v1920, %v979
  %v1937 = vadd.f32 %v1921, %v979
  %v1938 = vadd.f32 %v1922, %v979
  %v1939 = vadd.f32 %v1923, %v979
  %v1940 = vadd.f32 %v1924, %v979
  %v1941 = vadd.f32 %v1925, %v979
  %v1942 = vmax.f32 %v1926, 0.0
  %v1943 = vmax.f32 %v1927, 0.0
  %v1944 = vmax.f32 %v1928, 0.0
  %v1945 = vmax.f32 %v1929, 0.0
  %v1946 = vmax.f32 %v1930, 0.0
  %v1947 = vmax.f32 %v1931, 0.0
  %v1948 = vmax.f32 %v1932, 0.0
  %v1949 = vmax.f32 %v1933, 0.0
  %v1950 = vmax.f32 %v1934, 0.0
  %v1951 = vmax.f32 %v1935, 0.0
  %v1952 = vmax.f32 %v1936, 0.0
  %v1953 = vmax.f32 %v1937, 0.0
  %v1954 = vmax.f32 %v1938, 0.0
  %v1955 = vmax.f32 %v1939, 0.0
  %v1956 = vmax.f32 %v1940, 0.0
  %v1957 = vmax.f32 %v1941, 0.0
  %v1958 = vmax.f32 %v997, %v1942
  %v1959 = vmax.f32 %v998, %v1943
  %v1960 = vmax.f32 %v999, %v1944
  %v1961 = vmax.f32 %v1000, %v1945
  %v1962 = vmax.f32 %v1001, %v1946
  %v1963 = vmax.f32 %v1002, %v1947
  %v1964 = vmax.f32 %v1003, %v1948
  %v1965 = vmax.f32 %v1004, %v1949
  %v1966 = vmax.f32 %v1005, %v1950
  %v1967 = vmax.f32 %v1006, %v1951
  %v1968 = vmax.f32 %v1007, %v1952
  %v1969 = vmax.f32 %v1008, %v1953
  %v1970 = vmax.f32 %v1009, %v1954
  %v1971 = vmax.f32 %v1010, %v1955
  %v1972 = vmax.f32 %v1011, %v1956
  %v1973 = vmax.f32 %v1012, %v1957
  %s1974 = scalar_lea.vmem %s0, 256
  %v1975 = vld [vmem:[%s1974] sm:$0xff]
  %v1976 = vld [vmem:[%s1974 + $0x8] sm:$0xff]
  %v1977 = vld [vmem:[%s1974 + $0x10] sm:$0xff]
  %v1978 = vld [vmem:[%s1974 + $0x18] sm:$0xff]
  %v1979 = vld [vmem:[%s1974 + $0x20] sm:$0xff]
  %v1980 = vld [vmem:[%s1974 + $0x28] sm:$0xff]
  %v1981 = vld [vmem:[%s1974 + $0x30] sm:$0xff]
  %v1982 = vld [vmem:[%s1974 + $0x38] sm:$0xff]
  %v1983 = vld [vmem:[%s1974 + $0x40] sm:$0xff]
  %v1984 = vld [vmem:[%s1974 + $0x48] sm:$0xff]
  %v1985 = vld [vmem:[%s1974 + $0x50] sm:$0xff]
  %v1986 = vld [vmem:[%s1974 + $0x58] sm:$0xff]
  %v1987 = vld [vmem:[%s1974 + $0x60] sm:$0xff]
  %v1988 = vld [vmem:[%s1974 + $0x68] sm:$0xff]
  %v1989 = vld [vmem:[%s1974 + $0x70] sm:$0xff]
  %v1990 = vld [vmem:[%s1974 + $0x78] sm:$0xff]
  %1992 = vset.pattern.permute.xlu0 0
  %1993 = vperm.xlu0 %1992, %v1975
  %v1994 = vpop.permute.xlu0 %1993
  %1997 = vset.pattern.permute.xlu0 0
  %1998 = vperm.xlu0 %1997, %v1976
  %v1999 = vpop.permute.xlu0 %1998
  %2002 = vset.pattern.permute.xlu0 0
  %2003 = vperm.xlu0 %2002, %v1977
  %v2004 = vpop.permute.xlu0 %2003
  %2007 = vset.pattern.permute.xlu0 0
  %2008 = vperm.xlu0 %2007, %v1978
  %v2009 = vpop.permute.xlu0 %2008
  %2012 = vset.pattern.permute.xlu0 0
  %2013 = vperm.xlu0 %2012, %v1979
  %v2014 = vpop.permute.xlu0 %2013
  %2017 = vset.pattern.permute.xlu0 0
  %2018 = vperm.xlu0 %2017, %v1980
  %v2019 = vpop.permute.xlu0 %2018
  %2022 = vset.pattern.permute.xlu0 0
  %2023 = vperm.xlu0 %2022, %v1981
  %v2024 = vpop.permute.xlu0 %2023
  %2027 = vset.pattern.permute.xlu0 0
  %2028 = vperm.xlu0 %2027, %v1982
  %v2029 = vpop.permute.xlu0 %2028
  %2032 = vset.pattern.permute.xlu0 0
  %2033 = vperm.xlu0 %2032, %v1983
  %v2034 = vpop.permute.xlu0 %2033
  %2037 = vset.pattern.permute.xlu0 0
  %2038 = vperm.xlu0 %2037, %v1984
  %v2039 = vpop.permute.xlu0 %2038
  %2042 = vset.pattern.permute.xlu0 0
  %2043 = vperm.xlu0 %2042, %v1985
  %v2044 = vpop.permute.xlu0 %2043
  %2047 = vset.pattern.permute.xlu0 0
  %2048 = vperm.xlu0 %2047, %v1986
  %v2049 = vpop.permute.xlu0 %2048
  %2052 = vset.pattern.permute.xlu0 0
  %2053 = vperm.xlu0 %2052, %v1987
  %v2054 = vpop.permute.xlu0 %2053
  %2057 = vset.pattern.permute.xlu0 0
  %2058 = vperm.xlu0 %2057, %v1988
  %v2059 = vpop.permute.xlu0 %2058
  %2062 = vset.pattern.permute.xlu0 0
  %2063 = vperm.xlu0 %2062, %v1989
  %v2064 = vpop.permute.xlu0 %2063
  %2067 = vset.pattern.permute.xlu0 0
  %2068 = vperm.xlu0 %2067, %v1990
  %v2069 = vpop.permute.xlu0 %2068
  %v2071 = vmul.f32 %v1994, %v120
  %v2072 = vmul.f32 %v1999, %v120
  %v2073 = vmul.f32 %v2004, %v120
  %v2074 = vmul.f32 %v2009, %v120
  %v2075 = vmul.f32 %v2014, %v120
  %v2076 = vmul.f32 %v2019, %v120
  %v2077 = vmul.f32 %v2024, %v120
  %v2078 = vmul.f32 %v2029, %v120
  %v2079 = vmul.f32 %v2034, %v120
  %v2080 = vmul.f32 %v2039, %v120
  %v2081 = vmul.f32 %v2044, %v120
  %v2082 = vmul.f32 %v2049, %v120
  %v2083 = vmul.f32 %v2054, %v120
  %v2084 = vmul.f32 %v2059, %v120
  %v2085 = vmul.f32 %v2064, %v120
  %v2086 = vmul.f32 %v2069, %v120
  %v2087 = vadd.f32 %v2071, 0.0
  %v2088 = vadd.f32 %v2072, 0.0
  %v2089 = vadd.f32 %v2073, 0.0
  %v2090 = vadd.f32 %v2074, 0.0
  %v2091 = vadd.f32 %v2075, 0.0
  %v2092 = vadd.f32 %v2076, 0.0
  %v2093 = vadd.f32 %v2077, 0.0
  %v2094 = vadd.f32 %v2078, 0.0
  %v2095 = vadd.f32 %v2079, 0.0
  %v2096 = vadd.f32 %v2080, 0.0
  %v2097 = vadd.f32 %v2081, 0.0
  %v2098 = vadd.f32 %v2082, 0.0
  %v2099 = vadd.f32 %v2083, 0.0
  %v2100 = vadd.f32 %v2084, 0.0
  %v2101 = vadd.f32 %v2085, 0.0
  %v2102 = vadd.f32 %v2086, 0.0
  %2103 = vset.pattern.permute.xlu0 1
  %2104 = vperm.xlu0 %2103, %v1975
  %v2105 = vpop.permute.xlu0 %2104
  %2107 = vset.pattern.permute.xlu0 1
  %2108 = vperm.xlu0 %2107, %v1976
  %v2109 = vpop.permute.xlu0 %2108
  %2111 = vset.pattern.permute.xlu0 1
  %2112 = vperm.xlu0 %2111, %v1977
  %v2113 = vpop.permute.xlu0 %2112
  %2115 = vset.pattern.permute.xlu0 1
  %2116 = vperm.xlu0 %2115, %v1978
  %v2117 = vpop.permute.xlu0 %2116
  %2119 = vset.pattern.permute.xlu0 1
  %2120 = vperm.xlu0 %2119, %v1979
  %v2121 = vpop.permute.xlu0 %2120
  %2123 = vset.pattern.permute.xlu0 1
  %2124 = vperm.xlu0 %2123, %v1980
  %v2125 = vpop.permute.xlu0 %2124
  %2127 = vset.pattern.permute.xlu0 1
  %2128 = vperm.xlu0 %2127, %v1981
  %v2129 = vpop.permute.xlu0 %2128
  %2131 = vset.pattern.permute.xlu0 1
  %2132 = vperm.xlu0 %2131, %v1982
  %v2133 = vpop.permute.xlu0 %2132
  %2135 = vset.pattern.permute.xlu0 1
  %2136 = vperm.xlu0 %2135, %v1983
  %v2137 = vpop.permute.xlu0 %2136
  %2139 = vset.pattern.permute.xlu0 1
  %2140 = vperm.xlu0 %2139, %v1984
  %v2141 = vpop.permute.xlu0 %2140
  %2143 = vset.pattern.permute.xlu0 1
  %2144 = vperm.xlu0 %2143, %v1985
  %v2145 = vpop.permute.xlu0 %2144
  %2147 = vset.pattern.permute.xlu0 1
  %2148 = vperm.xlu0 %2147, %v1986
  %v2149 = vpop.permute.xlu0 %2148
  %2151 = vset.pattern.permute.xlu0 1
  %2152 = vperm.xlu0 %2151, %v1987
  %v2153 = vpop.permute.xlu0 %2152
  %2155 = vset.pattern.permute.xlu0 1
  %2156 = vperm.xlu0 %2155, %v1988
  %v2157 = vpop.permute.xlu0 %2156
  %2159 = vset.pattern.permute.xlu0 1
  %2160 = vperm.xlu0 %2159, %v1989
  %v2161 = vpop.permute.xlu0 %2160
  %2163 = vset.pattern.permute.xlu0 1
  %2164 = vperm.xlu0 %2163, %v1990
  %v2165 = vpop.permute.xlu0 %2164
  %v2167 = vmul.f32 %v2105, %v220
  %v2168 = vmul.f32 %v2109, %v220
  %v2169 = vmul.f32 %v2113, %v220
  %v2170 = vmul.f32 %v2117, %v220
  %v2171 = vmul.f32 %v2121, %v220
  %v2172 = vmul.f32 %v2125, %v220
  %v2173 = vmul.f32 %v2129, %v220
  %v2174 = vmul.f32 %v2133, %v220
  %v2175 = vmul.f32 %v2137, %v220
  %v2176 = vmul.f32 %v2141, %v220
  %v2177 = vmul.f32 %v2145, %v220
  %v2178 = vmul.f32 %v2149, %v220
  %v2179 = vmul.f32 %v2153, %v220
  %v2180 = vmul.f32 %v2157, %v220
  %v2181 = vmul.f32 %v2161, %v220
  %v2182 = vmul.f32 %v2165, %v220
  %v2183 = vadd.f32 %v2087, %v2167
  %v2184 = vadd.f32 %v2088, %v2168
  %v2185 = vadd.f32 %v2089, %v2169
  %v2186 = vadd.f32 %v2090, %v2170
  %v2187 = vadd.f32 %v2091, %v2171
  %v2188 = vadd.f32 %v2092, %v2172
  %v2189 = vadd.f32 %v2093, %v2173
  %v2190 = vadd.f32 %v2094, %v2174
  %v2191 = vadd.f32 %v2095, %v2175
  %v2192 = vadd.f32 %v2096, %v2176
  %v2193 = vadd.f32 %v2097, %v2177
  %v2194 = vadd.f32 %v2098, %v2178
  %v2195 = vadd.f32 %v2099, %v2179
  %v2196 = vadd.f32 %v2100, %v2180
  %v2197 = vadd.f32 %v2101, %v2181
  %v2198 = vadd.f32 %v2102, %v2182
  %2199 = vset.pattern.permute.xlu0 2
  %2200 = vperm.xlu0 %2199, %v1975
  %v2201 = vpop.permute.xlu0 %2200
  %2203 = vset.pattern.permute.xlu0 2
  %2204 = vperm.xlu0 %2203, %v1976
  %v2205 = vpop.permute.xlu0 %2204
  %2207 = vset.pattern.permute.xlu0 2
  %2208 = vperm.xlu0 %2207, %v1977
  %v2209 = vpop.permute.xlu0 %2208
  %2211 = vset.pattern.permute.xlu0 2
  %2212 = vperm.xlu0 %2211, %v1978
  %v2213 = vpop.permute.xlu0 %2212
  %2215 = vset.pattern.permute.xlu0 2
  %2216 = vperm.xlu0 %2215, %v1979
  %v2217 = vpop.permute.xlu0 %2216
  %2219 = vset.pattern.permute.xlu0 2
  %2220 = vperm.xlu0 %2219, %v1980
  %v2221 = vpop.permute.xlu0 %2220
  %2223 = vset.pattern.permute.xlu0 2
  %2224 = vperm.xlu0 %2223, %v1981
  %v2225 = vpop.permute.xlu0 %2224
  %2227 = vset.pattern.permute.xlu0 2
  %2228 = vperm.xlu0 %2227, %v1982
  %v2229 = vpop.permute.xlu0 %2228
  %2231 = vset.pattern.permute.xlu0 2
  %2232 = vperm.xlu0 %2231, %v1983
  %v2233 = vpop.permute.xlu0 %2232
  %2235 = vset.pattern.permute.xlu0 2
  %2236 = vperm.xlu0 %2235, %v1984
  %v2237 = vpop.permute.xlu0 %2236
  %2239 = vset.pattern.permute.xlu0 2
  %2240 = vperm.xlu0 %2239, %v1985
  %v2241 = vpop.permute.xlu0 %2240
  %2243 = vset.pattern.permute.xlu0 2
  %2244 = vperm.xlu0 %2243, %v1986
  %v2245 = vpop.permute.xlu0 %2244
  %2247 = vset.pattern.permute.xlu0 2
  %2248 = vperm.xlu0 %2247, %v1987
  %v2249 = vpop.permute.xlu0 %2248
  %2251 = vset.pattern.permute.xlu0 2
  %2252 = vperm.xlu0 %2251, %v1988
  %v2253 = vpop.permute.xlu0 %2252
  %2255 = vset.pattern.permute.xlu0 2
  %2256 = vperm.xlu0 %2255, %v1989
  %v2257 = vpop.permute.xlu0 %2256
  %2259 = vset.pattern.permute.xlu0 2
  %2260 = vperm.xlu0 %2259, %v1990
  %v2261 = vpop.permute.xlu0 %2260
  %v2263 = vmul.f32 %v2201, %v320
  %v2264 = vmul.f32 %v2205, %v320
  %v2265 = vmul.f32 %v2209, %v320
  %v2266 = vmul.f32 %v2213, %v320
  %v2267 = vmul.f32 %v2217, %v320
  %v2268 = vmul.f32 %v2221, %v320
  %v2269 = vmul.f32 %v2225, %v320
  %v2270 = vmul.f32 %v2229, %v320
  %v2271 = vmul.f32 %v2233, %v320
  %v2272 = vmul.f32 %v2237, %v320
  %v2273 = vmul.f32 %v2241, %v320
  %v2274 = vmul.f32 %v2245, %v320
  %v2275 = vmul.f32 %v2249, %v320
  %v2276 = vmul.f32 %v2253, %v320
  %v2277 = vmul.f32 %v2257, %v320
  %v2278 = vmul.f32 %v2261, %v320
  %v2279 = vadd.f32 %v2183, %v2263
  %v2280 = vadd.f32 %v2184, %v2264
  %v2281 = vadd.f32 %v2185, %v2265
  %v2282 = vadd.f32 %v2186, %v2266
  %v2283 = vadd.f32 %v2187, %v2267
  %v2284 = vadd.f32 %v2188, %v2268
  %v2285 = vadd.f32 %v2189, %v2269
  %v2286 = vadd.f32 %v2190, %v2270
  %v2287 = vadd.f32 %v2191, %v2271
  %v2288 = vadd.f32 %v2192, %v2272
  %v2289 = vadd.f32 %v2193, %v2273
  %v2290 = vadd.f32 %v2194, %v2274
  %v2291 = vadd.f32 %v2195, %v2275
  %v2292 = vadd.f32 %v2196, %v2276
  %v2293 = vadd.f32 %v2197, %v2277
  %v2294 = vadd.f32 %v2198, %v2278
  %2295 = vset.pattern.permute.xlu0 3
  %2296 = vperm.xlu0 %2295, %v1975
  %v2297 = vpop.permute.xlu0 %2296
  %2299 = vset.pattern.permute.xlu0 3
  %2300 = vperm.xlu0 %2299, %v1976
  %v2301 = vpop.permute.xlu0 %2300
  %2303 = vset.pattern.permute.xlu0 3
  %2304 = vperm.xlu0 %2303, %v1977
  %v2305 = vpop.permute.xlu0 %2304
  %2307 = vset.pattern.permute.xlu0 3
  %2308 = vperm.xlu0 %2307, %v1978
  %v2309 = vpop.permute.xlu0 %2308
  %2311 = vset.pattern.permute.xlu0 3
  %2312 = vperm.xlu0 %2311, %v1979
  %v2313 = vpop.permute.xlu0 %2312
  %2315 = vset.pattern.permute.xlu0 3
  %2316 = vperm.xlu0 %2315, %v1980
  %v2317 = vpop.permute.xlu0 %2316
  %2319 = vset.pattern.permute.xlu0 3
  %2320 = vperm.xlu0 %2319, %v1981
  %v2321 = vpop.permute.xlu0 %2320
  %2323 = vset.pattern.permute.xlu0 3
  %2324 = vperm.xlu0 %2323, %v1982
  %v2325 = vpop.permute.xlu0 %2324
  %2327 = vset.pattern.permute.xlu0 3
  %2328 = vperm.xlu0 %2327, %v1983
  %v2329 = vpop.permute.xlu0 %2328
  %2331 = vset.pattern.permute.xlu0 3
  %2332 = vperm.xlu0 %2331, %v1984
  %v2333 = vpop.permute.xlu0 %2332
  %2335 = vset.pattern.permute.xlu0 3
  %2336 = vperm.xlu0 %2335, %v1985
  %v2337 = vpop.permute.xlu0 %2336
  %2339 = vset.pattern.permute.xlu0 3
  %2340 = vperm.xlu0 %2339, %v1986
  %v2341 = vpop.permute.xlu0 %2340
  %2343 = vset.pattern.permute.xlu0 3
  %2344 = vperm.xlu0 %2343, %v1987
  %v2345 = vpop.permute.xlu0 %2344
  %2347 = vset.pattern.permute.xlu0 3
  %2348 = vperm.xlu0 %2347, %v1988
  %v2349 = vpop.permute.xlu0 %2348
  %2351 = vset.pattern.permute.xlu0 3
  %2352 = vperm.xlu0 %2351, %v1989
  %v2353 = vpop.permute.xlu0 %2352
  %2355 = vset.pattern.permute.xlu0 3
  %2356 = vperm.xlu0 %2355, %v1990
  %v2357 = vpop.permute.xlu0 %2356
  %v2359 = vmul.f32 %v2297, %v420
  %v2360 = vmul.f32 %v2301, %v420
  %v2361 = vmul.f32 %v2305, %v420
  %v2362 = vmul.f32 %v2309, %v420
  %v2363 = vmul.f32 %v2313, %v420
  %v2364 = vmul.f32 %v2317, %v420
  %v2365 = vmul.f32 %v2321, %v420
  %v2366 = vmul.f32 %v2325, %v420
  %v2367 = vmul.f32 %v2329, %v420
  %v2368 = vmul.f32 %v2333, %v420
  %v2369 = vmul.f32 %v2337, %v420
  %v2370 = vmul.f32 %v2341, %v420
  %v2371 = vmul.f32 %v2345, %v420
  %v2372 = vmul.f32 %v2349, %v420
  %v2373 = vmul.f32 %v2353, %v420
  %v2374 = vmul.f32 %v2357, %v420
  %v2375 = vadd.f32 %v2279, %v2359
  %v2376 = vadd.f32 %v2280, %v2360
  %v2377 = vadd.f32 %v2281, %v2361
  %v2378 = vadd.f32 %v2282, %v2362
  %v2379 = vadd.f32 %v2283, %v2363
  %v2380 = vadd.f32 %v2284, %v2364
  %v2381 = vadd.f32 %v2285, %v2365
  %v2382 = vadd.f32 %v2286, %v2366
  %v2383 = vadd.f32 %v2287, %v2367
  %v2384 = vadd.f32 %v2288, %v2368
  %v2385 = vadd.f32 %v2289, %v2369
  %v2386 = vadd.f32 %v2290, %v2370
  %v2387 = vadd.f32 %v2291, %v2371
  %v2388 = vadd.f32 %v2292, %v2372
  %v2389 = vadd.f32 %v2293, %v2373
  %v2390 = vadd.f32 %v2294, %v2374
  %2391 = vset.pattern.permute.xlu0 4
  %2392 = vperm.xlu0 %2391, %v1975
  %v2393 = vpop.permute.xlu0 %2392
  %2395 = vset.pattern.permute.xlu0 4
  %2396 = vperm.xlu0 %2395, %v1976
  %v2397 = vpop.permute.xlu0 %2396
  %2399 = vset.pattern.permute.xlu0 4
  %2400 = vperm.xlu0 %2399, %v1977
  %v2401 = vpop.permute.xlu0 %2400
  %2403 = vset.pattern.permute.xlu0 4
  %2404 = vperm.xlu0 %2403, %v1978
  %v2405 = vpop.permute.xlu0 %2404
  %2407 = vset.pattern.permute.xlu0 4
  %2408 = vperm.xlu0 %2407, %v1979
  %v2409 = vpop.permute.xlu0 %2408
  %2411 = vset.pattern.permute.xlu0 4
  %2412 = vperm.xlu0 %2411, %v1980
  %v2413 = vpop.permute.xlu0 %2412
  %2415 = vset.pattern.permute.xlu0 4
  %2416 = vperm.xlu0 %2415, %v1981
  %v2417 = vpop.permute.xlu0 %2416
  %2419 = vset.pattern.permute.xlu0 4
  %2420 = vperm.xlu0 %2419, %v1982
  %v2421 = vpop.permute.xlu0 %2420
  %2423 = vset.pattern.permute.xlu0 4
  %2424 = vperm.xlu0 %2423, %v1983
  %v2425 = vpop.permute.xlu0 %2424
  %2427 = vset.pattern.permute.xlu0 4
  %2428 = vperm.xlu0 %2427, %v1984
  %v2429 = vpop.permute.xlu0 %2428
  %2431 = vset.pattern.permute.xlu0 4
  %2432 = vperm.xlu0 %2431, %v1985
  %v2433 = vpop.permute.xlu0 %2432
  %2435 = vset.pattern.permute.xlu0 4
  %2436 = vperm.xlu0 %2435, %v1986
  %v2437 = vpop.permute.xlu0 %2436
  %2439 = vset.pattern.permute.xlu0 4
  %2440 = vperm.xlu0 %2439, %v1987
  %v2441 = vpop.permute.xlu0 %2440
  %2443 = vset.pattern.permute.xlu0 4
  %2444 = vperm.xlu0 %2443, %v1988
  %v2445 = vpop.permute.xlu0 %2444
  %2447 = vset.pattern.permute.xlu0 4
  %2448 = vperm.xlu0 %2447, %v1989
  %v2449 = vpop.permute.xlu0 %2448
  %2451 = vset.pattern.permute.xlu0 4
  %2452 = vperm.xlu0 %2451, %v1990
  %v2453 = vpop.permute.xlu0 %2452
  %v2455 = vmul.f32 %v2393, %v520
  %v2456 = vmul.f32 %v2397, %v520
  %v2457 = vmul.f32 %v2401, %v520
  %v2458 = vmul.f32 %v2405, %v520
  %v2459 = vmul.f32 %v2409, %v520
  %v2460 = vmul.f32 %v2413, %v520
  %v2461 = vmul.f32 %v2417, %v520
  %v2462 = vmul.f32 %v2421, %v520
  %v2463 = vmul.f32 %v2425, %v520
  %v2464 = vmul.f32 %v2429, %v520
  %v2465 = vmul.f32 %v2433, %v520
  %v2466 = vmul.f32 %v2437, %v520
  %v2467 = vmul.f32 %v2441, %v520
  %v2468 = vmul.f32 %v2445, %v520
  %v2469 = vmul.f32 %v2449, %v520
  %v2470 = vmul.f32 %v2453, %v520
  %v2471 = vadd.f32 %v2375, %v2455
  %v2472 = vadd.f32 %v2376, %v2456
  %v2473 = vadd.f32 %v2377, %v2457
  %v2474 = vadd.f32 %v2378, %v2458
  %v2475 = vadd.f32 %v2379, %v2459
  %v2476 = vadd.f32 %v2380, %v2460
  %v2477 = vadd.f32 %v2381, %v2461
  %v2478 = vadd.f32 %v2382, %v2462
  %v2479 = vadd.f32 %v2383, %v2463
  %v2480 = vadd.f32 %v2384, %v2464
  %v2481 = vadd.f32 %v2385, %v2465
  %v2482 = vadd.f32 %v2386, %v2466
  %v2483 = vadd.f32 %v2387, %v2467
  %v2484 = vadd.f32 %v2388, %v2468
  %v2485 = vadd.f32 %v2389, %v2469
  %v2486 = vadd.f32 %v2390, %v2470
  %2487 = vset.pattern.permute.xlu0 5
  %2488 = vperm.xlu0 %2487, %v1975
  %v2489 = vpop.permute.xlu0 %2488
  %2491 = vset.pattern.permute.xlu0 5
  %2492 = vperm.xlu0 %2491, %v1976
  %v2493 = vpop.permute.xlu0 %2492
  %2495 = vset.pattern.permute.xlu0 5
  %2496 = vperm.xlu0 %2495, %v1977
  %v2497 = vpop.permute.xlu0 %2496
  %2499 = vset.pattern.permute.xlu0 5
  %2500 = vperm.xlu0 %2499, %v1978
  %v2501 = vpop.permute.xlu0 %2500
  %2503 = vset.pattern.permute.xlu0 5
  %2504 = vperm.xlu0 %2503, %v1979
  %v2505 = vpop.permute.xlu0 %2504
  %2507 = vset.pattern.permute.xlu0 5
  %2508 = vperm.xlu0 %2507, %v1980
  %v2509 = vpop.permute.xlu0 %2508
  %2511 = vset.pattern.permute.xlu0 5
  %2512 = vperm.xlu0 %2511, %v1981
  %v2513 = vpop.permute.xlu0 %2512
  %2515 = vset.pattern.permute.xlu0 5
  %2516 = vperm.xlu0 %2515, %v1982
  %v2517 = vpop.permute.xlu0 %2516
  %2519 = vset.pattern.permute.xlu0 5
  %2520 = vperm.xlu0 %2519, %v1983
  %v2521 = vpop.permute.xlu0 %2520
  %2523 = vset.pattern.permute.xlu0 5
  %2524 = vperm.xlu0 %2523, %v1984
  %v2525 = vpop.permute.xlu0 %2524
  %2527 = vset.pattern.permute.xlu0 5
  %2528 = vperm.xlu0 %2527, %v1985
  %v2529 = vpop.permute.xlu0 %2528
  %2531 = vset.pattern.permute.xlu0 5
  %2532 = vperm.xlu0 %2531, %v1986
  %v2533 = vpop.permute.xlu0 %2532
  %2535 = vset.pattern.permute.xlu0 5
  %2536 = vperm.xlu0 %2535, %v1987
  %v2537 = vpop.permute.xlu0 %2536
  %2539 = vset.pattern.permute.xlu0 5
  %2540 = vperm.xlu0 %2539, %v1988
  %v2541 = vpop.permute.xlu0 %2540
  %2543 = vset.pattern.permute.xlu0 5
  %2544 = vperm.xlu0 %2543, %v1989
  %v2545 = vpop.permute.xlu0 %2544
  %2547 = vset.pattern.permute.xlu0 5
  %2548 = vperm.xlu0 %2547, %v1990
  %v2549 = vpop.permute.xlu0 %2548
  %v2551 = vmul.f32 %v2489, %v620
  %v2552 = vmul.f32 %v2493, %v620
  %v2553 = vmul.f32 %v2497, %v620
  %v2554 = vmul.f32 %v2501, %v620
  %v2555 = vmul.f32 %v2505, %v620
  %v2556 = vmul.f32 %v2509, %v620
  %v2557 = vmul.f32 %v2513, %v620
  %v2558 = vmul.f32 %v2517, %v620
  %v2559 = vmul.f32 %v2521, %v620
  %v2560 = vmul.f32 %v2525, %v620
  %v2561 = vmul.f32 %v2529, %v620
  %v2562 = vmul.f32 %v2533, %v620
  %v2563 = vmul.f32 %v2537, %v620
  %v2564 = vmul.f32 %v2541, %v620
  %v2565 = vmul.f32 %v2545, %v620
  %v2566 = vmul.f32 %v2549, %v620
  %v2567 = vadd.f32 %v2471, %v2551
  %v2568 = vadd.f32 %v2472, %v2552
  %v2569 = vadd.f32 %v2473, %v2553
  %v2570 = vadd.f32 %v2474, %v2554
  %v2571 = vadd.f32 %v2475, %v2555
  %v2572 = vadd.f32 %v2476, %v2556
  %v2573 = vadd.f32 %v2477, %v2557
  %v2574 = vadd.f32 %v2478, %v2558
  %v2575 = vadd.f32 %v2479, %v2559
  %v2576 = vadd.f32 %v2480, %v2560
  %v2577 = vadd.f32 %v2481, %v2561
  %v2578 = vadd.f32 %v2482, %v2562
  %v2579 = vadd.f32 %v2483, %v2563
  %v2580 = vadd.f32 %v2484, %v2564
  %v2581 = vadd.f32 %v2485, %v2565
  %v2582 = vadd.f32 %v2486, %v2566
  %2583 = vset.pattern.permute.xlu0 6
  %2584 = vperm.xlu0 %2583, %v1975
  %v2585 = vpop.permute.xlu0 %2584
  %2587 = vset.pattern.permute.xlu0 6
  %2588 = vperm.xlu0 %2587, %v1976
  %v2589 = vpop.permute.xlu0 %2588
  %2591 = vset.pattern.permute.xlu0 6
  %2592 = vperm.xlu0 %2591, %v1977
  %v2593 = vpop.permute.xlu0 %2592
  %2595 = vset.pattern.permute.xlu0 6
  %2596 = vperm.xlu0 %2595, %v1978
  %v2597 = vpop.permute.xlu0 %2596
  %2599 = vset.pattern.permute.xlu0 6
  %2600 = vperm.xlu0 %2599, %v1979
  %v2601 = vpop.permute.xlu0 %2600
  %2603 = vset.pattern.permute.xlu0 6
  %2604 = vperm.xlu0 %2603, %v1980
  %v2605 = vpop.permute.xlu0 %2604
  %2607 = vset.pattern.permute.xlu0 6
  %2608 = vperm.xlu0 %2607, %v1981
  %v2609 = vpop.permute.xlu0 %2608
  %2611 = vset.pattern.permute.xlu0 6
  %2612 = vperm.xlu0 %2611, %v1982
  %v2613 = vpop.permute.xlu0 %2612
  %2615 = vset.pattern.permute.xlu0 6
  %2616 = vperm.xlu0 %2615, %v1983
  %v2617 = vpop.permute.xlu0 %2616
  %2619 = vset.pattern.permute.xlu0 6
  %2620 = vperm.xlu0 %2619, %v1984
  %v2621 = vpop.permute.xlu0 %2620
  %2623 = vset.pattern.permute.xlu0 6
  %2624 = vperm.xlu0 %2623, %v1985
  %v2625 = vpop.permute.xlu0 %2624
  %2627 = vset.pattern.permute.xlu0 6
  %2628 = vperm.xlu0 %2627, %v1986
  %v2629 = vpop.permute.xlu0 %2628
  %2631 = vset.pattern.permute.xlu0 6
  %2632 = vperm.xlu0 %2631, %v1987
  %v2633 = vpop.permute.xlu0 %2632
  %2635 = vset.pattern.permute.xlu0 6
  %2636 = vperm.xlu0 %2635, %v1988
  %v2637 = vpop.permute.xlu0 %2636
  %2639 = vset.pattern.permute.xlu0 6
  %2640 = vperm.xlu0 %2639, %v1989
  %v2641 = vpop.permute.xlu0 %2640
  %2643 = vset.pattern.permute.xlu0 6
  %2644 = vperm.xlu0 %2643, %v1990
  %v2645 = vpop.permute.xlu0 %2644
  %v2647 = vmul.f32 %v2585, %v720
  %v2648 = vmul.f32 %v2589, %v720
  %v2649 = vmul.f32 %v2593, %v720
  %v2650 = vmul.f32 %v2597, %v720
  %v2651 = vmul.f32 %v2601, %v720
  %v2652 = vmul.f32 %v2605, %v720
  %v2653 = vmul.f32 %v2609, %v720
  %v2654 = vmul.f32 %v2613, %v720
  %v2655 = vmul.f32 %v2617, %v720
  %v2656 = vmul.f32 %v2621, %v720
  %v2657 = vmul.f32 %v2625, %v720
  %v2658 = vmul.f32 %v2629, %v720
  %v2659 = vmul.f32 %v2633, %v720
  %v2660 = vmul.f32 %v2637, %v720
  %v2661 = vmul.f32 %v2641, %v720
  %v2662 = vmul.f32 %v2645, %v720
  %v2663 = vadd.f32 %v2567, %v2647
  %v2664 = vadd.f32 %v2568, %v2648
  %v2665 = vadd.f32 %v2569, %v2649
  %v2666 = vadd.f32 %v2570, %v2650
  %v2667 = vadd.f32 %v2571, %v2651
  %v2668 = vadd.f32 %v2572, %v2652
  %v2669 = vadd.f32 %v2573, %v2653
  %v2670 = vadd.f32 %v2574, %v2654
  %v2671 = vadd.f32 %v2575, %v2655
  %v2672 = vadd.f32 %v2576, %v2656
  %v2673 = vadd.f32 %v2577, %v2657
  %v2674 = vadd.f32 %v2578, %v2658
  %v2675 = vadd.f32 %v2579, %v2659
  %v2676 = vadd.f32 %v2580, %v2660
  %v2677 = vadd.f32 %v2581, %v2661
  %v2678 = vadd.f32 %v2582, %v2662
  %2679 = vset.pattern.permute.xlu0 7
  %2680 = vperm.xlu0 %2679, %v1975
  %v2681 = vpop.permute.xlu0 %2680
  %2683 = vset.pattern.permute.xlu0 7
  %2684 = vperm.xlu0 %2683, %v1976
  %v2685 = vpop.permute.xlu0 %2684
  %2687 = vset.pattern.permute.xlu0 7
  %2688 = vperm.xlu0 %2687, %v1977
  %v2689 = vpop.permute.xlu0 %2688
  %2691 = vset.pattern.permute.xlu0 7
  %2692 = vperm.xlu0 %2691, %v1978
  %v2693 = vpop.permute.xlu0 %2692
  %2695 = vset.pattern.permute.xlu0 7
  %2696 = vperm.xlu0 %2695, %v1979
  %v2697 = vpop.permute.xlu0 %2696
  %2699 = vset.pattern.permute.xlu0 7
  %2700 = vperm.xlu0 %2699, %v1980
  %v2701 = vpop.permute.xlu0 %2700
  %2703 = vset.pattern.permute.xlu0 7
  %2704 = vperm.xlu0 %2703, %v1981
  %v2705 = vpop.permute.xlu0 %2704
  %2707 = vset.pattern.permute.xlu0 7
  %2708 = vperm.xlu0 %2707, %v1982
  %v2709 = vpop.permute.xlu0 %2708
  %2711 = vset.pattern.permute.xlu0 7
  %2712 = vperm.xlu0 %2711, %v1983
  %v2713 = vpop.permute.xlu0 %2712
  %2715 = vset.pattern.permute.xlu0 7
  %2716 = vperm.xlu0 %2715, %v1984
  %v2717 = vpop.permute.xlu0 %2716
  %2719 = vset.pattern.permute.xlu0 7
  %2720 = vperm.xlu0 %2719, %v1985
  %v2721 = vpop.permute.xlu0 %2720
  %2723 = vset.pattern.permute.xlu0 7
  %2724 = vperm.xlu0 %2723, %v1986
  %v2725 = vpop.permute.xlu0 %2724
  %2727 = vset.pattern.permute.xlu0 7
  %2728 = vperm.xlu0 %2727, %v1987
  %v2729 = vpop.permute.xlu0 %2728
  %2731 = vset.pattern.permute.xlu0 7
  %2732 = vperm.xlu0 %2731, %v1988
  %v2733 = vpop.permute.xlu0 %2732
  %2735 = vset.pattern.permute.xlu0 7
  %2736 = vperm.xlu0 %2735, %v1989
  %v2737 = vpop.permute.xlu0 %2736
  %2739 = vset.pattern.permute.xlu0 7
  %2740 = vperm.xlu0 %2739, %v1990
  %v2741 = vpop.permute.xlu0 %2740
  %v2743 = vmul.f32 %v2681, %v820
  %v2744 = vmul.f32 %v2685, %v820
  %v2745 = vmul.f32 %v2689, %v820
  %v2746 = vmul.f32 %v2693, %v820
  %v2747 = vmul.f32 %v2697, %v820
  %v2748 = vmul.f32 %v2701, %v820
  %v2749 = vmul.f32 %v2705, %v820
  %v2750 = vmul.f32 %v2709, %v820
  %v2751 = vmul.f32 %v2713, %v820
  %v2752 = vmul.f32 %v2717, %v820
  %v2753 = vmul.f32 %v2721, %v820
  %v2754 = vmul.f32 %v2725, %v820
  %v2755 = vmul.f32 %v2729, %v820
  %v2756 = vmul.f32 %v2733, %v820
  %v2757 = vmul.f32 %v2737, %v820
  %v2758 = vmul.f32 %v2741, %v820
  %v2759 = vadd.f32 %v2663, %v2743
  %v2760 = vadd.f32 %v2664, %v2744
  %v2761 = vadd.f32 %v2665, %v2745
  %v2762 = vadd.f32 %v2666, %v2746
  %v2763 = vadd.f32 %v2667, %v2747
  %v2764 = vadd.f32 %v2668, %v2748
  %v2765 = vadd.f32 %v2669, %v2749
  %v2766 = vadd.f32 %v2670, %v2750
  %v2767 = vadd.f32 %v2671, %v2751
  %v2768 = vadd.f32 %v2672, %v2752
  %v2769 = vadd.f32 %v2673, %v2753
  %v2770 = vadd.f32 %v2674, %v2754
  %v2771 = vadd.f32 %v2675, %v2755
  %v2772 = vadd.f32 %v2676, %v2756
  %v2773 = vadd.f32 %v2677, %v2757
  %v2774 = vadd.f32 %v2678, %v2758
  %2775 = vset.pattern.permute.xlu0 8
  %2776 = vperm.xlu0 %2775, %v1975
  %v2777 = vpop.permute.xlu0 %2776
  %2779 = vset.pattern.permute.xlu0 8
  %2780 = vperm.xlu0 %2779, %v1976
  %v2781 = vpop.permute.xlu0 %2780
  %2783 = vset.pattern.permute.xlu0 8
  %2784 = vperm.xlu0 %2783, %v1977
  %v2785 = vpop.permute.xlu0 %2784
  %2787 = vset.pattern.permute.xlu0 8
  %2788 = vperm.xlu0 %2787, %v1978
  %v2789 = vpop.permute.xlu0 %2788
  %2791 = vset.pattern.permute.xlu0 8
  %2792 = vperm.xlu0 %2791, %v1979
  %v2793 = vpop.permute.xlu0 %2792
  %2795 = vset.pattern.permute.xlu0 8
  %2796 = vperm.xlu0 %2795, %v1980
  %v2797 = vpop.permute.xlu0 %2796
  %2799 = vset.pattern.permute.xlu0 8
  %2800 = vperm.xlu0 %2799, %v1981
  %v2801 = vpop.permute.xlu0 %2800
  %2803 = vset.pattern.permute.xlu0 8
  %2804 = vperm.xlu0 %2803, %v1982
  %v2805 = vpop.permute.xlu0 %2804
  %2807 = vset.pattern.permute.xlu0 8
  %2808 = vperm.xlu0 %2807, %v1983
  %v2809 = vpop.permute.xlu0 %2808
  %2811 = vset.pattern.permute.xlu0 8
  %2812 = vperm.xlu0 %2811, %v1984
  %v2813 = vpop.permute.xlu0 %2812
  %2815 = vset.pattern.permute.xlu0 8
  %2816 = vperm.xlu0 %2815, %v1985
  %v2817 = vpop.permute.xlu0 %2816
  %2819 = vset.pattern.permute.xlu0 8
  %2820 = vperm.xlu0 %2819, %v1986
  %v2821 = vpop.permute.xlu0 %2820
  %2823 = vset.pattern.permute.xlu0 8
  %2824 = vperm.xlu0 %2823, %v1987
  %v2825 = vpop.permute.xlu0 %2824
  %2827 = vset.pattern.permute.xlu0 8
  %2828 = vperm.xlu0 %2827, %v1988
  %v2829 = vpop.permute.xlu0 %2828
  %2831 = vset.pattern.permute.xlu0 8
  %2832 = vperm.xlu0 %2831, %v1989
  %v2833 = vpop.permute.xlu0 %2832
  %2835 = vset.pattern.permute.xlu0 8
  %2836 = vperm.xlu0 %2835, %v1990
  %v2837 = vpop.permute.xlu0 %2836
  %v2839 = vmul.f32 %v2777, %v920
  %v2840 = vmul.f32 %v2781, %v920
  %v2841 = vmul.f32 %v2785, %v920
  %v2842 = vmul.f32 %v2789, %v920
  %v2843 = vmul.f32 %v2793, %v920
  %v2844 = vmul.f32 %v2797, %v920
  %v2845 = vmul.f32 %v2801, %v920
  %v2846 = vmul.f32 %v2805, %v920
  %v2847 = vmul.f32 %v2809, %v920
  %v2848 = vmul.f32 %v2813, %v920
  %v2849 = vmul.f32 %v2817, %v920
  %v2850 = vmul.f32 %v2821, %v920
  %v2851 = vmul.f32 %v2825, %v920
  %v2852 = vmul.f32 %v2829, %v920
  %v2853 = vmul.f32 %v2833, %v920
  %v2854 = vmul.f32 %v2837, %v920
  %v2855 = vadd.f32 %v2759, %v2839
  %v2856 = vadd.f32 %v2760, %v2840
  %v2857 = vadd.f32 %v2761, %v2841
  %v2858 = vadd.f32 %v2762, %v2842
  %v2859 = vadd.f32 %v2763, %v2843
  %v2860 = vadd.f32 %v2764, %v2844
  %v2861 = vadd.f32 %v2765, %v2845
  %v2862 = vadd.f32 %v2766, %v2846
  %v2863 = vadd.f32 %v2767, %v2847
  %v2864 = vadd.f32 %v2768, %v2848
  %v2865 = vadd.f32 %v2769, %v2849
  %v2866 = vadd.f32 %v2770, %v2850
  %v2867 = vadd.f32 %v2771, %v2851
  %v2868 = vadd.f32 %v2772, %v2852
  %v2869 = vadd.f32 %v2773, %v2853
  %v2870 = vadd.f32 %v2774, %v2854
  %v2871 = vmul.f32 %v2855, %v957
  %v2872 = vmul.f32 %v2856, %v957
  %v2873 = vmul.f32 %v2857, %v957
  %v2874 = vmul.f32 %v2858, %v957
  %v2875 = vmul.f32 %v2859, %v957
  %v2876 = vmul.f32 %v2860, %v957
  %v2877 = vmul.f32 %v2861, %v957
  %v2878 = vmul.f32 %v2862, %v957
  %v2879 = vmul.f32 %v2863, %v957
  %v2880 = vmul.f32 %v2864, %v957
  %v2881 = vmul.f32 %v2865, %v957
  %v2882 = vmul.f32 %v2866, %v957
  %v2883 = vmul.f32 %v2867, %v957
  %v2884 = vmul.f32 %v2868, %v957
  %v2885 = vmul.f32 %v2869, %v957
  %v2886 = vmul.f32 %v2870, %v957
  %v2887 = vadd.f32 %v2871, %v979
  %v2888 = vadd.f32 %v2872, %v979
  %v2889 = vadd.f32 %v2873, %v979
  %v2890 = vadd.f32 %v2874, %v979
  %v2891 = vadd.f32 %v2875, %v979
  %v2892 = vadd.f32 %v2876, %v979
  %v2893 = vadd.f32 %v2877, %v979
  %v2894 = vadd.f32 %v2878, %v979
  %v2895 = vadd.f32 %v2879, %v979
  %v2896 = vadd.f32 %v2880, %v979
  %v2897 = vadd.f32 %v2881, %v979
  %v2898 = vadd.f32 %v2882, %v979
  %v2899 = vadd.f32 %v2883, %v979
  %v2900 = vadd.f32 %v2884, %v979
  %v2901 = vadd.f32 %v2885, %v979
  %v2902 = vadd.f32 %v2886, %v979
  %v2903 = vmax.f32 %v2887, 0.0
  %v2904 = vmax.f32 %v2888, 0.0
  %v2905 = vmax.f32 %v2889, 0.0
  %v2906 = vmax.f32 %v2890, 0.0
  %v2907 = vmax.f32 %v2891, 0.0
  %v2908 = vmax.f32 %v2892, 0.0
  %v2909 = vmax.f32 %v2893, 0.0
  %v2910 = vmax.f32 %v2894, 0.0
  %v2911 = vmax.f32 %v2895, 0.0
  %v2912 = vmax.f32 %v2896, 0.0
  %v2913 = vmax.f32 %v2897, 0.0
  %v2914 = vmax.f32 %v2898, 0.0
  %v2915 = vmax.f32 %v2899, 0.0
  %v2916 = vmax.f32 %v2900, 0.0
  %v2917 = vmax.f32 %v2901, 0.0
  %v2918 = vmax.f32 %v2902, 0.0
  %v2919 = vmax.f32 %v1958, %v2903
  %v2920 = vmax.f32 %v1959, %v2904
  %v2921 = vmax.f32 %v1960, %v2905
  %v2922 = vmax.f32 %v1961, %v2906
  %v2923 = vmax.f32 %v1962, %v2907
  %v2924 = vmax.f32 %v1963, %v2908
  %v2925 = vmax.f32 %v1964, %v2909
  %v2926 = vmax.f32 %v1965, %v2910
  %v2927 = vmax.f32 %v1966, %v2911
  %v2928 = vmax.f32 %v1967, %v2912
  %v2929 = vmax.f32 %v1968, %v2913
  %v2930 = vmax.f32 %v1969, %v2914
  %v2931 = vmax.f32 %v1970, %v2915
  %v2932 = vmax.f32 %v1971, %v2916
  %v2933 = vmax.f32 %v1972, %v2917
  %v2934 = vmax.f32 %v1973, %v2918
  %s2935 = scalar_lea.vmem %s0, 384
  %v2936 = vld [vmem:[%s2935] sm:$0xff]
  %v2937 = vld [vmem:[%s2935 + $0x8] sm:$0xff]
  %v2938 = vld [vmem:[%s2935 + $0x10] sm:$0xff]
  %v2939 = vld [vmem:[%s2935 + $0x18] sm:$0xff]
  %v2940 = vld [vmem:[%s2935 + $0x20] sm:$0xff]
  %v2941 = vld [vmem:[%s2935 + $0x28] sm:$0xff]
  %v2942 = vld [vmem:[%s2935 + $0x30] sm:$0xff]
  %v2943 = vld [vmem:[%s2935 + $0x38] sm:$0xff]
  %v2944 = vld [vmem:[%s2935 + $0x40] sm:$0xff]
  %v2945 = vld [vmem:[%s2935 + $0x48] sm:$0xff]
  %v2946 = vld [vmem:[%s2935 + $0x50] sm:$0xff]
  %v2947 = vld [vmem:[%s2935 + $0x58] sm:$0xff]
  %v2948 = vld [vmem:[%s2935 + $0x60] sm:$0xff]
  %v2949 = vld [vmem:[%s2935 + $0x68] sm:$0xff]
  %v2950 = vld [vmem:[%s2935 + $0x70] sm:$0xff]
  %v2951 = vld [vmem:[%s2935 + $0x78] sm:$0xff]
  %2953 = vset.pattern.permute.xlu0 0
  %2954 = vperm.xlu0 %2953, %v2936
  %v2955 = vpop.permute.xlu0 %2954
  %2958 = vset.pattern.permute.xlu0 0
  %2959 = vperm.xlu0 %2958, %v2937
  %v2960 = vpop.permute.xlu0 %2959
  %2963 = vset.pattern.permute.xlu0 0
  %2964 = vperm.xlu0 %2963, %v2938
  %v2965 = vpop.permute.xlu0 %2964
  %2968 = vset.pattern.permute.xlu0 0
  %2969 = vperm.xlu0 %2968, %v2939
  %v2970 = vpop.permute.xlu0 %2969
  %2973 = vset.pattern.permute.xlu0 0
  %2974 = vperm.xlu0 %2973, %v2940
  %v2975 = vpop.permute.xlu0 %2974
  %2978 = vset.pattern.permute.xlu0 0
  %2979 = vperm.xlu0 %2978, %v2941
  %v2980 = vpop.permute.xlu0 %2979
  %2983 = vset.pattern.permute.xlu0 0
  %2984 = vperm.xlu0 %2983, %v2942
  %v2985 = vpop.permute.xlu0 %2984
  %2988 = vset.pattern.permute.xlu0 0
  %2989 = vperm.xlu0 %2988, %v2943
  %v2990 = vpop.permute.xlu0 %2989
  %2993 = vset.pattern.permute.xlu0 0
  %2994 = vperm.xlu0 %2993, %v2944
  %v2995 = vpop.permute.xlu0 %2994
  %2998 = vset.pattern.permute.xlu0 0
  %2999 = vperm.xlu0 %2998, %v2945
  %v3000 = vpop.permute.xlu0 %2999
  %3003 = vset.pattern.permute.xlu0 0
  %3004 = vperm.xlu0 %3003, %v2946
  %v3005 = vpop.permute.xlu0 %3004
  %3008 = vset.pattern.permute.xlu0 0
  %3009 = vperm.xlu0 %3008, %v2947
  %v3010 = vpop.permute.xlu0 %3009
  %3013 = vset.pattern.permute.xlu0 0
  %3014 = vperm.xlu0 %3013, %v2948
  %v3015 = vpop.permute.xlu0 %3014
  %3018 = vset.pattern.permute.xlu0 0
  %3019 = vperm.xlu0 %3018, %v2949
  %v3020 = vpop.permute.xlu0 %3019
  %3023 = vset.pattern.permute.xlu0 0
  %3024 = vperm.xlu0 %3023, %v2950
  %v3025 = vpop.permute.xlu0 %3024
  %3028 = vset.pattern.permute.xlu0 0
  %3029 = vperm.xlu0 %3028, %v2951
  %v3030 = vpop.permute.xlu0 %3029
  %v3032 = vmul.f32 %v2955, %v120
  %v3033 = vmul.f32 %v2960, %v120
  %v3034 = vmul.f32 %v2965, %v120
  %v3035 = vmul.f32 %v2970, %v120
  %v3036 = vmul.f32 %v2975, %v120
  %v3037 = vmul.f32 %v2980, %v120
  %v3038 = vmul.f32 %v2985, %v120
  %v3039 = vmul.f32 %v2990, %v120
  %v3040 = vmul.f32 %v2995, %v120
  %v3041 = vmul.f32 %v3000, %v120
  %v3042 = vmul.f32 %v3005, %v120
  %v3043 = vmul.f32 %v3010, %v120
  %v3044 = vmul.f32 %v3015, %v120
  %v3045 = vmul.f32 %v3020, %v120
  %v3046 = vmul.f32 %v3025, %v120
  %v3047 = vmul.f32 %v3030, %v120
  %v3048 = vadd.f32 %v3032, 0.0
  %v3049 = vadd.f32 %v3033, 0.0
  %v3050 = vadd.f32 %v3034, 0.0
  %v3051 = vadd.f32 %v3035, 0.0
  %v3052 = vadd.f32 %v3036, 0.0
  %v3053 = vadd.f32 %v3037, 0.0
  %v3054 = vadd.f32 %v3038, 0.0
  %v3055 = vadd.f32 %v3039, 0.0
  %v3056 = vadd.f32 %v3040, 0.0
  %v3057 = vadd.f32 %v3041, 0.0
  %v3058 = vadd.f32 %v3042, 0.0
  %v3059 = vadd.f32 %v3043, 0.0
  %v3060 = vadd.f32 %v3044, 0.0
  %v3061 = vadd.f32 %v3045, 0.0
  %v3062 = vadd.f32 %v3046, 0.0
  %v3063 = vadd.f32 %v3047, 0.0
  %3064 = vset.pattern.permute.xlu0 1
  %3065 = vperm.xlu0 %3064, %v2936
  %v3066 = vpop.permute.xlu0 %3065
  %3068 = vset.pattern.permute.xlu0 1
  %3069 = vperm.xlu0 %3068, %v2937
  %v3070 = vpop.permute.xlu0 %3069
  %3072 = vset.pattern.permute.xlu0 1
  %3073 = vperm.xlu0 %3072, %v2938
  %v3074 = vpop.permute.xlu0 %3073
  %3076 = vset.pattern.permute.xlu0 1
  %3077 = vperm.xlu0 %3076, %v2939
  %v3078 = vpop.permute.xlu0 %3077
  %3080 = vset.pattern.permute.xlu0 1
  %3081 = vperm.xlu0 %3080, %v2940
  %v3082 = vpop.permute.xlu0 %3081
  %3084 = vset.pattern.permute.xlu0 1
  %3085 = vperm.xlu0 %3084, %v2941
  %v3086 = vpop.permute.xlu0 %3085
  %3088 = vset.pattern.permute.xlu0 1
  %3089 = vperm.xlu0 %3088, %v2942
  %v3090 = vpop.permute.xlu0 %3089
  %3092 = vset.pattern.permute.xlu0 1
  %3093 = vperm.xlu0 %3092, %v2943
  %v3094 = vpop.permute.xlu0 %3093
  %3096 = vset.pattern.permute.xlu0 1
  %3097 = vperm.xlu0 %3096, %v2944
  %v3098 = vpop.permute.xlu0 %3097
  %3100 = vset.pattern.permute.xlu0 1
  %3101 = vperm.xlu0 %3100, %v2945
  %v3102 = vpop.permute.xlu0 %3101
  %3104 = vset.pattern.permute.xlu0 1
  %3105 = vperm.xlu0 %3104, %v2946
  %v3106 = vpop.permute.xlu0 %3105
  %3108 = vset.pattern.permute.xlu0 1
  %3109 = vperm.xlu0 %3108, %v2947
  %v3110 = vpop.permute.xlu0 %3109
  %3112 = vset.pattern.permute.xlu0 1
  %3113 = vperm.xlu0 %3112, %v2948
  %v3114 = vpop.permute.xlu0 %3113
  %3116 = vset.pattern.permute.xlu0 1
  %3117 = vperm.xlu0 %3116, %v2949
  %v3118 = vpop.permute.xlu0 %3117
  %3120 = vset.pattern.permute.xlu0 1
  %3121 = vperm.xlu0 %3120, %v2950
  %v3122 = vpop.permute.xlu0 %3121
  %3124 = vset.pattern.permute.xlu0 1
  %3125 = vperm.xlu0 %3124, %v2951
  %v3126 = vpop.permute.xlu0 %3125
  %v3128 = vmul.f32 %v3066, %v220
  %v3129 = vmul.f32 %v3070, %v220
  %v3130 = vmul.f32 %v3074, %v220
  %v3131 = vmul.f32 %v3078, %v220
  %v3132 = vmul.f32 %v3082, %v220
  %v3133 = vmul.f32 %v3086, %v220
  %v3134 = vmul.f32 %v3090, %v220
  %v3135 = vmul.f32 %v3094, %v220
  %v3136 = vmul.f32 %v3098, %v220
  %v3137 = vmul.f32 %v3102, %v220
  %v3138 = vmul.f32 %v3106, %v220
  %v3139 = vmul.f32 %v3110, %v220
  %v3140 = vmul.f32 %v3114, %v220
  %v3141 = vmul.f32 %v3118, %v220
  %v3142 = vmul.f32 %v3122, %v220
  %v3143 = vmul.f32 %v3126, %v220
  %v3144 = vadd.f32 %v3048, %v3128
  %v3145 = vadd.f32 %v3049, %v3129
  %v3146 = vadd.f32 %v3050, %v3130
  %v3147 = vadd.f32 %v3051, %v3131
  %v3148 = vadd.f32 %v3052, %v3132
  %v3149 = vadd.f32 %v3053, %v3133
  %v3150 = vadd.f32 %v3054, %v3134
  %v3151 = vadd.f32 %v3055, %v3135
  %v3152 = vadd.f32 %v3056, %v3136
  %v3153 = vadd.f32 %v3057, %v3137
  %v3154 = vadd.f32 %v3058, %v3138
  %v3155 = vadd.f32 %v3059, %v3139
  %v3156 = vadd.f32 %v3060, %v3140
  %v3157 = vadd.f32 %v3061, %v3141
  %v3158 = vadd.f32 %v3062, %v3142
  %v3159 = vadd.f32 %v3063, %v3143
  %3160 = vset.pattern.permute.xlu0 2
  %3161 = vperm.xlu0 %3160, %v2936
  %v3162 = vpop.permute.xlu0 %3161
  %3164 = vset.pattern.permute.xlu0 2
  %3165 = vperm.xlu0 %3164, %v2937
  %v3166 = vpop.permute.xlu0 %3165
  %3168 = vset.pattern.permute.xlu0 2
  %3169 = vperm.xlu0 %3168, %v2938
  %v3170 = vpop.permute.xlu0 %3169
  %3172 = vset.pattern.permute.xlu0 2
  %3173 = vperm.xlu0 %3172, %v2939
  %v3174 = vpop.permute.xlu0 %3173
  %3176 = vset.pattern.permute.xlu0 2
  %3177 = vperm.xlu0 %3176, %v2940
  %v3178 = vpop.permute.xlu0 %3177
  %3180 = vset.pattern.permute.xlu0 2
  %3181 = vperm.xlu0 %3180, %v2941
  %v3182 = vpop.permute.xlu0 %3181
  %3184 = vset.pattern.permute.xlu0 2
  %3185 = vperm.xlu0 %3184, %v2942
  %v3186 = vpop.permute.xlu0 %3185
  %3188 = vset.pattern.permute.xlu0 2
  %3189 = vperm.xlu0 %3188, %v2943
  %v3190 = vpop.permute.xlu0 %3189
  %3192 = vset.pattern.permute.xlu0 2
  %3193 = vperm.xlu0 %3192, %v2944
  %v3194 = vpop.permute.xlu0 %3193
  %3196 = vset.pattern.permute.xlu0 2
  %3197 = vperm.xlu0 %3196, %v2945
  %v3198 = vpop.permute.xlu0 %3197
  %3200 = vset.pattern.permute.xlu0 2
  %3201 = vperm.xlu0 %3200, %v2946
  %v3202 = vpop.permute.xlu0 %3201
  %3204 = vset.pattern.permute.xlu0 2
  %3205 = vperm.xlu0 %3204, %v2947
  %v3206 = vpop.permute.xlu0 %3205
  %3208 = vset.pattern.permute.xlu0 2
  %3209 = vperm.xlu0 %3208, %v2948
  %v3210 = vpop.permute.xlu0 %3209
  %3212 = vset.pattern.permute.xlu0 2
  %3213 = vperm.xlu0 %3212, %v2949
  %v3214 = vpop.permute.xlu0 %3213
  %3216 = vset.pattern.permute.xlu0 2
  %3217 = vperm.xlu0 %3216, %v2950
  %v3218 = vpop.permute.xlu0 %3217
  %3220 = vset.pattern.permute.xlu0 2
  %3221 = vperm.xlu0 %3220, %v2951
  %v3222 = vpop.permute.xlu0 %3221
  %v3224 = vmul.f32 %v3162, %v320
  %v3225 = vmul.f32 %v3166, %v320
  %v3226 = vmul.f32 %v3170, %v320
  %v3227 = vmul.f32 %v3174, %v320
  %v3228 = vmul.f32 %v3178, %v320
  %v3229 = vmul.f32 %v3182, %v320
  %v3230 = vmul.f32 %v3186, %v320
  %v3231 = vmul.f32 %v3190, %v320
  %v3232 = vmul.f32 %v3194, %v320
  %v3233 = vmul.f32 %v3198, %v320
  %v3234 = vmul.f32 %v3202, %v320
  %v3235 = vmul.f32 %v3206, %v320
  %v3236 = vmul.f32 %v3210, %v320
  %v3237 = vmul.f32 %v3214, %v320
  %v3238 = vmul.f32 %v3218, %v320
  %v3239 = vmul.f32 %v3222, %v320
  %v3240 = vadd.f32 %v3144, %v3224
  %v3241 = vadd.f32 %v3145, %v3225
  %v3242 = vadd.f32 %v3146, %v3226
  %v3243 = vadd.f32 %v3147, %v3227
  %v3244 = vadd.f32 %v3148, %v3228
  %v3245 = vadd.f32 %v3149, %v3229
  %v3246 = vadd.f32 %v3150, %v3230
  %v3247 = vadd.f32 %v3151, %v3231
  %v3248 = vadd.f32 %v3152, %v3232
  %v3249 = vadd.f32 %v3153, %v3233
  %v3250 = vadd.f32 %v3154, %v3234
  %v3251 = vadd.f32 %v3155, %v3235
  %v3252 = vadd.f32 %v3156, %v3236
  %v3253 = vadd.f32 %v3157, %v3237
  %v3254 = vadd.f32 %v3158, %v3238
  %v3255 = vadd.f32 %v3159, %v3239
  %3256 = vset.pattern.permute.xlu0 3
  %3257 = vperm.xlu0 %3256, %v2936
  %v3258 = vpop.permute.xlu0 %3257
  %3260 = vset.pattern.permute.xlu0 3
  %3261 = vperm.xlu0 %3260, %v2937
  %v3262 = vpop.permute.xlu0 %3261
  %3264 = vset.pattern.permute.xlu0 3
  %3265 = vperm.xlu0 %3264, %v2938
  %v3266 = vpop.permute.xlu0 %3265
  %3268 = vset.pattern.permute.xlu0 3
  %3269 = vperm.xlu0 %3268, %v2939
  %v3270 = vpop.permute.xlu0 %3269
  %3272 = vset.pattern.permute.xlu0 3
  %3273 = vperm.xlu0 %3272, %v2940
  %v3274 = vpop.permute.xlu0 %3273
  %3276 = vset.pattern.permute.xlu0 3
  %3277 = vperm.xlu0 %3276, %v2941
  %v3278 = vpop.permute.xlu0 %3277
  %3280 = vset.pattern.permute.xlu0 3
  %3281 = vperm.xlu0 %3280, %v2942
  %v3282 = vpop.permute.xlu0 %3281
  %3284 = vset.pattern.permute.xlu0 3
  %3285 = vperm.xlu0 %3284, %v2943
  %v3286 = vpop.permute.xlu0 %3285
  %3288 = vset.pattern.permute.xlu0 3
  %3289 = vperm.xlu0 %3288, %v2944
  %v3290 = vpop.permute.xlu0 %3289
  %3292 = vset.pattern.permute.xlu0 3
  %3293 = vperm.xlu0 %3292, %v2945
  %v3294 = vpop.permute.xlu0 %3293
  %3296 = vset.pattern.permute.xlu0 3
  %3297 = vperm.xlu0 %3296, %v2946
  %v3298 = vpop.permute.xlu0 %3297
  %3300 = vset.pattern.permute.xlu0 3
  %3301 = vperm.xlu0 %3300, %v2947
  %v3302 = vpop.permute.xlu0 %3301
  %3304 = vset.pattern.permute.xlu0 3
  %3305 = vperm.xlu0 %3304, %v2948
  %v3306 = vpop.permute.xlu0 %3305
  %3308 = vset.pattern.permute.xlu0 3
  %3309 = vperm.xlu0 %3308, %v2949
  %v3310 = vpop.permute.xlu0 %3309
  %3312 = vset.pattern.permute.xlu0 3
  %3313 = vperm.xlu0 %3312, %v2950
  %v3314 = vpop.permute.xlu0 %3313
  %3316 = vset.pattern.permute.xlu0 3
  %3317 = vperm.xlu0 %3316, %v2951
  %v3318 = vpop.permute.xlu0 %3317
  %v3320 = vmul.f32 %v3258, %v420
  %v3321 = vmul.f32 %v3262, %v420
  %v3322 = vmul.f32 %v3266, %v420
  %v3323 = vmul.f32 %v3270, %v420
  %v3324 = vmul.f32 %v3274, %v420
  %v3325 = vmul.f32 %v3278, %v420
  %v3326 = vmul.f32 %v3282, %v420
  %v3327 = vmul.f32 %v3286, %v420
  %v3328 = vmul.f32 %v3290, %v420
  %v3329 = vmul.f32 %v3294, %v420
  %v3330 = vmul.f32 %v3298, %v420
  %v3331 = vmul.f32 %v3302, %v420
  %v3332 = vmul.f32 %v3306, %v420
  %v3333 = vmul.f32 %v3310, %v420
  %v3334 = vmul.f32 %v3314, %v420
  %v3335 = vmul.f32 %v3318, %v420
  %v3336 = vadd.f32 %v3240, %v3320
  %v3337 = vadd.f32 %v3241, %v3321
  %v3338 = vadd.f32 %v3242, %v3322
  %v3339 = vadd.f32 %v3243, %v3323
  %v3340 = vadd.f32 %v3244, %v3324
  %v3341 = vadd.f32 %v3245, %v3325
  %v3342 = vadd.f32 %v3246, %v3326
  %v3343 = vadd.f32 %v3247, %v3327
  %v3344 = vadd.f32 %v3248, %v3328
  %v3345 = vadd.f32 %v3249, %v3329
  %v3346 = vadd.f32 %v3250, %v3330
  %v3347 = vadd.f32 %v3251, %v3331
  %v3348 = vadd.f32 %v3252, %v3332
  %v3349 = vadd.f32 %v3253, %v3333
  %v3350 = vadd.f32 %v3254, %v3334
  %v3351 = vadd.f32 %v3255, %v3335
  %3352 = vset.pattern.permute.xlu0 4
  %3353 = vperm.xlu0 %3352, %v2936
  %v3354 = vpop.permute.xlu0 %3353
  %3356 = vset.pattern.permute.xlu0 4
  %3357 = vperm.xlu0 %3356, %v2937
  %v3358 = vpop.permute.xlu0 %3357
  %3360 = vset.pattern.permute.xlu0 4
  %3361 = vperm.xlu0 %3360, %v2938
  %v3362 = vpop.permute.xlu0 %3361
  %3364 = vset.pattern.permute.xlu0 4
  %3365 = vperm.xlu0 %3364, %v2939
  %v3366 = vpop.permute.xlu0 %3365
  %3368 = vset.pattern.permute.xlu0 4
  %3369 = vperm.xlu0 %3368, %v2940
  %v3370 = vpop.permute.xlu0 %3369
  %3372 = vset.pattern.permute.xlu0 4
  %3373 = vperm.xlu0 %3372, %v2941
  %v3374 = vpop.permute.xlu0 %3373
  %3376 = vset.pattern.permute.xlu0 4
  %3377 = vperm.xlu0 %3376, %v2942
  %v3378 = vpop.permute.xlu0 %3377
  %3380 = vset.pattern.permute.xlu0 4
  %3381 = vperm.xlu0 %3380, %v2943
  %v3382 = vpop.permute.xlu0 %3381
  %3384 = vset.pattern.permute.xlu0 4
  %3385 = vperm.xlu0 %3384, %v2944
  %v3386 = vpop.permute.xlu0 %3385
  %3388 = vset.pattern.permute.xlu0 4
  %3389 = vperm.xlu0 %3388, %v2945
  %v3390 = vpop.permute.xlu0 %3389
  %3392 = vset.pattern.permute.xlu0 4
  %3393 = vperm.xlu0 %3392, %v2946
  %v3394 = vpop.permute.xlu0 %3393
  %3396 = vset.pattern.permute.xlu0 4
  %3397 = vperm.xlu0 %3396, %v2947
  %v3398 = vpop.permute.xlu0 %3397
  %3400 = vset.pattern.permute.xlu0 4
  %3401 = vperm.xlu0 %3400, %v2948
  %v3402 = vpop.permute.xlu0 %3401
  %3404 = vset.pattern.permute.xlu0 4
  %3405 = vperm.xlu0 %3404, %v2949
  %v3406 = vpop.permute.xlu0 %3405
  %3408 = vset.pattern.permute.xlu0 4
  %3409 = vperm.xlu0 %3408, %v2950
  %v3410 = vpop.permute.xlu0 %3409
  %3412 = vset.pattern.permute.xlu0 4
  %3413 = vperm.xlu0 %3412, %v2951
  %v3414 = vpop.permute.xlu0 %3413
  %v3416 = vmul.f32 %v3354, %v520
  %v3417 = vmul.f32 %v3358, %v520
  %v3418 = vmul.f32 %v3362, %v520
  %v3419 = vmul.f32 %v3366, %v520
  %v3420 = vmul.f32 %v3370, %v520
  %v3421 = vmul.f32 %v3374, %v520
  %v3422 = vmul.f32 %v3378, %v520
  %v3423 = vmul.f32 %v3382, %v520
  %v3424 = vmul.f32 %v3386, %v520
  %v3425 = vmul.f32 %v3390, %v520
  %v3426 = vmul.f32 %v3394, %v520
  %v3427 = vmul.f32 %v3398, %v520
  %v3428 = vmul.f32 %v3402, %v520
  %v3429 = vmul.f32 %v3406, %v520
  %v3430 = vmul.f32 %v3410, %v520
  %v3431 = vmul.f32 %v3414, %v520
  %v3432 = vadd.f32 %v3336, %v3416
  %v3433 = vadd.f32 %v3337, %v3417
  %v3434 = vadd.f32 %v3338, %v3418
  %v3435 = vadd.f32 %v3339, %v3419
  %v3436 = vadd.f32 %v3340, %v3420
  %v3437 = vadd.f32 %v3341, %v3421
  %v3438 = vadd.f32 %v3342, %v3422
  %v3439 = vadd.f32 %v3343, %v3423
  %v3440 = vadd.f32 %v3344, %v3424
  %v3441 = vadd.f32 %v3345, %v3425
  %v3442 = vadd.f32 %v3346, %v3426
  %v3443 = vadd.f32 %v3347, %v3427
  %v3444 = vadd.f32 %v3348, %v3428
  %v3445 = vadd.f32 %v3349, %v3429
  %v3446 = vadd.f32 %v3350, %v3430
  %v3447 = vadd.f32 %v3351, %v3431
  %3448 = vset.pattern.permute.xlu0 5
  %3449 = vperm.xlu0 %3448, %v2936
  %v3450 = vpop.permute.xlu0 %3449
  %3452 = vset.pattern.permute.xlu0 5
  %3453 = vperm.xlu0 %3452, %v2937
  %v3454 = vpop.permute.xlu0 %3453
  %3456 = vset.pattern.permute.xlu0 5
  %3457 = vperm.xlu0 %3456, %v2938
  %v3458 = vpop.permute.xlu0 %3457
  %3460 = vset.pattern.permute.xlu0 5
  %3461 = vperm.xlu0 %3460, %v2939
  %v3462 = vpop.permute.xlu0 %3461
  %3464 = vset.pattern.permute.xlu0 5
  %3465 = vperm.xlu0 %3464, %v2940
  %v3466 = vpop.permute.xlu0 %3465
  %3468 = vset.pattern.permute.xlu0 5
  %3469 = vperm.xlu0 %3468, %v2941
  %v3470 = vpop.permute.xlu0 %3469
  %3472 = vset.pattern.permute.xlu0 5
  %3473 = vperm.xlu0 %3472, %v2942
  %v3474 = vpop.permute.xlu0 %3473
  %3476 = vset.pattern.permute.xlu0 5
  %3477 = vperm.xlu0 %3476, %v2943
  %v3478 = vpop.permute.xlu0 %3477
  %3480 = vset.pattern.permute.xlu0 5
  %3481 = vperm.xlu0 %3480, %v2944
  %v3482 = vpop.permute.xlu0 %3481
  %3484 = vset.pattern.permute.xlu0 5
  %3485 = vperm.xlu0 %3484, %v2945
  %v3486 = vpop.permute.xlu0 %3485
  %3488 = vset.pattern.permute.xlu0 5
  %3489 = vperm.xlu0 %3488, %v2946
  %v3490 = vpop.permute.xlu0 %3489
  %3492 = vset.pattern.permute.xlu0 5
  %3493 = vperm.xlu0 %3492, %v2947
  %v3494 = vpop.permute.xlu0 %3493
  %3496 = vset.pattern.permute.xlu0 5
  %3497 = vperm.xlu0 %3496, %v2948
  %v3498 = vpop.permute.xlu0 %3497
  %3500 = vset.pattern.permute.xlu0 5
  %3501 = vperm.xlu0 %3500, %v2949
  %v3502 = vpop.permute.xlu0 %3501
  %3504 = vset.pattern.permute.xlu0 5
  %3505 = vperm.xlu0 %3504, %v2950
  %v3506 = vpop.permute.xlu0 %3505
  %3508 = vset.pattern.permute.xlu0 5
  %3509 = vperm.xlu0 %3508, %v2951
  %v3510 = vpop.permute.xlu0 %3509
  %v3512 = vmul.f32 %v3450, %v620
  %v3513 = vmul.f32 %v3454, %v620
  %v3514 = vmul.f32 %v3458, %v620
  %v3515 = vmul.f32 %v3462, %v620
  %v3516 = vmul.f32 %v3466, %v620
  %v3517 = vmul.f32 %v3470, %v620
  %v3518 = vmul.f32 %v3474, %v620
  %v3519 = vmul.f32 %v3478, %v620
  %v3520 = vmul.f32 %v3482, %v620
  %v3521 = vmul.f32 %v3486, %v620
  %v3522 = vmul.f32 %v3490, %v620
  %v3523 = vmul.f32 %v3494, %v620
  %v3524 = vmul.f32 %v3498, %v620
  %v3525 = vmul.f32 %v3502, %v620
  %v3526 = vmul.f32 %v3506, %v620
  %v3527 = vmul.f32 %v3510, %v620
  %v3528 = vadd.f32 %v3432, %v3512
  %v3529 = vadd.f32 %v3433, %v3513
  %v3530 = vadd.f32 %v3434, %v3514
  %v3531 = vadd.f32 %v3435, %v3515
  %v3532 = vadd.f32 %v3436, %v3516
  %v3533 = vadd.f32 %v3437, %v3517
  %v3534 = vadd.f32 %v3438, %v3518
  %v3535 = vadd.f32 %v3439, %v3519
  %v3536 = vadd.f32 %v3440, %v3520
  %v3537 = vadd.f32 %v3441, %v3521
  %v3538 = vadd.f32 %v3442, %v3522
  %v3539 = vadd.f32 %v3443, %v3523
  %v3540 = vadd.f32 %v3444, %v3524
  %v3541 = vadd.f32 %v3445, %v3525
  %v3542 = vadd.f32 %v3446, %v3526
  %v3543 = vadd.f32 %v3447, %v3527
  %3544 = vset.pattern.permute.xlu0 6
  %3545 = vperm.xlu0 %3544, %v2936
  %v3546 = vpop.permute.xlu0 %3545
  %3548 = vset.pattern.permute.xlu0 6
  %3549 = vperm.xlu0 %3548, %v2937
  %v3550 = vpop.permute.xlu0 %3549
  %3552 = vset.pattern.permute.xlu0 6
  %3553 = vperm.xlu0 %3552, %v2938
  %v3554 = vpop.permute.xlu0 %3553
  %3556 = vset.pattern.permute.xlu0 6
  %3557 = vperm.xlu0 %3556, %v2939
  %v3558 = vpop.permute.xlu0 %3557
  %3560 = vset.pattern.permute.xlu0 6
  %3561 = vperm.xlu0 %3560, %v2940
  %v3562 = vpop.permute.xlu0 %3561
  %3564 = vset.pattern.permute.xlu0 6
  %3565 = vperm.xlu0 %3564, %v2941
  %v3566 = vpop.permute.xlu0 %3565
  %3568 = vset.pattern.permute.xlu0 6
  %3569 = vperm.xlu0 %3568, %v2942
  %v3570 = vpop.permute.xlu0 %3569
  %3572 = vset.pattern.permute.xlu0 6
  %3573 = vperm.xlu0 %3572, %v2943
  %v3574 = vpop.permute.xlu0 %3573
  %3576 = vset.pattern.permute.xlu0 6
  %3577 = vperm.xlu0 %3576, %v2944
  %v3578 = vpop.permute.xlu0 %3577
  %3580 = vset.pattern.permute.xlu0 6
  %3581 = vperm.xlu0 %3580, %v2945
  %v3582 = vpop.permute.xlu0 %3581
  %3584 = vset.pattern.permute.xlu0 6
  %3585 = vperm.xlu0 %3584, %v2946
  %v3586 = vpop.permute.xlu0 %3585
  %3588 = vset.pattern.permute.xlu0 6
  %3589 = vperm.xlu0 %3588, %v2947
  %v3590 = vpop.permute.xlu0 %3589
  %3592 = vset.pattern.permute.xlu0 6
  %3593 = vperm.xlu0 %3592, %v2948
  %v3594 = vpop.permute.xlu0 %3593
  %3596 = vset.pattern.permute.xlu0 6
  %3597 = vperm.xlu0 %3596, %v2949
  %v3598 = vpop.permute.xlu0 %3597
  %3600 = vset.pattern.permute.xlu0 6
  %3601 = vperm.xlu0 %3600, %v2950
  %v3602 = vpop.permute.xlu0 %3601
  %3604 = vset.pattern.permute.xlu0 6
  %3605 = vperm.xlu0 %3604, %v2951
  %v3606 = vpop.permute.xlu0 %3605
  %v3608 = vmul.f32 %v3546, %v720
  %v3609 = vmul.f32 %v3550, %v720
  %v3610 = vmul.f32 %v3554, %v720
  %v3611 = vmul.f32 %v3558, %v720
  %v3612 = vmul.f32 %v3562, %v720
  %v3613 = vmul.f32 %v3566, %v720
  %v3614 = vmul.f32 %v3570, %v720
  %v3615 = vmul.f32 %v3574, %v720
  %v3616 = vmul.f32 %v3578, %v720
  %v3617 = vmul.f32 %v3582, %v720
  %v3618 = vmul.f32 %v3586, %v720
  %v3619 = vmul.f32 %v3590, %v720
  %v3620 = vmul.f32 %v3594, %v720
  %v3621 = vmul.f32 %v3598, %v720
  %v3622 = vmul.f32 %v3602, %v720
  %v3623 = vmul.f32 %v3606, %v720
  %v3624 = vadd.f32 %v3528, %v3608
  %v3625 = vadd.f32 %v3529, %v3609
  %v3626 = vadd.f32 %v3530, %v3610
  %v3627 = vadd.f32 %v3531, %v3611
  %v3628 = vadd.f32 %v3532, %v3612
  %v3629 = vadd.f32 %v3533, %v3613
  %v3630 = vadd.f32 %v3534, %v3614
  %v3631 = vadd.f32 %v3535, %v3615
  %v3632 = vadd.f32 %v3536, %v3616
  %v3633 = vadd.f32 %v3537, %v3617
  %v3634 = vadd.f32 %v3538, %v3618
  %v3635 = vadd.f32 %v3539, %v3619
  %v3636 = vadd.f32 %v3540, %v3620
  %v3637 = vadd.f32 %v3541, %v3621
  %v3638 = vadd.f32 %v3542, %v3622
  %v3639 = vadd.f32 %v3543, %v3623
  %3640 = vset.pattern.permute.xlu0 7
  %3641 = vperm.xlu0 %3640, %v2936
  %v3642 = vpop.permute.xlu0 %3641
  %3644 = vset.pattern.permute.xlu0 7
  %3645 = vperm.xlu0 %3644, %v2937
  %v3646 = vpop.permute.xlu0 %3645
  %3648 = vset.pattern.permute.xlu0 7
  %3649 = vperm.xlu0 %3648, %v2938
  %v3650 = vpop.permute.xlu0 %3649
  %3652 = vset.pattern.permute.xlu0 7
  %3653 = vperm.xlu0 %3652, %v2939
  %v3654 = vpop.permute.xlu0 %3653
  %3656 = vset.pattern.permute.xlu0 7
  %3657 = vperm.xlu0 %3656, %v2940
  %v3658 = vpop.permute.xlu0 %3657
  %3660 = vset.pattern.permute.xlu0 7
  %3661 = vperm.xlu0 %3660, %v2941
  %v3662 = vpop.permute.xlu0 %3661
  %3664 = vset.pattern.permute.xlu0 7
  %3665 = vperm.xlu0 %3664, %v2942
  %v3666 = vpop.permute.xlu0 %3665
  %3668 = vset.pattern.permute.xlu0 7
  %3669 = vperm.xlu0 %3668, %v2943
  %v3670 = vpop.permute.xlu0 %3669
  %3672 = vset.pattern.permute.xlu0 7
  %3673 = vperm.xlu0 %3672, %v2944
  %v3674 = vpop.permute.xlu0 %3673
  %3676 = vset.pattern.permute.xlu0 7
  %3677 = vperm.xlu0 %3676, %v2945
  %v3678 = vpop.permute.xlu0 %3677
  %3680 = vset.pattern.permute.xlu0 7
  %3681 = vperm.xlu0 %3680, %v2946
  %v3682 = vpop.permute.xlu0 %3681
  %3684 = vset.pattern.permute.xlu0 7
  %3685 = vperm.xlu0 %3684, %v2947
  %v3686 = vpop.permute.xlu0 %3685
  %3688 = vset.pattern.permute.xlu0 7
  %3689 = vperm.xlu0 %3688, %v2948
  %v3690 = vpop.permute.xlu0 %3689
  %3692 = vset.pattern.permute.xlu0 7
  %3693 = vperm.xlu0 %3692, %v2949
  %v3694 = vpop.permute.xlu0 %3693
  %3696 = vset.pattern.permute.xlu0 7
  %3697 = vperm.xlu0 %3696, %v2950
  %v3698 = vpop.permute.xlu0 %3697
  %3700 = vset.pattern.permute.xlu0 7
  %3701 = vperm.xlu0 %3700, %v2951
  %v3702 = vpop.permute.xlu0 %3701
  %v3704 = vmul.f32 %v3642, %v820
  %v3705 = vmul.f32 %v3646, %v820
  %v3706 = vmul.f32 %v3650, %v820
  %v3707 = vmul.f32 %v3654, %v820
  %v3708 = vmul.f32 %v3658, %v820
  %v3709 = vmul.f32 %v3662, %v820
  %v3710 = vmul.f32 %v3666, %v820
  %v3711 = vmul.f32 %v3670, %v820
  %v3712 = vmul.f32 %v3674, %v820
  %v3713 = vmul.f32 %v3678, %v820
  %v3714 = vmul.f32 %v3682, %v820
  %v3715 = vmul.f32 %v3686, %v820
  %v3716 = vmul.f32 %v3690, %v820
  %v3717 = vmul.f32 %v3694, %v820
  %v3718 = vmul.f32 %v3698, %v820
  %v3719 = vmul.f32 %v3702, %v820
  %v3720 = vadd.f32 %v3624, %v3704
  %v3721 = vadd.f32 %v3625, %v3705
  %v3722 = vadd.f32 %v3626, %v3706
  %v3723 = vadd.f32 %v3627, %v3707
  %v3724 = vadd.f32 %v3628, %v3708
  %v3725 = vadd.f32 %v3629, %v3709
  %v3726 = vadd.f32 %v3630, %v3710
  %v3727 = vadd.f32 %v3631, %v3711
  %v3728 = vadd.f32 %v3632, %v3712
  %v3729 = vadd.f32 %v3633, %v3713
  %v3730 = vadd.f32 %v3634, %v3714
  %v3731 = vadd.f32 %v3635, %v3715
  %v3732 = vadd.f32 %v3636, %v3716
  %v3733 = vadd.f32 %v3637, %v3717
  %v3734 = vadd.f32 %v3638, %v3718
  %v3735 = vadd.f32 %v3639, %v3719
  %3736 = vset.pattern.permute.xlu0 8
  %3737 = vperm.xlu0 %3736, %v2936
  %v3738 = vpop.permute.xlu0 %3737
  %3740 = vset.pattern.permute.xlu0 8
  %3741 = vperm.xlu0 %3740, %v2937
  %v3742 = vpop.permute.xlu0 %3741
  %3744 = vset.pattern.permute.xlu0 8
  %3745 = vperm.xlu0 %3744, %v2938
  %v3746 = vpop.permute.xlu0 %3745
  %3748 = vset.pattern.permute.xlu0 8
  %3749 = vperm.xlu0 %3748, %v2939
  %v3750 = vpop.permute.xlu0 %3749
  %3752 = vset.pattern.permute.xlu0 8
  %3753 = vperm.xlu0 %3752, %v2940
  %v3754 = vpop.permute.xlu0 %3753
  %3756 = vset.pattern.permute.xlu0 8
  %3757 = vperm.xlu0 %3756, %v2941
  %v3758 = vpop.permute.xlu0 %3757
  %3760 = vset.pattern.permute.xlu0 8
  %3761 = vperm.xlu0 %3760, %v2942
  %v3762 = vpop.permute.xlu0 %3761
  %3764 = vset.pattern.permute.xlu0 8
  %3765 = vperm.xlu0 %3764, %v2943
  %v3766 = vpop.permute.xlu0 %3765
  %3768 = vset.pattern.permute.xlu0 8
  %3769 = vperm.xlu0 %3768, %v2944
  %v3770 = vpop.permute.xlu0 %3769
  %3772 = vset.pattern.permute.xlu0 8
  %3773 = vperm.xlu0 %3772, %v2945
  %v3774 = vpop.permute.xlu0 %3773
  %3776 = vset.pattern.permute.xlu0 8
  %3777 = vperm.xlu0 %3776, %v2946
  %v3778 = vpop.permute.xlu0 %3777
  %3780 = vset.pattern.permute.xlu0 8
  %3781 = vperm.xlu0 %3780, %v2947
  %v3782 = vpop.permute.xlu0 %3781
  %3784 = vset.pattern.permute.xlu0 8
  %3785 = vperm.xlu0 %3784, %v2948
  %v3786 = vpop.permute.xlu0 %3785
  %3788 = vset.pattern.permute.xlu0 8
  %3789 = vperm.xlu0 %3788, %v2949
  %v3790 = vpop.permute.xlu0 %3789
  %3792 = vset.pattern.permute.xlu0 8
  %3793 = vperm.xlu0 %3792, %v2950
  %v3794 = vpop.permute.xlu0 %3793
  %3796 = vset.pattern.permute.xlu0 8
  %3797 = vperm.xlu0 %3796, %v2951
  %v3798 = vpop.permute.xlu0 %3797
  %v3800 = vmul.f32 %v3738, %v920
  %v3801 = vmul.f32 %v3742, %v920
  %v3802 = vmul.f32 %v3746, %v920
  %v3803 = vmul.f32 %v3750, %v920
  %v3804 = vmul.f32 %v3754, %v920
  %v3805 = vmul.f32 %v3758, %v920
  %v3806 = vmul.f32 %v3762, %v920
  %v3807 = vmul.f32 %v3766, %v920
  %v3808 = vmul.f32 %v3770, %v920
  %v3809 = vmul.f32 %v3774, %v920
  %v3810 = vmul.f32 %v3778, %v920
  %v3811 = vmul.f32 %v3782, %v920
  %v3812 = vmul.f32 %v3786, %v920
  %v3813 = vmul.f32 %v3790, %v920
  %v3814 = vmul.f32 %v3794, %v920
  %v3815 = vmul.f32 %v3798, %v920
  %v3816 = vadd.f32 %v3720, %v3800
  %v3817 = vadd.f32 %v3721, %v3801
  %v3818 = vadd.f32 %v3722, %v3802
  %v3819 = vadd.f32 %v3723, %v3803
  %v3820 = vadd.f32 %v3724, %v3804
  %v3821 = vadd.f32 %v3725, %v3805
  %v3822 = vadd.f32 %v3726, %v3806
  %v3823 = vadd.f32 %v3727, %v3807
  %v3824 = vadd.f32 %v3728, %v3808
  %v3825 = vadd.f32 %v3729, %v3809
  %v3826 = vadd.f32 %v3730, %v3810
  %v3827 = vadd.f32 %v3731, %v3811
  %v3828 = vadd.f32 %v3732, %v3812
  %v3829 = vadd.f32 %v3733, %v3813
  %v3830 = vadd.f32 %v3734, %v3814
  %v3831 = vadd.f32 %v3735, %v3815
  %v3832 = vmul.f32 %v3816, %v957
  %v3833 = vmul.f32 %v3817, %v957
  %v3834 = vmul.f32 %v3818, %v957
  %v3835 = vmul.f32 %v3819, %v957
  %v3836 = vmul.f32 %v3820, %v957
  %v3837 = vmul.f32 %v3821, %v957
  %v3838 = vmul.f32 %v3822, %v957
  %v3839 = vmul.f32 %v3823, %v957
  %v3840 = vmul.f32 %v3824, %v957
  %v3841 = vmul.f32 %v3825, %v957
  %v3842 = vmul.f32 %v3826, %v957
  %v3843 = vmul.f32 %v3827, %v957
  %v3844 = vmul.f32 %v3828, %v957
  %v3845 = vmul.f32 %v3829, %v957
  %v3846 = vmul.f32 %v3830, %v957
  %v3847 = vmul.f32 %v3831, %v957
  %v3848 = vadd.f32 %v3832, %v979
  %v3849 = vadd.f32 %v3833, %v979
  %v3850 = vadd.f32 %v3834, %v979
  %v3851 = vadd.f32 %v3835, %v979
  %v3852 = vadd.f32 %v3836, %v979
  %v3853 = vadd.f32 %v3837, %v979
  %v3854 = vadd.f32 %v3838, %v979
  %v3855 = vadd.f32 %v3839, %v979
  %v3856 = vadd.f32 %v3840, %v979
  %v3857 = vadd.f32 %v3841, %v979
  %v3858 = vadd.f32 %v3842, %v979
  %v3859 = vadd.f32 %v3843, %v979
  %v3860 = vadd.f32 %v3844, %v979
  %v3861 = vadd.f32 %v3845, %v979
  %v3862 = vadd.f32 %v3846, %v979
  %v3863 = vadd.f32 %v3847, %v979
  %v3864 = vmax.f32 %v3848, 0.0
  %v3865 = vmax.f32 %v3849, 0.0
  %v3866 = vmax.f32 %v3850, 0.0
  %v3867 = vmax.f32 %v3851, 0.0
  %v3868 = vmax.f32 %v3852, 0.0
  %v3869 = vmax.f32 %v3853, 0.0
  %v3870 = vmax.f32 %v3854, 0.0
  %v3871 = vmax.f32 %v3855, 0.0
  %v3872 = vmax.f32 %v3856, 0.0
  %v3873 = vmax.f32 %v3857, 0.0
  %v3874 = vmax.f32 %v3858, 0.0
  %v3875 = vmax.f32 %v3859, 0.0
  %v3876 = vmax.f32 %v3860, 0.0
  %v3877 = vmax.f32 %v3861, 0.0
  %v3878 = vmax.f32 %v3862, 0.0
  %v3879 = vmax.f32 %v3863, 0.0
  %v3880 = vmax.f32 %v2919, %v3864
  %v3881 = vmax.f32 %v2920, %v3865
  %v3882 = vmax.f32 %v2921, %v3866
  %v3883 = vmax.f32 %v2922, %v3867
  %v3884 = vmax.f32 %v2923, %v3868
  %v3885 = vmax.f32 %v2924, %v3869
  %v3886 = vmax.f32 %v2925, %v3870
  %v3887 = vmax.f32 %v2926, %v3871
  %v3888 = vmax.f32 %v2927, %v3872
  %v3889 = vmax.f32 %v2928, %v3873
  %v3890 = vmax.f32 %v2929, %v3874
  %v3891 = vmax.f32 %v2930, %v3875
  %v3892 = vmax.f32 %v2931, %v3876
  %v3893 = vmax.f32 %v2932, %v3877
  %v3894 = vmax.f32 %v2933, %v3878
  %v3895 = vmax.f32 %v2934, %v3879
  %v3896 = vpack.c.bf16 %v3881, %v3880
  %v3897 = vpack.c.bf16 %v3883, %v3882
  %v3898 = vpack.c.bf16 %v3885, %v3884
  %v3899 = vpack.c.bf16 %v3887, %v3886
  %v3900 = vpack.c.bf16 %v3889, %v3888
  %v3901 = vpack.c.bf16 %v3891, %v3890
  %v3902 = vpack.c.bf16 %v3893, %v3892
  %v3903 = vpack.c.bf16 %v3895, %v3894
  %v3912 = vunpack.c.l.b16 %v3896
  %v3913 = vunpack.c.h.b16 %v3896
  %v3914 = vunpack.c.l.b16 %v3897
  %v3915 = vunpack.c.h.b16 %v3897
  %v3916 = vunpack.c.l.b16 %v3898
  %v3917 = vunpack.c.h.b16 %v3898
  %v3918 = vunpack.c.l.b16 %v3899
  %v3919 = vunpack.c.h.b16 %v3899
  %v3920 = vunpack.c.l.b16 %v3900
  %v3921 = vunpack.c.h.b16 %v3900
  %v3922 = vunpack.c.l.b16 %v3901
  %v3923 = vunpack.c.h.b16 %v3901
  %v3924 = vunpack.c.l.b16 %v3902
  %v3925 = vunpack.c.h.b16 %v3902
  %v3926 = vunpack.c.l.b16 %v3903
  %v3927 = vunpack.c.h.b16 %v3903
  %v3928 = vpack.c.b16 %v3912, %v3912
  %v3929 = vpack.c.b16 %v3913, %v3913
  %v3930 = vpack.c.b16 %v3914, %v3914
  %v3931 = vpack.c.b16 %v3915, %v3915
  %v3932 = vpack.c.b16 %v3916, %v3916
  %v3933 = vpack.c.b16 %v3917, %v3917
  %v3934 = vpack.c.b16 %v3918, %v3918
  %v3935 = vpack.c.b16 %v3919, %v3919
  %v3936 = vpack.c.b16 %v3920, %v3920
  %v3937 = vpack.c.b16 %v3921, %v3921
  %v3938 = vpack.c.b16 %v3922, %v3922
  %v3939 = vpack.c.b16 %v3923, %v3923
  %v3940 = vpack.c.b16 %v3924, %v3924
  %v3941 = vpack.c.b16 %v3925, %v3925
  %v3942 = vpack.c.b16 %v3926, %v3926
  %v3943 = vpack.c.b16 %v3927, %v3927
  %vm3960 = vcmask 519168
  %3961 = vst.msk [vmem:[%s4] sm:$0xf] %vm3960, %v3928
  %3962 = vst.msk [vmem:[%s4 + $0x4] sm:$0xf] %vm3960, %v3929
  %3963 = vst.msk [vmem:[%s4 + $0x8] sm:$0xf] %vm3960, %v3930
  %3964 = vst.msk [vmem:[%s4 + $0xc] sm:$0xf] %vm3960, %v3931
  %3965 = vst.msk [vmem:[%s4 + $0x10] sm:$0xf] %vm3960, %v3932
  %3966 = vst.msk [vmem:[%s4 + $0x14] sm:$0xf] %vm3960, %v3933
  %3967 = vst.msk [vmem:[%s4 + $0x18] sm:$0xf] %vm3960, %v3934
  %3968 = vst.msk [vmem:[%s4 + $0x1c] sm:$0xf] %vm3960, %v3935
  %3969 = vst.msk [vmem:[%s4 + $0x20] sm:$0xf] %vm3960, %v3936
  %3970 = vst.msk [vmem:[%s4 + $0x24] sm:$0xf] %vm3960, %v3937
  %3971 = vst.msk [vmem:[%s4 + $0x28] sm:$0xf] %vm3960, %v3938
  %3972 = vst.msk [vmem:[%s4 + $0x2c] sm:$0xf] %vm3960, %v3939
  %3973 = vst.msk [vmem:[%s4 + $0x30] sm:$0xf] %vm3960, %v3940
  %3974 = vst.msk [vmem:[%s4 + $0x34] sm:$0xf] %vm3960, %v3941
  %3975 = vst.msk [vmem:[%s4 + $0x38] sm:$0xf] %vm3960, %v3942
  %3976 = vst.msk [vmem:[%s4 + $0x3c] sm:$0xf] %vm3960, %v3943
  // Predicated region
  $region18: #{simple_cnn_forward.4} parent=0 // pred_check
    _
  $region19: #{simple_cnn_forward.4} parent=0 // pred_check_branch
    %3978 = sbr.rel (0) target = $region21
  $region20: #{simple_cnn_forward.4} parent=0 // pred_region
    _
  $region21: #{simple_cnn_forward.4} parent=0 // pred_fallthru
    _
  // Predicated region
  $region22: #{simple_cnn_forward.4} parent=0 // pred_check
    _
  $region23: #{simple_cnn_forward.4} parent=0 // pred_check_branch
    %3980 = sbr.rel (0) target = $region25
  $region24: #{simple_cnn_forward.4} parent=0 // pred_region
    _
  $region25: #{simple_cnn_forward.4} parent=0 // pred_fallthru
    _

// kernel: simple_cnn_forward.5
$region0: #{simple_cnn_forward.5}
  #allocation0 [shape = 'u32[]', space=smem, size = 0x4, offset = 0x4, fixed_abs, tag = 'smem constant byte address 0x4 - core index']
  #allocation1 [shape = 'u32[144,128]{1,0:T(1,128)}', space=vmem, size = 0x12000, scoped, tag = 'internal scratch']
  %s0 = inlined_call_operand.vmem [shape: bf16[4,32,576], index: 0, kind: input, shape index: {}]
  %s1 = inlined_call_operand.vmem [shape: bf16[576,128], index: 1, kind: input, shape index: {}]
  %s2 = inlined_call_operand.vmem [shape: f32[1,128], index: 2, kind: input, shape index: {}]
  %s3 = inlined_call_operand.vmem [shape: f32[1,128], index: 3, kind: input, shape index: {}]
  %s4 = inlined_call_operand.vmem [shape: bf16[32,128], index: 4, kind: output, shape index: {}]
  %s5 = sld [smem:[#allocation0]]
  $region26: #{simple_cnn_forward.5} parent=0
    _
  %s7 = ssub.s32 1, %s5
  %s8 = scalar_select 0, %s7, %s5
  // Predicated region
  $region2: #{simple_cnn_forward.5} parent=0 // pred_check
    _
  $region3: #{simple_cnn_forward.5} parent=0 // pred_check_branch
    %10 = sbr.rel (0) target = $region5
  $region4: #{simple_cnn_forward.5} parent=0 // pred_region
    _
  $region5: #{simple_cnn_forward.5} parent=0 // pred_fallthru
    _
  // Predicated region
  $region6: #{simple_cnn_forward.5} parent=0 // pred_check
    _
  $region7: #{simple_cnn_forward.5} parent=0 // pred_check_branch
    %12 = sbr.rel (0) target = $region9
  $region8: #{simple_cnn_forward.5} parent=0 // pred_region
    _
  $region9: #{simple_cnn_forward.5} parent=0 // pred_fallthru
    _
  // Predicated region
  $region10: #{simple_cnn_forward.5} parent=0 // pred_check
    _
  $region11: #{simple_cnn_forward.5} parent=0 // pred_check_branch
    %14 = sbr.rel (0) target = $region13
  $region12: #{simple_cnn_forward.5} parent=0 // pred_region
    _
  $region13: #{simple_cnn_forward.5} parent=0 // pred_fallthru
    _
  // Predicated region
  $region14: #{simple_cnn_forward.5} parent=0 // pred_check
    _
  $region15: #{simple_cnn_forward.5} parent=0 // pred_check_branch
    %16 = sbr.rel (0) target = $region17
  $region16: #{simple_cnn_forward.5} parent=0 // pred_region
    _
  $region17: #{simple_cnn_forward.5} parent=0 // pred_fallthru
    _
  %v18 = vld [vmem:[%s2] sm:$0x1]
  %v19 = vld [vmem:[%s3] sm:$0x1]
  %v20 = vld [vmem:[%s1] sm:$0xf]
  %v21 = vld [vmem:[%s1 + $0x4] sm:$0xf]
  %v22 = vld [vmem:[%s1 + $0x8] sm:$0xf]
  %v23 = vld [vmem:[%s1 + $0xc] sm:$0xf]
  %v24 = vld [vmem:[%s1 + $0x10] sm:$0xf]
  %v25 = vld [vmem:[%s1 + $0x14] sm:$0xf]
  %v26 = vld [vmem:[%s1 + $0x18] sm:$0xf]
  %v27 = vld [vmem:[%s1 + $0x1c] sm:$0xf]
  %v28 = vld [vmem:[%s1 + $0x20] sm:$0xf]
  %v29 = vld [vmem:[%s1 + $0x24] sm:$0xf]
  %v30 = vld [vmem:[%s1 + $0x28] sm:$0xf]
  %v31 = vld [vmem:[%s1 + $0x2c] sm:$0xf]
  %v32 = vld [vmem:[%s1 + $0x30] sm:$0xf]
  %v33 = vld [vmem:[%s1 + $0x34] sm:$0xf]
  %v34 = vld [vmem:[%s1 + $0x38] sm:$0xf]
  %v35 = vld [vmem:[%s1 + $0x3c] sm:$0xf]
  %v36 = vld [vmem:[%s1 + $0x40] sm:$0xf]
  %v37 = vld [vmem:[%s1 + $0x44] sm:$0xf]
  %v38 = vld [vmem:[%s1 + $0x48] sm:$0xf]
  %v39 = vld [vmem:[%s1 + $0x4c] sm:$0xf]
  %v40 = vld [vmem:[%s1 + $0x50] sm:$0xf]
  %v41 = vld [vmem:[%s1 + $0x54] sm:$0xf]
  %v42 = vld [vmem:[%s1 + $0x58] sm:$0xf]
  %v43 = vld [vmem:[%s1 + $0x5c] sm:$0xf]
  %v44 = vld [vmem:[%s1 + $0x60] sm:$0xf]
  %v45 = vld [vmem:[%s1 + $0x64] sm:$0xf]
  %v46 = vld [vmem:[%s1 + $0x68] sm:$0xf]
  %v47 = vld [vmem:[%s1 + $0x6c] sm:$0xf]
  %v48 = vld [vmem:[%s1 + $0x70] sm:$0xf]
  %v49 = vld [vmem:[%s1 + $0x74] sm:$0xf]
  %v50 = vld [vmem:[%s1 + $0x78] sm:$0xf]
  %v51 = vld [vmem:[%s1 + $0x7c] sm:$0xf]
  %v52 = vld [vmem:[%s1 + $0x80] sm:$0xf]
  %v53 = vld [vmem:[%s1 + $0x84] sm:$0xf]
  %v54 = vld [vmem:[%s1 + $0x88] sm:$0xf]
  %v55 = vld [vmem:[%s1 + $0x8c] sm:$0xf]
  %v56 = vld [vmem:[%s1 + $0x90] sm:$0xf]
  %v57 = vld [vmem:[%s1 + $0x94] sm:$0xf]
  %v58 = vld [vmem:[%s1 + $0x98] sm:$0xf]
  %v59 = vld [vmem:[%s1 + $0x9c] sm:$0xf]
  %v60 = vld [vmem:[%s1 + $0xa0] sm:$0xf]
  %v61 = vld [vmem:[%s1 + $0xa4] sm:$0xf]
  %v62 = vld [vmem:[%s1 + $0xa8] sm:$0xf]
  %v63 = vld [vmem:[%s1 + $0xac] sm:$0xf]
  %v64 = vld [vmem:[%s1 + $0xb0] sm:$0xf]
  %v65 = vld [vmem:[%s1 + $0xb4] sm:$0xf]
  %v66 = vld [vmem:[%s1 + $0xb8] sm:$0xf]
  %v67 = vld [vmem:[%s1 + $0xbc] sm:$0xf]
  %v68 = vld [vmem:[%s1 + $0xc0] sm:$0xf]
  %v69 = vld [vmem:[%s1 + $0xc4] sm:$0xf]
  %v70 = vld [vmem:[%s1 + $0xc8] sm:$0xf]
  %v71 = vld [vmem:[%s1 + $0xcc] sm:$0xf]
  %v72 = vld [vmem:[%s1 + $0xd0] sm:$0xf]
  %v73 = vld [vmem:[%s1 + $0xd4] sm:$0xf]
  %v74 = vld [vmem:[%s1 + $0xd8] sm:$0xf]
  %v75 = vld [vmem:[%s1 + $0xdc] sm:$0xf]
  %v76 = vld [vmem:[%s1 + $0xe0] sm:$0xf]
  %v77 = vld [vmem:[%s1 + $0xe4] sm:$0xf]
  %v78 = vld [vmem:[%s1 + $0xe8] sm:$0xf]
  %v79 = vld [vmem:[%s1 + $0xec] sm:$0xf]
  %v80 = vld [vmem:[%s1 + $0xf0] sm:$0xf]
  %v81 = vld [vmem:[%s1 + $0xf4] sm:$0xf]
  %v82 = vld [vmem:[%s1 + $0xf8] sm:$0xf]
  %v83 = vld [vmem:[%s1 + $0xfc] sm:$0xf]
  %v84 = vld [vmem:[%s1 + $0x100] sm:$0xf]
  %v85 = vld [vmem:[%s1 + $0x104] sm:$0xf]
  %v86 = vld [vmem:[%s1 + $0x108] sm:$0xf]
  %v87 = vld [vmem:[%s1 + $0x10c] sm:$0xf]
  %v88 = vld [vmem:[%s1 + $0x110] sm:$0xf]
  %v89 = vld [vmem:[%s1 + $0x114] sm:$0xf]
  %v90 = vld [vmem:[%s1 + $0x118] sm:$0xf]
  %v91 = vld [vmem:[%s1 + $0x11c] sm:$0xf]
  %v92 = vld [vmem:[%s0] sm:$0xff]
  %v93 = vld [vmem:[%s0 + $0x8] sm:$0xff]
  %v94 = vld [vmem:[%s0 + $0x10] sm:$0xf]
  %v95 = vld [vmem:[%s0 + $0x14] sm:$0xff]
  %v96 = vld [vmem:[%s0 + $0x1c] sm:$0xff]
  %v97 = vld [vmem:[%s0 + $0x24] sm:$0xf]
  %v98 = vld [vmem:[%s0 + $0x28] sm:$0xff]
  %v99 = vld [vmem:[%s0 + $0x30] sm:$0xff]
  %v100 = vld [vmem:[%s0 + $0x38] sm:$0xf]
  %v101 = vld [vmem:[%s0 + $0x3c] sm:$0xff]
  %v102 = vld [vmem:[%s0 + $0x44] sm:$0xff]
  %v103 = vld [vmem:[%s0 + $0x4c] sm:$0xf]
  %v116 = vunpack.c.l.b16 %v92
  %v117 = vunpack.c.h.b16 %v92
  %v118 = vunpack.c.l.b16 %v93
  %v119 = vunpack.c.h.b16 %v93
  %v120 = vunpack.c.l.b16 %v94
  %v121 = vunpack.c.l.b16 %v95
  %v122 = vunpack.c.h.b16 %v95
  %v123 = vunpack.c.l.b16 %v96
  %v124 = vunpack.c.h.b16 %v96
  %v125 = vunpack.c.l.b16 %v97
  %v126 = vunpack.c.l.b16 %v98
  %v127 = vunpack.c.h.b16 %v98
  %v128 = vunpack.c.l.b16 %v99
  %v129 = vunpack.c.h.b16 %v99
  %v130 = vunpack.c.l.b16 %v100
  %v131 = vunpack.c.l.b16 %v101
  %v132 = vunpack.c.h.b16 %v101
  %v133 = vunpack.c.l.b16 %v102
  %v134 = vunpack.c.h.b16 %v102
  %v135 = vunpack.c.l.b16 %v103
  %v136 = vpack.c.b16 %v121, %v116
  %v137 = vpack.c.b16 %v122, %v117
  %v138 = vpack.c.b16 %v123, %v118
  %v139 = vpack.c.b16 %v124, %v119
  %v140 = vpack.c.b16 %v125, %v120
  %v141 = vpack.c.b16 %v131, %v126
  %v142 = vpack.c.b16 %v132, %v127
  %v143 = vpack.c.b16 %v133, %v128
  %v144 = vpack.c.b16 %v134, %v129
  %v145 = vpack.c.b16 %v135, %v130
  %v226 = vunpack.c.l.b16 %v20
  %v227 = vunpack.c.l.b16 %v21
  %v228 = vunpack.c.l.b16 %v22
  %v229 = vunpack.c.l.b16 %v23
  %v230 = vunpack.c.l.b16 %v24
  %v231 = vunpack.c.l.b16 %v25
  %v232 = vunpack.c.l.b16 %v26
  %v233 = vunpack.c.l.b16 %v27
  %v234 = vunpack.c.l.b16 %v28
  %v235 = vunpack.c.l.b16 %v29
  %v236 = vunpack.c.l.b16 %v30
  %v237 = vunpack.c.l.b16 %v31
  %v238 = vunpack.c.l.b16 %v32
  %v239 = vunpack.c.l.b16 %v33
  %v240 = vunpack.c.l.b16 %v34
  %v241 = vunpack.c.l.b16 %v35
  %v242 = vunpack.c.l.b16 %v36
  %v243 = vunpack.c.l.b16 %v37
  %v244 = vunpack.c.l.b16 %v38
  %v245 = vunpack.c.l.b16 %v39
  %v246 = vunpack.c.l.b16 %v40
  %v247 = vunpack.c.l.b16 %v41
  %v248 = vunpack.c.l.b16 %v42
  %v249 = vunpack.c.l.b16 %v43
  %v250 = vunpack.c.l.b16 %v44
  %v251 = vunpack.c.l.b16 %v45
  %v252 = vunpack.c.l.b16 %v46
  %v253 = vunpack.c.l.b16 %v47
  %v254 = vunpack.c.l.b16 %v48
  %v255 = vunpack.c.l.b16 %v49
  %v256 = vunpack.c.l.b16 %v50
  %v257 = vunpack.c.l.b16 %v51
  %v258 = vunpack.c.l.b16 %v52
  %v259 = vunpack.c.l.b16 %v53
  %v260 = vunpack.c.l.b16 %v54
  %v261 = vunpack.c.l.b16 %v55
  %v262 = vunpack.c.l.b16 %v56
  %v263 = vunpack.c.l.b16 %v57
  %v264 = vunpack.c.l.b16 %v58
  %v265 = vunpack.c.l.b16 %v59
  %v266 = vunpack.c.l.b16 %v60
  %v267 = vunpack.c.l.b16 %v61
  %v268 = vunpack.c.l.b16 %v62
  %v269 = vunpack.c.l.b16 %v63
  %v270 = vunpack.c.l.b16 %v64
  %v271 = vunpack.c.l.b16 %v65
  %v272 = vunpack.c.l.b16 %v66
  %v273 = vunpack.c.l.b16 %v67
  %v274 = vunpack.c.l.b16 %v68
  %v275 = vunpack.c.l.b16 %v69
  %v276 = vunpack.c.l.b16 %v70
  %v277 = vunpack.c.l.b16 %v71
  %v278 = vunpack.c.l.b16 %v72
  %v279 = vunpack.c.l.b16 %v73
  %v280 = vunpack.c.l.b16 %v74
  %v281 = vunpack.c.l.b16 %v75
  %v282 = vunpack.c.l.b16 %v76
  %v283 = vunpack.c.l.b16 %v77
  %v284 = vunpack.c.l.b16 %v78
  %v285 = vunpack.c.l.b16 %v79
  %v286 = vunpack.c.l.b16 %v80
  %v287 = vunpack.c.l.b16 %v81
  %v288 = vunpack.c.l.b16 %v82
  %v289 = vunpack.c.l.b16 %v83
  %v290 = vunpack.c.l.b16 %v84
  %v291 = vunpack.c.l.b16 %v85
  %v292 = vunpack.c.l.b16 %v86
  %v293 = vunpack.c.l.b16 %v87
  %v294 = vunpack.c.l.b16 %v88
  %v295 = vunpack.c.l.b16 %v89
  %v296 = vunpack.c.l.b16 %v90
  %v297 = vunpack.c.l.b16 %v91
  %v298 = vpack.c.b16 %v227, %v226
  %v299 = vpack.c.b16 %v229, %v228
  %v300 = vpack.c.b16 %v231, %v230
  %v301 = vpack.c.b16 %v233, %v232
  %v302 = vpack.c.b16 %v235, %v234
  %v303 = vpack.c.b16 %v237, %v236
  %v304 = vpack.c.b16 %v239, %v238
  %v305 = vpack.c.b16 %v241, %v240
  %v306 = vpack.c.b16 %v243, %v242
  %v307 = vpack.c.b16 %v245, %v244
  %v308 = vpack.c.b16 %v247, %v246
  %v309 = vpack.c.b16 %v249, %v248
  %v310 = vpack.c.b16 %v251, %v250
  %v311 = vpack.c.b16 %v253, %v252
  %v312 = vpack.c.b16 %v255, %v254
  %v313 = vpack.c.b16 %v257, %v256
  %v314 = vpack.c.b16 %v259, %v258
  %v315 = vpack.c.b16 %v261, %v260
  %v316 = vpack.c.b16 %v263, %v262
  %v317 = vpack.c.b16 %v265, %v264
  %v318 = vpack.c.b16 %v267, %v266
  %v319 = vpack.c.b16 %v269, %v268
  %v320 = vpack.c.b16 %v271, %v270
  %v321 = vpack.c.b16 %v273, %v272
  %v322 = vpack.c.b16 %v275, %v274
  %v323 = vpack.c.b16 %v277, %v276
  %v324 = vpack.c.b16 %v279, %v278
  %v325 = vpack.c.b16 %v281, %v280
  %v326 = vpack.c.b16 %v283, %v282
  %v327 = vpack.c.b16 %v285, %v284
  %v328 = vpack.c.b16 %v287, %v286
  %v329 = vpack.c.b16 %v289, %v288
  %v330 = vpack.c.b16 %v291, %v290
  %v331 = vpack.c.b16 %v293, %v292
  %v332 = vpack.c.b16 %v295, %v294
  %v333 = vpack.c.b16 %v297, %v296
  %vm370 = vcmask 523264
  %v372 = vsel %vm370, %v140, 0
  %v375 = vsel %vm370, %v145, 0
  %377 = vmatprep.subr.bf16.mxu0 0
  %378 = vmatpush1.bf16.msra.mxu0 %v298
  %379 = vmatprep.subr.bf16.mxu0 0
  %380 = vmatpush1.bf16.msra.mxu0 %v299
  %381 = vmatprep.subr.bf16.mxu0 0
  %382 = vmatpush1.bf16.msra.mxu0 %v300
  %383 = vmatprep.subr.bf16.mxu0 0
  %384 = vmatpush1.bf16.msra.mxu0 %v301
  %385 = vmatprep.subr.bf16.mxu0 0
  %386 = vmatpush1.bf16.msra.mxu0 %v302
  %387 = vmatprep.subr.bf16.mxu0 0
  %388 = vmatpush1.bf16.msra.mxu0 %v303
  %389 = vmatprep.subr.bf16.mxu0 0
  %390 = vmatpush1.bf16.msra.mxu0 %v304
  %391 = vmatprep.subr.bf16.mxu0 0
  %392 = vmatpush1.bf16.msra.mxu0 %v305
  %393 = vmatprep.subr.bf16.mxu0 0
  %394 = vmatpush1.bf16.msra.mxu0 %v306
  %395 = vmatprep.subr.bf16.mxu0 0
  %396 = vmatpush1.bf16.msra.mxu0 %v307
  %397 = vmatprep.subr.bf16.mxu0 0
  %398 = vmatpush1.bf16.msra.mxu0 %v308
  %399 = vmatprep.subr.bf16.mxu0 0
  %400 = vmatpush1.bf16.msra.mxu0 %v309
  %401 = vmatprep.subr.bf16.mxu0 0
  %402 = vmatpush1.bf16.msra.mxu0 %v310
  %403 = vmatprep.subr.bf16.mxu0 0
  %404 = vmatpush1.bf16.msra.mxu0 %v311
  %405 = vmatprep.subr.bf16.mxu0 0
  %406 = vmatpush1.bf16.msra.mxu0 %v312
  %407 = vmatprep.subr.bf16.mxu0 0
  %408 = vmatpush1.bf16.msra.mxu0 %v313
  %409 = vmatprep.mubr.bf16.mxu0 %v137
  %410 = vmatmul.mubr.bf16.gmra.mrb[0].mxu0 %v136
  %v411 = vpop.f32.mrb[0].mxu0
  %v412 = vadd.f32 0.0, %v411
  %v413 = vpop.f32.mrb[0].mxu0
  %v414 = vpop.f32.mrb[0].mxu0
  %v415 = vadd.f32 0.0, %v414
  %v416 = vpop.f32.mrb[0].mxu0
  %417 = vmatprep.mubr.bf16.mxu0 %v142
  %418 = vmatmul.mubr.bf16.gmra.mrb[0].mxu0 %v141
  %v419 = vpop.f32.mrb[0].mxu0
  %v420 = vadd.f32 0.0, %v419
  %v421 = vpop.f32.mrb[0].mxu0
  %v422 = vpop.f32.mrb[0].mxu0
  %v423 = vadd.f32 0.0, %v422
  %v424 = vpop.f32.mrb[0].mxu0
  %425 = vdwg.mxu0
  %426 = vmatprep.subr.bf16.mxu0 0
  %427 = vmatpush1.bf16.msra.mxu0 %v314
  %428 = vmatprep.subr.bf16.mxu0 0
  %429 = vmatpush1.bf16.msra.mxu0 %v315
  %430 = vmatprep.subr.bf16.mxu0 0
  %431 = vmatpush1.bf16.msra.mxu0 %v316
  %432 = vmatprep.subr.bf16.mxu0 0
  %433 = vmatpush1.bf16.msra.mxu0 %v317
  %434 = vmatprep.subr.bf16.mxu0 0
  %435 = vmatpush1.bf16.msra.mxu0 %v318
  %436 = vmatprep.subr.bf16.mxu0 0
  %437 = vmatpush1.bf16.msra.mxu0 %v319
  %438 = vmatprep.subr.bf16.mxu0 0
  %439 = vmatpush1.bf16.msra.mxu0 %v320
  %440 = vmatprep.subr.bf16.mxu0 0
  %441 = vmatpush1.bf16.msra.mxu0 %v321
  %442 = vmatprep.subr.bf16.mxu0 0
  %443 = vmatpush1.bf16.msra.mxu0 %v322
  %444 = vmatprep.subr.bf16.mxu0 0
  %445 = vmatpush1.bf16.msra.mxu0 %v323
  %446 = vmatprep.subr.bf16.mxu0 0
  %447 = vmatpush1.bf16.msra.mxu0 %v324
  %448 = vmatprep.subr.bf16.mxu0 0
  %449 = vmatpush1.bf16.msra.mxu0 %v325
  %450 = vmatprep.subr.bf16.mxu0 0
  %451 = vmatpush1.bf16.msra.mxu0 %v326
  %452 = vmatprep.subr.bf16.mxu0 0
  %453 = vmatpush1.bf16.msra.mxu0 %v327
  %454 = vmatprep.subr.bf16.mxu0 0
  %455 = vmatpush1.bf16.msra.mxu0 %v328
  %456 = vmatprep.subr.bf16.mxu0 0
  %457 = vmatpush1.bf16.msra.mxu0 %v329
  %458 = vmatprep.mubr.bf16.mxu0 %v139
  %459 = vmatmul.mubr.bf16.gmra.mrb[0].mxu0 %v138
  %v460 = vpop.f32.mrb[0].mxu0
  %v461 = vadd.f32 %v412, %v460
  %v462 = vpop.f32.mrb[0].mxu0
  %v463 = vpop.f32.mrb[0].mxu0
  %v464 = vadd.f32 %v415, %v463
  %v465 = vpop.f32.mrb[0].mxu0
  %466 = vmatprep.mubr.bf16.mxu0 %v144
  %467 = vmatmul.mubr.bf16.gmra.mrb[0].mxu0 %v143
  %v468 = vpop.f32.mrb[0].mxu0
  %v469 = vadd.f32 %v420, %v468
  %v470 = vpop.f32.mrb[0].mxu0
  %v471 = vpop.f32.mrb[0].mxu0
  %v472 = vadd.f32 %v423, %v471
  %v473 = vpop.f32.mrb[0].mxu0
  %474 = vdwg.mxu0
  %475 = vmatprep.subr.bf16.mxu0 0
  %476 = vmatpush1.bf16.msra.mxu0 %v330
  %477 = vmatprep.subr.bf16.mxu0 0
  %478 = vmatpush1.bf16.msra.mxu0 %v331
  %479 = vmatprep.subr.bf16.mxu0 0
  %480 = vmatpush1.bf16.msra.mxu0 %v332
  %481 = vmatprep.subr.bf16.mxu0 0
  %482 = vmatpush1.bf16.msra.mxu0 %v333
  %483 = vmatprep.subr.bf16.mxu0 0
  %484 = vmatpush1.bf16.msra.mxu0 0
  %485 = vmatprep.subr.bf16.mxu0 0
  %486 = vmatpush1.bf16.msra.mxu0 0
  %487 = vmatprep.subr.bf16.mxu0 0
  %488 = vmatpush1.bf16.msra.mxu0 0
  %489 = vmatprep.subr.bf16.mxu0 0
  %490 = vmatpush1.bf16.msra.mxu0 0
  %491 = vmatprep.subr.bf16.mxu0 0
  %492 = vmatpush1.bf16.msra.mxu0 0
  %493 = vmatprep.subr.bf16.mxu0 0
  %494 = vmatpush1.bf16.msra.mxu0 0
  %495 = vmatprep.subr.bf16.mxu0 0
  %496 = vmatpush1.bf16.msra.mxu0 0
  %497 = vmatprep.subr.bf16.mxu0 0
  %498 = vmatpush1.bf16.msra.mxu0 0
  %499 = vmatprep.subr.bf16.mxu0 0
  %500 = vmatpush1.bf16.msra.mxu0 0
  %501 = vmatprep.subr.bf16.mxu0 0
  %502 = vmatpush1.bf16.msra.mxu0 0
  %503 = vmatprep.subr.bf16.mxu0 0
  %504 = vmatpush1.bf16.msra.mxu0 0
  %505 = vmatprep.subr.bf16.mxu0 0
  %506 = vmatpush1.bf16.msra.mxu0 0
  %507 = vmatprep.mubr.bf16.mxu0 0
  %508 = vmatmul.mubr.bf16.gmra.mrb[0].mxu0 %v372
  %v509 = vpop.f32.mrb[0].mxu0
  %v510 = vadd.f32 %v461, %v509
  %v511 = vpop.f32.mrb[0].mxu0
  %v512 = vpop.f32.mrb[0].mxu0
  %v513 = vadd.f32 %v464, %v512
  %v514 = vpop.f32.mrb[0].mxu0
  %515 = vmatprep.mubr.bf16.mxu0 0
  %516 = vmatmul.mubr.bf16.gmra.mrb[0].mxu0 %v375
  %v517 = vpop.f32.mrb[0].mxu0
  %v518 = vadd.f32 %v469, %v517
  %v519 = vpop.f32.mrb[0].mxu0
  %v520 = vpop.f32.mrb[0].mxu0
  %v521 = vadd.f32 %v472, %v520
  %v522 = vpop.f32.mrb[0].mxu0
  %523 = vdwg.mxu0
  %v525 = vlaneseq
  %v526 = vshrl.u32 %v525, 7
  %v527 = vsub.s32 0, %v526
  %v528 = vrot.slane %v18, %v527
  %v530 = vmul.f32 %v510, %v528
  %v531 = vmul.f32 %v513, %v528
  %v532 = vmul.f32 %v518, %v528
  %v533 = vmul.f32 %v521, %v528
  %v535 = vlaneseq
  %v536 = vshrl.u32 %v535, 7
  %v537 = vsub.s32 0, %v536
  %v538 = vrot.slane %v19, %v537
  %v540 = vadd.f32 %v530, %v538
  %v541 = vadd.f32 %v531, %v538
  %v542 = vadd.f32 %v532, %v538
  %v543 = vadd.f32 %v533, %v538
  %v544 = vmax.f32 %v540, 0.0
  %v545 = vmax.f32 %v541, 0.0
  %v546 = vmax.f32 %v542, 0.0
  %v547 = vmax.f32 %v543, 0.0
  %s548 = scalar_lea.vmem %s0, 80
  %v549 = vld [vmem:[%s548] sm:$0xff]
  %v550 = vld [vmem:[%s548 + $0x8] sm:$0xff]
  %v551 = vld [vmem:[%s548 + $0x10] sm:$0xf]
  %v552 = vld [vmem:[%s548 + $0x14] sm:$0xff]
  %v553 = vld [vmem:[%s548 + $0x1c] sm:$0xff]
  %v554 = vld [vmem:[%s548 + $0x24] sm:$0xf]
  %v555 = vld [vmem:[%s548 + $0x28] sm:$0xff]
  %v556 = vld [vmem:[%s548 + $0x30] sm:$0xff]
  %v557 = vld [vmem:[%s548 + $0x38] sm:$0xf]
  %v558 = vld [vmem:[%s548 + $0x3c] sm:$0xff]
  %v559 = vld [vmem:[%s548 + $0x44] sm:$0xff]
  %v560 = vld [vmem:[%s548 + $0x4c] sm:$0xf]
  %v573 = vunpack.c.l.b16 %v549
  %v574 = vunpack.c.h.b16 %v549
  %v575 = vunpack.c.l.b16 %v550
  %v576 = vunpack.c.h.b16 %v550
  %v577 = vunpack.c.l.b16 %v551
  %v578 = vunpack.c.l.b16 %v552
  %v579 = vunpack.c.h.b16 %v552
  %v580 = vunpack.c.l.b16 %v553
  %v581 = vunpack.c.h.b16 %v553
  %v582 = vunpack.c.l.b16 %v554
  %v583 = vunpack.c.l.b16 %v555
  %v584 = vunpack.c.h.b16 %v555
  %v585 = vunpack.c.l.b16 %v556
  %v586 = vunpack.c.h.b16 %v556
  %v587 = vunpack.c.l.b16 %v557
  %v588 = vunpack.c.l.b16 %v558
  %v589 = vunpack.c.h.b16 %v558
  %v590 = vunpack.c.l.b16 %v559
  %v591 = vunpack.c.h.b16 %v559
  %v592 = vunpack.c.l.b16 %v560
  %v593 = vpack.c.b16 %v578, %v573
  %v594 = vpack.c.b16 %v579, %v574
  %v595 = vpack.c.b16 %v580, %v575
  %v596 = vpack.c.b16 %v581, %v576
  %v597 = vpack.c.b16 %v582, %v577
  %v598 = vpack.c.b16 %v588, %v583
  %v599 = vpack.c.b16 %v589, %v584
  %v600 = vpack.c.b16 %v590, %v585
  %v601 = vpack.c.b16 %v591, %v586
  %v602 = vpack.c.b16 %v592, %v587
  %v612 = vsel %vm370, %v597, 0
  %v615 = vsel %vm370, %v602, 0
  %617 = vmatprep.subr.bf16.mxu0 0
  %618 = vmatpush1.bf16.msra.mxu0 %v298
  %619 = vmatprep.subr.bf16.mxu0 0
  %620 = vmatpush1.bf16.msra.mxu0 %v299
  %621 = vmatprep.subr.bf16.mxu0 0
  %622 = vmatpush1.bf16.msra.mxu0 %v300
  %623 = vmatprep.subr.bf16.mxu0 0
  %624 = vmatpush1.bf16.msra.mxu0 %v301
  %625 = vmatprep.subr.bf16.mxu0 0
  %626 = vmatpush1.bf16.msra.mxu0 %v302
  %627 = vmatprep.subr.bf16.mxu0 0
  %628 = vmatpush1.bf16.msra.mxu0 %v303
  %629 = vmatprep.subr.bf16.mxu0 0
  %630 = vmatpush1.bf16.msra.mxu0 %v304
  %631 = vmatprep.subr.bf16.mxu0 0
  %632 = vmatpush1.bf16.msra.mxu0 %v305
  %633 = vmatprep.subr.bf16.mxu0 0
  %634 = vmatpush1.bf16.msra.mxu0 %v306
  %635 = vmatprep.subr.bf16.mxu0 0
  %636 = vmatpush1.bf16.msra.mxu0 %v307
  %637 = vmatprep.subr.bf16.mxu0 0
  %638 = vmatpush1.bf16.msra.mxu0 %v308
  %639 = vmatprep.subr.bf16.mxu0 0
  %640 = vmatpush1.bf16.msra.mxu0 %v309
  %641 = vmatprep.subr.bf16.mxu0 0
  %642 = vmatpush1.bf16.msra.mxu0 %v310
  %643 = vmatprep.subr.bf16.mxu0 0
  %644 = vmatpush1.bf16.msra.mxu0 %v311
  %645 = vmatprep.subr.bf16.mxu0 0
  %646 = vmatpush1.bf16.msra.mxu0 %v312
  %647 = vmatprep.subr.bf16.mxu0 0
  %648 = vmatpush1.bf16.msra.mxu0 %v313
  %649 = vmatprep.mubr.bf16.mxu0 %v594
  %650 = vmatmul.mubr.bf16.gmra.mrb[0].mxu0 %v593
  %v651 = vpop.f32.mrb[0].mxu0
  %v652 = vadd.f32 0.0, %v651
  %v653 = vpop.f32.mrb[0].mxu0
  %v654 = vpop.f32.mrb[0].mxu0
  %v655 = vadd.f32 0.0, %v654
  %v656 = vpop.f32.mrb[0].mxu0
  %657 = vmatprep.mubr.bf16.mxu0 %v599
  %658 = vmatmul.mubr.bf16.gmra.mrb[0].mxu0 %v598
  %v659 = vpop.f32.mrb[0].mxu0
  %v660 = vadd.f32 0.0, %v659
  %v661 = vpop.f32.mrb[0].mxu0
  %v662 = vpop.f32.mrb[0].mxu0
  %v663 = vadd.f32 0.0, %v662
  %v664 = vpop.f32.mrb[0].mxu0
  %665 = vdwg.mxu0
  %666 = vmatprep.subr.bf16.mxu0 0
  %667 = vmatpush1.bf16.msra.mxu0 %v314
  %668 = vmatprep.subr.bf16.mxu0 0
  %669 = vmatpush1.bf16.msra.mxu0 %v315
  %670 = vmatprep.subr.bf16.mxu0 0
  %671 = vmatpush1.bf16.msra.mxu0 %v316
  %672 = vmatprep.subr.bf16.mxu0 0
  %673 = vmatpush1.bf16.msra.mxu0 %v317
  %674 = vmatprep.subr.bf16.mxu0 0
  %675 = vmatpush1.bf16.msra.mxu0 %v318
  %676 = vmatprep.subr.bf16.mxu0 0
  %677 = vmatpush1.bf16.msra.mxu0 %v319
  %678 = vmatprep.subr.bf16.mxu0 0
  %679 = vmatpush1.bf16.msra.mxu0 %v320
  %680 = vmatprep.subr.bf16.mxu0 0
  %681 = vmatpush1.bf16.msra.mxu0 %v321
  %682 = vmatprep.subr.bf16.mxu0 0
  %683 = vmatpush1.bf16.msra.mxu0 %v322
  %684 = vmatprep.subr.bf16.mxu0 0
  %685 = vmatpush1.bf16.msra.mxu0 %v323
  %686 = vmatprep.subr.bf16.mxu0 0
  %687 = vmatpush1.bf16.msra.mxu0 %v324
  %688 = vmatprep.subr.bf16.mxu0 0
  %689 = vmatpush1.bf16.msra.mxu0 %v325
  %690 = vmatprep.subr.bf16.mxu0 0
  %691 = vmatpush1.bf16.msra.mxu0 %v326
  %692 = vmatprep.subr.bf16.mxu0 0
  %693 = vmatpush1.bf16.msra.mxu0 %v327
  %694 = vmatprep.subr.bf16.mxu0 0
  %695 = vmatpush1.bf16.msra.mxu0 %v328
  %696 = vmatprep.subr.bf16.mxu0 0
  %697 = vmatpush1.bf16.msra.mxu0 %v329
  %698 = vmatprep.mubr.bf16.mxu0 %v596
  %699 = vmatmul.mubr.bf16.gmra.mrb[0].mxu0 %v595
  %v700 = vpop.f32.mrb[0].mxu0
  %v701 = vadd.f32 %v652, %v700
  %v702 = vpop.f32.mrb[0].mxu0
  %v703 = vpop.f32.mrb[0].mxu0
  %v704 = vadd.f32 %v655, %v703
  %v705 = vpop.f32.mrb[0].mxu0
  %706 = vmatprep.mubr.bf16.mxu0 %v601
  %707 = vmatmul.mubr.bf16.gmra.mrb[0].mxu0 %v600
  %v708 = vpop.f32.mrb[0].mxu0
  %v709 = vadd.f32 %v660, %v708
  %v710 = vpop.f32.mrb[0].mxu0
  %v711 = vpop.f32.mrb[0].mxu0
  %v712 = vadd.f32 %v663, %v711
  %v713 = vpop.f32.mrb[0].mxu0
  %714 = vdwg.mxu0
  %715 = vmatprep.subr.bf16.mxu0 0
  %716 = vmatpush1.bf16.msra.mxu0 %v330
  %717 = vmatprep.subr.bf16.mxu0 0
  %718 = vmatpush1.bf16.msra.mxu0 %v331
  %719 = vmatprep.subr.bf16.mxu0 0
  %720 = vmatpush1.bf16.msra.mxu0 %v332
  %721 = vmatprep.subr.bf16.mxu0 0
  %722 = vmatpush1.bf16.msra.mxu0 %v333
  %723 = vmatprep.subr.bf16.mxu0 0
  %724 = vmatpush1.bf16.msra.mxu0 0
  %725 = vmatprep.subr.bf16.mxu0 0
  %726 = vmatpush1.bf16.msra.mxu0 0
  %727 = vmatprep.subr.bf16.mxu0 0
  %728 = vmatpush1.bf16.msra.mxu0 0
  %729 = vmatprep.subr.bf16.mxu0 0
  %730 = vmatpush1.bf16.msra.mxu0 0
  %731 = vmatprep.subr.bf16.mxu0 0
  %732 = vmatpush1.bf16.msra.mxu0 0
  %733 = vmatprep.subr.bf16.mxu0 0
  %734 = vmatpush1.bf16.msra.mxu0 0
  %735 = vmatprep.subr.bf16.mxu0 0
  %736 = vmatpush1.bf16.msra.mxu0 0
  %737 = vmatprep.subr.bf16.mxu0 0
  %738 = vmatpush1.bf16.msra.mxu0 0
  %739 = vmatprep.subr.bf16.mxu0 0
  %740 = vmatpush1.bf16.msra.mxu0 0
  %741 = vmatprep.subr.bf16.mxu0 0
  %742 = vmatpush1.bf16.msra.mxu0 0
  %743 = vmatprep.subr.bf16.mxu0 0
  %744 = vmatpush1.bf16.msra.mxu0 0
  %745 = vmatprep.subr.bf16.mxu0 0
  %746 = vmatpush1.bf16.msra.mxu0 0
  %747 = vmatprep.mubr.bf16.mxu0 0
  %748 = vmatmul.mubr.bf16.gmra.mrb[0].mxu0 %v612
  %v749 = vpop.f32.mrb[0].mxu0
  %v750 = vadd.f32 %v701, %v749
  %v751 = vpop.f32.mrb[0].mxu0
  %v752 = vpop.f32.mrb[0].mxu0
  %v753 = vadd.f32 %v704, %v752
  %v754 = vpop.f32.mrb[0].mxu0
  %755 = vmatprep.mubr.bf16.mxu0 0
  %756 = vmatmul.mubr.bf16.gmra.mrb[0].mxu0 %v615
  %v757 = vpop.f32.mrb[0].mxu0
  %v758 = vadd.f32 %v709, %v757
  %v759 = vpop.f32.mrb[0].mxu0
  %v760 = vpop.f32.mrb[0].mxu0
  %v761 = vadd.f32 %v712, %v760
  %v762 = vpop.f32.mrb[0].mxu0
  %763 = vdwg.mxu0
  %v764 = vmul.f32 %v750, %v528
  %v765 = vmul.f32 %v753, %v528
  %v766 = vmul.f32 %v758, %v528
  %v767 = vmul.f32 %v761, %v528
  %v768 = vadd.f32 %v764, %v538
  %v769 = vadd.f32 %v765, %v538
  %v770 = vadd.f32 %v766, %v538
  %v771 = vadd.f32 %v767, %v538
  %v772 = vmax.f32 %v768, 0.0
  %v773 = vmax.f32 %v769, 0.0
  %v774 = vmax.f32 %v770, 0.0
  %v775 = vmax.f32 %v771, 0.0
  %v776 = vmax.f32 %v544, %v772
  %v777 = vmax.f32 %v545, %v773
  %v778 = vmax.f32 %v546, %v774
  %v779 = vmax.f32 %v547, %v775
  %s780 = scalar_lea.vmem %s0, 160
  %v781 = vld [vmem:[%s780] sm:$0xff]
  %v782 = vld [vmem:[%s780 + $0x8] sm:$0xff]
  %v783 = vld [vmem:[%s780 + $0x10] sm:$0xf]
  %v784 = vld [vmem:[%s780 + $0x14] sm:$0xff]
  %v785 = vld [vmem:[%s780 + $0x1c] sm:$0xff]
  %v786 = vld [vmem:[%s780 + $0x24] sm:$0xf]
  %v787 = vld [vmem:[%s780 + $0x28] sm:$0xff]
  %v788 = vld [vmem:[%s780 + $0x30] sm:$0xff]
  %v789 = vld [vmem:[%s780 + $0x38] sm:$0xf]
  %v790 = vld [vmem:[%s780 + $0x3c] sm:$0xff]
  %v791 = vld [vmem:[%s780 + $0x44] sm:$0xff]
  %v792 = vld [vmem:[%s780 + $0x4c] sm:$0xf]
  %v805 = vunpack.c.l.b16 %v781
  %v806 = vunpack.c.h.b16 %v781
  %v807 = vunpack.c.l.b16 %v782
  %v808 = vunpack.c.h.b16 %v782
  %v809 = vunpack.c.l.b16 %v783
  %v810 = vunpack.c.l.b16 %v784
  %v811 = vunpack.c.h.b16 %v784
  %v812 = vunpack.c.l.b16 %v785
  %v813 = vunpack.c.h.b16 %v785
  %v814 = vunpack.c.l.b16 %v786
  %v815 = vunpack.c.l.b16 %v787
  %v816 = vunpack.c.h.b16 %v787
  %v817 = vunpack.c.l.b16 %v788
  %v818 = vunpack.c.h.b16 %v788
  %v819 = vunpack.c.l.b16 %v789
  %v820 = vunpack.c.l.b16 %v790
  %v821 = vunpack.c.h.b16 %v790
  %v822 = vunpack.c.l.b16 %v791
  %v823 = vunpack.c.h.b16 %v791
  %v824 = vunpack.c.l.b16 %v792
  %v825 = vpack.c.b16 %v810, %v805
  %v826 = vpack.c.b16 %v811, %v806
  %v827 = vpack.c.b16 %v812, %v807
  %v828 = vpack.c.b16 %v813, %v808
  %v829 = vpack.c.b16 %v814, %v809
  %v830 = vpack.c.b16 %v820, %v815
  %v831 = vpack.c.b16 %v821, %v816
  %v832 = vpack.c.b16 %v822, %v817
  %v833 = vpack.c.b16 %v823, %v818
  %v834 = vpack.c.b16 %v824, %v819
  %v844 = vsel %vm370, %v829, 0
  %v847 = vsel %vm370, %v834, 0
  %849 = vmatprep.subr.bf16.mxu0 0
  %850 = vmatpush1.bf16.msra.mxu0 %v298
  %851 = vmatprep.subr.bf16.mxu0 0
  %852 = vmatpush1.bf16.msra.mxu0 %v299
  %853 = vmatprep.subr.bf16.mxu0 0
  %854 = vmatpush1.bf16.msra.mxu0 %v300
  %855 = vmatprep.subr.bf16.mxu0 0
  %856 = vmatpush1.bf16.msra.mxu0 %v301
  %857 = vmatprep.subr.bf16.mxu0 0
  %858 = vmatpush1.bf16.msra.mxu0 %v302
  %859 = vmatprep.subr.bf16.mxu0 0
  %860 = vmatpush1.bf16.msra.mxu0 %v303
  %861 = vmatprep.subr.bf16.mxu0 0
  %862 = vmatpush1.bf16.msra.mxu0 %v304
  %863 = vmatprep.subr.bf16.mxu0 0
  %864 = vmatpush1.bf16.msra.mxu0 %v305
  %865 = vmatprep.subr.bf16.mxu0 0
  %866 = vmatpush1.bf16.msra.mxu0 %v306
  %867 = vmatprep.subr.bf16.mxu0 0
  %868 = vmatpush1.bf16.msra.mxu0 %v307
  %869 = vmatprep.subr.bf16.mxu0 0
  %870 = vmatpush1.bf16.msra.mxu0 %v308
  %871 = vmatprep.subr.bf16.mxu0 0
  %872 = vmatpush1.bf16.msra.mxu0 %v309
  %873 = vmatprep.subr.bf16.mxu0 0
  %874 = vmatpush1.bf16.msra.mxu0 %v310
  %875 = vmatprep.subr.bf16.mxu0 0
  %876 = vmatpush1.bf16.msra.mxu0 %v311
  %877 = vmatprep.subr.bf16.mxu0 0
  %878 = vmatpush1.bf16.msra.mxu0 %v312
  %879 = vmatprep.subr.bf16.mxu0 0
  %880 = vmatpush1.bf16.msra.mxu0 %v313
  %881 = vmatprep.mubr.bf16.mxu0 %v826
  %882 = vmatmul.mubr.bf16.gmra.mrb[0].mxu0 %v825
  %v883 = vpop.f32.mrb[0].mxu0
  %v884 = vadd.f32 0.0, %v883
  %v885 = vpop.f32.mrb[0].mxu0
  %v886 = vpop.f32.mrb[0].mxu0
  %v887 = vadd.f32 0.0, %v886
  %v888 = vpop.f32.mrb[0].mxu0
  %889 = vmatprep.mubr.bf16.mxu0 %v831
  %890 = vmatmul.mubr.bf16.gmra.mrb[0].mxu0 %v830
  %v891 = vpop.f32.mrb[0].mxu0
  %v892 = vadd.f32 0.0, %v891
  %v893 = vpop.f32.mrb[0].mxu0
  %v894 = vpop.f32.mrb[0].mxu0
  %v895 = vadd.f32 0.0, %v894
  %v896 = vpop.f32.mrb[0].mxu0
  %897 = vdwg.mxu0
  %898 = vmatprep.subr.bf16.mxu0 0
  %899 = vmatpush1.bf16.msra.mxu0 %v314
  %900 = vmatprep.subr.bf16.mxu0 0
  %901 = vmatpush1.bf16.msra.mxu0 %v315
  %902 = vmatprep.subr.bf16.mxu0 0
  %903 = vmatpush1.bf16.msra.mxu0 %v316
  %904 = vmatprep.subr.bf16.mxu0 0
  %905 = vmatpush1.bf16.msra.mxu0 %v317
  %906 = vmatprep.subr.bf16.mxu0 0
  %907 = vmatpush1.bf16.msra.mxu0 %v318
  %908 = vmatprep.subr.bf16.mxu0 0
  %909 = vmatpush1.bf16.msra.mxu0 %v319
  %910 = vmatprep.subr.bf16.mxu0 0
  %911 = vmatpush1.bf16.msra.mxu0 %v320
  %912 = vmatprep.subr.bf16.mxu0 0
  %913 = vmatpush1.bf16.msra.mxu0 %v321
  %914 = vmatprep.subr.bf16.mxu0 0
  %915 = vmatpush1.bf16.msra.mxu0 %v322
  %916 = vmatprep.subr.bf16.mxu0 0
  %917 = vmatpush1.bf16.msra.mxu0 %v323
  %918 = vmatprep.subr.bf16.mxu0 0
  %919 = vmatpush1.bf16.msra.mxu0 %v324
  %920 = vmatprep.subr.bf16.mxu0 0
  %921 = vmatpush1.bf16.msra.mxu0 %v325
  %922 = vmatprep.subr.bf16.mxu0 0
  %923 = vmatpush1.bf16.msra.mxu0 %v326
  %924 = vmatprep.subr.bf16.mxu0 0
  %925 = vmatpush1.bf16.msra.mxu0 %v327
  %926 = vmatprep.subr.bf16.mxu0 0
  %927 = vmatpush1.bf16.msra.mxu0 %v328
  %928 = vmatprep.subr.bf16.mxu0 0
  %929 = vmatpush1.bf16.msra.mxu0 %v329
  %930 = vmatprep.mubr.bf16.mxu0 %v828
  %931 = vmatmul.mubr.bf16.gmra.mrb[0].mxu0 %v827
  %v932 = vpop.f32.mrb[0].mxu0
  %v933 = vadd.f32 %v884, %v932
  %v934 = vpop.f32.mrb[0].mxu0
  %v935 = vpop.f32.mrb[0].mxu0
  %v936 = vadd.f32 %v887, %v935
  %v937 = vpop.f32.mrb[0].mxu0
  %938 = vmatprep.mubr.bf16.mxu0 %v833
  %939 = vmatmul.mubr.bf16.gmra.mrb[0].mxu0 %v832
  %v940 = vpop.f32.mrb[0].mxu0
  %v941 = vadd.f32 %v892, %v940
  %v942 = vpop.f32.mrb[0].mxu0
  %v943 = vpop.f32.mrb[0].mxu0
  %v944 = vadd.f32 %v895, %v943
  %v945 = vpop.f32.mrb[0].mxu0
  %946 = vdwg.mxu0
  %947 = vmatprep.subr.bf16.mxu0 0
  %948 = vmatpush1.bf16.msra.mxu0 %v330
  %949 = vmatprep.subr.bf16.mxu0 0
  %950 = vmatpush1.bf16.msra.mxu0 %v331
  %951 = vmatprep.subr.bf16.mxu0 0
  %952 = vmatpush1.bf16.msra.mxu0 %v332
  %953 = vmatprep.subr.bf16.mxu0 0
  %954 = vmatpush1.bf16.msra.mxu0 %v333
  %955 = vmatprep.subr.bf16.mxu0 0
  %956 = vmatpush1.bf16.msra.mxu0 0
  %957 = vmatprep.subr.bf16.mxu0 0
  %958 = vmatpush1.bf16.msra.mxu0 0
  %959 = vmatprep.subr.bf16.mxu0 0
  %960 = vmatpush1.bf16.msra.mxu0 0
  %961 = vmatprep.subr.bf16.mxu0 0
  %962 = vmatpush1.bf16.msra.mxu0 0
  %963 = vmatprep.subr.bf16.mxu0 0
  %964 = vmatpush1.bf16.msra.mxu0 0
  %965 = vmatprep.subr.bf16.mxu0 0
  %966 = vmatpush1.bf16.msra.mxu0 0
  %967 = vmatprep.subr.bf16.mxu0 0
  %968 = vmatpush1.bf16.msra.mxu0 0
  %969 = vmatprep.subr.bf16.mxu0 0
  %970 = vmatpush1.bf16.msra.mxu0 0
  %971 = vmatprep.subr.bf16.mxu0 0
  %972 = vmatpush1.bf16.msra.mxu0 0
  %973 = vmatprep.subr.bf16.mxu0 0
  %974 = vmatpush1.bf16.msra.mxu0 0
  %975 = vmatprep.subr.bf16.mxu0 0
  %976 = vmatpush1.bf16.msra.mxu0 0
  %977 = vmatprep.subr.bf16.mxu0 0
  %978 = vmatpush1.bf16.msra.mxu0 0
  %979 = vmatprep.mubr.bf16.mxu0 0
  %980 = vmatmul.mubr.bf16.gmra.mrb[0].mxu0 %v844
  %v981 = vpop.f32.mrb[0].mxu0
  %v982 = vadd.f32 %v933, %v981
  %v983 = vpop.f32.mrb[0].mxu0
  %v984 = vpop.f32.mrb[0].mxu0
  %v985 = vadd.f32 %v936, %v984
  %v986 = vpop.f32.mrb[0].mxu0
  %987 = vmatprep.mubr.bf16.mxu0 0
  %988 = vmatmul.mubr.bf16.gmra.mrb[0].mxu0 %v847
  %v989 = vpop.f32.mrb[0].mxu0
  %v990 = vadd.f32 %v941, %v989
  %v991 = vpop.f32.mrb[0].mxu0
  %v992 = vpop.f32.mrb[0].mxu0
  %v993 = vadd.f32 %v944, %v992
  %v994 = vpop.f32.mrb[0].mxu0
  %995 = vdwg.mxu0
  %v996 = vmul.f32 %v982, %v528
  %v997 = vmul.f32 %v985, %v528
  %v998 = vmul.f32 %v990, %v528
  %v999 = vmul.f32 %v993, %v528
  %v1000 = vadd.f32 %v996, %v538
  %v1001 = vadd.f32 %v997, %v538
  %v1002 = vadd.f32 %v998, %v538
  %v1003 = vadd.f32 %v999, %v538
  %v1004 = vmax.f32 %v1000, 0.0
  %v1005 = vmax.f32 %v1001, 0.0
  %v1006 = vmax.f32 %v1002, 0.0
  %v1007 = vmax.f32 %v1003, 0.0
  %v1008 = vmax.f32 %v776, %v1004
  %v1009 = vmax.f32 %v777, %v1005
  %v1010 = vmax.f32 %v778, %v1006
  %v1011 = vmax.f32 %v779, %v1007
  %s1012 = scalar_lea.vmem %s0, 240
  %v1013 = vld [vmem:[%s1012] sm:$0xff]
  %v1014 = vld [vmem:[%s1012 + $0x8] sm:$0xff]
  %v1015 = vld [vmem:[%s1012 + $0x10] sm:$0xf]
  %v1016 = vld [vmem:[%s1012 + $0x14] sm:$0xff]
  %v1017 = vld [vmem:[%s1012 + $0x1c] sm:$0xff]
  %v1018 = vld [vmem:[%s1012 + $0x24] sm:$0xf]
  %v1019 = vld [vmem:[%s1012 + $0x28] sm:$0xff]
  %v1020 = vld [vmem:[%s1012 + $0x30] sm:$0xff]
  %v1021 = vld [vmem:[%s1012 + $0x38] sm:$0xf]
  %v1022 = vld [vmem:[%s1012 + $0x3c] sm:$0xff]
  %v1023 = vld [vmem:[%s1012 + $0x44] sm:$0xff]
  %v1024 = vld [vmem:[%s1012 + $0x4c] sm:$0xf]
  %v1037 = vunpack.c.l.b16 %v1013
  %v1038 = vunpack.c.h.b16 %v1013
  %v1039 = vunpack.c.l.b16 %v1014
  %v1040 = vunpack.c.h.b16 %v1014
  %v1041 = vunpack.c.l.b16 %v1015
  %v1042 = vunpack.c.l.b16 %v1016
  %v1043 = vunpack.c.h.b16 %v1016
  %v1044 = vunpack.c.l.b16 %v1017
  %v1045 = vunpack.c.h.b16 %v1017
  %v1046 = vunpack.c.l.b16 %v1018
  %v1047 = vunpack.c.l.b16 %v1019
  %v1048 = vunpack.c.h.b16 %v1019
  %v1049 = vunpack.c.l.b16 %v1020
  %v1050 = vunpack.c.h.b16 %v1020
  %v1051 = vunpack.c.l.b16 %v1021
  %v1052 = vunpack.c.l.b16 %v1022
  %v1053 = vunpack.c.h.b16 %v1022
  %v1054 = vunpack.c.l.b16 %v1023
  %v1055 = vunpack.c.h.b16 %v1023
  %v1056 = vunpack.c.l.b16 %v1024
  %v1057 = vpack.c.b16 %v1042, %v1037
  %v1058 = vpack.c.b16 %v1043, %v1038
  %v1059 = vpack.c.b16 %v1044, %v1039
  %v1060 = vpack.c.b16 %v1045, %v1040
  %v1061 = vpack.c.b16 %v1046, %v1041
  %v1062 = vpack.c.b16 %v1052, %v1047
  %v1063 = vpack.c.b16 %v1053, %v1048
  %v1064 = vpack.c.b16 %v1054, %v1049
  %v1065 = vpack.c.b16 %v1055, %v1050
  %v1066 = vpack.c.b16 %v1056, %v1051
  %v1076 = vsel %vm370, %v1061, 0
  %v1079 = vsel %vm370, %v1066, 0
  %1081 = vmatprep.subr.bf16.mxu0 0
  %1082 = vmatpush1.bf16.msra.mxu0 %v298
  %1083 = vmatprep.subr.bf16.mxu0 0
  %1084 = vmatpush1.bf16.msra.mxu0 %v299
  %1085 = vmatprep.subr.bf16.mxu0 0
  %1086 = vmatpush1.bf16.msra.mxu0 %v300
  %1087 = vmatprep.subr.bf16.mxu0 0
  %1088 = vmatpush1.bf16.msra.mxu0 %v301
  %1089 = vmatprep.subr.bf16.mxu0 0
  %1090 = vmatpush1.bf16.msra.mxu0 %v302
  %1091 = vmatprep.subr.bf16.mxu0 0
  %1092 = vmatpush1.bf16.msra.mxu0 %v303
  %1093 = vmatprep.subr.bf16.mxu0 0
  %1094 = vmatpush1.bf16.msra.mxu0 %v304
  %1095 = vmatprep.subr.bf16.mxu0 0
  %1096 = vmatpush1.bf16.msra.mxu0 %v305
  %1097 = vmatprep.subr.bf16.mxu0 0
  %1098 = vmatpush1.bf16.msra.mxu0 %v306
  %1099 = vmatprep.subr.bf16.mxu0 0
  %1100 = vmatpush1.bf16.msra.mxu0 %v307
  %1101 = vmatprep.subr.bf16.mxu0 0
  %1102 = vmatpush1.bf16.msra.mxu0 %v308
  %1103 = vmatprep.subr.bf16.mxu0 0
  %1104 = vmatpush1.bf16.msra.mxu0 %v309
  %1105 = vmatprep.subr.bf16.mxu0 0
  %1106 = vmatpush1.bf16.msra.mxu0 %v310
  %1107 = vmatprep.subr.bf16.mxu0 0
  %1108 = vmatpush1.bf16.msra.mxu0 %v311
  %1109 = vmatprep.subr.bf16.mxu0 0
  %1110 = vmatpush1.bf16.msra.mxu0 %v312
  %1111 = vmatprep.subr.bf16.mxu0 0
  %1112 = vmatpush1.bf16.msra.mxu0 %v313
  %1113 = vmatprep.mubr.bf16.mxu0 %v1058
  %1114 = vmatmul.mubr.bf16.gmra.mrb[0].mxu0 %v1057
  %v1115 = vpop.f32.mrb[0].mxu0
  %v1116 = vadd.f32 0.0, %v1115
  %v1117 = vpop.f32.mrb[0].mxu0
  %v1118 = vpop.f32.mrb[0].mxu0
  %v1119 = vadd.f32 0.0, %v1118
  %v1120 = vpop.f32.mrb[0].mxu0
  %1121 = vmatprep.mubr.bf16.mxu0 %v1063
  %1122 = vmatmul.mubr.bf16.gmra.mrb[0].mxu0 %v1062
  %v1123 = vpop.f32.mrb[0].mxu0
  %v1124 = vadd.f32 0.0, %v1123
  %v1125 = vpop.f32.mrb[0].mxu0
  %v1126 = vpop.f32.mrb[0].mxu0
  %v1127 = vadd.f32 0.0, %v1126
  %v1128 = vpop.f32.mrb[0].mxu0
  %1129 = vdwg.mxu0
  %1130 = vmatprep.subr.bf16.mxu0 0
  %1131 = vmatpush1.bf16.msra.mxu0 %v314
  %1132 = vmatprep.subr.bf16.mxu0 0
  %1133 = vmatpush1.bf16.msra.mxu0 %v315
  %1134 = vmatprep.subr.bf16.mxu0 0
  %1135 = vmatpush1.bf16.msra.mxu0 %v316
  %1136 = vmatprep.subr.bf16.mxu0 0
  %1137 = vmatpush1.bf16.msra.mxu0 %v317
  %1138 = vmatprep.subr.bf16.mxu0 0
  %1139 = vmatpush1.bf16.msra.mxu0 %v318
  %1140 = vmatprep.subr.bf16.mxu0 0
  %1141 = vmatpush1.bf16.msra.mxu0 %v319
  %1142 = vmatprep.subr.bf16.mxu0 0
  %1143 = vmatpush1.bf16.msra.mxu0 %v320
  %1144 = vmatprep.subr.bf16.mxu0 0
  %1145 = vmatpush1.bf16.msra.mxu0 %v321
  %1146 = vmatprep.subr.bf16.mxu0 0
  %1147 = vmatpush1.bf16.msra.mxu0 %v322
  %1148 = vmatprep.subr.bf16.mxu0 0
  %1149 = vmatpush1.bf16.msra.mxu0 %v323
  %1150 = vmatprep.subr.bf16.mxu0 0
  %1151 = vmatpush1.bf16.msra.mxu0 %v324
  %1152 = vmatprep.subr.bf16.mxu0 0
  %1153 = vmatpush1.bf16.msra.mxu0 %v325
  %1154 = vmatprep.subr.bf16.mxu0 0
  %1155 = vmatpush1.bf16.msra.mxu0 %v326
  %1156 = vmatprep.subr.bf16.mxu0 0
  %1157 = vmatpush1.bf16.msra.mxu0 %v327
  %1158 = vmatprep.subr.bf16.mxu0 0
  %1159 = vmatpush1.bf16.msra.mxu0 %v328
  %1160 = vmatprep.subr.bf16.mxu0 0
  %1161 = vmatpush1.bf16.msra.mxu0 %v329
  %1162 = vmatprep.mubr.bf16.mxu0 %v1060
  %1163 = vmatmul.mubr.bf16.gmra.mrb[0].mxu0 %v1059
  %v1164 = vpop.f32.mrb[0].mxu0
  %v1165 = vadd.f32 %v1116, %v1164
  %v1166 = vpop.f32.mrb[0].mxu0
  %v1167 = vpop.f32.mrb[0].mxu0
  %v1168 = vadd.f32 %v1119, %v1167
  %v1169 = vpop.f32.mrb[0].mxu0
  %1170 = vmatprep.mubr.bf16.mxu0 %v1065
  %1171 = vmatmul.mubr.bf16.gmra.mrb[0].mxu0 %v1064
  %v1172 = vpop.f32.mrb[0].mxu0
  %v1173 = vadd.f32 %v1124, %v1172
  %v1174 = vpop.f32.mrb[0].mxu0
  %v1175 = vpop.f32.mrb[0].mxu0
  %v1176 = vadd.f32 %v1127, %v1175
  %v1177 = vpop.f32.mrb[0].mxu0
  %1178 = vdwg.mxu0
  %1179 = vmatprep.subr.bf16.mxu0 0
  %1180 = vmatpush1.bf16.msra.mxu0 %v330
  %1181 = vmatprep.subr.bf16.mxu0 0
  %1182 = vmatpush1.bf16.msra.mxu0 %v331
  %1183 = vmatprep.subr.bf16.mxu0 0
  %1184 = vmatpush1.bf16.msra.mxu0 %v332
  %1185 = vmatprep.subr.bf16.mxu0 0
  %1186 = vmatpush1.bf16.msra.mxu0 %v333
  %1187 = vmatprep.subr.bf16.mxu0 0
  %1188 = vmatpush1.bf16.msra.mxu0 0
  %1189 = vmatprep.subr.bf16.mxu0 0
  %1190 = vmatpush1.bf16.msra.mxu0 0
  %1191 = vmatprep.subr.bf16.mxu0 0
  %1192 = vmatpush1.bf16.msra.mxu0 0
  %1193 = vmatprep.subr.bf16.mxu0 0
  %1194 = vmatpush1.bf16.msra.mxu0 0
  %1195 = vmatprep.subr.bf16.mxu0 0
  %1196 = vmatpush1.bf16.msra.mxu0 0
  %1197 = vmatprep.subr.bf16.mxu0 0
  %1198 = vmatpush1.bf16.msra.mxu0 0
  %1199 = vmatprep.subr.bf16.mxu0 0
  %1200 = vmatpush1.bf16.msra.mxu0 0
  %1201 = vmatprep.subr.bf16.mxu0 0
  %1202 = vmatpush1.bf16.msra.mxu0 0
  %1203 = vmatprep.subr.bf16.mxu0 0
  %1204 = vmatpush1.bf16.msra.mxu0 0
  %1205 = vmatprep.subr.bf16.mxu0 0
  %1206 = vmatpush1.bf16.msra.mxu0 0
  %1207 = vmatprep.subr.bf16.mxu0 0
  %1208 = vmatpush1.bf16.msra.mxu0 0
  %1209 = vmatprep.subr.bf16.mxu0 0
  %1210 = vmatpush1.bf16.msra.mxu0 0
  %1211 = vmatprep.mubr.bf16.mxu0 0
  %1212 = vmatmul.mubr.bf16.gmra.mrb[0].mxu0 %v1076
  %v1213 = vpop.f32.mrb[0].mxu0
  %v1214 = vadd.f32 %v1165, %v1213
  %v1215 = vpop.f32.mrb[0].mxu0
  %v1216 = vpop.f32.mrb[0].mxu0
  %v1217 = vadd.f32 %v1168, %v1216
  %v1218 = vpop.f32.mrb[0].mxu0
  %1219 = vmatprep.mubr.bf16.mxu0 0
  %1220 = vmatmul.mubr.bf16.gmra.mrb[0].mxu0 %v1079
  %v1221 = vpop.f32.mrb[0].mxu0
  %v1222 = vadd.f32 %v1173, %v1221
  %v1223 = vpop.f32.mrb[0].mxu0
  %v1224 = vpop.f32.mrb[0].mxu0
  %v1225 = vadd.f32 %v1176, %v1224
  %v1226 = vpop.f32.mrb[0].mxu0
  %1227 = vdwg.mxu0
  %v1228 = vmul.f32 %v1214, %v528
  %v1229 = vmul.f32 %v1217, %v528
  %v1230 = vmul.f32 %v1222, %v528
  %v1231 = vmul.f32 %v1225, %v528
  %v1232 = vadd.f32 %v1228, %v538
  %v1233 = vadd.f32 %v1229, %v538
  %v1234 = vadd.f32 %v1230, %v538
  %v1235 = vadd.f32 %v1231, %v538
  %v1236 = vmax.f32 %v1232, 0.0
  %v1237 = vmax.f32 %v1233, 0.0
  %v1238 = vmax.f32 %v1234, 0.0
  %v1239 = vmax.f32 %v1235, 0.0
  %v1240 = vmax.f32 %v1008, %v1236
  %v1241 = vmax.f32 %v1009, %v1237
  %v1242 = vmax.f32 %v1010, %v1238
  %v1243 = vmax.f32 %v1011, %v1239
  %v1244 = vpack.c.bf16 %v1241, %v1240
  %v1245 = vpack.c.bf16 %v1243, %v1242
  %v1248 = vunpack.c.l.b16 %v1244
  %v1249 = vunpack.c.h.b16 %v1244
  %v1250 = vunpack.c.l.b16 %v1245
  %v1251 = vunpack.c.h.b16 %v1245
  %v1252 = vpack.c.b16 %v1248, %v1248
  %v1253 = vpack.c.b16 %v1249, %v1249
  %v1254 = vpack.c.b16 %v1250, %v1250
  %v1255 = vpack.c.b16 %v1251, %v1251
  %1260 = vst [vmem:[%s4] sm:$0xf] %v1252
  %1261 = vst [vmem:[%s4 + $0x4] sm:$0xf] %v1253
  %1262 = vst [vmem:[%s4 + $0x8] sm:$0xf] %v1254
  %1263 = vst [vmem:[%s4 + $0xc] sm:$0xf] %v1255
  // Predicated region
  $region18: #{simple_cnn_forward.5} parent=0 // pred_check
    _
  $region19: #{simple_cnn_forward.5} parent=0 // pred_check_branch
    %1265 = sbr.rel (0) target = $region21
  $region20: #{simple_cnn_forward.5} parent=0 // pred_region
    _
  $region21: #{simple_cnn_forward.5} parent=0 // pred_fallthru
    _
  // Predicated region
  $region22: #{simple_cnn_forward.5} parent=0 // pred_check
    _
  $region23: #{simple_cnn_forward.5} parent=0 // pred_check_branch
    %1267 = sbr.rel (0) target = $region25
  $region24: #{simple_cnn_forward.5} parent=0 // pred_region
    _
  $region25: #{simple_cnn_forward.5} parent=0 // pred_fallthru
    _

// kernel: simple_cnn_forward.7
$region0: #{simple_cnn_forward.7}
  #allocation0 [shape = 'u32[]', space=smem, size = 0x4, offset = 0x4, fixed_abs, tag = 'smem constant byte address 0x4 - core index']
  #allocation1 [shape = 'u32[144,128]{1,0:T(1,128)}', space=vmem, size = 0x12000, scoped, tag = 'internal scratch']
  %s0 = inlined_call_operand.vmem [shape: f32[2,4,256], index: 0, kind: input, shape index: {}]
  %s1 = inlined_call_operand.vmem [shape: f32[256,512], index: 1, kind: input, shape index: {}]
  %s2 = inlined_call_operand.vmem [shape: f32[1,512], index: 2, kind: input, shape index: {}]
  %s3 = inlined_call_operand.vmem [shape: f32[512,128], index: 3, kind: input, shape index: {}]
  %s4 = inlined_call_operand.vmem [shape: f32[1,128], index: 4, kind: input, shape index: {}]
  %s5 = inlined_call_operand.hbm [shape: f32[2,128], index: 5, kind: output, shape index: {}]
  %s6 = sld [smem:[#allocation0]]
  $region30: #{simple_cnn_forward.7} parent=0
    _
  %s8 = ssub.s32 1, %s6
  %s9 = scalar_select 0, %s8, %s6
  $region1: #{simple_cnn_forward.7} parent=0
    #allocation2 [shape = 'u8[1024]{0}', space=vmem, size = 0x400, scoped, tag = 'output window, operand 0, single buffered']
    #allocation3 [shape = 's32[1]{0}', space=sflag, size = 0x4, scoped, tag = 'scoped memory for simple_cnn_forward.7']
    %10 = vsyncpa [#allocation3], 0
    // Predicated region
    $region2: #{simple_cnn_forward.7} parent=1 // pred_check
      _
    $region3: #{simple_cnn_forward.7} parent=1 // pred_check_branch
      %12 = sbr.rel (0) target = $region5
    $region4: #{simple_cnn_forward.7} parent=1 // pred_region
      _
    $region5: #{simple_cnn_forward.7} parent=1 // pred_fallthru
      _
    // Predicated region
    $region6: #{simple_cnn_forward.7} parent=1 // pred_check
      _
    $region7: #{simple_cnn_forward.7} parent=1 // pred_check_branch
      %14 = sbr.rel (0) target = $region9
    $region8: #{simple_cnn_forward.7} parent=1 // pred_region
      _
    $region9: #{simple_cnn_forward.7} parent=1 // pred_fallthru
      _
    // Predicated region
    $region10: #{simple_cnn_forward.7} parent=1 // pred_check
      _
    $region11: #{simple_cnn_forward.7} parent=1 // pred_check_branch
      %16 = sbr.rel (0) target = $region13
    $region12: #{simple_cnn_forward.7} parent=1 // pred_region
      _
    $region13: #{simple_cnn_forward.7} parent=1 // pred_fallthru
      _
    // Predicated region
    $region14: #{simple_cnn_forward.7} parent=1 // pred_check
      _
    $region15: #{simple_cnn_forward.7} parent=1 // pred_check_branch
      %18 = sbr.rel (0) target = $region17
    $region16: #{simple_cnn_forward.7} parent=1 // pred_region
      _
    $region17: #{simple_cnn_forward.7} parent=1 // pred_fallthru
      _
    // Predicated region
    $region18: #{simple_cnn_forward.7} parent=1 // pred_check
      _
    $region19: #{simple_cnn_forward.7} parent=1 // pred_check_branch
      %20 = sbr.rel (0) target = $region21
    $region20: #{simple_cnn_forward.7} parent=1 // pred_region
      _
    $region21: #{simple_cnn_forward.7} parent=1 // pred_fallthru
      _
    %v21 = vld [vmem:[%s0] sm:$0xff]
    %v22 = vld [vmem:[%s0 + $0x8] sm:$0xff]
    %v25 = vcombine.high %v21, %v21
    %v26 = vcombine.high %v22, %v22
    %vm29 = vcmask 1043456
    %v30 = vsel %vm29, %v21, 0.0
    %v31 = vrot.slane %v30, 4
    %v32 = vadd.f32 %v30, %v31
    %v33 = vrot.slane %v32, 2
    %v34 = vadd.f32 %v32, %v33
    %v35 = vrot.slane %v34, 1
    %v36 = vadd.f32 %v34, %v35
    %v37 = vsel %vm29, %v25, 0.0
    %v38 = vrot.slane %v37, 4
    %v39 = vadd.f32 %v37, %v38
    %v40 = vrot.slane %v39, 2
    %v41 = vadd.f32 %v39, %v40
    %v42 = vrot.slane %v41, 1
    %v43 = vadd.f32 %v41, %v42
    %v44 = vsel %vm29, %v22, 0.0
    %v45 = vrot.slane %v44, 4
    %v46 = vadd.f32 %v44, %v45
    %v47 = vrot.slane %v46, 2
    %v48 = vadd.f32 %v46, %v47
    %v49 = vrot.slane %v48, 1
    %v50 = vadd.f32 %v48, %v49
    %v51 = vsel %vm29, %v26, 0.0
    %v52 = vrot.slane %v51, 4
    %v53 = vadd.f32 %v51, %v52
    %v54 = vrot.slane %v53, 2
    %v55 = vadd.f32 %v53, %v54
    %v56 = vrot.slane %v55, 1
    %v57 = vadd.f32 %v55, %v56
    %v58 = vrcp.pop 4.0
    %v59 = vmul.f32 %v36, %v58
    %v60 = vmul.f32 %v43, %v58
    %v61 = vmul.f32 %v50, %v58
    %v62 = vmul.f32 %v57, %v58
    %v63 = vld [vmem:[%s1] sm:$0xff]
    %v64 = vld [vmem:[%s1 + $0x8] sm:$0xff]
    %v65 = vld [vmem:[%s1 + $0x10] sm:$0xff]
    %v66 = vld [vmem:[%s1 + $0x18] sm:$0xff]
    %v67 = vld [vmem:[%s1 + $0x20] sm:$0xff]
    %v68 = vld [vmem:[%s1 + $0x28] sm:$0xff]
    %v69 = vld [vmem:[%s1 + $0x30] sm:$0xff]
    %v70 = vld [vmem:[%s1 + $0x38] sm:$0xff]
    %v71 = vld [vmem:[%s1 + $0x40] sm:$0xff]
    %v72 = vld [vmem:[%s1 + $0x48] sm:$0xff]
    %v73 = vld [vmem:[%s1 + $0x50] sm:$0xff]
    %v74 = vld [vmem:[%s1 + $0x58] sm:$0xff]
    %v75 = vld [vmem:[%s1 + $0x60] sm:$0xff]
    %v76 = vld [vmem:[%s1 + $0x68] sm:$0xff]
    %v77 = vld [vmem:[%s1 + $0x70] sm:$0xff]
    %v78 = vld [vmem:[%s1 + $0x78] sm:$0xff]
    %v79 = vld [vmem:[%s1 + $0x80] sm:$0xff]
    %v80 = vld [vmem:[%s1 + $0x88] sm:$0xff]
    %v81 = vld [vmem:[%s1 + $0x90] sm:$0xff]
    %v82 = vld [vmem:[%s1 + $0x98] sm:$0xff]
    %v83 = vld [vmem:[%s1 + $0xa0] sm:$0xff]
    %v84 = vld [vmem:[%s1 + $0xa8] sm:$0xff]
    %v85 = vld [vmem:[%s1 + $0xb0] sm:$0xff]
    %v86 = vld [vmem:[%s1 + $0xb8] sm:$0xff]
    %v87 = vld [vmem:[%s1 + $0xc0] sm:$0xff]
    %v88 = vld [vmem:[%s1 + $0xc8] sm:$0xff]
    %v89 = vld [vmem:[%s1 + $0xd0] sm:$0xff]
    %v90 = vld [vmem:[%s1 + $0xd8] sm:$0xff]
    %v91 = vld [vmem:[%s1 + $0xe0] sm:$0xff]
    %v92 = vld [vmem:[%s1 + $0xe8] sm:$0xff]
    %v93 = vld [vmem:[%s1 + $0xf0] sm:$0xff]
    %v94 = vld [vmem:[%s1 + $0xf8] sm:$0xff]
    %v95 = vld [vmem:[%s1 + $0x100] sm:$0xff]
    %v96 = vld [vmem:[%s1 + $0x108] sm:$0xff]
    %v97 = vld [vmem:[%s1 + $0x110] sm:$0xff]
    %v98 = vld [vmem:[%s1 + $0x118] sm:$0xff]
    %v99 = vld [vmem:[%s1 + $0x120] sm:$0xff]
    %v100 = vld [vmem:[%s1 + $0x128] sm:$0xff]
    %v101 = vld [vmem:[%s1 + $0x130] sm:$0xff]
    %v102 = vld [vmem:[%s1 + $0x138] sm:$0xff]
    %v103 = vld [vmem:[%s1 + $0x140] sm:$0xff]
    %v104 = vld [vmem:[%s1 + $0x148] sm:$0xff]
    %v105 = vld [vmem:[%s1 + $0x150] sm:$0xff]
    %v106 = vld [vmem:[%s1 + $0x158] sm:$0xff]
    %v107 = vld [vmem:[%s1 + $0x160] sm:$0xff]
    %v108 = vld [vmem:[%s1 + $0x168] sm:$0xff]
    %v109 = vld [vmem:[%s1 + $0x170] sm:$0xff]
    %v110 = vld [vmem:[%s1 + $0x178] sm:$0xff]
    %v111 = vld [vmem:[%s1 + $0x180] sm:$0xff]
    %v112 = vld [vmem:[%s1 + $0x188] sm:$0xff]
    %v113 = vld [vmem:[%s1 + $0x190] sm:$0xff]
    %v114 = vld [vmem:[%s1 + $0x198] sm:$0xff]
    %v115 = vld [vmem:[%s1 + $0x1a0] sm:$0xff]
    %v116 = vld [vmem:[%s1 + $0x1a8] sm:$0xff]
    %v117 = vld [vmem:[%s1 + $0x1b0] sm:$0xff]
    %v118 = vld [vmem:[%s1 + $0x1b8] sm:$0xff]
    %v119 = vld [vmem:[%s1 + $0x1c0] sm:$0xff]
    %v120 = vld [vmem:[%s1 + $0x1c8] sm:$0xff]
    %v121 = vld [vmem:[%s1 + $0x1d0] sm:$0xff]
    %v122 = vld [vmem:[%s1 + $0x1d8] sm:$0xff]
    %v123 = vld [vmem:[%s1 + $0x1e0] sm:$0xff]
    %v124 = vld [vmem:[%s1 + $0x1e8] sm:$0xff]
    %v125 = vld [vmem:[%s1 + $0x1f0] sm:$0xff]
    %v126 = vld [vmem:[%s1 + $0x1f8] sm:$0xff]
    %v127 = vld [vmem:[%s1 + $0x200] sm:$0xff]
    %v128 = vld [vmem:[%s1 + $0x208] sm:$0xff]
    %v129 = vld [vmem:[%s1 + $0x210] sm:$0xff]
    %v130 = vld [vmem:[%s1 + $0x218] sm:$0xff]
    %v131 = vld [vmem:[%s1 + $0x220] sm:$0xff]
    %v132 = vld [vmem:[%s1 + $0x228] sm:$0xff]
    %v133 = vld [vmem:[%s1 + $0x230] sm:$0xff]
    %v134 = vld [vmem:[%s1 + $0x238] sm:$0xff]
    %v135 = vld [vmem:[%s1 + $0x240] sm:$0xff]
    %v136 = vld [vmem:[%s1 + $0x248] sm:$0xff]
    %v137 = vld [vmem:[%s1 + $0x250] sm:$0xff]
    %v138 = vld [vmem:[%s1 + $0x258] sm:$0xff]
    %v139 = vld [vmem:[%s1 + $0x260] sm:$0xff]
    %v140 = vld [vmem:[%s1 + $0x268] sm:$0xff]
    %v141 = vld [vmem:[%s1 + $0x270] sm:$0xff]
    %v142 = vld [vmem:[%s1 + $0x278] sm:$0xff]
    %v143 = vld [vmem:[%s1 + $0x280] sm:$0xff]
    %v144 = vld [vmem:[%s1 + $0x288] sm:$0xff]
    %v145 = vld [vmem:[%s1 + $0x290] sm:$0xff]
    %v146 = vld [vmem:[%s1 + $0x298] sm:$0xff]
    %v147 = vld [vmem:[%s1 + $0x2a0] sm:$0xff]
    %v148 = vld [vmem:[%s1 + $0x2a8] sm:$0xff]
    %v149 = vld [vmem:[%s1 + $0x2b0] sm:$0xff]
    %v150 = vld [vmem:[%s1 + $0x2b8] sm:$0xff]
    %v151 = vld [vmem:[%s1 + $0x2c0] sm:$0xff]
    %v152 = vld [vmem:[%s1 + $0x2c8] sm:$0xff]
    %v153 = vld [vmem:[%s1 + $0x2d0] sm:$0xff]
    %v154 = vld [vmem:[%s1 + $0x2d8] sm:$0xff]
    %v155 = vld [vmem:[%s1 + $0x2e0] sm:$0xff]
    %v156 = vld [vmem:[%s1 + $0x2e8] sm:$0xff]
    %v157 = vld [vmem:[%s1 + $0x2f0] sm:$0xff]
    %v158 = vld [vmem:[%s1 + $0x2f8] sm:$0xff]
    %v159 = vld [vmem:[%s1 + $0x300] sm:$0xff]
    %v160 = vld [vmem:[%s1 + $0x308] sm:$0xff]
    %v161 = vld [vmem:[%s1 + $0x310] sm:$0xff]
    %v162 = vld [vmem:[%s1 + $0x318] sm:$0xff]
    %v163 = vld [vmem:[%s1 + $0x320] sm:$0xff]
    %v164 = vld [vmem:[%s1 + $0x328] sm:$0xff]
    %v165 = vld [vmem:[%s1 + $0x330] sm:$0xff]
    %v166 = vld [vmem:[%s1 + $0x338] sm:$0xff]
    %v167 = vld [vmem:[%s1 + $0x340] sm:$0xff]
    %v168 = vld [vmem:[%s1 + $0x348] sm:$0xff]
    %v169 = vld [vmem:[%s1 + $0x350] sm:$0xff]
    %v170 = vld [vmem:[%s1 + $0x358] sm:$0xff]
    %v171 = vld [vmem:[%s1 + $0x360] sm:$0xff]
    %v172 = vld [vmem:[%s1 + $0x368] sm:$0xff]
    %v173 = vld [vmem:[%s1 + $0x370] sm:$0xff]
    %v174 = vld [vmem:[%s1 + $0x378] sm:$0xff]
    %v175 = vld [vmem:[%s1 + $0x380] sm:$0xff]
    %v176 = vld [vmem:[%s1 + $0x388] sm:$0xff]
    %v177 = vld [vmem:[%s1 + $0x390] sm:$0xff]
    %v178 = vld [vmem:[%s1 + $0x398] sm:$0xff]
    %v179 = vld [vmem:[%s1 + $0x3a0] sm:$0xff]
    %v180 = vld [vmem:[%s1 + $0x3a8] sm:$0xff]
    %v181 = vld [vmem:[%s1 + $0x3b0] sm:$0xff]
    %v182 = vld [vmem:[%s1 + $0x3b8] sm:$0xff]
    %v183 = vld [vmem:[%s1 + $0x3c0] sm:$0xff]
    %v184 = vld [vmem:[%s1 + $0x3c8] sm:$0xff]
    %v185 = vld [vmem:[%s1 + $0x3d0] sm:$0xff]
    %v186 = vld [vmem:[%s1 + $0x3d8] sm:$0xff]
    %v187 = vld [vmem:[%s1 + $0x3e0] sm:$0xff]
    %v188 = vld [vmem:[%s1 + $0x3e8] sm:$0xff]
    %v189 = vld [vmem:[%s1 + $0x3f0] sm:$0xff]
    %v190 = vld [vmem:[%s1 + $0x3f8] sm:$0xff]
    %v191 = vld [vmem:[%s2] sm:$0xf]
    %v193 = vlaneseq
    %v194 = vshrl.u32 %v193, 7
    %v195 = vsub.s32 0, %v194
    %v196 = vrot.slane %v191, %v195
    %v197 = vlaneseq
    %v198 = vshrl.u32 %v197, 7
    %v199 = vsub.s32 1, %v198
    %v200 = vrot.slane %v191, %v199
    %v201 = vlaneseq
    %v202 = vshrl.u32 %v201, 7
    %v203 = vsub.s32 2, %v202
    %v204 = vrot.slane %v191, %v203
    %v205 = vlaneseq
    %v206 = vshrl.u32 %v205, 7
    %v207 = vsub.s32 3, %v206
    %v208 = vrot.slane %v191, %v207
    %vm217 = vcmask 1041409
    %v218 = vsel %vm217, %v61, %v59
    %v219 = vsel %vm217, %v62, %v60
    %222 = vmatprep.subr.mxu0 %v64
    %223 = vmatpush1.msra.mxu0 %v63
    %224 = vmatprep.subr.mxu0 %v68
    %225 = vmatpush1.msra.mxu0 %v67
    %226 = vmatprep.subr.mxu0 %v72
    %227 = vmatpush1.msra.mxu0 %v71
    %228 = vmatprep.subr.mxu0 %v76
    %229 = vmatpush1.msra.mxu0 %v75
    %230 = vmatprep.subr.mxu0 %v80
    %231 = vmatpush1.msra.mxu0 %v79
    %232 = vmatprep.subr.mxu0 %v84
    %233 = vmatpush1.msra.mxu0 %v83
    %234 = vmatprep.subr.mxu0 %v88
    %235 = vmatpush1.msra.mxu0 %v87
    %236 = vmatprep.subr.mxu0 %v92
    %237 = vmatpush1.msra.mxu0 %v91
    %238 = vmatprep.subr.mxu0 %v96
    %239 = vmatpush1.msra.mxu0 %v95
    %240 = vmatprep.subr.mxu0 %v100
    %241 = vmatpush1.msra.mxu0 %v99
    %242 = vmatprep.subr.mxu0 %v104
    %243 = vmatpush1.msra.mxu0 %v103
    %244 = vmatprep.subr.mxu0 %v108
    %245 = vmatpush1.msra.mxu0 %v107
    %246 = vmatprep.subr.mxu0 %v112
    %247 = vmatpush1.msra.mxu0 %v111
    %248 = vmatprep.subr.mxu0 %v116
    %249 = vmatpush1.msra.mxu0 %v115
    %250 = vmatprep.subr.mxu0 %v120
    %251 = vmatpush1.msra.mxu0 %v119
    %252 = vmatprep.subr.mxu0 %v124
    %253 = vmatpush1.msra.mxu0 %v123
    %254 = vmatprep.subr.mxu0 %v128
    %255 = vmatpush1.msra.mxu0 %v127
    %256 = vmatprep.subr.mxu0 %v132
    %257 = vmatpush1.msra.mxu0 %v131
    %258 = vmatprep.subr.mxu0 %v136
    %259 = vmatpush1.msra.mxu0 %v135
    %260 = vmatprep.subr.mxu0 %v140
    %261 = vmatpush1.msra.mxu0 %v139
    %262 = vmatprep.subr.mxu0 %v144
    %263 = vmatpush1.msra.mxu0 %v143
    %264 = vmatprep.subr.mxu0 %v148
    %265 = vmatpush1.msra.mxu0 %v147
    %266 = vmatprep.subr.mxu0 %v152
    %267 = vmatpush1.msra.mxu0 %v151
    %268 = vmatprep.subr.mxu0 %v156
    %269 = vmatpush1.msra.mxu0 %v155
    %270 = vmatprep.subr.mxu0 %v160
    %271 = vmatpush1.msra.mxu0 %v159
    %272 = vmatprep.subr.mxu0 %v164
    %273 = vmatpush1.msra.mxu0 %v163
    %274 = vmatprep.subr.mxu0 %v168
    %275 = vmatpush1.msra.mxu0 %v167
    %276 = vmatprep.subr.mxu0 %v172
    %277 = vmatpush1.msra.mxu0 %v171
    %278 = vmatprep.subr.mxu0 %v176
    %279 = vmatpush1.msra.mxu0 %v175
    %280 = vmatprep.subr.mxu0 %v180
    %281 = vmatpush1.msra.mxu0 %v179
    %282 = vmatprep.subr.mxu0 %v184
    %283 = vmatpush1.msra.mxu0 %v183
    %284 = vmatprep.subr.mxu0 %v188
    %285 = vmatpush1.msra.mxu0 %v187
    %286 = vmatprep.mubr.f32.mxu0 %v219
    %287 = vmatmul.mubr.f32.gmra.mrb[0].mxu0 %v218
    %v288 = vpop.f32.mrb[0].mxu0
    %v289 = vadd.f32 %v196, %v288
    %v290 = vpop.f32.mrb[0].mxu0
    %v291 = vadd.f32 %v200, %v290
    %292 = vdwg.mxu0
    %293 = vmatprep.subr.mxu0 %v66
    %294 = vmatpush1.msra.mxu0 %v65
    %295 = vmatprep.subr.mxu0 %v70
    %296 = vmatpush1.msra.mxu0 %v69
    %297 = vmatprep.subr.mxu0 %v74
    %298 = vmatpush1.msra.mxu0 %v73
    %299 = vmatprep.subr.mxu0 %v78
    %300 = vmatpush1.msra.mxu0 %v77
    %301 = vmatprep.subr.mxu0 %v82
    %302 = vmatpush1.msra.mxu0 %v81
    %303 = vmatprep.subr.mxu0 %v86
    %304 = vmatpush1.msra.mxu0 %v85
    %305 = vmatprep.subr.mxu0 %v90
    %306 = vmatpush1.msra.mxu0 %v89
    %307 = vmatprep.subr.mxu0 %v94
    %308 = vmatpush1.msra.mxu0 %v93
    %309 = vmatprep.subr.mxu0 %v98
    %310 = vmatpush1.msra.mxu0 %v97
    %311 = vmatprep.subr.mxu0 %v102
    %312 = vmatpush1.msra.mxu0 %v101
    %313 = vmatprep.subr.mxu0 %v106
    %314 = vmatpush1.msra.mxu0 %v105
    %315 = vmatprep.subr.mxu0 %v110
    %316 = vmatpush1.msra.mxu0 %v109
    %317 = vmatprep.subr.mxu0 %v114
    %318 = vmatpush1.msra.mxu0 %v113
    %319 = vmatprep.subr.mxu0 %v118
    %320 = vmatpush1.msra.mxu0 %v117
    %321 = vmatprep.subr.mxu0 %v122
    %322 = vmatpush1.msra.mxu0 %v121
    %323 = vmatprep.subr.mxu0 %v126
    %324 = vmatpush1.msra.mxu0 %v125
    %325 = vmatprep.subr.mxu0 %v130
    %326 = vmatpush1.msra.mxu0 %v129
    %327 = vmatprep.subr.mxu0 %v134
    %328 = vmatpush1.msra.mxu0 %v133
    %329 = vmatprep.subr.mxu0 %v138
    %330 = vmatpush1.msra.mxu0 %v137
    %331 = vmatprep.subr.mxu0 %v142
    %332 = vmatpush1.msra.mxu0 %v141
    %333 = vmatprep.subr.mxu0 %v146
    %334 = vmatpush1.msra.mxu0 %v145
    %335 = vmatprep.subr.mxu0 %v150
    %336 = vmatpush1.msra.mxu0 %v149
    %337 = vmatprep.subr.mxu0 %v154
    %338 = vmatpush1.msra.mxu0 %v153
    %339 = vmatprep.subr.mxu0 %v158
    %340 = vmatpush1.msra.mxu0 %v157
    %341 = vmatprep.subr.mxu0 %v162
    %342 = vmatpush1.msra.mxu0 %v161
    %343 = vmatprep.subr.mxu0 %v166
    %344 = vmatpush1.msra.mxu0 %v165
    %345 = vmatprep.subr.mxu0 %v170
    %346 = vmatpush1.msra.mxu0 %v169
    %347 = vmatprep.subr.mxu0 %v174
    %348 = vmatpush1.msra.mxu0 %v173
    %349 = vmatprep.subr.mxu0 %v178
    %350 = vmatpush1.msra.mxu0 %v177
    %351 = vmatprep.subr.mxu0 %v182
    %352 = vmatpush1.msra.mxu0 %v181
    %353 = vmatprep.subr.mxu0 %v186
    %354 = vmatpush1.msra.mxu0 %v185
    %355 = vmatprep.subr.mxu0 %v190
    %356 = vmatpush1.msra.mxu0 %v189
    %357 = vmatprep.mubr.f32.mxu0 %v219
    %358 = vmatmul.mubr.f32.gmra.mrb[0].mxu0 %v218
    %v359 = vpop.f32.mrb[0].mxu0
    %v360 = vadd.f32 %v204, %v359
    %v361 = vpop.f32.mrb[0].mxu0
    %v362 = vadd.f32 %v208, %v361
    %363 = vdwg.mxu0
    %v364 = vmax.f32 %v289, 0.0
    %v365 = vmax.f32 %v291, 0.0
    %v366 = vmax.f32 %v360, 0.0
    %v367 = vmax.f32 %v362, 0.0
    %v368 = vld [vmem:[%s3] sm:$0xff]
    %v369 = vld [vmem:[%s3 + $0x8] sm:$0xff]
    %v370 = vld [vmem:[%s3 + $0x10] sm:$0xff]
    %v371 = vld [vmem:[%s3 + $0x18] sm:$0xff]
    %v372 = vld [vmem:[%s3 + $0x20] sm:$0xff]
    %v373 = vld [vmem:[%s3 + $0x28] sm:$0xff]
    %v374 = vld [vmem:[%s3 + $0x30] sm:$0xff]
    %v375 = vld [vmem:[%s3 + $0x38] sm:$0xff]
    %v376 = vld [vmem:[%s3 + $0x40] sm:$0xff]
    %v377 = vld [vmem:[%s3 + $0x48] sm:$0xff]
    %v378 = vld [vmem:[%s3 + $0x50] sm:$0xff]
    %v379 = vld [vmem:[%s3 + $0x58] sm:$0xff]
    %v380 = vld [vmem:[%s3 + $0x60] sm:$0xff]
    %v381 = vld [vmem:[%s3 + $0x68] sm:$0xff]
    %v382 = vld [vmem:[%s3 + $0x70] sm:$0xff]
    %v383 = vld [vmem:[%s3 + $0x78] sm:$0xff]
    %v384 = vld [vmem:[%s3 + $0x80] sm:$0xff]
    %v385 = vld [vmem:[%s3 + $0x88] sm:$0xff]
    %v386 = vld [vmem:[%s3 + $0x90] sm:$0xff]
    %v387 = vld [vmem:[%s3 + $0x98] sm:$0xff]
    %v388 = vld [vmem:[%s3 + $0xa0] sm:$0xff]
    %v389 = vld [vmem:[%s3 + $0xa8] sm:$0xff]
    %v390 = vld [vmem:[%s3 + $0xb0] sm:$0xff]
    %v391 = vld [vmem:[%s3 + $0xb8] sm:$0xff]
    %v392 = vld [vmem:[%s3 + $0xc0] sm:$0xff]
    %v393 = vld [vmem:[%s3 + $0xc8] sm:$0xff]
    %v394 = vld [vmem:[%s3 + $0xd0] sm:$0xff]
    %v395 = vld [vmem:[%s3 + $0xd8] sm:$0xff]
    %v396 = vld [vmem:[%s3 + $0xe0] sm:$0xff]
    %v397 = vld [vmem:[%s3 + $0xe8] sm:$0xff]
    %v398 = vld [vmem:[%s3 + $0xf0] sm:$0xff]
    %v399 = vld [vmem:[%s3 + $0xf8] sm:$0xff]
    %v400 = vld [vmem:[%s3 + $0x100] sm:$0xff]
    %v401 = vld [vmem:[%s3 + $0x108] sm:$0xff]
    %v402 = vld [vmem:[%s3 + $0x110] sm:$0xff]
    %v403 = vld [vmem:[%s3 + $0x118] sm:$0xff]
    %v404 = vld [vmem:[%s3 + $0x120] sm:$0xff]
    %v405 = vld [vmem:[%s3 + $0x128] sm:$0xff]
    %v406 = vld [vmem:[%s3 + $0x130] sm:$0xff]
    %v407 = vld [vmem:[%s3 + $0x138] sm:$0xff]
    %v408 = vld [vmem:[%s3 + $0x140] sm:$0xff]
    %v409 = vld [vmem:[%s3 + $0x148] sm:$0xff]
    %v410 = vld [vmem:[%s3 + $0x150] sm:$0xff]
    %v411 = vld [vmem:[%s3 + $0x158] sm:$0xff]
    %v412 = vld [vmem:[%s3 + $0x160] sm:$0xff]
    %v413 = vld [vmem:[%s3 + $0x168] sm:$0xff]
    %v414 = vld [vmem:[%s3 + $0x170] sm:$0xff]
    %v415 = vld [vmem:[%s3 + $0x178] sm:$0xff]
    %v416 = vld [vmem:[%s3 + $0x180] sm:$0xff]
    %v417 = vld [vmem:[%s3 + $0x188] sm:$0xff]
    %v418 = vld [vmem:[%s3 + $0x190] sm:$0xff]
    %v419 = vld [vmem:[%s3 + $0x198] sm:$0xff]
    %v420 = vld [vmem:[%s3 + $0x1a0] sm:$0xff]
    %v421 = vld [vmem:[%s3 + $0x1a8] sm:$0xff]
    %v422 = vld [vmem:[%s3 + $0x1b0] sm:$0xff]
    %v423 = vld [vmem:[%s3 + $0x1b8] sm:$0xff]
    %v424 = vld [vmem:[%s3 + $0x1c0] sm:$0xff]
    %v425 = vld [vmem:[%s3 + $0x1c8] sm:$0xff]
    %v426 = vld [vmem:[%s3 + $0x1d0] sm:$0xff]
    %v427 = vld [vmem:[%s3 + $0x1d8] sm:$0xff]
    %v428 = vld [vmem:[%s3 + $0x1e0] sm:$0xff]
    %v429 = vld [vmem:[%s3 + $0x1e8] sm:$0xff]
    %v430 = vld [vmem:[%s3 + $0x1f0] sm:$0xff]
    %v431 = vld [vmem:[%s3 + $0x1f8] sm:$0xff]
    %v432 = vld [vmem:[%s4] sm:$0x1]
    %v434 = vlaneseq
    %v435 = vshrl.u32 %v434, 7
    %v436 = vsub.s32 0, %v435
    %v437 = vrot.slane %v432, %v436
    %439 = vmatprep.subr.mxu0 0.0
    %440 = vmatpush1.msra.mxu0 %v368
    %441 = vmatprep.subr.mxu0 0.0
    %442 = vmatpush1.msra.mxu0 %v369
    %443 = vmatprep.subr.mxu0 0.0
    %444 = vmatpush1.msra.mxu0 %v370
    %445 = vmatprep.subr.mxu0 0.0
    %446 = vmatpush1.msra.mxu0 %v371
    %447 = vmatprep.subr.mxu0 0.0
    %448 = vmatpush1.msra.mxu0 %v372
    %449 = vmatprep.subr.mxu0 0.0
    %450 = vmatpush1.msra.mxu0 %v373
    %451 = vmatprep.subr.mxu0 0.0
    %452 = vmatpush1.msra.mxu0 %v374
    %453 = vmatprep.subr.mxu0 0.0
    %454 = vmatpush1.msra.mxu0 %v375
    %455 = vmatprep.subr.mxu0 0.0
    %456 = vmatpush1.msra.mxu0 %v376
    %457 = vmatprep.subr.mxu0 0.0
    %458 = vmatpush1.msra.mxu0 %v377
    %459 = vmatprep.subr.mxu0 0.0
    %460 = vmatpush1.msra.mxu0 %v378
    %461 = vmatprep.subr.mxu0 0.0
    %462 = vmatpush1.msra.mxu0 %v379
    %463 = vmatprep.subr.mxu0 0.0
    %464 = vmatpush1.msra.mxu0 %v380
    %465 = vmatprep.subr.mxu0 0.0
    %466 = vmatpush1.msra.mxu0 %v381
    %467 = vmatprep.subr.mxu0 0.0
    %468 = vmatpush1.msra.mxu0 %v382
    %469 = vmatprep.subr.mxu0 0.0
    %470 = vmatpush1.msra.mxu0 %v383
    %471 = vmatprep.subr.mxu0 0.0
    %472 = vmatpush1.msra.mxu0 %v384
    %473 = vmatprep.subr.mxu0 0.0
    %474 = vmatpush1.msra.mxu0 %v385
    %475 = vmatprep.subr.mxu0 0.0
    %476 = vmatpush1.msra.mxu0 %v386
    %477 = vmatprep.subr.mxu0 0.0
    %478 = vmatpush1.msra.mxu0 %v387
    %479 = vmatprep.subr.mxu0 0.0
    %480 = vmatpush1.msra.mxu0 %v388
    %481 = vmatprep.subr.mxu0 0.0
    %482 = vmatpush1.msra.mxu0 %v389
    %483 = vmatprep.subr.mxu0 0.0
    %484 = vmatpush1.msra.mxu0 %v390
    %485 = vmatprep.subr.mxu0 0.0
    %486 = vmatpush1.msra.mxu0 %v391
    %487 = vmatprep.subr.mxu0 0.0
    %488 = vmatpush1.msra.mxu0 %v392
    %489 = vmatprep.subr.mxu0 0.0
    %490 = vmatpush1.msra.mxu0 %v393
    %491 = vmatprep.subr.mxu0 0.0
    %492 = vmatpush1.msra.mxu0 %v394
    %493 = vmatprep.subr.mxu0 0.0
    %494 = vmatpush1.msra.mxu0 %v395
    %495 = vmatprep.subr.mxu0 0.0
    %496 = vmatpush1.msra.mxu0 %v396
    %497 = vmatprep.subr.mxu0 0.0
    %498 = vmatpush1.msra.mxu0 %v397
    %499 = vmatprep.subr.mxu0 0.0
    %500 = vmatpush1.msra.mxu0 %v398
    %501 = vmatprep.subr.mxu0 0.0
    %502 = vmatpush1.msra.mxu0 %v399
    %503 = vmatprep.mubr.f32.mxu0 %v365
    %504 = vmatmul.mubr.f32.gmra.mrb[0].mxu0 %v364
    %v505 = vpop.f32.mrb[0].mxu0
    %v506 = vadd.f32 %v437, %v505
    %v507 = vpop.f32.mrb[0].mxu0
    %508 = vdwg.mxu0
    %509 = vmatprep.subr.mxu0 0.0
    %510 = vmatpush1.msra.mxu0 %v400
    %511 = vmatprep.subr.mxu0 0.0
    %512 = vmatpush1.msra.mxu0 %v401
    %513 = vmatprep.subr.mxu0 0.0
    %514 = vmatpush1.msra.mxu0 %v402
    %515 = vmatprep.subr.mxu0 0.0
    %516 = vmatpush1.msra.mxu0 %v403
    %517 = vmatprep.subr.mxu0 0.0
    %518 = vmatpush1.msra.mxu0 %v404
    %519 = vmatprep.subr.mxu0 0.0
    %520 = vmatpush1.msra.mxu0 %v405
    %521 = vmatprep.subr.mxu0 0.0
    %522 = vmatpush1.msra.mxu0 %v406
    %523 = vmatprep.subr.mxu0 0.0
    %524 = vmatpush1.msra.mxu0 %v407
    %525 = vmatprep.subr.mxu0 0.0
    %526 = vmatpush1.msra.mxu0 %v408
    %527 = vmatprep.subr.mxu0 0.0
    %528 = vmatpush1.msra.mxu0 %v409
    %529 = vmatprep.subr.mxu0 0.0
    %530 = vmatpush1.msra.mxu0 %v410
    %531 = vmatprep.subr.mxu0 0.0
    %532 = vmatpush1.msra.mxu0 %v411
    %533 = vmatprep.subr.mxu0 0.0
    %534 = vmatpush1.msra.mxu0 %v412
    %535 = vmatprep.subr.mxu0 0.0
    %536 = vmatpush1.msra.mxu0 %v413
    %537 = vmatprep.subr.mxu0 0.0
    %538 = vmatpush1.msra.mxu0 %v414
    %539 = vmatprep.subr.mxu0 0.0
    %540 = vmatpush1.msra.mxu0 %v415
    %541 = vmatprep.subr.mxu0 0.0
    %542 = vmatpush1.msra.mxu0 %v416
    %543 = vmatprep.subr.mxu0 0.0
    %544 = vmatpush1.msra.mxu0 %v417
    %545 = vmatprep.subr.mxu0 0.0
    %546 = vmatpush1.msra.mxu0 %v418
    %547 = vmatprep.subr.mxu0 0.0
    %548 = vmatpush1.msra.mxu0 %v419
    %549 = vmatprep.subr.mxu0 0.0
    %550 = vmatpush1.msra.mxu0 %v420
    %551 = vmatprep.subr.mxu0 0.0
    %552 = vmatpush1.msra.mxu0 %v421
    %553 = vmatprep.subr.mxu0 0.0
    %554 = vmatpush1.msra.mxu0 %v422
    %555 = vmatprep.subr.mxu0 0.0
    %556 = vmatpush1.msra.mxu0 %v423
    %557 = vmatprep.subr.mxu0 0.0
    %558 = vmatpush1.msra.mxu0 %v424
    %559 = vmatprep.subr.mxu0 0.0
    %560 = vmatpush1.msra.mxu0 %v425
    %561 = vmatprep.subr.mxu0 0.0
    %562 = vmatpush1.msra.mxu0 %v426
    %563 = vmatprep.subr.mxu0 0.0
    %564 = vmatpush1.msra.mxu0 %v427
    %565 = vmatprep.subr.mxu0 0.0
    %566 = vmatpush1.msra.mxu0 %v428
    %567 = vmatprep.subr.mxu0 0.0
    %568 = vmatpush1.msra.mxu0 %v429
    %569 = vmatprep.subr.mxu0 0.0
    %570 = vmatpush1.msra.mxu0 %v430
    %571 = vmatprep.subr.mxu0 0.0
    %572 = vmatpush1.msra.mxu0 %v431
    %573 = vmatprep.mubr.f32.mxu0 %v367
    %574 = vmatmul.mubr.f32.gmra.mrb[0].mxu0 %v366
    %v575 = vpop.f32.mrb[0].mxu0
    %v576 = vadd.f32 %v506, %v575
    %v577 = vpop.f32.mrb[0].mxu0
    %578 = vdwg.mxu0
    %579 = vst [vmem:[#allocation2] sm:$0x3] %v576
    // Predicated region
    $region22: #{simple_cnn_forward.7} parent=1 // pred_check
      _
    $region23: #{simple_cnn_forward.7} parent=1 // pred_check_branch
      %581 = sbr.rel (0) target = $region25
    $region24: #{simple_cnn_forward.7} parent=1 // pred_region
      %s583 = ssub.s32 32, 32
      %584 = vsyncadd [#allocation3], %s583
      %s586 = sshll.u32 [#allocation2], 4
      %s587 = int_to_ptr.vmem [resolvable:$true] %s586
      %589 = dma.vmem_to_hbm [thread:$0]  %s587, 32, %s5, [#allocation3]
    $region25: #{simple_cnn_forward.7} parent=1 // pred_fallthru
      _
    // Predicated region
    $region26: #{simple_cnn_forward.7} parent=1 // pred_check
      _
    $region27: #{simple_cnn_forward.7} parent=1 // pred_check_branch
      %591 = sbr.rel (0) target = $region29
    $region28: #{simple_cnn_forward.7} parent=1 // pred_region
      %592 = dma.done [#allocation3], 32
    $region29: #{simple_cnn_forward.7} parent=1 // pred_fallthru
      _
    %593 = vsyncpa [#allocation3], 1

// kernel: simple_cnn_forward.6
$region0: #{simple_cnn_forward.6}
  #allocation0 [shape = 'u32[]', space=smem, size = 0x4, offset = 0x4, fixed_abs, tag = 'smem constant byte address 0x4 - core index']
  #allocation1 [shape = 'u32[144,128]{1,0:T(1,128)}', space=vmem, size = 0x12000, scoped, tag = 'internal scratch']
  %s0 = inlined_call_operand.vmem [shape: bf16[4,8,1152], index: 0, kind: input, shape index: {}]
  %s1 = inlined_call_operand.vmem [shape: bf16[1152,256], index: 1, kind: input, shape index: {}]
  %s2 = inlined_call_operand.vmem [shape: f32[1,256], index: 2, kind: input, shape index: {}]
  %s3 = inlined_call_operand.vmem [shape: f32[1,256], index: 3, kind: input, shape index: {}]
  %s4 = inlined_call_operand.vmem [shape: f32[8,256], index: 4, kind: output, shape index: {}]
  %s5 = sld [smem:[#allocation0]]
  $region26: #{simple_cnn_forward.6} parent=0
    _
  %s7 = ssub.s32 1, %s5
  %s8 = scalar_select 0, %s7, %s5
  // Predicated region
  $region2: #{simple_cnn_forward.6} parent=0 // pred_check
    _
  $region3: #{simple_cnn_forward.6} parent=0 // pred_check_branch
    %10 = sbr.rel (0) target = $region5
  $region4: #{simple_cnn_forward.6} parent=0 // pred_region
    _
  $region5: #{simple_cnn_forward.6} parent=0 // pred_fallthru
    _
  // Predicated region
  $region6: #{simple_cnn_forward.6} parent=0 // pred_check
    _
  $region7: #{simple_cnn_forward.6} parent=0 // pred_check_branch
    %12 = sbr.rel (0) target = $region9
  $region8: #{simple_cnn_forward.6} parent=0 // pred_region
    _
  $region9: #{simple_cnn_forward.6} parent=0 // pred_fallthru
    _
  // Predicated region
  $region10: #{simple_cnn_forward.6} parent=0 // pred_check
    _
  $region11: #{simple_cnn_forward.6} parent=0 // pred_check_branch
    %14 = sbr.rel (0) target = $region13
  $region12: #{simple_cnn_forward.6} parent=0 // pred_region
    _
  $region13: #{simple_cnn_forward.6} parent=0 // pred_fallthru
    _
  // Predicated region
  $region14: #{simple_cnn_forward.6} parent=0 // pred_check
    _
  $region15: #{simple_cnn_forward.6} parent=0 // pred_check_branch
    %16 = sbr.rel (0) target = $region17
  $region16: #{simple_cnn_forward.6} parent=0 // pred_region
    _
  $region17: #{simple_cnn_forward.6} parent=0 // pred_fallthru
    _
  %v18 = vld [vmem:[%s2] sm:$0x3]
  %v19 = vld [vmem:[%s3] sm:$0x3]
  %v20 = vld [vmem:[%s1] sm:$0xff]
  %v21 = vld [vmem:[%s1 + $0x8] sm:$0xff]
  %v22 = vld [vmem:[%s1 + $0x10] sm:$0xff]
  %v23 = vld [vmem:[%s1 + $0x18] sm:$0xff]
  %v24 = vld [vmem:[%s1 + $0x20] sm:$0xff]
  %v25 = vld [vmem:[%s1 + $0x28] sm:$0xff]
  %v26 = vld [vmem:[%s1 + $0x30] sm:$0xff]
  %v27 = vld [vmem:[%s1 + $0x38] sm:$0xff]
  %v28 = vld [vmem:[%s1 + $0x40] sm:$0xff]
  %v29 = vld [vmem:[%s1 + $0x48] sm:$0xff]
  %v30 = vld [vmem:[%s1 + $0x50] sm:$0xff]
  %v31 = vld [vmem:[%s1 + $0x58] sm:$0xff]
  %v32 = vld [vmem:[%s1 + $0x60] sm:$0xff]
  %v33 = vld [vmem:[%s1 + $0x68] sm:$0xff]
  %v34 = vld [vmem:[%s1 + $0x70] sm:$0xff]
  %v35 = vld [vmem:[%s1 + $0x78] sm:$0xff]
  %v36 = vld [vmem:[%s1 + $0x80] sm:$0xff]
  %v37 = vld [vmem:[%s1 + $0x88] sm:$0xff]
  %v38 = vld [vmem:[%s1 + $0x90] sm:$0xff]
  %v39 = vld [vmem:[%s1 + $0x98] sm:$0xff]
  %v40 = vld [vmem:[%s1 + $0xa0] sm:$0xff]
  %v41 = vld [vmem:[%s1 + $0xa8] sm:$0xff]
  %v42 = vld [vmem:[%s1 + $0xb0] sm:$0xff]
  %v43 = vld [vmem:[%s1 + $0xb8] sm:$0xff]
  %v44 = vld [vmem:[%s1 + $0xc0] sm:$0xff]
  %v45 = vld [vmem:[%s1 + $0xc8] sm:$0xff]
  %v46 = vld [vmem:[%s1 + $0xd0] sm:$0xff]
  %v47 = vld [vmem:[%s1 + $0xd8] sm:$0xff]
  %v48 = vld [vmem:[%s1 + $0xe0] sm:$0xff]
  %v49 = vld [vmem:[%s1 + $0xe8] sm:$0xff]
  %v50 = vld [vmem:[%s1 + $0xf0] sm:$0xff]
  %v51 = vld [vmem:[%s1 + $0xf8] sm:$0xff]
  %v52 = vld [vmem:[%s1 + $0x100] sm:$0xff]
  %v53 = vld [vmem:[%s1 + $0x108] sm:$0xff]
  %v54 = vld [vmem:[%s1 + $0x110] sm:$0xff]
  %v55 = vld [vmem:[%s1 + $0x118] sm:$0xff]
  %v56 = vld [vmem:[%s1 + $0x120] sm:$0xff]
  %v57 = vld [vmem:[%s1 + $0x128] sm:$0xff]
  %v58 = vld [vmem:[%s1 + $0x130] sm:$0xff]
  %v59 = vld [vmem:[%s1 + $0x138] sm:$0xff]
  %v60 = vld [vmem:[%s1 + $0x140] sm:$0xff]
  %v61 = vld [vmem:[%s1 + $0x148] sm:$0xff]
  %v62 = vld [vmem:[%s1 + $0x150] sm:$0xff]
  %v63 = vld [vmem:[%s1 + $0x158] sm:$0xff]
  %v64 = vld [vmem:[%s1 + $0x160] sm:$0xff]
  %v65 = vld [vmem:[%s1 + $0x168] sm:$0xff]
  %v66 = vld [vmem:[%s1 + $0x170] sm:$0xff]
  %v67 = vld [vmem:[%s1 + $0x178] sm:$0xff]
  %v68 = vld [vmem:[%s1 + $0x180] sm:$0xff]
  %v69 = vld [vmem:[%s1 + $0x188] sm:$0xff]
  %v70 = vld [vmem:[%s1 + $0x190] sm:$0xff]
  %v71 = vld [vmem:[%s1 + $0x198] sm:$0xff]
  %v72 = vld [vmem:[%s1 + $0x1a0] sm:$0xff]
  %v73 = vld [vmem:[%s1 + $0x1a8] sm:$0xff]
  %v74 = vld [vmem:[%s1 + $0x1b0] sm:$0xff]
  %v75 = vld [vmem:[%s1 + $0x1b8] sm:$0xff]
  %v76 = vld [vmem:[%s1 + $0x1c0] sm:$0xff]
  %v77 = vld [vmem:[%s1 + $0x1c8] sm:$0xff]
  %v78 = vld [vmem:[%s1 + $0x1d0] sm:$0xff]
  %v79 = vld [vmem:[%s1 + $0x1d8] sm:$0xff]
  %v80 = vld [vmem:[%s1 + $0x1e0] sm:$0xff]
  %v81 = vld [vmem:[%s1 + $0x1e8] sm:$0xff]
  %v82 = vld [vmem:[%s1 + $0x1f0] sm:$0xff]
  %v83 = vld [vmem:[%s1 + $0x1f8] sm:$0xff]
  %v84 = vld [vmem:[%s1 + $0x200] sm:$0xff]
  %v85 = vld [vmem:[%s1 + $0x208] sm:$0xff]
  %v86 = vld [vmem:[%s1 + $0x210] sm:$0xff]
  %v87 = vld [vmem:[%s1 + $0x218] sm:$0xff]
  %v88 = vld [vmem:[%s1 + $0x220] sm:$0xff]
  %v89 = vld [vmem:[%s1 + $0x228] sm:$0xff]
  %v90 = vld [vmem:[%s1 + $0x230] sm:$0xff]
  %v91 = vld [vmem:[%s1 + $0x238] sm:$0xff]
  %v92 = vld [vmem:[%s1 + $0x240] sm:$0xff]
  %v93 = vld [vmem:[%s1 + $0x248] sm:$0xff]
  %v94 = vld [vmem:[%s1 + $0x250] sm:$0xff]
  %v95 = vld [vmem:[%s1 + $0x258] sm:$0xff]
  %v96 = vld [vmem:[%s1 + $0x260] sm:$0xff]
  %v97 = vld [vmem:[%s1 + $0x268] sm:$0xff]
  %v98 = vld [vmem:[%s1 + $0x270] sm:$0xff]
  %v99 = vld [vmem:[%s1 + $0x278] sm:$0xff]
  %v100 = vld [vmem:[%s1 + $0x280] sm:$0xff]
  %v101 = vld [vmem:[%s1 + $0x288] sm:$0xff]
  %v102 = vld [vmem:[%s1 + $0x290] sm:$0xff]
  %v103 = vld [vmem:[%s1 + $0x298] sm:$0xff]
  %v104 = vld [vmem:[%s1 + $0x2a0] sm:$0xff]
  %v105 = vld [vmem:[%s1 + $0x2a8] sm:$0xff]
  %v106 = vld [vmem:[%s1 + $0x2b0] sm:$0xff]
  %v107 = vld [vmem:[%s1 + $0x2b8] sm:$0xff]
  %v108 = vld [vmem:[%s1 + $0x2c0] sm:$0xff]
  %v109 = vld [vmem:[%s1 + $0x2c8] sm:$0xff]
  %v110 = vld [vmem:[%s1 + $0x2d0] sm:$0xff]
  %v111 = vld [vmem:[%s1 + $0x2d8] sm:$0xff]
  %v112 = vld [vmem:[%s1 + $0x2e0] sm:$0xff]
  %v113 = vld [vmem:[%s1 + $0x2e8] sm:$0xff]
  %v114 = vld [vmem:[%s1 + $0x2f0] sm:$0xff]
  %v115 = vld [vmem:[%s1 + $0x2f8] sm:$0xff]
  %v116 = vld [vmem:[%s1 + $0x300] sm:$0xff]
  %v117 = vld [vmem:[%s1 + $0x308] sm:$0xff]
  %v118 = vld [vmem:[%s1 + $0x310] sm:$0xff]
  %v119 = vld [vmem:[%s1 + $0x318] sm:$0xff]
  %v120 = vld [vmem:[%s1 + $0x320] sm:$0xff]
  %v121 = vld [vmem:[%s1 + $0x328] sm:$0xff]
  %v122 = vld [vmem:[%s1 + $0x330] sm:$0xff]
  %v123 = vld [vmem:[%s1 + $0x338] sm:$0xff]
  %v124 = vld [vmem:[%s1 + $0x340] sm:$0xff]
  %v125 = vld [vmem:[%s1 + $0x348] sm:$0xff]
  %v126 = vld [vmem:[%s1 + $0x350] sm:$0xff]
  %v127 = vld [vmem:[%s1 + $0x358] sm:$0xff]
  %v128 = vld [vmem:[%s1 + $0x360] sm:$0xff]
  %v129 = vld [vmem:[%s1 + $0x368] sm:$0xff]
  %v130 = vld [vmem:[%s1 + $0x370] sm:$0xff]
  %v131 = vld [vmem:[%s1 + $0x378] sm:$0xff]
  %v132 = vld [vmem:[%s1 + $0x380] sm:$0xff]
  %v133 = vld [vmem:[%s1 + $0x388] sm:$0xff]
  %v134 = vld [vmem:[%s1 + $0x390] sm:$0xff]
  %v135 = vld [vmem:[%s1 + $0x398] sm:$0xff]
  %v136 = vld [vmem:[%s1 + $0x3a0] sm:$0xff]
  %v137 = vld [vmem:[%s1 + $0x3a8] sm:$0xff]
  %v138 = vld [vmem:[%s1 + $0x3b0] sm:$0xff]
  %v139 = vld [vmem:[%s1 + $0x3b8] sm:$0xff]
  %v140 = vld [vmem:[%s1 + $0x3c0] sm:$0xff]
  %v141 = vld [vmem:[%s1 + $0x3c8] sm:$0xff]
  %v142 = vld [vmem:[%s1 + $0x3d0] sm:$0xff]
  %v143 = vld [vmem:[%s1 + $0x3d8] sm:$0xff]
  %v144 = vld [vmem:[%s1 + $0x3e0] sm:$0xff]
  %v145 = vld [vmem:[%s1 + $0x3e8] sm:$0xff]
  %v146 = vld [vmem:[%s1 + $0x3f0] sm:$0xff]
  %v147 = vld [vmem:[%s1 + $0x3f8] sm:$0xff]
  %v148 = vld [vmem:[%s1 + $0x400] sm:$0xff]
  %v149 = vld [vmem:[%s1 + $0x408] sm:$0xff]
  %v150 = vld [vmem:[%s1 + $0x410] sm:$0xff]
  %v151 = vld [vmem:[%s1 + $0x418] sm:$0xff]
  %v152 = vld [vmem:[%s1 + $0x420] sm:$0xff]
  %v153 = vld [vmem:[%s1 + $0x428] sm:$0xff]
  %v154 = vld [vmem:[%s1 + $0x430] sm:$0xff]
  %v155 = vld [vmem:[%s1 + $0x438] sm:$0xff]
  %v156 = vld [vmem:[%s1 + $0x440] sm:$0xff]
  %v157 = vld [vmem:[%s1 + $0x448] sm:$0xff]
  %v158 = vld [vmem:[%s1 + $0x450] sm:$0xff]
  %v159 = vld [vmem:[%s1 + $0x458] sm:$0xff]
  %v160 = vld [vmem:[%s1 + $0x460] sm:$0xff]
  %v161 = vld [vmem:[%s1 + $0x468] sm:$0xff]
  %v162 = vld [vmem:[%s1 + $0x470] sm:$0xff]
  %v163 = vld [vmem:[%s1 + $0x478] sm:$0xff]
  %v164 = vld [vmem:[%s0] sm:$0xff]
  %v165 = vld [vmem:[%s0 + $0x8] sm:$0xff]
  %v166 = vld [vmem:[%s0 + $0x10] sm:$0xff]
  %v167 = vld [vmem:[%s0 + $0x18] sm:$0xff]
  %v168 = vld [vmem:[%s0 + $0x20] sm:$0xf]
  %v174 = vunpack.c.l.b16 %v164
  %v175 = vunpack.c.h.b16 %v164
  %v176 = vunpack.c.l.b16 %v165
  %v177 = vunpack.c.h.b16 %v165
  %v178 = vunpack.c.l.b16 %v166
  %v179 = vunpack.c.h.b16 %v166
  %v180 = vunpack.c.l.b16 %v167
  %v181 = vunpack.c.h.b16 %v167
  %v182 = vunpack.c.l.b16 %v168
  %v183 = vpack.c.b16 %v174, %v174
  %v184 = vpack.c.b16 %v175, %v175
  %v185 = vpack.c.b16 %v176, %v176
  %v186 = vpack.c.b16 %v177, %v177
  %v187 = vpack.c.b16 %v178, %v178
  %v188 = vpack.c.b16 %v179, %v179
  %v189 = vpack.c.b16 %v180, %v180
  %v190 = vpack.c.b16 %v181, %v181
  %v191 = vpack.c.b16 %v182, %v182
  %v345 = vunpack.c.l.b16 %v20
  %v346 = vunpack.c.h.b16 %v20
  %v347 = vunpack.c.l.b16 %v21
  %v348 = vunpack.c.h.b16 %v21
  %v349 = vunpack.c.l.b16 %v22
  %v350 = vunpack.c.h.b16 %v22
  %v351 = vunpack.c.l.b16 %v23
  %v352 = vunpack.c.h.b16 %v23
  %v353 = vunpack.c.l.b16 %v24
  %v354 = vunpack.c.h.b16 %v24
  %v355 = vunpack.c.l.b16 %v25
  %v356 = vunpack.c.h.b16 %v25
  %v357 = vunpack.c.l.b16 %v26
  %v358 = vunpack.c.h.b16 %v26
  %v359 = vunpack.c.l.b16 %v27
  %v360 = vunpack.c.h.b16 %v27
  %v361 = vunpack.c.l.b16 %v28
  %v362 = vunpack.c.h.b16 %v28
  %v363 = vunpack.c.l.b16 %v29
  %v364 = vunpack.c.h.b16 %v29
  %v365 = vunpack.c.l.b16 %v30
  %v366 = vunpack.c.h.b16 %v30
  %v367 = vunpack.c.l.b16 %v31
  %v368 = vunpack.c.h.b16 %v31
  %v369 = vunpack.c.l.b16 %v32
  %v370 = vunpack.c.h.b16 %v32
  %v371 = vunpack.c.l.b16 %v33
  %v372 = vunpack.c.h.b16 %v33
  %v373 = vunpack.c.l.b16 %v34
  %v374 = vunpack.c.h.b16 %v34
  %v375 = vunpack.c.l.b16 %v35
  %v376 = vunpack.c.h.b16 %v35
  %v377 = vunpack.c.l.b16 %v36
  %v378 = vunpack.c.h.b16 %v36
  %v379 = vunpack.c.l.b16 %v37
  %v380 = vunpack.c.h.b16 %v37
  %v381 = vunpack.c.l.b16 %v38
  %v382 = vunpack.c.h.b16 %v38
  %v383 = vunpack.c.l.b16 %v39
  %v384 = vunpack.c.h.b16 %v39
  %v385 = vunpack.c.l.b16 %v40
  %v386 = vunpack.c.h.b16 %v40
  %v387 = vunpack.c.l.b16 %v41
  %v388 = vunpack.c.h.b16 %v41
  %v389 = vunpack.c.l.b16 %v42
  %v390 = vunpack.c.h.b16 %v42
  %v391 = vunpack.c.l.b16 %v43
  %v392 = vunpack.c.h.b16 %v43
  %v393 = vunpack.c.l.b16 %v44
  %v394 = vunpack.c.h.b16 %v44
  %v395 = vunpack.c.l.b16 %v45
  %v396 = vunpack.c.h.b16 %v45
  %v397 = vunpack.c.l.b16 %v46
  %v398 = vunpack.c.h.b16 %v46
  %v399 = vunpack.c.l.b16 %v47
  %v400 = vunpack.c.h.b16 %v47
  %v401 = vunpack.c.l.b16 %v48
  %v402 = vunpack.c.h.b16 %v48
  %v403 = vunpack.c.l.b16 %v49
  %v404 = vunpack.c.h.b16 %v49
  %v405 = vunpack.c.l.b16 %v50
  %v406 = vunpack.c.h.b16 %v50
  %v407 = vunpack.c.l.b16 %v51
  %v408 = vunpack.c.h.b16 %v51
  %v409 = vunpack.c.l.b16 %v52
  %v410 = vunpack.c.h.b16 %v52
  %v411 = vunpack.c.l.b16 %v53
  %v412 = vunpack.c.h.b16 %v53
  %v413 = vunpack.c.l.b16 %v54
  %v414 = vunpack.c.h.b16 %v54
  %v415 = vunpack.c.l.b16 %v55
  %v416 = vunpack.c.h.b16 %v55
  %v417 = vunpack.c.l.b16 %v56
  %v418 = vunpack.c.h.b16 %v56
  %v419 = vunpack.c.l.b16 %v57
  %v420 = vunpack.c.h.b16 %v57
  %v421 = vunpack.c.l.b16 %v58
  %v422 = vunpack.c.h.b16 %v58
  %v423 = vunpack.c.l.b16 %v59
  %v424 = vunpack.c.h.b16 %v59
  %v425 = vunpack.c.l.b16 %v60
  %v426 = vunpack.c.h.b16 %v60
  %v427 = vunpack.c.l.b16 %v61
  %v428 = vunpack.c.h.b16 %v61
  %v429 = vunpack.c.l.b16 %v62
  %v430 = vunpack.c.h.b16 %v62
  %v431 = vunpack.c.l.b16 %v63
  %v432 = vunpack.c.h.b16 %v63
  %v433 = vunpack.c.l.b16 %v64
  %v434 = vunpack.c.h.b16 %v64
  %v435 = vunpack.c.l.b16 %v65
  %v436 = vunpack.c.h.b16 %v65
  %v437 = vunpack.c.l.b16 %v66
  %v438 = vunpack.c.h.b16 %v66
  %v439 = vunpack.c.l.b16 %v67
  %v440 = vunpack.c.h.b16 %v67
  %v441 = vunpack.c.l.b16 %v68
  %v442 = vunpack.c.h.b16 %v68
  %v443 = vunpack.c.l.b16 %v69
  %v444 = vunpack.c.h.b16 %v69
  %v445 = vunpack.c.l.b16 %v70
  %v446 = vunpack.c.h.b16 %v70
  %v447 = vunpack.c.l.b16 %v71
  %v448 = vunpack.c.h.b16 %v71
  %v449 = vunpack.c.l.b16 %v72
  %v450 = vunpack.c.h.b16 %v72
  %v451 = vunpack.c.l.b16 %v73
  %v452 = vunpack.c.h.b16 %v73
  %v453 = vunpack.c.l.b16 %v74
  %v454 = vunpack.c.h.b16 %v74
  %v455 = vunpack.c.l.b16 %v75
  %v456 = vunpack.c.h.b16 %v75
  %v457 = vunpack.c.l.b16 %v76
  %v458 = vunpack.c.h.b16 %v76
  %v459 = vunpack.c.l.b16 %v77
  %v460 = vunpack.c.h.b16 %v77
  %v461 = vunpack.c.l.b16 %v78
  %v462 = vunpack.c.h.b16 %v78
  %v463 = vunpack.c.l.b16 %v79
  %v464 = vunpack.c.h.b16 %v79
  %v465 = vunpack.c.l.b16 %v80
  %v466 = vunpack.c.h.b16 %v80
  %v467 = vunpack.c.l.b16 %v81
  %v468 = vunpack.c.h.b16 %v81
  %v469 = vunpack.c.l.b16 %v82
  %v470 = vunpack.c.h.b16 %v82
  %v471 = vunpack.c.l.b16 %v83
  %v472 = vunpack.c.h.b16 %v83
  %v473 = vunpack.c.l.b16 %v84
  %v474 = vunpack.c.h.b16 %v84
  %v475 = vunpack.c.l.b16 %v85
  %v476 = vunpack.c.h.b16 %v85
  %v477 = vunpack.c.l.b16 %v86
  %v478 = vunpack.c.h.b16 %v86
  %v479 = vunpack.c.l.b16 %v87
  %v480 = vunpack.c.h.b16 %v87
  %v481 = vunpack.c.l.b16 %v88
  %v482 = vunpack.c.h.b16 %v88
  %v483 = vunpack.c.l.b16 %v89
  %v484 = vunpack.c.h.b16 %v89
  %v485 = vunpack.c.l.b16 %v90
  %v486 = vunpack.c.h.b16 %v90
  %v487 = vunpack.c.l.b16 %v91
  %v488 = vunpack.c.h.b16 %v91
  %v489 = vunpack.c.l.b16 %v92
  %v490 = vunpack.c.h.b16 %v92
  %v491 = vunpack.c.l.b16 %v93
  %v492 = vunpack.c.h.b16 %v93
  %v493 = vunpack.c.l.b16 %v94
  %v494 = vunpack.c.h.b16 %v94
  %v495 = vunpack.c.l.b16 %v95
  %v496 = vunpack.c.h.b16 %v95
  %v497 = vunpack.c.l.b16 %v96
  %v498 = vunpack.c.h.b16 %v96
  %v499 = vunpack.c.l.b16 %v97
  %v500 = vunpack.c.h.b16 %v97
  %v501 = vunpack.c.l.b16 %v98
  %v502 = vunpack.c.h.b16 %v98
  %v503 = vunpack.c.l.b16 %v99
  %v504 = vunpack.c.h.b16 %v99
  %v505 = vunpack.c.l.b16 %v100
  %v506 = vunpack.c.h.b16 %v100
  %v507 = vunpack.c.l.b16 %v101
  %v508 = vunpack.c.h.b16 %v101
  %v509 = vunpack.c.l.b16 %v102
  %v510 = vunpack.c.h.b16 %v102
  %v511 = vunpack.c.l.b16 %v103
  %v512 = vunpack.c.h.b16 %v103
  %v513 = vunpack.c.l.b16 %v104
  %v514 = vunpack.c.h.b16 %v104
  %v515 = vunpack.c.l.b16 %v105
  %v516 = vunpack.c.h.b16 %v105
  %v517 = vunpack.c.l.b16 %v106
  %v518 = vunpack.c.h.b16 %v106
  %v519 = vunpack.c.l.b16 %v107
  %v520 = vunpack.c.h.b16 %v107
  %v521 = vunpack.c.l.b16 %v108
  %v522 = vunpack.c.h.b16 %v108
  %v523 = vunpack.c.l.b16 %v109
  %v524 = vunpack.c.h.b16 %v109
  %v525 = vunpack.c.l.b16 %v110
  %v526 = vunpack.c.h.b16 %v110
  %v527 = vunpack.c.l.b16 %v111
  %v528 = vunpack.c.h.b16 %v111
  %v529 = vunpack.c.l.b16 %v112
  %v530 = vunpack.c.h.b16 %v112
  %v531 = vunpack.c.l.b16 %v113
  %v532 = vunpack.c.h.b16 %v113
  %v533 = vunpack.c.l.b16 %v114
  %v534 = vunpack.c.h.b16 %v114
  %v535 = vunpack.c.l.b16 %v115
  %v536 = vunpack.c.h.b16 %v115
  %v537 = vunpack.c.l.b16 %v116
  %v538 = vunpack.c.h.b16 %v116
  %v539 = vunpack.c.l.b16 %v117
  %v540 = vunpack.c.h.b16 %v117
  %v541 = vunpack.c.l.b16 %v118
  %v542 = vunpack.c.h.b16 %v118
  %v543 = vunpack.c.l.b16 %v119
  %v544 = vunpack.c.h.b16 %v119
  %v545 = vunpack.c.l.b16 %v120
  %v546 = vunpack.c.h.b16 %v120
  %v547 = vunpack.c.l.b16 %v121
  %v548 = vunpack.c.h.b16 %v121
  %v549 = vunpack.c.l.b16 %v122
  %v550 = vunpack.c.h.b16 %v122
  %v551 = vunpack.c.l.b16 %v123
  %v552 = vunpack.c.h.b16 %v123
  %v553 = vunpack.c.l.b16 %v124
  %v554 = vunpack.c.h.b16 %v124
  %v555 = vunpack.c.l.b16 %v125
  %v556 = vunpack.c.h.b16 %v125
  %v557 = vunpack.c.l.b16 %v126
  %v558 = vunpack.c.h.b16 %v126
  %v559 = vunpack.c.l.b16 %v127
  %v560 = vunpack.c.h.b16 %v127
  %v561 = vunpack.c.l.b16 %v128
  %v562 = vunpack.c.h.b16 %v128
  %v563 = vunpack.c.l.b16 %v129
  %v564 = vunpack.c.h.b16 %v129
  %v565 = vunpack.c.l.b16 %v130
  %v566 = vunpack.c.h.b16 %v130
  %v567 = vunpack.c.l.b16 %v131
  %v568 = vunpack.c.h.b16 %v131
  %v569 = vunpack.c.l.b16 %v132
  %v570 = vunpack.c.h.b16 %v132
  %v571 = vunpack.c.l.b16 %v133
  %v572 = vunpack.c.h.b16 %v133
  %v573 = vunpack.c.l.b16 %v134
  %v574 = vunpack.c.h.b16 %v134
  %v575 = vunpack.c.l.b16 %v135
  %v576 = vunpack.c.h.b16 %v135
  %v577 = vunpack.c.l.b16 %v136
  %v578 = vunpack.c.h.b16 %v136
  %v579 = vunpack.c.l.b16 %v137
  %v580 = vunpack.c.h.b16 %v137
  %v581 = vunpack.c.l.b16 %v138
  %v582 = vunpack.c.h.b16 %v138
  %v583 = vunpack.c.l.b16 %v139
  %v584 = vunpack.c.h.b16 %v139
  %v585 = vunpack.c.l.b16 %v140
  %v586 = vunpack.c.h.b16 %v140
  %v587 = vunpack.c.l.b16 %v141
  %v588 = vunpack.c.h.b16 %v141
  %v589 = vunpack.c.l.b16 %v142
  %v590 = vunpack.c.h.b16 %v142
  %v591 = vunpack.c.l.b16 %v143
  %v592 = vunpack.c.h.b16 %v143
  %v593 = vunpack.c.l.b16 %v144
  %v594 = vunpack.c.h.b16 %v144
  %v595 = vunpack.c.l.b16 %v145
  %v596 = vunpack.c.h.b16 %v145
  %v597 = vunpack.c.l.b16 %v146
  %v598 = vunpack.c.h.b16 %v146
  %v599 = vunpack.c.l.b16 %v147
  %v600 = vunpack.c.h.b16 %v147
  %v601 = vunpack.c.l.b16 %v148
  %v602 = vunpack.c.h.b16 %v148
  %v603 = vunpack.c.l.b16 %v149
  %v604 = vunpack.c.h.b16 %v149
  %v605 = vunpack.c.l.b16 %v150
  %v606 = vunpack.c.h.b16 %v150
  %v607 = vunpack.c.l.b16 %v151
  %v608 = vunpack.c.h.b16 %v151
  %v609 = vunpack.c.l.b16 %v152
  %v610 = vunpack.c.h.b16 %v152
  %v611 = vunpack.c.l.b16 %v153
  %v612 = vunpack.c.h.b16 %v153
  %v613 = vunpack.c.l.b16 %v154
  %v614 = vunpack.c.h.b16 %v154
  %v615 = vunpack.c.l.b16 %v155
  %v616 = vunpack.c.h.b16 %v155
  %v617 = vunpack.c.l.b16 %v156
  %v618 = vunpack.c.h.b16 %v156
  %v619 = vunpack.c.l.b16 %v157
  %v620 = vunpack.c.h.b16 %v157
  %v621 = vunpack.c.l.b16 %v158
  %v622 = vunpack.c.h.b16 %v158
  %v623 = vunpack.c.l.b16 %v159
  %v624 = vunpack.c.h.b16 %v159
  %v625 = vunpack.c.l.b16 %v160
  %v626 = vunpack.c.h.b16 %v160
  %v627 = vunpack.c.l.b16 %v161
  %v628 = vunpack.c.h.b16 %v161
  %v629 = vunpack.c.l.b16 %v162
  %v630 = vunpack.c.h.b16 %v162
  %v631 = vunpack.c.l.b16 %v163
  %v632 = vunpack.c.h.b16 %v163
  %v633 = vpack.c.b16 %v347, %v345
  %v634 = vpack.c.b16 %v348, %v346
  %v635 = vpack.c.b16 %v351, %v349
  %v636 = vpack.c.b16 %v352, %v350
  %v637 = vpack.c.b16 %v355, %v353
  %v638 = vpack.c.b16 %v356, %v354
  %v639 = vpack.c.b16 %v359, %v357
  %v640 = vpack.c.b16 %v360, %v358
  %v641 = vpack.c.b16 %v363, %v361
  %v642 = vpack.c.b16 %v364, %v362
  %v643 = vpack.c.b16 %v367, %v365
  %v644 = vpack.c.b16 %v368, %v366
  %v645 = vpack.c.b16 %v371, %v369
  %v646 = vpack.c.b16 %v372, %v370
  %v647 = vpack.c.b16 %v375, %v373
  %v648 = vpack.c.b16 %v376, %v374
  %v649 = vpack.c.b16 %v379, %v377
  %v650 = vpack.c.b16 %v380, %v378
  %v651 = vpack.c.b16 %v383, %v381
  %v652 = vpack.c.b16 %v384, %v382
  %v653 = vpack.c.b16 %v387, %v385
  %v654 = vpack.c.b16 %v388, %v386
  %v655 = vpack.c.b16 %v391, %v389
  %v656 = vpack.c.b16 %v392, %v390
  %v657 = vpack.c.b16 %v395, %v393
  %v658 = vpack.c.b16 %v396, %v394
  %v659 = vpack.c.b16 %v399, %v397
  %v660 = vpack.c.b16 %v400, %v398
  %v661 = vpack.c.b16 %v403, %v401
  %v662 = vpack.c.b16 %v404, %v402
  %v663 = vpack.c.b16 %v407, %v405
  %v664 = vpack.c.b16 %v408, %v406
  %v665 = vpack.c.b16 %v411, %v409
  %v666 = vpack.c.b16 %v412, %v410
  %v667 = vpack.c.b16 %v415, %v413
  %v668 = vpack.c.b16 %v416, %v414
  %v669 = vpack.c.b16 %v419, %v417
  %v670 = vpack.c.b16 %v420, %v418
  %v671 = vpack.c.b16 %v423, %v421
  %v672 = vpack.c.b16 %v424, %v422
  %v673 = vpack.c.b16 %v427, %v425
  %v674 = vpack.c.b16 %v428, %v426
  %v675 = vpack.c.b16 %v431, %v429
  %v676 = vpack.c.b16 %v432, %v430
  %v677 = vpack.c.b16 %v435, %v433
  %v678 = vpack.c.b16 %v436, %v434
  %v679 = vpack.c.b16 %v439, %v437
  %v680 = vpack.c.b16 %v440, %v438
  %v681 = vpack.c.b16 %v443, %v441
  %v682 = vpack.c.b16 %v444, %v442
  %v683 = vpack.c.b16 %v447, %v445
  %v684 = vpack.c.b16 %v448, %v446
  %v685 = vpack.c.b16 %v451, %v449
  %v686 = vpack.c.b16 %v452, %v450
  %v687 = vpack.c.b16 %v455, %v453
  %v688 = vpack.c.b16 %v456, %v454
  %v689 = vpack.c.b16 %v459, %v457
  %v690 = vpack.c.b16 %v460, %v458
  %v691 = vpack.c.b16 %v463, %v461
  %v692 = vpack.c.b16 %v464, %v462
  %v693 = vpack.c.b16 %v467, %v465
  %v694 = vpack.c.b16 %v468, %v466
  %v695 = vpack.c.b16 %v471, %v469
  %v696 = vpack.c.b16 %v472, %v470
  %v697 = vpack.c.b16 %v475, %v473
  %v698 = vpack.c.b16 %v476, %v474
  %v699 = vpack.c.b16 %v479, %v477
  %v700 = vpack.c.b16 %v480, %v478
  %v701 = vpack.c.b16 %v483, %v481
  %v702 = vpack.c.b16 %v484, %v482
  %v703 = vpack.c.b16 %v487, %v485
  %v704 = vpack.c.b16 %v488, %v486
  %v705 = vpack.c.b16 %v491, %v489
  %v706 = vpack.c.b16 %v492, %v490
  %v707 = vpack.c.b16 %v495, %v493
  %v708 = vpack.c.b16 %v496, %v494
  %v709 = vpack.c.b16 %v499, %v497
  %v710 = vpack.c.b16 %v500, %v498
  %v711 = vpack.c.b16 %v503, %v501
  %v712 = vpack.c.b16 %v504, %v502
  %v713 = vpack.c.b16 %v507, %v505
  %v714 = vpack.c.b16 %v508, %v506
  %v715 = vpack.c.b16 %v511, %v509
  %v716 = vpack.c.b16 %v512, %v510
  %v717 = vpack.c.b16 %v515, %v513
  %v718 = vpack.c.b16 %v516, %v514
  %v719 = vpack.c.b16 %v519, %v517
  %v720 = vpack.c.b16 %v520, %v518
  %v721 = vpack.c.b16 %v523, %v521
  %v722 = vpack.c.b16 %v524, %v522
  %v723 = vpack.c.b16 %v527, %v525
  %v724 = vpack.c.b16 %v528, %v526
  %v725 = vpack.c.b16 %v531, %v529
  %v726 = vpack.c.b16 %v532, %v530
  %v727 = vpack.c.b16 %v535, %v533
  %v728 = vpack.c.b16 %v536, %v534
  %v729 = vpack.c.b16 %v539, %v537
  %v730 = vpack.c.b16 %v540, %v538
  %v731 = vpack.c.b16 %v543, %v541
  %v732 = vpack.c.b16 %v544, %v542
  %v733 = vpack.c.b16 %v547, %v545
  %v734 = vpack.c.b16 %v548, %v546
  %v735 = vpack.c.b16 %v551, %v549
  %v736 = vpack.c.b16 %v552, %v550
  %v737 = vpack.c.b16 %v555, %v553
  %v738 = vpack.c.b16 %v556, %v554
  %v739 = vpack.c.b16 %v559, %v557
  %v740 = vpack.c.b16 %v560, %v558
  %v741 = vpack.c.b16 %v563, %v561
  %v742 = vpack.c.b16 %v564, %v562
  %v743 = vpack.c.b16 %v567, %v565
  %v744 = vpack.c.b16 %v568, %v566
  %v745 = vpack.c.b16 %v571, %v569
  %v746 = vpack.c.b16 %v572, %v570
  %v747 = vpack.c.b16 %v575, %v573
  %v748 = vpack.c.b16 %v576, %v574
  %v749 = vpack.c.b16 %v579, %v577
  %v750 = vpack.c.b16 %v580, %v578
  %v751 = vpack.c.b16 %v583, %v581
  %v752 = vpack.c.b16 %v584, %v582
  %v753 = vpack.c.b16 %v587, %v585
  %v754 = vpack.c.b16 %v588, %v586
  %v755 = vpack.c.b16 %v591, %v589
  %v756 = vpack.c.b16 %v592, %v590
  %v757 = vpack.c.b16 %v595, %v593
  %v758 = vpack.c.b16 %v596, %v594
  %v759 = vpack.c.b16 %v599, %v597
  %v760 = vpack.c.b16 %v600, %v598
  %v761 = vpack.c.b16 %v603, %v601
  %v762 = vpack.c.b16 %v604, %v602
  %v763 = vpack.c.b16 %v607, %v605
  %v764 = vpack.c.b16 %v608, %v606
  %v765 = vpack.c.b16 %v611, %v609
  %v766 = vpack.c.b16 %v612, %v610
  %v767 = vpack.c.b16 %v615, %v613
  %v768 = vpack.c.b16 %v616, %v614
  %v769 = vpack.c.b16 %v619, %v617
  %v770 = vpack.c.b16 %v620, %v618
  %v771 = vpack.c.b16 %v623, %v621
  %v772 = vpack.c.b16 %v624, %v622
  %v773 = vpack.c.b16 %v627, %v625
  %v774 = vpack.c.b16 %v628, %v626
  %v775 = vpack.c.b16 %v631, %v629
  %v776 = vpack.c.b16 %v632, %v630
  %921 = vmatprep.subr.bf16.mxu0 %v634
  %922 = vmatpush1.bf16.msra.mxu0 %v633
  %923 = vmatprep.subr.bf16.mxu0 %v636
  %924 = vmatpush1.bf16.msra.mxu0 %v635
  %925 = vmatprep.subr.bf16.mxu0 %v638
  %926 = vmatpush1.bf16.msra.mxu0 %v637
  %927 = vmatprep.subr.bf16.mxu0 %v640
  %928 = vmatpush1.bf16.msra.mxu0 %v639
  %929 = vmatprep.subr.bf16.mxu0 %v642
  %930 = vmatpush1.bf16.msra.mxu0 %v641
  %931 = vmatprep.subr.bf16.mxu0 %v644
  %932 = vmatpush1.bf16.msra.mxu0 %v643
  %933 = vmatprep.subr.bf16.mxu0 %v646
  %934 = vmatpush1.bf16.msra.mxu0 %v645
  %935 = vmatprep.subr.bf16.mxu0 %v648
  %936 = vmatpush1.bf16.msra.mxu0 %v647
  %937 = vmatprep.subr.bf16.mxu0 %v650
  %938 = vmatpush1.bf16.msra.mxu0 %v649
  %939 = vmatprep.subr.bf16.mxu0 %v652
  %940 = vmatpush1.bf16.msra.mxu0 %v651
  %941 = vmatprep.subr.bf16.mxu0 %v654
  %942 = vmatpush1.bf16.msra.mxu0 %v653
  %943 = vmatprep.subr.bf16.mxu0 %v656
  %944 = vmatpush1.bf16.msra.mxu0 %v655
  %945 = vmatprep.subr.bf16.mxu0 %v658
  %946 = vmatpush1.bf16.msra.mxu0 %v657
  %947 = vmatprep.subr.bf16.mxu0 %v660
  %948 = vmatpush1.bf16.msra.mxu0 %v659
  %949 = vmatprep.subr.bf16.mxu0 %v662
  %950 = vmatpush1.bf16.msra.mxu0 %v661
  %951 = vmatprep.subr.bf16.mxu0 %v664
  %952 = vmatpush1.bf16.msra.mxu0 %v663
  %953 = vmatprep.mubr.bf16.mxu0 %v184
  %954 = vmatmul.mubr.bf16.gmra.mrb[0].mxu0 %v183
  %v955 = vpop.f32.mrb[0].mxu0
  %v956 = vadd.f32 0.0, %v955
  %v957 = vpop.f32.mrb[0].mxu0
  %v958 = vadd.f32 0.0, %v957
  %v959 = vpop.f32.mrb[0].mxu0
  %v960 = vpop.f32.mrb[0].mxu0
  %961 = vdwg.mxu0
  %962 = vmatprep.subr.bf16.mxu0 %v666
  %963 = vmatpush1.bf16.msra.mxu0 %v665
  %964 = vmatprep.subr.bf16.mxu0 %v668
  %965 = vmatpush1.bf16.msra.mxu0 %v667
  %966 = vmatprep.subr.bf16.mxu0 %v670
  %967 = vmatpush1.bf16.msra.mxu0 %v669
  %968 = vmatprep.subr.bf16.mxu0 %v672
  %969 = vmatpush1.bf16.msra.mxu0 %v671
  %970 = vmatprep.subr.bf16.mxu0 %v674
  %971 = vmatpush1.bf16.msra.mxu0 %v673
  %972 = vmatprep.subr.bf16.mxu0 %v676
  %973 = vmatpush1.bf16.msra.mxu0 %v675
  %974 = vmatprep.subr.bf16.mxu0 %v678
  %975 = vmatpush1.bf16.msra.mxu0 %v677
  %976 = vmatprep.subr.bf16.mxu0 %v680
  %977 = vmatpush1.bf16.msra.mxu0 %v679
  %978 = vmatprep.subr.bf16.mxu0 %v682
  %979 = vmatpush1.bf16.msra.mxu0 %v681
  %980 = vmatprep.subr.bf16.mxu0 %v684
  %981 = vmatpush1.bf16.msra.mxu0 %v683
  %982 = vmatprep.subr.bf16.mxu0 %v686
  %983 = vmatpush1.bf16.msra.mxu0 %v685
  %984 = vmatprep.subr.bf16.mxu0 %v688
  %985 = vmatpush1.bf16.msra.mxu0 %v687
  %986 = vmatprep.subr.bf16.mxu0 %v690
  %987 = vmatpush1.bf16.msra.mxu0 %v689
  %988 = vmatprep.subr.bf16.mxu0 %v692
  %989 = vmatpush1.bf16.msra.mxu0 %v691
  %990 = vmatprep.subr.bf16.mxu0 %v694
  %991 = vmatpush1.bf16.msra.mxu0 %v693
  %992 = vmatprep.subr.bf16.mxu0 %v696
  %993 = vmatpush1.bf16.msra.mxu0 %v695
  %994 = vmatprep.mubr.bf16.mxu0 %v186
  %995 = vmatmul.mubr.bf16.gmra.mrb[0].mxu0 %v185
  %v996 = vpop.f32.mrb[0].mxu0
  %v997 = vadd.f32 %v956, %v996
  %v998 = vpop.f32.mrb[0].mxu0
  %v999 = vadd.f32 %v958, %v998
  %v1000 = vpop.f32.mrb[0].mxu0
  %v1001 = vpop.f32.mrb[0].mxu0
  %1002 = vdwg.mxu0
  %1003 = vmatprep.subr.bf16.mxu0 %v698
  %1004 = vmatpush1.bf16.msra.mxu0 %v697
  %1005 = vmatprep.subr.bf16.mxu0 %v700
  %1006 = vmatpush1.bf16.msra.mxu0 %v699
  %1007 = vmatprep.subr.bf16.mxu0 %v702
  %1008 = vmatpush1.bf16.msra.mxu0 %v701
  %1009 = vmatprep.subr.bf16.mxu0 %v704
  %1010 = vmatpush1.bf16.msra.mxu0 %v703
  %1011 = vmatprep.subr.bf16.mxu0 %v706
  %1012 = vmatpush1.bf16.msra.mxu0 %v705
  %1013 = vmatprep.subr.bf16.mxu0 %v708
  %1014 = vmatpush1.bf16.msra.mxu0 %v707
  %1015 = vmatprep.subr.bf16.mxu0 %v710
  %1016 = vmatpush1.bf16.msra.mxu0 %v709
  %1017 = vmatprep.subr.bf16.mxu0 %v712
  %1018 = vmatpush1.bf16.msra.mxu0 %v711
  %1019 = vmatprep.subr.bf16.mxu0 %v714
  %1020 = vmatpush1.bf16.msra.mxu0 %v713
  %1021 = vmatprep.subr.bf16.mxu0 %v716
  %1022 = vmatpush1.bf16.msra.mxu0 %v715
  %1023 = vmatprep.subr.bf16.mxu0 %v718
  %1024 = vmatpush1.bf16.msra.mxu0 %v717
  %1025 = vmatprep.subr.bf16.mxu0 %v720
  %1026 = vmatpush1.bf16.msra.mxu0 %v719
  %1027 = vmatprep.subr.bf16.mxu0 %v722
  %1028 = vmatpush1.bf16.msra.mxu0 %v721
  %1029 = vmatprep.subr.bf16.mxu0 %v724
  %1030 = vmatpush1.bf16.msra.mxu0 %v723
  %1031 = vmatprep.subr.bf16.mxu0 %v726
  %1032 = vmatpush1.bf16.msra.mxu0 %v725
  %1033 = vmatprep.subr.bf16.mxu0 %v728
  %1034 = vmatpush1.bf16.msra.mxu0 %v727
  %1035 = vmatprep.mubr.bf16.mxu0 %v188
  %1036 = vmatmul.mubr.bf16.gmra.mrb[0].mxu0 %v187
  %v1037 = vpop.f32.mrb[0].mxu0
  %v1038 = vadd.f32 %v997, %v1037
  %v1039 = vpop.f32.mrb[0].mxu0
  %v1040 = vadd.f32 %v999, %v1039
  %v1041 = vpop.f32.mrb[0].mxu0
  %v1042 = vpop.f32.mrb[0].mxu0
  %1043 = vdwg.mxu0
  %1044 = vmatprep.subr.bf16.mxu0 %v730
  %1045 = vmatpush1.bf16.msra.mxu0 %v729
  %1046 = vmatprep.subr.bf16.mxu0 %v732
  %1047 = vmatpush1.bf16.msra.mxu0 %v731
  %1048 = vmatprep.subr.bf16.mxu0 %v734
  %1049 = vmatpush1.bf16.msra.mxu0 %v733
  %1050 = vmatprep.subr.bf16.mxu0 %v736
  %1051 = vmatpush1.bf16.msra.mxu0 %v735
  %1052 = vmatprep.subr.bf16.mxu0 %v738
  %1053 = vmatpush1.bf16.msra.mxu0 %v737
  %1054 = vmatprep.subr.bf16.mxu0 %v740
  %1055 = vmatpush1.bf16.msra.mxu0 %v739
  %1056 = vmatprep.subr.bf16.mxu0 %v742
  %1057 = vmatpush1.bf16.msra.mxu0 %v741
  %1058 = vmatprep.subr.bf16.mxu0 %v744
  %1059 = vmatpush1.bf16.msra.mxu0 %v743
  %1060 = vmatprep.subr.bf16.mxu0 %v746
  %1061 = vmatpush1.bf16.msra.mxu0 %v745
  %1062 = vmatprep.subr.bf16.mxu0 %v748
  %1063 = vmatpush1.bf16.msra.mxu0 %v747
  %1064 = vmatprep.subr.bf16.mxu0 %v750
  %1065 = vmatpush1.bf16.msra.mxu0 %v749
  %1066 = vmatprep.subr.bf16.mxu0 %v752
  %1067 = vmatpush1.bf16.msra.mxu0 %v751
  %1068 = vmatprep.subr.bf16.mxu0 %v754
  %1069 = vmatpush1.bf16.msra.mxu0 %v753
  %1070 = vmatprep.subr.bf16.mxu0 %v756
  %1071 = vmatpush1.bf16.msra.mxu0 %v755
  %1072 = vmatprep.subr.bf16.mxu0 %v758
  %1073 = vmatpush1.bf16.msra.mxu0 %v757
  %1074 = vmatprep.subr.bf16.mxu0 %v760
  %1075 = vmatpush1.bf16.msra.mxu0 %v759
  %1076 = vmatprep.mubr.bf16.mxu0 %v190
  %1077 = vmatmul.mubr.bf16.gmra.mrb[0].mxu0 %v189
  %v1078 = vpop.f32.mrb[0].mxu0
  %v1079 = vadd.f32 %v1038, %v1078
  %v1080 = vpop.f32.mrb[0].mxu0
  %v1081 = vadd.f32 %v1040, %v1080
  %v1082 = vpop.f32.mrb[0].mxu0
  %v1083 = vpop.f32.mrb[0].mxu0
  %1084 = vdwg.mxu0
  %1085 = vmatprep.subr.bf16.mxu0 %v762
  %1086 = vmatpush1.bf16.msra.mxu0 %v761
  %1087 = vmatprep.subr.bf16.mxu0 %v764
  %1088 = vmatpush1.bf16.msra.mxu0 %v763
  %1089 = vmatprep.subr.bf16.mxu0 %v766
  %1090 = vmatpush1.bf16.msra.mxu0 %v765
  %1091 = vmatprep.subr.bf16.mxu0 %v768
  %1092 = vmatpush1.bf16.msra.mxu0 %v767
  %1093 = vmatprep.subr.bf16.mxu0 %v770
  %1094 = vmatpush1.bf16.msra.mxu0 %v769
  %1095 = vmatprep.subr.bf16.mxu0 %v772
  %1096 = vmatpush1.bf16.msra.mxu0 %v771
  %1097 = vmatprep.subr.bf16.mxu0 %v774
  %1098 = vmatpush1.bf16.msra.mxu0 %v773
  %1099 = vmatprep.subr.bf16.mxu0 %v776
  %1100 = vmatpush1.bf16.msra.mxu0 %v775
  %1101 = vmatprep.subr.bf16.mxu0 0
  %1102 = vmatpush1.bf16.msra.mxu0 0
  %1103 = vmatprep.subr.bf16.mxu0 0
  %1104 = vmatpush1.bf16.msra.mxu0 0
  %1105 = vmatprep.subr.bf16.mxu0 0
  %1106 = vmatpush1.bf16.msra.mxu0 0
  %1107 = vmatprep.subr.bf16.mxu0 0
  %1108 = vmatpush1.bf16.msra.mxu0 0
  %1109 = vmatprep.subr.bf16.mxu0 0
  %1110 = vmatpush1.bf16.msra.mxu0 0
  %1111 = vmatprep.subr.bf16.mxu0 0
  %1112 = vmatpush1.bf16.msra.mxu0 0
  %1113 = vmatprep.subr.bf16.mxu0 0
  %1114 = vmatpush1.bf16.msra.mxu0 0
  %1115 = vmatprep.subr.bf16.mxu0 0
  %1116 = vmatpush1.bf16.msra.mxu0 0
  %1117 = vmatprep.mubr.bf16.mxu0 0
  %1118 = vmatmul.mubr.bf16.gmra.mrb[0].mxu0 %v191
  %v1119 = vpop.f32.mrb[0].mxu0
  %v1120 = vadd.f32 %v1079, %v1119
  %v1121 = vpop.f32.mrb[0].mxu0
  %v1122 = vadd.f32 %v1081, %v1121
  %v1123 = vpop.f32.mrb[0].mxu0
  %v1124 = vpop.f32.mrb[0].mxu0
  %1125 = vdwg.mxu0
  %v1127 = vlaneseq
  %v1128 = vshrl.u32 %v1127, 7
  %v1129 = vsub.s32 0, %v1128
  %v1130 = vrot.slane %v18, %v1129
  %v1131 = vlaneseq
  %v1132 = vshrl.u32 %v1131, 7
  %v1133 = vsub.s32 1, %v1132
  %v1134 = vrot.slane %v18, %v1133
  %v1137 = vmul.f32 %v1120, %v1130
  %v1138 = vmul.f32 %v1122, %v1134
  %v1140 = vlaneseq
  %v1141 = vshrl.u32 %v1140, 7
  %v1142 = vsub.s32 0, %v1141
  %v1143 = vrot.slane %v19, %v1142
  %v1144 = vlaneseq
  %v1145 = vshrl.u32 %v1144, 7
  %v1146 = vsub.s32 1, %v1145
  %v1147 = vrot.slane %v19, %v1146
  %v1150 = vadd.f32 %v1137, %v1143
  %v1151 = vadd.f32 %v1138, %v1147
  %v1152 = vmax.f32 %v1150, 0.0
  %v1153 = vmax.f32 %v1151, 0.0
  %s1154 = scalar_lea.vmem %s0, 36
  %v1155 = vld [vmem:[%s1154] sm:$0xff]
  %v1156 = vld [vmem:[%s1154 + $0x8] sm:$0xff]
  %v1157 = vld [vmem:[%s1154 + $0x10] sm:$0xff]
  %v1158 = vld [vmem:[%s1154 + $0x18] sm:$0xff]
  %v1159 = vld [vmem:[%s1154 + $0x20] sm:$0xf]
  %v1165 = vunpack.c.l.b16 %v1155
  %v1166 = vunpack.c.h.b16 %v1155
  %v1167 = vunpack.c.l.b16 %v1156
  %v1168 = vunpack.c.h.b16 %v1156
  %v1169 = vunpack.c.l.b16 %v1157
  %v1170 = vunpack.c.h.b16 %v1157
  %v1171 = vunpack.c.l.b16 %v1158
  %v1172 = vunpack.c.h.b16 %v1158
  %v1173 = vunpack.c.l.b16 %v1159
  %v1174 = vpack.c.b16 %v1165, %v1165
  %v1175 = vpack.c.b16 %v1166, %v1166
  %v1176 = vpack.c.b16 %v1167, %v1167
  %v1177 = vpack.c.b16 %v1168, %v1168
  %v1178 = vpack.c.b16 %v1169, %v1169
  %v1179 = vpack.c.b16 %v1170, %v1170
  %v1180 = vpack.c.b16 %v1171, %v1171
  %v1181 = vpack.c.b16 %v1172, %v1172
  %v1182 = vpack.c.b16 %v1173, %v1173
  %1192 = vmatprep.subr.bf16.mxu0 %v634
  %1193 = vmatpush1.bf16.msra.mxu0 %v633
  %1194 = vmatprep.subr.bf16.mxu0 %v636
  %1195 = vmatpush1.bf16.msra.mxu0 %v635
  %1196 = vmatprep.subr.bf16.mxu0 %v638
  %1197 = vmatpush1.bf16.msra.mxu0 %v637
  %1198 = vmatprep.subr.bf16.mxu0 %v640
  %1199 = vmatpush1.bf16.msra.mxu0 %v639
  %1200 = vmatprep.subr.bf16.mxu0 %v642
  %1201 = vmatpush1.bf16.msra.mxu0 %v641
  %1202 = vmatprep.subr.bf16.mxu0 %v644
  %1203 = vmatpush1.bf16.msra.mxu0 %v643
  %1204 = vmatprep.subr.bf16.mxu0 %v646
  %1205 = vmatpush1.bf16.msra.mxu0 %v645
  %1206 = vmatprep.subr.bf16.mxu0 %v648
  %1207 = vmatpush1.bf16.msra.mxu0 %v647
  %1208 = vmatprep.subr.bf16.mxu0 %v650
  %1209 = vmatpush1.bf16.msra.mxu0 %v649
  %1210 = vmatprep.subr.bf16.mxu0 %v652
  %1211 = vmatpush1.bf16.msra.mxu0 %v651
  %1212 = vmatprep.subr.bf16.mxu0 %v654
  %1213 = vmatpush1.bf16.msra.mxu0 %v653
  %1214 = vmatprep.subr.bf16.mxu0 %v656
  %1215 = vmatpush1.bf16.msra.mxu0 %v655
  %1216 = vmatprep.subr.bf16.mxu0 %v658
  %1217 = vmatpush1.bf16.msra.mxu0 %v657
  %1218 = vmatprep.subr.bf16.mxu0 %v660
  %1219 = vmatpush1.bf16.msra.mxu0 %v659
  %1220 = vmatprep.subr.bf16.mxu0 %v662
  %1221 = vmatpush1.bf16.msra.mxu0 %v661
  %1222 = vmatprep.subr.bf16.mxu0 %v664
  %1223 = vmatpush1.bf16.msra.mxu0 %v663
  %1224 = vmatprep.mubr.bf16.mxu0 %v1175
  %1225 = vmatmul.mubr.bf16.gmra.mrb[0].mxu0 %v1174
  %v1226 = vpop.f32.mrb[0].mxu0
  %v1227 = vadd.f32 0.0, %v1226
  %v1228 = vpop.f32.mrb[0].mxu0
  %v1229 = vadd.f32 0.0, %v1228
  %v1230 = vpop.f32.mrb[0].mxu0
  %v1231 = vpop.f32.mrb[0].mxu0
  %1232 = vdwg.mxu0
  %1233 = vmatprep.subr.bf16.mxu0 %v666
  %1234 = vmatpush1.bf16.msra.mxu0 %v665
  %1235 = vmatprep.subr.bf16.mxu0 %v668
  %1236 = vmatpush1.bf16.msra.mxu0 %v667
  %1237 = vmatprep.subr.bf16.mxu0 %v670
  %1238 = vmatpush1.bf16.msra.mxu0 %v669
  %1239 = vmatprep.subr.bf16.mxu0 %v672
  %1240 = vmatpush1.bf16.msra.mxu0 %v671
  %1241 = vmatprep.subr.bf16.mxu0 %v674
  %1242 = vmatpush1.bf16.msra.mxu0 %v673
  %1243 = vmatprep.subr.bf16.mxu0 %v676
  %1244 = vmatpush1.bf16.msra.mxu0 %v675
  %1245 = vmatprep.subr.bf16.mxu0 %v678
  %1246 = vmatpush1.bf16.msra.mxu0 %v677
  %1247 = vmatprep.subr.bf16.mxu0 %v680
  %1248 = vmatpush1.bf16.msra.mxu0 %v679
  %1249 = vmatprep.subr.bf16.mxu0 %v682
  %1250 = vmatpush1.bf16.msra.mxu0 %v681
  %1251 = vmatprep.subr.bf16.mxu0 %v684
  %1252 = vmatpush1.bf16.msra.mxu0 %v683
  %1253 = vmatprep.subr.bf16.mxu0 %v686
  %1254 = vmatpush1.bf16.msra.mxu0 %v685
  %1255 = vmatprep.subr.bf16.mxu0 %v688
  %1256 = vmatpush1.bf16.msra.mxu0 %v687
  %1257 = vmatprep.subr.bf16.mxu0 %v690
  %1258 = vmatpush1.bf16.msra.mxu0 %v689
  %1259 = vmatprep.subr.bf16.mxu0 %v692
  %1260 = vmatpush1.bf16.msra.mxu0 %v691
  %1261 = vmatprep.subr.bf16.mxu0 %v694
  %1262 = vmatpush1.bf16.msra.mxu0 %v693
  %1263 = vmatprep.subr.bf16.mxu0 %v696
  %1264 = vmatpush1.bf16.msra.mxu0 %v695
  %1265 = vmatprep.mubr.bf16.mxu0 %v1177
  %1266 = vmatmul.mubr.bf16.gmra.mrb[0].mxu0 %v1176
  %v1267 = vpop.f32.mrb[0].mxu0
  %v1268 = vadd.f32 %v1227, %v1267
  %v1269 = vpop.f32.mrb[0].mxu0
  %v1270 = vadd.f32 %v1229, %v1269
  %v1271 = vpop.f32.mrb[0].mxu0
  %v1272 = vpop.f32.mrb[0].mxu0
  %1273 = vdwg.mxu0
  %1274 = vmatprep.subr.bf16.mxu0 %v698
  %1275 = vmatpush1.bf16.msra.mxu0 %v697
  %1276 = vmatprep.subr.bf16.mxu0 %v700
  %1277 = vmatpush1.bf16.msra.mxu0 %v699
  %1278 = vmatprep.subr.bf16.mxu0 %v702
  %1279 = vmatpush1.bf16.msra.mxu0 %v701
  %1280 = vmatprep.subr.bf16.mxu0 %v704
  %1281 = vmatpush1.bf16.msra.mxu0 %v703
  %1282 = vmatprep.subr.bf16.mxu0 %v706
  %1283 = vmatpush1.bf16.msra.mxu0 %v705
  %1284 = vmatprep.subr.bf16.mxu0 %v708
  %1285 = vmatpush1.bf16.msra.mxu0 %v707
  %1286 = vmatprep.subr.bf16.mxu0 %v710
  %1287 = vmatpush1.bf16.msra.mxu0 %v709
  %1288 = vmatprep.subr.bf16.mxu0 %v712
  %1289 = vmatpush1.bf16.msra.mxu0 %v711
  %1290 = vmatprep.subr.bf16.mxu0 %v714
  %1291 = vmatpush1.bf16.msra.mxu0 %v713
  %1292 = vmatprep.subr.bf16.mxu0 %v716
  %1293 = vmatpush1.bf16.msra.mxu0 %v715
  %1294 = vmatprep.subr.bf16.mxu0 %v718
  %1295 = vmatpush1.bf16.msra.mxu0 %v717
  %1296 = vmatprep.subr.bf16.mxu0 %v720
  %1297 = vmatpush1.bf16.msra.mxu0 %v719
  %1298 = vmatprep.subr.bf16.mxu0 %v722
  %1299 = vmatpush1.bf16.msra.mxu0 %v721
  %1300 = vmatprep.subr.bf16.mxu0 %v724
  %1301 = vmatpush1.bf16.msra.mxu0 %v723
  %1302 = vmatprep.subr.bf16.mxu0 %v726
  %1303 = vmatpush1.bf16.msra.mxu0 %v725
  %1304 = vmatprep.subr.bf16.mxu0 %v728
  %1305 = vmatpush1.bf16.msra.mxu0 %v727
  %1306 = vmatprep.mubr.bf16.mxu0 %v1179
  %1307 = vmatmul.mubr.bf16.gmra.mrb[0].mxu0 %v1178
  %v1308 = vpop.f32.mrb[0].mxu0
  %v1309 = vadd.f32 %v1268, %v1308
  %v1310 = vpop.f32.mrb[0].mxu0
  %v1311 = vadd.f32 %v1270, %v1310
  %v1312 = vpop.f32.mrb[0].mxu0
  %v1313 = vpop.f32.mrb[0].mxu0
  %1314 = vdwg.mxu0
  %1315 = vmatprep.subr.bf16.mxu0 %v730
  %1316 = vmatpush1.bf16.msra.mxu0 %v729
  %1317 = vmatprep.subr.bf16.mxu0 %v732
  %1318 = vmatpush1.bf16.msra.mxu0 %v731
  %1319 = vmatprep.subr.bf16.mxu0 %v734
  %1320 = vmatpush1.bf16.msra.mxu0 %v733
  %1321 = vmatprep.subr.bf16.mxu0 %v736
  %1322 = vmatpush1.bf16.msra.mxu0 %v735
  %1323 = vmatprep.subr.bf16.mxu0 %v738
  %1324 = vmatpush1.bf16.msra.mxu0 %v737
  %1325 = vmatprep.subr.bf16.mxu0 %v740
  %1326 = vmatpush1.bf16.msra.mxu0 %v739
  %1327 = vmatprep.subr.bf16.mxu0 %v742
  %1328 = vmatpush1.bf16.msra.mxu0 %v741
  %1329 = vmatprep.subr.bf16.mxu0 %v744
  %1330 = vmatpush1.bf16.msra.mxu0 %v743
  %1331 = vmatprep.subr.bf16.mxu0 %v746
  %1332 = vmatpush1.bf16.msra.mxu0 %v745
  %1333 = vmatprep.subr.bf16.mxu0 %v748
  %1334 = vmatpush1.bf16.msra.mxu0 %v747
  %1335 = vmatprep.subr.bf16.mxu0 %v750
  %1336 = vmatpush1.bf16.msra.mxu0 %v749
  %1337 = vmatprep.subr.bf16.mxu0 %v752
  %1338 = vmatpush1.bf16.msra.mxu0 %v751
  %1339 = vmatprep.subr.bf16.mxu0 %v754
  %1340 = vmatpush1.bf16.msra.mxu0 %v753
  %1341 = vmatprep.subr.bf16.mxu0 %v756
  %1342 = vmatpush1.bf16.msra.mxu0 %v755
  %1343 = vmatprep.subr.bf16.mxu0 %v758
  %1344 = vmatpush1.bf16.msra.mxu0 %v757
  %1345 = vmatprep.subr.bf16.mxu0 %v760
  %1346 = vmatpush1.bf16.msra.mxu0 %v759
  %1347 = vmatprep.mubr.bf16.mxu0 %v1181
  %1348 = vmatmul.mubr.bf16.gmra.mrb[0].mxu0 %v1180
  %v1349 = vpop.f32.mrb[0].mxu0
  %v1350 = vadd.f32 %v1309, %v1349
  %v1351 = vpop.f32.mrb[0].mxu0
  %v1352 = vadd.f32 %v1311, %v1351
  %v1353 = vpop.f32.mrb[0].mxu0
  %v1354 = vpop.f32.mrb[0].mxu0
  %1355 = vdwg.mxu0
  %1356 = vmatprep.subr.bf16.mxu0 %v762
  %1357 = vmatpush1.bf16.msra.mxu0 %v761
  %1358 = vmatprep.subr.bf16.mxu0 %v764
  %1359 = vmatpush1.bf16.msra.mxu0 %v763
  %1360 = vmatprep.subr.bf16.mxu0 %v766
  %1361 = vmatpush1.bf16.msra.mxu0 %v765
  %1362 = vmatprep.subr.bf16.mxu0 %v768
  %1363 = vmatpush1.bf16.msra.mxu0 %v767
  %1364 = vmatprep.subr.bf16.mxu0 %v770
  %1365 = vmatpush1.bf16.msra.mxu0 %v769
  %1366 = vmatprep.subr.bf16.mxu0 %v772
  %1367 = vmatpush1.bf16.msra.mxu0 %v771
  %1368 = vmatprep.subr.bf16.mxu0 %v774
  %1369 = vmatpush1.bf16.msra.mxu0 %v773
  %1370 = vmatprep.subr.bf16.mxu0 %v776
  %1371 = vmatpush1.bf16.msra.mxu0 %v775
  %1372 = vmatprep.subr.bf16.mxu0 0
  %1373 = vmatpush1.bf16.msra.mxu0 0
  %1374 = vmatprep.subr.bf16.mxu0 0
  %1375 = vmatpush1.bf16.msra.mxu0 0
  %1376 = vmatprep.subr.bf16.mxu0 0
  %1377 = vmatpush1.bf16.msra.mxu0 0
  %1378 = vmatprep.subr.bf16.mxu0 0
  %1379 = vmatpush1.bf16.msra.mxu0 0
  %1380 = vmatprep.subr.bf16.mxu0 0
  %1381 = vmatpush1.bf16.msra.mxu0 0
  %1382 = vmatprep.subr.bf16.mxu0 0
  %1383 = vmatpush1.bf16.msra.mxu0 0
  %1384 = vmatprep.subr.bf16.mxu0 0
  %1385 = vmatpush1.bf16.msra.mxu0 0
  %1386 = vmatprep.subr.bf16.mxu0 0
  %1387 = vmatpush1.bf16.msra.mxu0 0
  %1388 = vmatprep.mubr.bf16.mxu0 0
  %1389 = vmatmul.mubr.bf16.gmra.mrb[0].mxu0 %v1182
  %v1390 = vpop.f32.mrb[0].mxu0
  %v1391 = vadd.f32 %v1350, %v1390
  %v1392 = vpop.f32.mrb[0].mxu0
  %v1393 = vadd.f32 %v1352, %v1392
  %v1394 = vpop.f32.mrb[0].mxu0
  %v1395 = vpop.f32.mrb[0].mxu0
  %1396 = vdwg.mxu0
  %v1397 = vmul.f32 %v1391, %v1130
  %v1398 = vmul.f32 %v1393, %v1134
  %v1399 = vadd.f32 %v1397, %v1143
  %v1400 = vadd.f32 %v1398, %v1147
  %v1401 = vmax.f32 %v1399, 0.0
  %v1402 = vmax.f32 %v1400, 0.0
  %v1403 = vmax.f32 %v1152, %v1401
  %v1404 = vmax.f32 %v1153, %v1402
  %s1405 = scalar_lea.vmem %s0, 72
  %v1406 = vld [vmem:[%s1405] sm:$0xff]
  %v1407 = vld [vmem:[%s1405 + $0x8] sm:$0xff]
  %v1408 = vld [vmem:[%s1405 + $0x10] sm:$0xff]
  %v1409 = vld [vmem:[%s1405 + $0x18] sm:$0xff]
  %v1410 = vld [vmem:[%s1405 + $0x20] sm:$0xf]
  %v1416 = vunpack.c.l.b16 %v1406
  %v1417 = vunpack.c.h.b16 %v1406
  %v1418 = vunpack.c.l.b16 %v1407
  %v1419 = vunpack.c.h.b16 %v1407
  %v1420 = vunpack.c.l.b16 %v1408
  %v1421 = vunpack.c.h.b16 %v1408
  %v1422 = vunpack.c.l.b16 %v1409
  %v1423 = vunpack.c.h.b16 %v1409
  %v1424 = vunpack.c.l.b16 %v1410
  %v1425 = vpack.c.b16 %v1416, %v1416
  %v1426 = vpack.c.b16 %v1417, %v1417
  %v1427 = vpack.c.b16 %v1418, %v1418
  %v1428 = vpack.c.b16 %v1419, %v1419
  %v1429 = vpack.c.b16 %v1420, %v1420
  %v1430 = vpack.c.b16 %v1421, %v1421
  %v1431 = vpack.c.b16 %v1422, %v1422
  %v1432 = vpack.c.b16 %v1423, %v1423
  %v1433 = vpack.c.b16 %v1424, %v1424
  %1443 = vmatprep.subr.bf16.mxu0 %v634
  %1444 = vmatpush1.bf16.msra.mxu0 %v633
  %1445 = vmatprep.subr.bf16.mxu0 %v636
  %1446 = vmatpush1.bf16.msra.mxu0 %v635
  %1447 = vmatprep.subr.bf16.mxu0 %v638
  %1448 = vmatpush1.bf16.msra.mxu0 %v637
  %1449 = vmatprep.subr.bf16.mxu0 %v640
  %1450 = vmatpush1.bf16.msra.mxu0 %v639
  %1451 = vmatprep.subr.bf16.mxu0 %v642
  %1452 = vmatpush1.bf16.msra.mxu0 %v641
  %1453 = vmatprep.subr.bf16.mxu0 %v644
  %1454 = vmatpush1.bf16.msra.mxu0 %v643
  %1455 = vmatprep.subr.bf16.mxu0 %v646
  %1456 = vmatpush1.bf16.msra.mxu0 %v645
  %1457 = vmatprep.subr.bf16.mxu0 %v648
  %1458 = vmatpush1.bf16.msra.mxu0 %v647
  %1459 = vmatprep.subr.bf16.mxu0 %v650
  %1460 = vmatpush1.bf16.msra.mxu0 %v649
  %1461 = vmatprep.subr.bf16.mxu0 %v652
  %1462 = vmatpush1.bf16.msra.mxu0 %v651
  %1463 = vmatprep.subr.bf16.mxu0 %v654
  %1464 = vmatpush1.bf16.msra.mxu0 %v653
  %1465 = vmatprep.subr.bf16.mxu0 %v656
  %1466 = vmatpush1.bf16.msra.mxu0 %v655
  %1467 = vmatprep.subr.bf16.mxu0 %v658
  %1468 = vmatpush1.bf16.msra.mxu0 %v657
  %1469 = vmatprep.subr.bf16.mxu0 %v660
  %1470 = vmatpush1.bf16.msra.mxu0 %v659
  %1471 = vmatprep.subr.bf16.mxu0 %v662
  %1472 = vmatpush1.bf16.msra.mxu0 %v661
  %1473 = vmatprep.subr.bf16.mxu0 %v664
  %1474 = vmatpush1.bf16.msra.mxu0 %v663
  %1475 = vmatprep.mubr.bf16.mxu0 %v1426
  %1476 = vmatmul.mubr.bf16.gmra.mrb[0].mxu0 %v1425
  %v1477 = vpop.f32.mrb[0].mxu0
  %v1478 = vadd.f32 0.0, %v1477
  %v1479 = vpop.f32.mrb[0].mxu0
  %v1480 = vadd.f32 0.0, %v1479
  %v1481 = vpop.f32.mrb[0].mxu0
  %v1482 = vpop.f32.mrb[0].mxu0
  %1483 = vdwg.mxu0
  %1484 = vmatprep.subr.bf16.mxu0 %v666
  %1485 = vmatpush1.bf16.msra.mxu0 %v665
  %1486 = vmatprep.subr.bf16.mxu0 %v668
  %1487 = vmatpush1.bf16.msra.mxu0 %v667
  %1488 = vmatprep.subr.bf16.mxu0 %v670
  %1489 = vmatpush1.bf16.msra.mxu0 %v669
  %1490 = vmatprep.subr.bf16.mxu0 %v672
  %1491 = vmatpush1.bf16.msra.mxu0 %v671
  %1492 = vmatprep.subr.bf16.mxu0 %v674
  %1493 = vmatpush1.bf16.msra.mxu0 %v673
  %1494 = vmatprep.subr.bf16.mxu0 %v676
  %1495 = vmatpush1.bf16.msra.mxu0 %v675
  %1496 = vmatprep.subr.bf16.mxu0 %v678
  %1497 = vmatpush1.bf16.msra.mxu0 %v677
  %1498 = vmatprep.subr.bf16.mxu0 %v680
  %1499 = vmatpush1.bf16.msra.mxu0 %v679
  %1500 = vmatprep.subr.bf16.mxu0 %v682
  %1501 = vmatpush1.bf16.msra.mxu0 %v681
  %1502 = vmatprep.subr.bf16.mxu0 %v684
  %1503 = vmatpush1.bf16.msra.mxu0 %v683
  %1504 = vmatprep.subr.bf16.mxu0 %v686
  %1505 = vmatpush1.bf16.msra.mxu0 %v685
  %1506 = vmatprep.subr.bf16.mxu0 %v688
  %1507 = vmatpush1.bf16.msra.mxu0 %v687
  %1508 = vmatprep.subr.bf16.mxu0 %v690
  %1509 = vmatpush1.bf16.msra.mxu0 %v689
  %1510 = vmatprep.subr.bf16.mxu0 %v692
  %1511 = vmatpush1.bf16.msra.mxu0 %v691
  %1512 = vmatprep.subr.bf16.mxu0 %v694
  %1513 = vmatpush1.bf16.msra.mxu0 %v693
  %1514 = vmatprep.subr.bf16.mxu0 %v696
  %1515 = vmatpush1.bf16.msra.mxu0 %v695
  %1516 = vmatprep.mubr.bf16.mxu0 %v1428
  %1517 = vmatmul.mubr.bf16.gmra.mrb[0].mxu0 %v1427
  %v1518 = vpop.f32.mrb[0].mxu0
  %v1519 = vadd.f32 %v1478, %v1518
  %v1520 = vpop.f32.mrb[0].mxu0
  %v1521 = vadd.f32 %v1480, %v1520
  %v1522 = vpop.f32.mrb[0].mxu0
  %v1523 = vpop.f32.mrb[0].mxu0
  %1524 = vdwg.mxu0
  %1525 = vmatprep.subr.bf16.mxu0 %v698
  %1526 = vmatpush1.bf16.msra.mxu0 %v697
  %1527 = vmatprep.subr.bf16.mxu0 %v700
  %1528 = vmatpush1.bf16.msra.mxu0 %v699
  %1529 = vmatprep.subr.bf16.mxu0 %v702
  %1530 = vmatpush1.bf16.msra.mxu0 %v701
  %1531 = vmatprep.subr.bf16.mxu0 %v704
  %1532 = vmatpush1.bf16.msra.mxu0 %v703
  %1533 = vmatprep.subr.bf16.mxu0 %v706
  %1534 = vmatpush1.bf16.msra.mxu0 %v705
  %1535 = vmatprep.subr.bf16.mxu0 %v708
  %1536 = vmatpush1.bf16.msra.mxu0 %v707
  %1537 = vmatprep.subr.bf16.mxu0 %v710
  %1538 = vmatpush1.bf16.msra.mxu0 %v709
  %1539 = vmatprep.subr.bf16.mxu0 %v712
  %1540 = vmatpush1.bf16.msra.mxu0 %v711
  %1541 = vmatprep.subr.bf16.mxu0 %v714
  %1542 = vmatpush1.bf16.msra.mxu0 %v713
  %1543 = vmatprep.subr.bf16.mxu0 %v716
  %1544 = vmatpush1.bf16.msra.mxu0 %v715
  %1545 = vmatprep.subr.bf16.mxu0 %v718
  %1546 = vmatpush1.bf16.msra.mxu0 %v717
  %1547 = vmatprep.subr.bf16.mxu0 %v720
  %1548 = vmatpush1.bf16.msra.mxu0 %v719
  %1549 = vmatprep.subr.bf16.mxu0 %v722
  %1550 = vmatpush1.bf16.msra.mxu0 %v721
  %1551 = vmatprep.subr.bf16.mxu0 %v724
  %1552 = vmatpush1.bf16.msra.mxu0 %v723
  %1553 = vmatprep.subr.bf16.mxu0 %v726
  %1554 = vmatpush1.bf16.msra.mxu0 %v725
  %1555 = vmatprep.subr.bf16.mxu0 %v728
  %1556 = vmatpush1.bf16.msra.mxu0 %v727
  %1557 = vmatprep.mubr.bf16.mxu0 %v1430
  %1558 = vmatmul.mubr.bf16.gmra.mrb[0].mxu0 %v1429
  %v1559 = vpop.f32.mrb[0].mxu0
  %v1560 = vadd.f32 %v1519, %v1559
  %v1561 = vpop.f32.mrb[0].mxu0
  %v1562 = vadd.f32 %v1521, %v1561
  %v1563 = vpop.f32.mrb[0].mxu0
  %v1564 = vpop.f32.mrb[0].mxu0
  %1565 = vdwg.mxu0
  %1566 = vmatprep.subr.bf16.mxu0 %v730
  %1567 = vmatpush1.bf16.msra.mxu0 %v729
  %1568 = vmatprep.subr.bf16.mxu0 %v732
  %1569 = vmatpush1.bf16.msra.mxu0 %v731
  %1570 = vmatprep.subr.bf16.mxu0 %v734
  %1571 = vmatpush1.bf16.msra.mxu0 %v733
  %1572 = vmatprep.subr.bf16.mxu0 %v736
  %1573 = vmatpush1.bf16.msra.mxu0 %v735
  %1574 = vmatprep.subr.bf16.mxu0 %v738
  %1575 = vmatpush1.bf16.msra.mxu0 %v737
  %1576 = vmatprep.subr.bf16.mxu0 %v740
  %1577 = vmatpush1.bf16.msra.mxu0 %v739
  %1578 = vmatprep.subr.bf16.mxu0 %v742
  %1579 = vmatpush1.bf16.msra.mxu0 %v741
  %1580 = vmatprep.subr.bf16.mxu0 %v744
  %1581 = vmatpush1.bf16.msra.mxu0 %v743
  %1582 = vmatprep.subr.bf16.mxu0 %v746
  %1583 = vmatpush1.bf16.msra.mxu0 %v745
  %1584 = vmatprep.subr.bf16.mxu0 %v748
  %1585 = vmatpush1.bf16.msra.mxu0 %v747
  %1586 = vmatprep.subr.bf16.mxu0 %v750
  %1587 = vmatpush1.bf16.msra.mxu0 %v749
  %1588 = vmatprep.subr.bf16.mxu0 %v752
  %1589 = vmatpush1.bf16.msra.mxu0 %v751
  %1590 = vmatprep.subr.bf16.mxu0 %v754
  %1591 = vmatpush1.bf16.msra.mxu0 %v753
  %1592 = vmatprep.subr.bf16.mxu0 %v756
  %1593 = vmatpush1.bf16.msra.mxu0 %v755
  %1594 = vmatprep.subr.bf16.mxu0 %v758
  %1595 = vmatpush1.bf16.msra.mxu0 %v757
  %1596 = vmatprep.subr.bf16.mxu0 %v760
  %1597 = vmatpush1.bf16.msra.mxu0 %v759
  %1598 = vmatprep.mubr.bf16.mxu0 %v1432
  %1599 = vmatmul.mubr.bf16.gmra.mrb[0].mxu0 %v1431
  %v1600 = vpop.f32.mrb[0].mxu0
  %v1601 = vadd.f32 %v1560, %v1600
  %v1602 = vpop.f32.mrb[0].mxu0
  %v1603 = vadd.f32 %v1562, %v1602
  %v1604 = vpop.f32.mrb[0].mxu0
  %v1605 = vpop.f32.mrb[0].mxu0
  %1606 = vdwg.mxu0
  %1607 = vmatprep.subr.bf16.mxu0 %v762
  %1608 = vmatpush1.bf16.msra.mxu0 %v761
  %1609 = vmatprep.subr.bf16.mxu0 %v764
  %1610 = vmatpush1.bf16.msra.mxu0 %v763
  %1611 = vmatprep.subr.bf16.mxu0 %v766
  %1612 = vmatpush1.bf16.msra.mxu0 %v765
  %1613 = vmatprep.subr.bf16.mxu0 %v768
  %1614 = vmatpush1.bf16.msra.mxu0 %v767
  %1615 = vmatprep.subr.bf16.mxu0 %v770
  %1616 = vmatpush1.bf16.msra.mxu0 %v769
  %1617 = vmatprep.subr.bf16.mxu0 %v772
  %1618 = vmatpush1.bf16.msra.mxu0 %v771
  %1619 = vmatprep.subr.bf16.mxu0 %v774
  %1620 = vmatpush1.bf16.msra.mxu0 %v773
  %1621 = vmatprep.subr.bf16.mxu0 %v776
  %1622 = vmatpush1.bf16.msra.mxu0 %v775
  %1623 = vmatprep.subr.bf16.mxu0 0
  %1624 = vmatpush1.bf16.msra.mxu0 0
  %1625 = vmatprep.subr.bf16.mxu0 0
  %1626 = vmatpush1.bf16.msra.mxu0 0
  %1627 = vmatprep.subr.bf16.mxu0 0
  %1628 = vmatpush1.bf16.msra.mxu0 0
  %1629 = vmatprep.subr.bf16.mxu0 0
  %1630 = vmatpush1.bf16.msra.mxu0 0
  %1631 = vmatprep.subr.bf16.mxu0 0
  %1632 = vmatpush1.bf16.msra.mxu0 0
  %1633 = vmatprep.subr.bf16.mxu0 0
  %1634 = vmatpush1.bf16.msra.mxu0 0
  %1635 = vmatprep.subr.bf16.mxu0 0
  %1636 = vmatpush1.bf16.msra.mxu0 0
  %1637 = vmatprep.subr.bf16.mxu0 0
  %1638 = vmatpush1.bf16.msra.mxu0 0
  %1639 = vmatprep.mubr.bf16.mxu0 0
  %1640 = vmatmul.mubr.bf16.gmra.mrb[0].mxu0 %v1433
  %v1641 = vpop.f32.mrb[0].mxu0
  %v1642 = vadd.f32 %v1601, %v1641
  %v1643 = vpop.f32.mrb[0].mxu0
  %v1644 = vadd.f32 %v1603, %v1643
  %v1645 = vpop.f32.mrb[0].mxu0
  %v1646 = vpop.f32.mrb[0].mxu0
  %1647 = vdwg.mxu0
  %v1648 = vmul.f32 %v1642, %v1130
  %v1649 = vmul.f32 %v1644, %v1134
  %v1650 = vadd.f32 %v1648, %v1143
  %v1651 = vadd.f32 %v1649, %v1147
  %v1652 = vmax.f32 %v1650, 0.0
  %v1653 = vmax.f32 %v1651, 0.0
  %v1654 = vmax.f32 %v1403, %v1652
  %v1655 = vmax.f32 %v1404, %v1653
  %s1656 = scalar_lea.vmem %s0, 108
  %v1657 = vld [vmem:[%s1656] sm:$0xff]
  %v1658 = vld [vmem:[%s1656 + $0x8] sm:$0xff]
  %v1659 = vld [vmem:[%s1656 + $0x10] sm:$0xff]
  %v1660 = vld [vmem:[%s1656 + $0x18] sm:$0xff]
  %v1661 = vld [vmem:[%s1656 + $0x20] sm:$0xf]
  %v1667 = vunpack.c.l.b16 %v1657
  %v1668 = vunpack.c.h.b16 %v1657
  %v1669 = vunpack.c.l.b16 %v1658
  %v1670 = vunpack.c.h.b16 %v1658
  %v1671 = vunpack.c.l.b16 %v1659
  %v1672 = vunpack.c.h.b16 %v1659
  %v1673 = vunpack.c.l.b16 %v1660
  %v1674 = vunpack.c.h.b16 %v1660
  %v1675 = vunpack.c.l.b16 %v1661
  %v1676 = vpack.c.b16 %v1667, %v1667
  %v1677 = vpack.c.b16 %v1668, %v1668
  %v1678 = vpack.c.b16 %v1669, %v1669
  %v1679 = vpack.c.b16 %v1670, %v1670
  %v1680 = vpack.c.b16 %v1671, %v1671
  %v1681 = vpack.c.b16 %v1672, %v1672
  %v1682 = vpack.c.b16 %v1673, %v1673
  %v1683 = vpack.c.b16 %v1674, %v1674
  %v1684 = vpack.c.b16 %v1675, %v1675
  %1694 = vmatprep.subr.bf16.mxu0 %v634
  %1695 = vmatpush1.bf16.msra.mxu0 %v633
  %1696 = vmatprep.subr.bf16.mxu0 %v636
  %1697 = vmatpush1.bf16.msra.mxu0 %v635
  %1698 = vmatprep.subr.bf16.mxu0 %v638
  %1699 = vmatpush1.bf16.msra.mxu0 %v637
  %1700 = vmatprep.subr.bf16.mxu0 %v640
  %1701 = vmatpush1.bf16.msra.mxu0 %v639
  %1702 = vmatprep.subr.bf16.mxu0 %v642
  %1703 = vmatpush1.bf16.msra.mxu0 %v641
  %1704 = vmatprep.subr.bf16.mxu0 %v644
  %1705 = vmatpush1.bf16.msra.mxu0 %v643
  %1706 = vmatprep.subr.bf16.mxu0 %v646
  %1707 = vmatpush1.bf16.msra.mxu0 %v645
  %1708 = vmatprep.subr.bf16.mxu0 %v648
  %1709 = vmatpush1.bf16.msra.mxu0 %v647
  %1710 = vmatprep.subr.bf16.mxu0 %v650
  %1711 = vmatpush1.bf16.msra.mxu0 %v649
  %1712 = vmatprep.subr.bf16.mxu0 %v652
  %1713 = vmatpush1.bf16.msra.mxu0 %v651
  %1714 = vmatprep.subr.bf16.mxu0 %v654
  %1715 = vmatpush1.bf16.msra.mxu0 %v653
  %1716 = vmatprep.subr.bf16.mxu0 %v656
  %1717 = vmatpush1.bf16.msra.mxu0 %v655
  %1718 = vmatprep.subr.bf16.mxu0 %v658
  %1719 = vmatpush1.bf16.msra.mxu0 %v657
  %1720 = vmatprep.subr.bf16.mxu0 %v660
  %1721 = vmatpush1.bf16.msra.mxu0 %v659
  %1722 = vmatprep.subr.bf16.mxu0 %v662
  %1723 = vmatpush1.bf16.msra.mxu0 %v661
  %1724 = vmatprep.subr.bf16.mxu0 %v664
  %1725 = vmatpush1.bf16.msra.mxu0 %v663
  %1726 = vmatprep.mubr.bf16.mxu0 %v1677
  %1727 = vmatmul.mubr.bf16.gmra.mrb[0].mxu0 %v1676
  %v1728 = vpop.f32.mrb[0].mxu0
  %v1729 = vadd.f32 0.0, %v1728
  %v1730 = vpop.f32.mrb[0].mxu0
  %v1731 = vadd.f32 0.0, %v1730
  %v1732 = vpop.f32.mrb[0].mxu0
  %v1733 = vpop.f32.mrb[0].mxu0
  %1734 = vdwg.mxu0
  %1735 = vmatprep.subr.bf16.mxu0 %v666
  %1736 = vmatpush1.bf16.msra.mxu0 %v665
  %1737 = vmatprep.subr.bf16.mxu0 %v668
  %1738 = vmatpush1.bf16.msra.mxu0 %v667
  %1739 = vmatprep.subr.bf16.mxu0 %v670
  %1740 = vmatpush1.bf16.msra.mxu0 %v669
  %1741 = vmatprep.subr.bf16.mxu0 %v672
  %1742 = vmatpush1.bf16.msra.mxu0 %v671
  %1743 = vmatprep.subr.bf16.mxu0 %v674
  %1744 = vmatpush1.bf16.msra.mxu0 %v673
  %1745 = vmatprep.subr.bf16.mxu0 %v676
  %1746 = vmatpush1.bf16.msra.mxu0 %v675
  %1747 = vmatprep.subr.bf16.mxu0 %v678
  %1748 = vmatpush1.bf16.msra.mxu0 %v677
  %1749 = vmatprep.subr.bf16.mxu0 %v680
  %1750 = vmatpush1.bf16.msra.mxu0 %v679
  %1751 = vmatprep.subr.bf16.mxu0 %v682
  %1752 = vmatpush1.bf16.msra.mxu0 %v681
  %1753 = vmatprep.subr.bf16.mxu0 %v684
  %1754 = vmatpush1.bf16.msra.mxu0 %v683
  %1755 = vmatprep.subr.bf16.mxu0 %v686
  %1756 = vmatpush1.bf16.msra.mxu0 %v685
  %1757 = vmatprep.subr.bf16.mxu0 %v688
  %1758 = vmatpush1.bf16.msra.mxu0 %v687
  %1759 = vmatprep.subr.bf16.mxu0 %v690
  %1760 = vmatpush1.bf16.msra.mxu0 %v689
  %1761 = vmatprep.subr.bf16.mxu0 %v692
  %1762 = vmatpush1.bf16.msra.mxu0 %v691
  %1763 = vmatprep.subr.bf16.mxu0 %v694
  %1764 = vmatpush1.bf16.msra.mxu0 %v693
  %1765 = vmatprep.subr.bf16.mxu0 %v696
  %1766 = vmatpush1.bf16.msra.mxu0 %v695
  %1767 = vmatprep.mubr.bf16.mxu0 %v1679
  %1768 = vmatmul.mubr.bf16.gmra.mrb[0].mxu0 %v1678
  %v1769 = vpop.f32.mrb[0].mxu0
  %v1770 = vadd.f32 %v1729, %v1769
  %v1771 = vpop.f32.mrb[0].mxu0
  %v1772 = vadd.f32 %v1731, %v1771
  %v1773 = vpop.f32.mrb[0].mxu0
  %v1774 = vpop.f32.mrb[0].mxu0
  %1775 = vdwg.mxu0
  %1776 = vmatprep.subr.bf16.mxu0 %v698
  %1777 = vmatpush1.bf16.msra.mxu0 %v697
  %1778 = vmatprep.subr.bf16.mxu0 %v700
  %1779 = vmatpush1.bf16.msra.mxu0 %v699
  %1780 = vmatprep.subr.bf16.mxu0 %v702
  %1781 = vmatpush1.bf16.msra.mxu0 %v701
  %1782 = vmatprep.subr.bf16.mxu0 %v704
  %1783 = vmatpush1.bf16.msra.mxu0 %v703
  %1784 = vmatprep.subr.bf16.mxu0 %v706
  %1785 = vmatpush1.bf16.msra.mxu0 %v705
  %1786 = vmatprep.subr.bf16.mxu0 %v708
  %1787 = vmatpush1.bf16.msra.mxu0 %v707
  %1788 = vmatprep.subr.bf16.mxu0 %v710
  %1789 = vmatpush1.bf16.msra.mxu0 %v709
  %1790 = vmatprep.subr.bf16.mxu0 %v712
  %1791 = vmatpush1.bf16.msra.mxu0 %v711
  %1792 = vmatprep.subr.bf16.mxu0 %v714
  %1793 = vmatpush1.bf16.msra.mxu0 %v713
  %1794 = vmatprep.subr.bf16.mxu0 %v716
  %1795 = vmatpush1.bf16.msra.mxu0 %v715
  %1796 = vmatprep.subr.bf16.mxu0 %v718
  %1797 = vmatpush1.bf16.msra.mxu0 %v717
  %1798 = vmatprep.subr.bf16.mxu0 %v720
  %1799 = vmatpush1.bf16.msra.mxu0 %v719
  %1800 = vmatprep.subr.bf16.mxu0 %v722
  %1801 = vmatpush1.bf16.msra.mxu0 %v721
  %1802 = vmatprep.subr.bf16.mxu0 %v724
  %1803 = vmatpush1.bf16.msra.mxu0 %v723
  %1804 = vmatprep.subr.bf16.mxu0 %v726
  %1805 = vmatpush1.bf16.msra.mxu0 %v725
  %1806 = vmatprep.subr.bf16.mxu0 %v728
  %1807 = vmatpush1.bf16.msra.mxu0 %v727
  %1808 = vmatprep.mubr.bf16.mxu0 %v1681
  %1809 = vmatmul.mubr.bf16.gmra.mrb[0].mxu0 %v1680
  %v1810 = vpop.f32.mrb[0].mxu0
  %v1811 = vadd.f32 %v1770, %v1810
  %v1812 = vpop.f32.mrb[0].mxu0
  %v1813 = vadd.f32 %v1772, %v1812
  %v1814 = vpop.f32.mrb[0].mxu0
  %v1815 = vpop.f32.mrb[0].mxu0
  %1816 = vdwg.mxu0
  %1817 = vmatprep.subr.bf16.mxu0 %v730
  %1818 = vmatpush1.bf16.msra.mxu0 %v729
  %1819 = vmatprep.subr.bf16.mxu0 %v732
  %1820 = vmatpush1.bf16.msra.mxu0 %v731
  %1821 = vmatprep.subr.bf16.mxu0 %v734
  %1822 = vmatpush1.bf16.msra.mxu0 %v733
  %1823 = vmatprep.subr.bf16.mxu0 %v736
  %1824 = vmatpush1.bf16.msra.mxu0 %v735
  %1825 = vmatprep.subr.bf16.mxu0 %v738
  %1826 = vmatpush1.bf16.msra.mxu0 %v737
  %1827 = vmatprep.subr.bf16.mxu0 %v740
  %1828 = vmatpush1.bf16.msra.mxu0 %v739
  %1829 = vmatprep.subr.bf16.mxu0 %v742
  %1830 = vmatpush1.bf16.msra.mxu0 %v741
  %1831 = vmatprep.subr.bf16.mxu0 %v744
  %1832 = vmatpush1.bf16.msra.mxu0 %v743
  %1833 = vmatprep.subr.bf16.mxu0 %v746
  %1834 = vmatpush1.bf16.msra.mxu0 %v745
  %1835 = vmatprep.subr.bf16.mxu0 %v748
  %1836 = vmatpush1.bf16.msra.mxu0 %v747
  %1837 = vmatprep.subr.bf16.mxu0 %v750
  %1838 = vmatpush1.bf16.msra.mxu0 %v749
  %1839 = vmatprep.subr.bf16.mxu0 %v752
  %1840 = vmatpush1.bf16.msra.mxu0 %v751
  %1841 = vmatprep.subr.bf16.mxu0 %v754
  %1842 = vmatpush1.bf16.msra.mxu0 %v753
  %1843 = vmatprep.subr.bf16.mxu0 %v756
  %1844 = vmatpush1.bf16.msra.mxu0 %v755
  %1845 = vmatprep.subr.bf16.mxu0 %v758
  %1846 = vmatpush1.bf16.msra.mxu0 %v757
  %1847 = vmatprep.subr.bf16.mxu0 %v760
  %1848 = vmatpush1.bf16.msra.mxu0 %v759
  %1849 = vmatprep.mubr.bf16.mxu0 %v1683
  %1850 = vmatmul.mubr.bf16.gmra.mrb[0].mxu0 %v1682
  %v1851 = vpop.f32.mrb[0].mxu0
  %v1852 = vadd.f32 %v1811, %v1851
  %v1853 = vpop.f32.mrb[0].mxu0
  %v1854 = vadd.f32 %v1813, %v1853
  %v1855 = vpop.f32.mrb[0].mxu0
  %v1856 = vpop.f32.mrb[0].mxu0
  %1857 = vdwg.mxu0
  %1858 = vmatprep.subr.bf16.mxu0 %v762
  %1859 = vmatpush1.bf16.msra.mxu0 %v761
  %1860 = vmatprep.subr.bf16.mxu0 %v764
  %1861 = vmatpush1.bf16.msra.mxu0 %v763
  %1862 = vmatprep.subr.bf16.mxu0 %v766
  %1863 = vmatpush1.bf16.msra.mxu0 %v765
  %1864 = vmatprep.subr.bf16.mxu0 %v768
  %1865 = vmatpush1.bf16.msra.mxu0 %v767
  %1866 = vmatprep.subr.bf16.mxu0 %v770
  %1867 = vmatpush1.bf16.msra.mxu0 %v769
  %1868 = vmatprep.subr.bf16.mxu0 %v772
  %1869 = vmatpush1.bf16.msra.mxu0 %v771
  %1870 = vmatprep.subr.bf16.mxu0 %v774
  %1871 = vmatpush1.bf16.msra.mxu0 %v773
  %1872 = vmatprep.subr.bf16.mxu0 %v776
  %1873 = vmatpush1.bf16.msra.mxu0 %v775
  %1874 = vmatprep.subr.bf16.mxu0 0
  %1875 = vmatpush1.bf16.msra.mxu0 0
  %1876 = vmatprep.subr.bf16.mxu0 0
  %1877 = vmatpush1.bf16.msra.mxu0 0
  %1878 = vmatprep.subr.bf16.mxu0 0
  %1879 = vmatpush1.bf16.msra.mxu0 0
  %1880 = vmatprep.subr.bf16.mxu0 0
  %1881 = vmatpush1.bf16.msra.mxu0 0
  %1882 = vmatprep.subr.bf16.mxu0 0
  %1883 = vmatpush1.bf16.msra.mxu0 0
  %1884 = vmatprep.subr.bf16.mxu0 0
  %1885 = vmatpush1.bf16.msra.mxu0 0
  %1886 = vmatprep.subr.bf16.mxu0 0
  %1887 = vmatpush1.bf16.msra.mxu0 0
  %1888 = vmatprep.subr.bf16.mxu0 0
  %1889 = vmatpush1.bf16.msra.mxu0 0
  %1890 = vmatprep.mubr.bf16.mxu0 0
  %1891 = vmatmul.mubr.bf16.gmra.mrb[0].mxu0 %v1684
  %v1892 = vpop.f32.mrb[0].mxu0
  %v1893 = vadd.f32 %v1852, %v1892
  %v1894 = vpop.f32.mrb[0].mxu0
  %v1895 = vadd.f32 %v1854, %v1894
  %v1896 = vpop.f32.mrb[0].mxu0
  %v1897 = vpop.f32.mrb[0].mxu0
  %1898 = vdwg.mxu0
  %v1899 = vmul.f32 %v1893, %v1130
  %v1900 = vmul.f32 %v1895, %v1134
  %v1901 = vadd.f32 %v1899, %v1143
  %v1902 = vadd.f32 %v1900, %v1147
  %v1903 = vmax.f32 %v1901, 0.0
  %v1904 = vmax.f32 %v1902, 0.0
  %v1905 = vmax.f32 %v1654, %v1903
  %v1906 = vmax.f32 %v1655, %v1904
  %1907 = vst [vmem:[%s4] sm:$0xff] %v1905
  %1908 = vst [vmem:[%s4 + $0x8] sm:$0xff] %v1906
  // Predicated region
  $region18: #{simple_cnn_forward.6} parent=0 // pred_check
    _
  $region19: #{simple_cnn_forward.6} parent=0 // pred_check_branch
    %1910 = sbr.rel (0) target = $region21
  $region20: #{simple_cnn_forward.6} parent=0 // pred_region
    _
  $region21: #{simple_cnn_forward.6} parent=0 // pred_fallthru
    _
  // Predicated region
  $region22: #{simple_cnn_forward.6} parent=0 // pred_check
    _
  $region23: #{simple_cnn_forward.6} parent=0 // pred_check_branch
    %1912 = sbr.rel (0) target = $region25
  $region24: #{simple_cnn_forward.6} parent=0 // pred_region
    _
  $region25: #{simple_cnn_forward.6} parent=0 // pred_fallthru
    _

</llo_original>
